<compile_context>
chip_gen: v5e
topology: v5e:2x2
jax: 0.10.0
libtpu: 0.0.40
codegen_flags: <defaults>
</compile_context>

<pallas_src>
import functools
import math

import jax
import jax.numpy as jnp
from jax.experimental import pallas as pl
from jax.experimental.pallas import tpu as pltpu


def _round_up(x, m):
    return (x + m - 1) // m * m


# ----------------------------------------------------------------------------
# Pallas kernels
# ----------------------------------------------------------------------------
def _gemm_bias_act_kernel(x_ref, w_ref, b_ref, o_ref, *, act):
    """o = act(x @ w + b); bf16 operands, f32 accumulation."""
    y = jnp.dot(x_ref[...], w_ref[...], preferred_element_type=jnp.float32)
    y = y + b_ref[...]
    if act == "relu":
        y = jnp.maximum(y, 0.0)
    o_ref[...] = y.astype(o_ref.dtype)


def matmul_bias_act(x, w, b, act="relu", out_dtype=jnp.bfloat16,
                    vmem_budget=8 * 1024 * 1024):
    """act(x @ w + b). x:(M,K); w:(K,N) bf16 with N % 128 == 0; b:(1,N) f32."""
    M, K = x.shape
    Kw, N = w.shape
    assert K == Kw and N % 128 == 0
    x = x.astype(jnp.bfloat16)
    out_bytes = 2 if out_dtype == jnp.bfloat16 else 4

    # VMEM-budget-capped row block (double-buffered lhs/out + resident w/bias).
    fixed = 2 * (K * N * 2 + N * 4)
    per_row = 2 * (K * 2 + N * out_bytes)
    cap = (vmem_budget - fixed) // per_row
    cap = max(8, min(1024, (cap // 8) * 8))

    m_full = _round_up(M, 8)
    bm = min(cap, m_full)
    if m_full > 128:
        # keep >= 2 blocks on the parallel axis so both v7x TensorCores get work
        bm = min(bm, max(128, (m_full // 2) // 8 * 8))
    m_pad = _round_up(M, bm)
    if m_pad != M:
        x = jnp.pad(x, ((0, m_pad - M), (0, 0)))

    out = pl.pallas_call(
        functools.partial(_gemm_bias_act_kernel, act=act),
        out_shape=jax.ShapeDtypeStruct((m_pad, N), out_dtype),
        grid=(m_pad // bm,),
        in_specs=[
            pl.BlockSpec((bm, K), lambda i: (i, 0)),
            pl.BlockSpec((K, N), lambda i: (0, 0)),
            pl.BlockSpec((1, N), lambda i: (0, 0)),
        ],
        out_specs=pl.BlockSpec((bm, N), lambda i: (i, 0)),
        compiler_params=pltpu.CompilerParams(dimension_semantics=("parallel",)),
    )(x, w, b)
    return out[:M] if m_pad != M else out


def _max8_kernel(x0, x1, x2, x3, x4, x5, x6, x7, o_ref):
    """Element-wise max of 8 lane-dense slabs (MaxPool3d 2x2x2 window)."""
    m = jnp.maximum
    a = m(m(x0[...].astype(jnp.float32), x1[...].astype(jnp.float32)),
          m(x2[...].astype(jnp.float32), x3[...].astype(jnp.float32)))
    b = m(m(x4[...].astype(jnp.float32), x5[...].astype(jnp.float32)),
          m(x6[...].astype(jnp.float32), x7[...].astype(jnp.float32)))
    o_ref[...] = m(a, b).astype(o_ref.dtype)


def maxpool3d_2x(x):
    """MaxPool3d(kernel=2, stride=2) on channels-last (N, D, H, W, C), C%128==0."""
    N, D, H, W, C = x.shape
    assert C % 128 == 0
    Do, Ho, Wo = D // 2, H // 2, W // 2
    M = N * Do * Ho * Wo
    slabs = [
        x[:, dz:2 * Do:2, dy:2 * Ho:2, dx:2 * Wo:2, :].reshape(M, C)
        for dz in range(2) for dy in range(2) for dx in range(2)
    ]
    bm = min(256, _round_up(M, 8))
    m_pad = _round_up(M, bm)
    if m_pad != M:
        slabs = [jnp.pad(s, ((0, m_pad - M), (0, 0))) for s in slabs]
    out = pl.pallas_call(
        _max8_kernel,
        out_shape=jax.ShapeDtypeStruct((m_pad, C), x.dtype),
        grid=(m_pad // bm,),
        in_specs=[pl.BlockSpec((bm, C), lambda i: (i, 0)) for _ in range(8)],
        out_specs=pl.BlockSpec((bm, C), lambda i: (i, 0)),
        compiler_params=pltpu.CompilerParams(dimension_semantics=("parallel",)),
    )(*slabs)
    return out[:M].reshape(N, Do, Ho, Wo, C)


def _lstm_fc_kernel(feat_ref, wih0_ref, whh0_ref, b0_ref,
                    wih1_ref, whh1_ref, b1_ref,
                    fc1w_ref, fc1b_ref, fc2w_ref, fc2b_ref, fc3w_ref, fc3b_ref,
                    o_ref, *, T, B, H):
    """Fused 2-layer LSTM recurrence (state in vregs) + fc1/ReLU/fc2/ReLU/fc3.

    Layer-0 input projection for all T steps is hoisted to one GEMM before the
    recurrence; the loop only runs the small (B,H)x(H,4H) matmuls.
    """
    f32, bf16 = jnp.float32, jnp.bfloat16
    whh0 = whh0_ref[...]
    wih1 = wih1_ref[...]
    whh1 = whh1_ref[...]
    b1 = b1_ref[...]

    # Hoisted input projection: (T*B, I) @ (I, 4H) + b0   (rows are time-major).
    gx0 = jnp.dot(feat_ref[...], wih0_ref[...],
                  preferred_element_type=f32) + b0_ref[...]

    def cell(gates, c_prev):
        # PyTorch gate order (i, f, g, o); slices are lane-aligned when H%128==0.
        i = jax.nn.sigmoid(gates[:, 0 * H:1 * H])
        f = jax.nn.sigmoid(gates[:, 1 * H:2 * H])
        g = jnp.tanh(gates[:, 2 * H:3 * H])
        o = jax.nn.sigmoid(gates[:, 3 * H:4 * H])
        c = f * c_prev + i * g
        return o * jnp.tanh(c), c

    z = jnp.zeros((B, H), f32)
    h0, c0, h1, c1 = z, z, z, z
    for t in range(T):                                    # T is small & static
        g0 = gx0[t * B:(t + 1) * B] + jnp.dot(
            h0.astype(bf16), whh0, preferred_element_type=f32)
        h0, c0 = cell(g0, c0)
        # TODO(synk): nn.LSTM inter-layer dropout (training mode) not applied.
        g1 = (b1
              + jnp.dot(h0.astype(bf16), wih1, preferred_element_type=f32)
              + jnp.dot(h1.astype(bf16), whh1, preferred_element_type=f32))
        h1, c1 = cell(g1, c1)

    y = jnp.dot(h1.astype(bf16), fc1w_ref[...], preferred_element_type=f32)
    y = jnp.maximum(y + fc1b_ref[...], 0.0)
    # TODO(synk): dropout1 (eval-mode identity)
    y = jnp.dot(y.astype(bf16), fc2w_ref[...], preferred_element_type=f32)
    y = jnp.maximum(y + fc2b_ref[...], 0.0)
    # TODO(synk): dropout2 (eval-mode identity)
    y = jnp.dot(y.astype(bf16), fc3w_ref[...], preferred_element_type=f32)
    o_ref[...] = y + fc3b_ref[...]


def lstm_fc_head(feat, prep, hidden_dim, output_size):
    """feat: (B, T, I) -> (B, output_size). One fused pallas_call."""
    B, T, I = feat.shape
    feat_tb = jnp.transpose(feat, (1, 0, 2)).reshape(T * B, I).astype(jnp.bfloat16)
    wih0, whh0, b0 = prep["lstm0"]
    wih1, whh1, b1 = prep["lstm1"]
    fc1w, fc1b = prep["fc1"]
    fc2w, fc2b = prep["fc2"]
    fc3w, fc3b = prep["fc3"]
    out = pl.pallas_call(
        functools.partial(_lstm_fc_kernel, T=T, B=B, H=hidden_dim),
        out_shape=jax.ShapeDtypeStruct((B, fc3w.shape[1]), jnp.float32),
    )(feat_tb, wih0, whh0, b0, wih1, whh1, b1,
      fc1w, fc1b, fc2w, fc2b, fc3w, fc3b)
    return out[:, :output_size]


# ----------------------------------------------------------------------------
# Glue: channels-last im2col + layer composition
# ----------------------------------------------------------------------------
def conv3d_relu(x, w_prep, b_prep):
    """Conv3d(k=3,s=1,p=1)+ReLU. x:(N,D,H,W,Cin) channels-last.
    w_prep:(27*Cin, Np) bf16 with Cout zero-padded to Np (mult. of 128);
    b_prep:(1, Np) f32. Returns (N,D,H,W,Np) bf16 (lane-dense)."""
    N, D, H, W, C = x.shape
    x = x.astype(jnp.bfloat16)
    xp = jnp.pad(x, ((0, 0), (1, 1), (1, 1), (1, 1), (0, 0)))
    cols = [xp[:, dz:dz + D, dy:dy + H, dx:dx + W, :]
            for dz in range(3) for dy in range(3) for dx in range(3)]
    patches = jnp.concatenate(cols, axis=-1).reshape(N * D * H * W, 27 * C)
    y = matmul_bias_act(patches, w_prep, b_prep, act="relu",
                        out_dtype=jnp.bfloat16)
    return y.reshape(N, D, H, W, w_prep.shape[1])


# Static per-layer spec: (param name, true out-channels, apply MaxPool3d after).
# Channel counts MUST stay static Python ints (they drive lane slices).
_CONV_LAYERS = (("conv1", 16, True), ("conv2", 32, True),
                ("conv3", 64, True), ("conv4", 128, False))


# ----------------------------------------------------------------------------
# Parameters (PyTorch layouts) and kernel-layout preparation
# ----------------------------------------------------------------------------
def init_params(key, spatial_bins=8, output_size=8, hidden_dim=128):
    def u(k, shape, fan_in):
        bound = 1.0 / math.sqrt(fan_in)
        return jax.random.uniform(k, shape, jnp.float32, -bound, bound)

    keys = iter(jax.random.split(key, 40))
    p = {}
    for name, cin, cout in (("conv1", 1, 16), ("conv2", 16, 32),
                            ("conv3", 32, 64), ("conv4", 64, 128)):
        fan = cin * 27
        p[name + "_w"] = u(next(keys), (cout, cin, 3, 3, 3), fan)
        p[name + "_b"] = u(next(keys), (cout,), fan)
    lstm_in = 128 * (spatial_bins // 8) ** 3
    Hd = hidden_dim
    for layer, isz in ((0, lstm_in), (1, Hd)):
        p[f"lstm{layer}_wih"] = u(next(keys), (4 * Hd, isz), Hd)
        p[f"lstm{layer}_whh"] = u(next(keys), (4 * Hd, Hd), Hd)
        p[f"lstm{layer}_bih"] = u(next(keys), (4 * Hd,), Hd)
        p[f"lstm{layer}_bhh"] = u(next(keys), (4 * Hd,), Hd)
    for name, fin, fout in (("fc1", Hd, 512), ("fc2", 512, 128),
                            ("fc3", 128, output_size)):
        p[name + "_w"] = u(next(keys), (fout, fin), fin)
        p[name + "_b"] = u(next(keys), (fout,), fin)
    return p


def prep_params(p):
    """PyTorch-layout params -> kernel layouts (bf16 weights, lane-padded N).

    The returned dict contains ONLY arrays (jit-safe pytree)."""
    prep = {}
    for name in ("conv1", "conv2", "conv3", "conv4"):
        w, b = p[name + "_w"], p[name + "_b"]
        cout, cin = w.shape[0], w.shape[1]
        n_pad = _round_up(cout, 128)
        w2 = jnp.transpose(w, (2, 3, 4, 1, 0)).reshape(27 * cin, cout)
        w2 = jnp.pad(w2, ((0, 0), (0, n_pad - cout))).astype(jnp.bfloat16)
        b2 = jnp.pad(b, (0, n_pad - cout)).reshape(1, n_pad).astype(jnp.float32)
        prep[name] = (w2, b2)
    for layer in (0, 1):
        prep[f"lstm{layer}"] = (
            p[f"lstm{layer}_wih"].T.astype(jnp.bfloat16),     # (I, 4H)
            p[f"lstm{layer}_whh"].T.astype(jnp.bfloat16),     # (H, 4H)
            (p[f"lstm{layer}_bih"] + p[f"lstm{layer}_bhh"]
             ).reshape(1, -1).astype(jnp.float32))
    for name in ("fc1", "fc2", "fc3"):
        w, b = p[name + "_w"], p[name + "_b"]
        fout = w.shape[0]
        n_pad = _round_up(fout, 128)
        wt = jnp.pad(w.T, ((0, 0), (0, n_pad - fout))).astype(jnp.bfloat16)
        bt = jnp.pad(b, (0, n_pad - fout)).reshape(1, n_pad).astype(jnp.float32)
        prep[name] = (wt, bt)
    return prep


# ----------------------------------------------------------------------------
# Full forward pass
# ----------------------------------------------------------------------------
def temporal3d_forward(prep, x, hidden_dim, output_size):
    """x: (batch, time_steps, D, H, W) float32 -> (batch, output_size) float32."""
    B, T, D, H, W = x.shape
    N = B * T
    # Conv weights are shared across time -> fold time into batch (identical to
    # the per-timestep PyTorch loop). Activations stay channels-last; channels
    # are kept zero-padded to 128 through the GEMM + pool (lane-dense) and
    # sliced back to the TRUE (static) count only for the next im2col.
    act = x.reshape(N, D, H, W, 1)
    for name, cout, do_pool in _CONV_LAYERS:   # cout is a static Python int
        w2, b2 = prep[name]
        y = conv3d_relu(act, w2, b2)        # (N, d, h, w, 128k), lane-dense
        if do_pool:
            y = maxpool3d_2x(y)             # lane-dense pool on padded channels
        act = y[..., :cout]                 # static lane slice -> next im2col
    # Flatten (channels-last order; identical to PyTorch's NCDHW flatten when
    # the spatial dims are 1x1x1, i.e. spatial_bins // 8 == 1).
    feat = act.reshape(B, T, -1)
    return lstm_fc_head(feat, prep, hidden_dim, output_size)


# ----------------------------------------------------------------------------
# Demo
# ----------------------------------------------------------------------------
if __name__ == "__main__":
    # Small shapes consistent with the module (spatial_bins divisible by 8 so
    # the three 2x pools land exactly on 1x1x1, as the module's flatten implies).
    spatial_bins = 8
    output_size = 8
    hidden_dim = 128     # multiple of 128 keeps LSTM gate slices lane-aligned
    batch, time_steps = 2, 4

    key = jax.random.PRNGKey(0)
    pkey, xkey = jax.random.split(key)
    params = init_params(pkey, spatial_bins=spatial_bins,
                         output_size=output_size, hidden_dim=hidden_dim)
    prep = prep_params(params)
    x = jax.random.normal(
        xkey, (batch, time_steps, spatial_bins, spatial_bins, spatial_bins),
        dtype=jnp.float32)

    fwd = jax.jit(functools.partial(temporal3d_forward,
                                    hidden_dim=hidden_dim,
                                    output_size=output_size))
    out = jax.block_until_ready(fwd(prep, x))
    assert out.shape == (batch, output_size), out.shape
    assert bool(jnp.all(jnp.isfinite(out)))
    print("KERNEL_OK")
</pallas_src>

<mosaic_0001>
module attributes {stable_mosaic.version = 11 : i64} {
  func.func @_gemm_bias_act_kernel(%arg0: i32, %arg1: memref<1024x27xbf16, #tpu.memory_space<vmem>>, %arg2: memref<27x128xbf16, #tpu.memory_space<vmem>>, %arg3: memref<1x128xf32, #tpu.memory_space<vmem>>, %arg4: memref<1024x128xbf16, #tpu.memory_space<vmem>>) attributes {dimension_semantics = [#tpu.dimension_semantics<parallel>], iteration_bounds = array<i64: 4>, scalar_prefetch = 0 : i64, scratch_operands = 0 : i64, tpu.core_type = #tpu.core_type<tc>, window_params = [{transform_indices = @transform_0, window_bounds = array<i64: 1024, 27>}, {pipeline_mode = #tpu.pipeline_mode<synchronous>, transform_indices = @transform_1, window_bounds = array<i64: 27, 128>}, {pipeline_mode = #tpu.pipeline_mode<synchronous>, transform_indices = @transform_2, window_bounds = array<i64: 1, 128>}, {transform_indices = @transform_3, window_bounds = array<i64: 1024, 128>}]} {
    %c0 = arith.constant 0 : index
    %c0_0 = arith.constant 0 : index
    %0 = vector.load %arg1[%c0, %c0_0] : memref<1024x27xbf16, #tpu.memory_space<vmem>>, vector<1024x27xbf16>
    %c0_1 = arith.constant 0 : index
    %c0_2 = arith.constant 0 : index
    %1 = vector.load %arg2[%c0_1, %c0_2] : memref<27x128xbf16, #tpu.memory_space<vmem>>, vector<27x128xbf16>
    %cst = arith.constant dense<0.000000e+00> : vector<1024x128xf32>
    %2 = tpu.matmul %0, %1, %cst {dimension_numbers = #tpu.dot_dimension_numbers<[1], [0], [0], [1], [0, 0, 1, 1], [], []>} : vector<1024x27xbf16>, vector<27x128xbf16>, vector<1024x128xf32> -> vector<1024x128xf32>
    %c0_3 = arith.constant 0 : index
    %c0_4 = arith.constant 0 : index
    %3 = vector.load %arg3[%c0_3, %c0_4] : memref<1x128xf32, #tpu.memory_space<vmem>>, vector<1x128xf32>
    %4 = vector.broadcast %3 : vector<1x128xf32> to vector<1024x128xf32>
    %5 = arith.addf %2, %4 : vector<1024x128xf32>
    %cst_5 = arith.constant 0.000000e+00 : f32
    %6 = vector.broadcast %cst_5 : f32 to vector<1024x128xf32>
    %7 = arith.maximumf %5, %6 : vector<1024x128xf32>
    %8 = arith.truncf %7 : vector<1024x128xf32> to vector<1024x128xbf16>
    %c0_6 = arith.constant 0 : index
    %c0_7 = arith.constant 0 : index
    %9 = vector.load %arg4[%c0_6, %c0_7] : memref<1024x128xbf16, #tpu.memory_space<vmem>>, vector<1024x128xbf16>
    tpu.vector_store %arg4[%c0_6, %c0_7], %8 {strides = array<i32>} : memref<1024x128xbf16, #tpu.memory_space<vmem>>, vector<1024x128xbf16>,
    return
  }
  func.func @transform_0(%arg0: i32) -> (i32, i32) {
    %c0_i32 = arith.constant 0 : i32
    %c0_i32_0 = arith.constant 0 : i32
    return %arg0, %c0_i32 : i32, i32
  }
  func.func @transform_1(%arg0: i32) -> (i32, i32) {
    %c0_i32 = arith.constant 0 : i32
    %c0_i32_0 = arith.constant 0 : i32
    %c0_i32_1 = arith.constant 0 : i32
    return %c0_i32, %c0_i32_0 : i32, i32
  }
  func.func @transform_2(%arg0: i32) -> (i32, i32) {
    %c0_i32 = arith.constant 0 : i32
    %c0_i32_0 = arith.constant 0 : i32
    %c0_i32_1 = arith.constant 0 : i32
    return %c0_i32, %c0_i32_0 : i32, i32
  }
  func.func @transform_3(%arg0: i32) -> (i32, i32) {
    %c0_i32 = arith.constant 0 : i32
    %c0_i32_0 = arith.constant 0 : i32
    return %arg0, %c0_i32 : i32, i32
  }
}

module attributes {stable_mosaic.version = 11 : i64} {
  func.func @_max8_kernel(%arg0: i32, %arg1: memref<256x128xbf16, #tpu.memory_space<vmem>>, %arg2: memref<256x128xbf16, #tpu.memory_space<vmem>>, %arg3: memref<256x128xbf16, #tpu.memory_space<vmem>>, %arg4: memref<256x128xbf16, #tpu.memory_space<vmem>>, %arg5: memref<256x128xbf16, #tpu.memory_space<vmem>>, %arg6: memref<256x128xbf16, #tpu.memory_space<vmem>>, %arg7: memref<256x128xbf16, #tpu.memory_space<vmem>>, %arg8: memref<256x128xbf16, #tpu.memory_space<vmem>>, %arg9: memref<256x128xbf16, #tpu.memory_space<vmem>>) attributes {dimension_semantics = [#tpu.dimension_semantics<parallel>], iteration_bounds = array<i64: 2>, scalar_prefetch = 0 : i64, scratch_operands = 0 : i64, tpu.core_type = #tpu.core_type<tc>, window_params = [{transform_indices = @transform_0, window_bounds = array<i64: 256, 128>}, {transform_indices = @transform_1, window_bounds = array<i64: 256, 128>}, {transform_indices = @transform_2, window_bounds = array<i64: 256, 128>}, {transform_indices = @transform_3, window_bounds = array<i64: 256, 128>}, {transform_indices = @transform_4, window_bounds = array<i64: 256, 128>}, {transform_indices = @transform_5, window_bounds = array<i64: 256, 128>}, {transform_indices = @transform_6, window_bounds = array<i64: 256, 128>}, {transform_indices = @transform_7, window_bounds = array<i64: 256, 128>}, {transform_indices = @transform_8, window_bounds = array<i64: 256, 128>}]} {
    %c0 = arith.constant 0 : index
    %c0_0 = arith.constant 0 : index
    %0 = vector.load %arg1[%c0, %c0_0] : memref<256x128xbf16, #tpu.memory_space<vmem>>, vector<256x128xbf16>
    %1 = arith.extf %0 : vector<256x128xbf16> to vector<256x128xf32>
    %c0_1 = arith.constant 0 : index
    %c0_2 = arith.constant 0 : index
    %2 = vector.load %arg2[%c0_1, %c0_2] : memref<256x128xbf16, #tpu.memory_space<vmem>>, vector<256x128xbf16>
    %3 = arith.extf %2 : vector<256x128xbf16> to vector<256x128xf32>
    %4 = arith.maximumf %1, %3 : vector<256x128xf32>
    %c0_3 = arith.constant 0 : index
    %c0_4 = arith.constant 0 : index
    %5 = vector.load %arg3[%c0_3, %c0_4] : memref<256x128xbf16, #tpu.memory_space<vmem>>, vector<256x128xbf16>
    %6 = arith.extf %5 : vector<256x128xbf16> to vector<256x128xf32>
    %c0_5 = arith.constant 0 : index
    %c0_6 = arith.constant 0 : index
    %7 = vector.load %arg4[%c0_5, %c0_6] : memref<256x128xbf16, #tpu.memory_space<vmem>>, vector<256x128xbf16>
    %8 = arith.extf %7 : vector<256x128xbf16> to vector<256x128xf32>
    %9 = arith.maximumf %6, %8 : vector<256x128xf32>
    %10 = arith.maximumf %4, %9 : vector<256x128xf32>
    %c0_7 = arith.constant 0 : index
    %c0_8 = arith.constant 0 : index
    %11 = vector.load %arg5[%c0_7, %c0_8] : memref<256x128xbf16, #tpu.memory_space<vmem>>, vector<256x128xbf16>
    %12 = arith.extf %11 : vector<256x128xbf16> to vector<256x128xf32>
    %c0_9 = arith.constant 0 : index
    %c0_10 = arith.constant 0 : index
    %13 = vector.load %arg6[%c0_9, %c0_10] : memref<256x128xbf16, #tpu.memory_space<vmem>>, vector<256x128xbf16>
    %14 = arith.extf %13 : vector<256x128xbf16> to vector<256x128xf32>
    %15 = arith.maximumf %12, %14 : vector<256x128xf32>
    %c0_11 = arith.constant 0 : index
    %c0_12 = arith.constant 0 : index
    %16 = vector.load %arg7[%c0_11, %c0_12] : memref<256x128xbf16, #tpu.memory_space<vmem>>, vector<256x128xbf16>
    %17 = arith.extf %16 : vector<256x128xbf16> to vector<256x128xf32>
    %c0_13 = arith.constant 0 : index
    %c0_14 = arith.constant 0 : index
    %18 = vector.load %arg8[%c0_13, %c0_14] : memref<256x128xbf16, #tpu.memory_space<vmem>>, vector<256x128xbf16>
    %19 = arith.extf %18 : vector<256x128xbf16> to vector<256x128xf32>
    %20 = arith.maximumf %17, %19 : vector<256x128xf32>
    %21 = arith.maximumf %15, %20 : vector<256x128xf32>
    %22 = arith.maximumf %10, %21 : vector<256x128xf32>
    %23 = arith.truncf %22 : vector<256x128xf32> to vector<256x128xbf16>
    %c0_15 = arith.constant 0 : index
    %c0_16 = arith.constant 0 : index
    %24 = vector.load %arg9[%c0_15, %c0_16] : memref<256x128xbf16, #tpu.memory_space<vmem>>, vector<256x128xbf16>
    tpu.vector_store %arg9[%c0_15, %c0_16], %23 {strides = array<i32>} : memref<256x128xbf16, #tpu.memory_space<vmem>>, vector<256x128xbf16>,
    return
  }
  func.func @transform_0(%arg0: i32) -> (i32, i32) {
    %c0_i32 = arith.constant 0 : i32
    %c0_i32_0 = arith.constant 0 : i32
    return %arg0, %c0_i32 : i32, i32
  }
  func.func @transform_1(%arg0: i32) -> (i32, i32) {
    %c0_i32 = arith.constant 0 : i32
    %c0_i32_0 = arith.constant 0 : i32
    return %arg0, %c0_i32 : i32, i32
  }
  func.func @transform_2(%arg0: i32) -> (i32, i32) {
    %c0_i32 = arith.constant 0 : i32
    %c0_i32_0 = arith.constant 0 : i32
    return %arg0, %c0_i32 : i32, i32
  }
  func.func @transform_3(%arg0: i32) -> (i32, i32) {
    %c0_i32 = arith.constant 0 : i32
    %c0_i32_0 = arith.constant 0 : i32
    return %arg0, %c0_i32 : i32, i32
  }
  func.func @transform_4(%arg0: i32) -> (i32, i32) {
    %c0_i32 = arith.constant 0 : i32
    %c0_i32_0 = arith.constant 0 : i32
    return %arg0, %c0_i32 : i32, i32
  }
  func.func @transform_5(%arg0: i32) -> (i32, i32) {
    %c0_i32 = arith.constant 0 : i32
    %c0_i32_0 = arith.constant 0 : i32
    return %arg0, %c0_i32 : i32, i32
  }
  func.func @transform_6(%arg0: i32) -> (i32, i32) {
    %c0_i32 = arith.constant 0 : i32
    %c0_i32_0 = arith.constant 0 : i32
    return %arg0, %c0_i32 : i32, i32
  }
  func.func @transform_7(%arg0: i32) -> (i32, i32) {
    %c0_i32 = arith.constant 0 : i32
    %c0_i32_0 = arith.constant 0 : i32
    return %arg0, %c0_i32 : i32, i32
  }
  func.func @transform_8(%arg0: i32) -> (i32, i32) {
    %c0_i32 = arith.constant 0 : i32
    %c0_i32_0 = arith.constant 0 : i32
    return %arg0, %c0_i32 : i32, i32
  }
}

module attributes {stable_mosaic.version = 11 : i64} {
  func.func @_gemm_bias_act_kernel(%arg0: i32, %arg1: memref<256x432xbf16, #tpu.memory_space<vmem>>, %arg2: memref<432x128xbf16, #tpu.memory_space<vmem>>, %arg3: memref<1x128xf32, #tpu.memory_space<vmem>>, %arg4: memref<256x128xbf16, #tpu.memory_space<vmem>>) attributes {dimension_semantics = [#tpu.dimension_semantics<parallel>], iteration_bounds = array<i64: 2>, scalar_prefetch = 0 : i64, scratch_operands = 0 : i64, tpu.core_type = #tpu.core_type<tc>, window_params = [{transform_indices = @transform_0, window_bounds = array<i64: 256, 432>}, {pipeline_mode = #tpu.pipeline_mode<synchronous>, transform_indices = @transform_1, window_bounds = array<i64: 432, 128>}, {pipeline_mode = #tpu.pipeline_mode<synchronous>, transform_indices = @transform_2, window_bounds = array<i64: 1, 128>}, {transform_indices = @transform_3, window_bounds = array<i64: 256, 128>}]} {
    %c0 = arith.constant 0 : index
    %c0_0 = arith.constant 0 : index
    %0 = vector.load %arg1[%c0, %c0_0] : memref<256x432xbf16, #tpu.memory_space<vmem>>, vector<256x432xbf16>
    %c0_1 = arith.constant 0 : index
    %c0_2 = arith.constant 0 : index
    %1 = vector.load %arg2[%c0_1, %c0_2] : memref<432x128xbf16, #tpu.memory_space<vmem>>, vector<432x128xbf16>
    %cst = arith.constant dense<0.000000e+00> : vector<256x128xf32>
    %2 = tpu.matmul %0, %1, %cst {dimension_numbers = #tpu.dot_dimension_numbers<[1], [0], [0], [1], [0, 0, 1, 1], [], []>} : vector<256x432xbf16>, vector<432x128xbf16>, vector<256x128xf32> -> vector<256x128xf32>
    %c0_3 = arith.constant 0 : index
    %c0_4 = arith.constant 0 : index
    %3 = vector.load %arg3[%c0_3, %c0_4] : memref<1x128xf32, #tpu.memory_space<vmem>>, vector<1x128xf32>
    %4 = vector.broadcast %3 : vector<1x128xf32> to vector<256x128xf32>
    %5 = arith.addf %2, %4 : vector<256x128xf32>
    %cst_5 = arith.constant 0.000000e+00 : f32
    %6 = vector.broadcast %cst_5 : f32 to vector<256x128xf32>
    %7 = arith.maximumf %5, %6 : vector<256x128xf32>
    %8 = arith.truncf %7 : vector<256x128xf32> to vector<256x128xbf16>
    %c0_6 = arith.constant 0 : index
    %c0_7 = arith.constant 0 : index
    %9 = vector.load %arg4[%c0_6, %c0_7] : memref<256x128xbf16, #tpu.memory_space<vmem>>, vector<256x128xbf16>
    tpu.vector_store %arg4[%c0_6, %c0_7], %8 {strides = array<i32>} : memref<256x128xbf16, #tpu.memory_space<vmem>>, vector<256x128xbf16>,
    return
  }
  func.func @transform_0(%arg0: i32) -> (i32, i32) {
    %c0_i32 = arith.constant 0 : i32
    %c0_i32_0 = arith.constant 0 : i32
    return %arg0, %c0_i32 : i32, i32
  }
  func.func @transform_1(%arg0: i32) -> (i32, i32) {
    %c0_i32 = arith.constant 0 : i32
    %c0_i32_0 = arith.constant 0 : i32
    %c0_i32_1 = arith.constant 0 : i32
    return %c0_i32, %c0_i32_0 : i32, i32
  }
  func.func @transform_2(%arg0: i32) -> (i32, i32) {
    %c0_i32 = arith.constant 0 : i32
    %c0_i32_0 = arith.constant 0 : i32
    %c0_i32_1 = arith.constant 0 : i32
    return %c0_i32, %c0_i32_0 : i32, i32
  }
  func.func @transform_3(%arg0: i32) -> (i32, i32) {
    %c0_i32 = arith.constant 0 : i32
    %c0_i32_0 = arith.constant 0 : i32
    return %arg0, %c0_i32 : i32, i32
  }
}

module attributes {stable_mosaic.version = 11 : i64} {
  func.func @_max8_kernel(%arg0: i32, %arg1: memref<64x128xbf16, #tpu.memory_space<vmem>>, %arg2: memref<64x128xbf16, #tpu.memory_space<vmem>>, %arg3: memref<64x128xbf16, #tpu.memory_space<vmem>>, %arg4: memref<64x128xbf16, #tpu.memory_space<vmem>>, %arg5: memref<64x128xbf16, #tpu.memory_space<vmem>>, %arg6: memref<64x128xbf16, #tpu.memory_space<vmem>>, %arg7: memref<64x128xbf16, #tpu.memory_space<vmem>>, %arg8: memref<64x128xbf16, #tpu.memory_space<vmem>>, %arg9: memref<64x128xbf16, #tpu.memory_space<vmem>>) attributes {dimension_semantics = [#tpu.dimension_semantics<parallel>], iteration_bounds = array<i64: 1>, scalar_prefetch = 0 : i64, scratch_operands = 0 : i64, tpu.core_type = #tpu.core_type<tc>, window_params = [{transform_indices = @transform_0, window_bounds = array<i64: 64, 128>}, {transform_indices = @transform_1, window_bounds = array<i64: 64, 128>}, {transform_indices = @transform_2, window_bounds = array<i64: 64, 128>}, {transform_indices = @transform_3, window_bounds = array<i64: 64, 128>}, {transform_indices = @transform_4, window_bounds = array<i64: 64, 128>}, {transform_indices = @transform_5, window_bounds = array<i64: 64, 128>}, {transform_indices = @transform_6, window_bounds = array<i64: 64, 128>}, {transform_indices = @transform_7, window_bounds = array<i64: 64, 128>}, {transform_indices = @transform_8, window_bounds = array<i64: 64, 128>}]} {
    %c0 = arith.constant 0 : index
    %c0_0 = arith.constant 0 : index
    %0 = vector.load %arg1[%c0, %c0_0] : memref<64x128xbf16, #tpu.memory_space<vmem>>, vector<64x128xbf16>
    %1 = arith.extf %0 : vector<64x128xbf16> to vector<64x128xf32>
    %c0_1 = arith.constant 0 : index
    %c0_2 = arith.constant 0 : index
    %2 = vector.load %arg2[%c0_1, %c0_2] : memref<64x128xbf16, #tpu.memory_space<vmem>>, vector<64x128xbf16>
    %3 = arith.extf %2 : vector<64x128xbf16> to vector<64x128xf32>
    %4 = arith.maximumf %1, %3 : vector<64x128xf32>
    %c0_3 = arith.constant 0 : index
    %c0_4 = arith.constant 0 : index
    %5 = vector.load %arg3[%c0_3, %c0_4] : memref<64x128xbf16, #tpu.memory_space<vmem>>, vector<64x128xbf16>
    %6 = arith.extf %5 : vector<64x128xbf16> to vector<64x128xf32>
    %c0_5 = arith.constant 0 : index
    %c0_6 = arith.constant 0 : index
    %7 = vector.load %arg4[%c0_5, %c0_6] : memref<64x128xbf16, #tpu.memory_space<vmem>>, vector<64x128xbf16>
    %8 = arith.extf %7 : vector<64x128xbf16> to vector<64x128xf32>
    %9 = arith.maximumf %6, %8 : vector<64x128xf32>
    %10 = arith.maximumf %4, %9 : vector<64x128xf32>
    %c0_7 = arith.constant 0 : index
    %c0_8 = arith.constant 0 : index
    %11 = vector.load %arg5[%c0_7, %c0_8] : memref<64x128xbf16, #tpu.memory_space<vmem>>, vector<64x128xbf16>
    %12 = arith.extf %11 : vector<64x128xbf16> to vector<64x128xf32>
    %c0_9 = arith.constant 0 : index
    %c0_10 = arith.constant 0 : index
    %13 = vector.load %arg6[%c0_9, %c0_10] : memref<64x128xbf16, #tpu.memory_space<vmem>>, vector<64x128xbf16>
    %14 = arith.extf %13 : vector<64x128xbf16> to vector<64x128xf32>
    %15 = arith.maximumf %12, %14 : vector<64x128xf32>
    %c0_11 = arith.constant 0 : index
    %c0_12 = arith.constant 0 : index
    %16 = vector.load %arg7[%c0_11, %c0_12] : memref<64x128xbf16, #tpu.memory_space<vmem>>, vector<64x128xbf16>
    %17 = arith.extf %16 : vector<64x128xbf16> to vector<64x128xf32>
    %c0_13 = arith.constant 0 : index
    %c0_14 = arith.constant 0 : index
    %18 = vector.load %arg8[%c0_13, %c0_14] : memref<64x128xbf16, #tpu.memory_space<vmem>>, vector<64x128xbf16>
    %19 = arith.extf %18 : vector<64x128xbf16> to vector<64x128xf32>
    %20 = arith.maximumf %17, %19 : vector<64x128xf32>
    %21 = arith.maximumf %15, %20 : vector<64x128xf32>
    %22 = arith.maximumf %10, %21 : vector<64x128xf32>
    %23 = arith.truncf %22 : vector<64x128xf32> to vector<64x128xbf16>
    %c0_15 = arith.constant 0 : index
    %c0_16 = arith.constant 0 : index
    %24 = vector.load %arg9[%c0_15, %c0_16] : memref<64x128xbf16, #tpu.memory_space<vmem>>, vector<64x128xbf16>
    tpu.vector_store %arg9[%c0_15, %c0_16], %23 {strides = array<i32>} : memref<64x128xbf16, #tpu.memory_space<vmem>>, vector<64x128xbf16>,
    return
  }
  func.func @transform_0(%arg0: i32) -> (i32, i32) {
    %c0_i32 = arith.constant 0 : i32
    %c0_i32_0 = arith.constant 0 : i32
    return %arg0, %c0_i32 : i32, i32
  }
  func.func @transform_1(%arg0: i32) -> (i32, i32) {
    %c0_i32 = arith.constant 0 : i32
    %c0_i32_0 = arith.constant 0 : i32
    return %arg0, %c0_i32 : i32, i32
  }
  func.func @transform_2(%arg0: i32) -> (i32, i32) {
    %c0_i32 = arith.constant 0 : i32
    %c0_i32_0 = arith.constant 0 : i32
    return %arg0, %c0_i32 : i32, i32
  }
  func.func @transform_3(%arg0: i32) -> (i32, i32) {
    %c0_i32 = arith.constant 0 : i32
    %c0_i32_0 = arith.constant 0 : i32
    return %arg0, %c0_i32 : i32, i32
  }
  func.func @transform_4(%arg0: i32) -> (i32, i32) {
    %c0_i32 = arith.constant 0 : i32
    %c0_i32_0 = arith.constant 0 : i32
    return %arg0, %c0_i32 : i32, i32
  }
  func.func @transform_5(%arg0: i32) -> (i32, i32) {
    %c0_i32 = arith.constant 0 : i32
    %c0_i32_0 = arith.constant 0 : i32
    return %arg0, %c0_i32 : i32, i32
  }
  func.func @transform_6(%arg0: i32) -> (i32, i32) {
    %c0_i32 = arith.constant 0 : i32
    %c0_i32_0 = arith.constant 0 : i32
    return %arg0, %c0_i32 : i32, i32
  }
  func.func @transform_7(%arg0: i32) -> (i32, i32) {
    %c0_i32 = arith.constant 0 : i32
    %c0_i32_0 = arith.constant 0 : i32
    return %arg0, %c0_i32 : i32, i32
  }
  func.func @transform_8(%arg0: i32) -> (i32, i32) {
    %c0_i32 = arith.constant 0 : i32
    %c0_i32_0 = arith.constant 0 : i32
    return %arg0, %c0_i32 : i32, i32
  }
}

module attributes {stable_mosaic.version = 11 : i64} {
  func.func @_gemm_bias_act_kernel(%arg0: i32, %arg1: memref<64x864xbf16, #tpu.memory_space<vmem>>, %arg2: memref<864x128xbf16, #tpu.memory_space<vmem>>, %arg3: memref<1x128xf32, #tpu.memory_space<vmem>>, %arg4: memref<64x128xbf16, #tpu.memory_space<vmem>>) attributes {dimension_semantics = [#tpu.dimension_semantics<parallel>], iteration_bounds = array<i64: 1>, scalar_prefetch = 0 : i64, scratch_operands = 0 : i64, tpu.core_type = #tpu.core_type<tc>, window_params = [{transform_indices = @transform_0, window_bounds = array<i64: 64, 864>}, {pipeline_mode = #tpu.pipeline_mode<synchronous>, transform_indices = @transform_1, window_bounds = array<i64: 864, 128>}, {pipeline_mode = #tpu.pipeline_mode<synchronous>, transform_indices = @transform_2, window_bounds = array<i64: 1, 128>}, {transform_indices = @transform_3, window_bounds = array<i64: 64, 128>}]} {
    %c0 = arith.constant 0 : index
    %c0_0 = arith.constant 0 : index
    %0 = vector.load %arg1[%c0, %c0_0] : memref<64x864xbf16, #tpu.memory_space<vmem>>, vector<64x864xbf16>
    %c0_1 = arith.constant 0 : index
    %c0_2 = arith.constant 0 : index
    %1 = vector.load %arg2[%c0_1, %c0_2] : memref<864x128xbf16, #tpu.memory_space<vmem>>, vector<864x128xbf16>
    %cst = arith.constant dense<0.000000e+00> : vector<64x128xf32>
    %2 = tpu.matmul %0, %1, %cst {dimension_numbers = #tpu.dot_dimension_numbers<[1], [0], [0], [1], [0, 0, 1, 1], [], []>} : vector<64x864xbf16>, vector<864x128xbf16>, vector<64x128xf32> -> vector<64x128xf32>
    %c0_3 = arith.constant 0 : index
    %c0_4 = arith.constant 0 : index
    %3 = vector.load %arg3[%c0_3, %c0_4] : memref<1x128xf32, #tpu.memory_space<vmem>>, vector<1x128xf32>
    %4 = vector.broadcast %3 : vector<1x128xf32> to vector<64x128xf32>
    %5 = arith.addf %2, %4 : vector<64x128xf32>
    %cst_5 = arith.constant 0.000000e+00 : f32
    %6 = vector.broadcast %cst_5 : f32 to vector<64x128xf32>
    %7 = arith.maximumf %5, %6 : vector<64x128xf32>
    %8 = arith.truncf %7 : vector<64x128xf32> to vector<64x128xbf16>
    %c0_6 = arith.constant 0 : index
    %c0_7 = arith.constant 0 : index
    %9 = vector.load %arg4[%c0_6, %c0_7] : memref<64x128xbf16, #tpu.memory_space<vmem>>, vector<64x128xbf16>
    tpu.vector_store %arg4[%c0_6, %c0_7], %8 {strides = array<i32>} : memref<64x128xbf16, #tpu.memory_space<vmem>>, vector<64x128xbf16>,
    return
  }
  func.func @transform_0(%arg0: i32) -> (i32, i32) {
    %c0_i32 = arith.constant 0 : i32
    %c0_i32_0 = arith.constant 0 : i32
    return %arg0, %c0_i32 : i32, i32
  }
  func.func @transform_1(%arg0: i32) -> (i32, i32) {
    %c0_i32 = arith.constant 0 : i32
    %c0_i32_0 = arith.constant 0 : i32
    %c0_i32_1 = arith.constant 0 : i32
    return %c0_i32, %c0_i32_0 : i32, i32
  }
  func.func @transform_2(%arg0: i32) -> (i32, i32) {
    %c0_i32 = arith.constant 0 : i32
    %c0_i32_0 = arith.constant 0 : i32
    %c0_i32_1 = arith.constant 0 : i32
    return %c0_i32, %c0_i32_0 : i32, i32
  }
  func.func @transform_3(%arg0: i32) -> (i32, i32) {
    %c0_i32 = arith.constant 0 : i32
    %c0_i32_0 = arith.constant 0 : i32
    return %arg0, %c0_i32 : i32, i32
  }
}

module attributes {stable_mosaic.version = 11 : i64} {
  func.func @_max8_kernel(%arg0: i32, %arg1: memref<8x128xbf16, #tpu.memory_space<vmem>>, %arg2: memref<8x128xbf16, #tpu.memory_space<vmem>>, %arg3: memref<8x128xbf16, #tpu.memory_space<vmem>>, %arg4: memref<8x128xbf16, #tpu.memory_space<vmem>>, %arg5: memref<8x128xbf16, #tpu.memory_space<vmem>>, %arg6: memref<8x128xbf16, #tpu.memory_space<vmem>>, %arg7: memref<8x128xbf16, #tpu.memory_space<vmem>>, %arg8: memref<8x128xbf16, #tpu.memory_space<vmem>>, %arg9: memref<8x128xbf16, #tpu.memory_space<vmem>>) attributes {dimension_semantics = [#tpu.dimension_semantics<parallel>], iteration_bounds = array<i64: 1>, scalar_prefetch = 0 : i64, scratch_operands = 0 : i64, tpu.core_type = #tpu.core_type<tc>, window_params = [{transform_indices = @transform_0, window_bounds = array<i64: 8, 128>}, {transform_indices = @transform_1, window_bounds = array<i64: 8, 128>}, {transform_indices = @transform_2, window_bounds = array<i64: 8, 128>}, {transform_indices = @transform_3, window_bounds = array<i64: 8, 128>}, {transform_indices = @transform_4, window_bounds = array<i64: 8, 128>}, {transform_indices = @transform_5, window_bounds = array<i64: 8, 128>}, {transform_indices = @transform_6, window_bounds = array<i64: 8, 128>}, {transform_indices = @transform_7, window_bounds = array<i64: 8, 128>}, {transform_indices = @transform_8, window_bounds = array<i64: 8, 128>}]} {
    %c0 = arith.constant 0 : index
    %c0_0 = arith.constant 0 : index
    %0 = vector.load %arg1[%c0, %c0_0] : memref<8x128xbf16, #tpu.memory_space<vmem>>, vector<8x128xbf16>
    %1 = arith.extf %0 : vector<8x128xbf16> to vector<8x128xf32>
    %c0_1 = arith.constant 0 : index
    %c0_2 = arith.constant 0 : index
    %2 = vector.load %arg2[%c0_1, %c0_2] : memref<8x128xbf16, #tpu.memory_space<vmem>>, vector<8x128xbf16>
    %3 = arith.extf %2 : vector<8x128xbf16> to vector<8x128xf32>
    %4 = arith.maximumf %1, %3 : vector<8x128xf32>
    %c0_3 = arith.constant 0 : index
    %c0_4 = arith.constant 0 : index
    %5 = vector.load %arg3[%c0_3, %c0_4] : memref<8x128xbf16, #tpu.memory_space<vmem>>, vector<8x128xbf16>
    %6 = arith.extf %5 : vector<8x128xbf16> to vector<8x128xf32>
    %c0_5 = arith.constant 0 : index
    %c0_6 = arith.constant 0 : index
    %7 = vector.load %arg4[%c0_5, %c0_6] : memref<8x128xbf16, #tpu.memory_space<vmem>>, vector<8x128xbf16>
    %8 = arith.extf %7 : vector<8x128xbf16> to vector<8x128xf32>
    %9 = arith.maximumf %6, %8 : vector<8x128xf32>
    %10 = arith.maximumf %4, %9 : vector<8x128xf32>
    %c0_7 = arith.constant 0 : index
    %c0_8 = arith.constant 0 : index
    %11 = vector.load %arg5[%c0_7, %c0_8] : memref<8x128xbf16, #tpu.memory_space<vmem>>, vector<8x128xbf16>
    %12 = arith.extf %11 : vector<8x128xbf16> to vector<8x128xf32>
    %c0_9 = arith.constant 0 : index
    %c0_10 = arith.constant 0 : index
    %13 = vector.load %arg6[%c0_9, %c0_10] : memref<8x128xbf16, #tpu.memory_space<vmem>>, vector<8x128xbf16>
    %14 = arith.extf %13 : vector<8x128xbf16> to vector<8x128xf32>
    %15 = arith.maximumf %12, %14 : vector<8x128xf32>
    %c0_11 = arith.constant 0 : index
    %c0_12 = arith.constant 0 : index
    %16 = vector.load %arg7[%c0_11, %c0_12] : memref<8x128xbf16, #tpu.memory_space<vmem>>, vector<8x128xbf16>
    %17 = arith.extf %16 : vector<8x128xbf16> to vector<8x128xf32>
    %c0_13 = arith.constant 0 : index
    %c0_14 = arith.constant 0 : index
    %18 = vector.load %arg8[%c0_13, %c0_14] : memref<8x128xbf16, #tpu.memory_space<vmem>>, vector<8x128xbf16>
    %19 = arith.extf %18 : vector<8x128xbf16> to vector<8x128xf32>
    %20 = arith.maximumf %17, %19 : vector<8x128xf32>
    %21 = arith.maximumf %15, %20 : vector<8x128xf32>
    %22 = arith.maximumf %10, %21 : vector<8x128xf32>
    %23 = arith.truncf %22 : vector<8x128xf32> to vector<8x128xbf16>
    %c0_15 = arith.constant 0 : index
    %c0_16 = arith.constant 0 : index
    %24 = vector.load %arg9[%c0_15, %c0_16] : memref<8x128xbf16, #tpu.memory_space<vmem>>, vector<8x128xbf16>
    tpu.vector_store %arg9[%c0_15, %c0_16], %23 {strides = array<i32>} : memref<8x128xbf16, #tpu.memory_space<vmem>>, vector<8x128xbf16>,
    return
  }
  func.func @transform_0(%arg0: i32) -> (i32, i32) {
    %c0_i32 = arith.constant 0 : i32
    %c0_i32_0 = arith.constant 0 : i32
    return %arg0, %c0_i32 : i32, i32
  }
  func.func @transform_1(%arg0: i32) -> (i32, i32) {
    %c0_i32 = arith.constant 0 : i32
    %c0_i32_0 = arith.constant 0 : i32
    return %arg0, %c0_i32 : i32, i32
  }
  func.func @transform_2(%arg0: i32) -> (i32, i32) {
    %c0_i32 = arith.constant 0 : i32
    %c0_i32_0 = arith.constant 0 : i32
    return %arg0, %c0_i32 : i32, i32
  }
  func.func @transform_3(%arg0: i32) -> (i32, i32) {
    %c0_i32 = arith.constant 0 : i32
    %c0_i32_0 = arith.constant 0 : i32
    return %arg0, %c0_i32 : i32, i32
  }
  func.func @transform_4(%arg0: i32) -> (i32, i32) {
    %c0_i32 = arith.constant 0 : i32
    %c0_i32_0 = arith.constant 0 : i32
    return %arg0, %c0_i32 : i32, i32
  }
  func.func @transform_5(%arg0: i32) -> (i32, i32) {
    %c0_i32 = arith.constant 0 : i32
    %c0_i32_0 = arith.constant 0 : i32
    return %arg0, %c0_i32 : i32, i32
  }
  func.func @transform_6(%arg0: i32) -> (i32, i32) {
    %c0_i32 = arith.constant 0 : i32
    %c0_i32_0 = arith.constant 0 : i32
    return %arg0, %c0_i32 : i32, i32
  }
  func.func @transform_7(%arg0: i32) -> (i32, i32) {
    %c0_i32 = arith.constant 0 : i32
    %c0_i32_0 = arith.constant 0 : i32
    return %arg0, %c0_i32 : i32, i32
  }
  func.func @transform_8(%arg0: i32) -> (i32, i32) {
    %c0_i32 = arith.constant 0 : i32
    %c0_i32_0 = arith.constant 0 : i32
    return %arg0, %c0_i32 : i32, i32
  }
}

module attributes {stable_mosaic.version = 11 : i64} {
  func.func @_gemm_bias_act_kernel(%arg0: i32, %arg1: memref<8x1728xbf16, #tpu.memory_space<vmem>>, %arg2: memref<1728x128xbf16, #tpu.memory_space<vmem>>, %arg3: memref<1x128xf32, #tpu.memory_space<vmem>>, %arg4: memref<8x128xbf16, #tpu.memory_space<vmem>>) attributes {dimension_semantics = [#tpu.dimension_semantics<parallel>], iteration_bounds = array<i64: 1>, scalar_prefetch = 0 : i64, scratch_operands = 0 : i64, tpu.core_type = #tpu.core_type<tc>, window_params = [{transform_indices = @transform_0, window_bounds = array<i64: 8, 1728>}, {pipeline_mode = #tpu.pipeline_mode<synchronous>, transform_indices = @transform_1, window_bounds = array<i64: 1728, 128>}, {pipeline_mode = #tpu.pipeline_mode<synchronous>, transform_indices = @transform_2, window_bounds = array<i64: 1, 128>}, {transform_indices = @transform_3, window_bounds = array<i64: 8, 128>}]} {
    %c0 = arith.constant 0 : index
    %c0_0 = arith.constant 0 : index
    %0 = vector.load %arg1[%c0, %c0_0] : memref<8x1728xbf16, #tpu.memory_space<vmem>>, vector<8x1728xbf16>
    %c0_1 = arith.constant 0 : index
    %c0_2 = arith.constant 0 : index
    %1 = vector.load %arg2[%c0_1, %c0_2] : memref<1728x128xbf16, #tpu.memory_space<vmem>>, vector<1728x128xbf16>
    %cst = arith.constant dense<0.000000e+00> : vector<8x128xf32>
    %2 = tpu.matmul %0, %1, %cst {dimension_numbers = #tpu.dot_dimension_numbers<[1], [0], [0], [1], [0, 0, 1, 1], [], []>} : vector<8x1728xbf16>, vector<1728x128xbf16>, vector<8x128xf32> -> vector<8x128xf32>
    %c0_3 = arith.constant 0 : index
    %c0_4 = arith.constant 0 : index
    %3 = vector.load %arg3[%c0_3, %c0_4] : memref<1x128xf32, #tpu.memory_space<vmem>>, vector<1x128xf32>
    %4 = vector.broadcast %3 : vector<1x128xf32> to vector<8x128xf32>
    %5 = arith.addf %2, %4 : vector<8x128xf32>
    %cst_5 = arith.constant 0.000000e+00 : f32
    %6 = vector.broadcast %cst_5 : f32 to vector<8x128xf32>
    %7 = arith.maximumf %5, %6 : vector<8x128xf32>
    %8 = arith.truncf %7 : vector<8x128xf32> to vector<8x128xbf16>
    %c0_6 = arith.constant 0 : index
    %c0_7 = arith.constant 0 : index
    %9 = vector.load %arg4[%c0_6, %c0_7] : memref<8x128xbf16, #tpu.memory_space<vmem>>, vector<8x128xbf16>
    tpu.vector_store %arg4[%c0_6, %c0_7], %8 {strides = array<i32>} : memref<8x128xbf16, #tpu.memory_space<vmem>>, vector<8x128xbf16>,
    return
  }
  func.func @transform_0(%arg0: i32) -> (i32, i32) {
    %c0_i32 = arith.constant 0 : i32
    %c0_i32_0 = arith.constant 0 : i32
    return %arg0, %c0_i32 : i32, i32
  }
  func.func @transform_1(%arg0: i32) -> (i32, i32) {
    %c0_i32 = arith.constant 0 : i32
    %c0_i32_0 = arith.constant 0 : i32
    %c0_i32_1 = arith.constant 0 : i32
    return %c0_i32, %c0_i32_0 : i32, i32
  }
  func.func @transform_2(%arg0: i32) -> (i32, i32) {
    %c0_i32 = arith.constant 0 : i32
    %c0_i32_0 = arith.constant 0 : i32
    %c0_i32_1 = arith.constant 0 : i32
    return %c0_i32, %c0_i32_0 : i32, i32
  }
  func.func @transform_3(%arg0: i32) -> (i32, i32) {
    %c0_i32 = arith.constant 0 : i32
    %c0_i32_0 = arith.constant 0 : i32
    return %arg0, %c0_i32 : i32, i32
  }
}

module attributes {stable_mosaic.version = 11 : i64} {
  func.func @_lstm_fc_kernel(%arg0: memref<8x128xbf16, #tpu.memory_space<vmem>>, %arg1: memref<128x512xbf16, #tpu.memory_space<vmem>>, %arg2: memref<128x512xbf16, #tpu.memory_space<vmem>>, %arg3: memref<1x512xf32, #tpu.memory_space<vmem>>, %arg4: memref<128x512xbf16, #tpu.memory_space<vmem>>, %arg5: memref<128x512xbf16, #tpu.memory_space<vmem>>, %arg6: memref<1x512xf32, #tpu.memory_space<vmem>>, %arg7: memref<128x512xbf16, #tpu.memory_space<vmem>>, %arg8: memref<1x512xf32, #tpu.memory_space<vmem>>, %arg9: memref<512x128xbf16, #tpu.memory_space<vmem>>, %arg10: memref<1x128xf32, #tpu.memory_space<vmem>>, %arg11: memref<128x128xbf16, #tpu.memory_space<vmem>>, %arg12: memref<1x128xf32, #tpu.memory_space<vmem>>, %arg13: memref<2x128xf32, #tpu.memory_space<vmem>>) attributes {dimension_semantics = [], scalar_prefetch = 0 : i64, scratch_operands = 0 : i64, tpu.core_type = #tpu.core_type<tc>} {
    %c0 = arith.constant 0 : index
    %c0_0 = arith.constant 0 : index
    %0 = vector.load %arg2[%c0, %c0_0] : memref<128x512xbf16, #tpu.memory_space<vmem>>, vector<128x512xbf16>
    %c0_1 = arith.constant 0 : index
    %c0_2 = arith.constant 0 : index
    %1 = vector.load %arg4[%c0_1, %c0_2] : memref<128x512xbf16, #tpu.memory_space<vmem>>, vector<128x512xbf16>
    %c0_3 = arith.constant 0 : index
    %c0_4 = arith.constant 0 : index
    %2 = vector.load %arg5[%c0_3, %c0_4] : memref<128x512xbf16, #tpu.memory_space<vmem>>, vector<128x512xbf16>
    %c0_5 = arith.constant 0 : index
    %c0_6 = arith.constant 0 : index
    %3 = vector.load %arg6[%c0_5, %c0_6] : memref<1x512xf32, #tpu.memory_space<vmem>>, vector<1x512xf32>
    %c0_7 = arith.constant 0 : index
    %c0_8 = arith.constant 0 : index
    %4 = vector.load %arg0[%c0_7, %c0_8] : memref<8x128xbf16, #tpu.memory_space<vmem>>, vector<8x128xbf16>
    %c0_9 = arith.constant 0 : index
    %c0_10 = arith.constant 0 : index
    %5 = vector.load %arg1[%c0_9, %c0_10] : memref<128x512xbf16, #tpu.memory_space<vmem>>, vector<128x512xbf16>
    %cst = arith.constant dense<0.000000e+00> : vector<8x512xf32>
    %6 = tpu.matmul %4, %5, %cst {dimension_numbers = #tpu.dot_dimension_numbers<[1], [0], [0], [1], [0, 0, 1, 1], [], []>} : vector<8x128xbf16>, vector<128x512xbf16>, vector<8x512xf32> -> vector<8x512xf32>
    %c0_11 = arith.constant 0 : index
    %c0_12 = arith.constant 0 : index
    %7 = vector.load %arg3[%c0_11, %c0_12] : memref<1x512xf32, #tpu.memory_space<vmem>>, vector<1x512xf32>
    %8 = vector.broadcast %7 : vector<1x512xf32> to vector<8x512xf32>
    %9 = arith.addf %6, %8 : vector<8x512xf32>
    %cst_13 = arith.constant 0.000000e+00 : f32
    %10 = vector.broadcast %cst_13 : f32 to vector<2x128xf32>
    %11 = vector.extract_strided_slice %9 {offsets = [0, 0], sizes = [2, 512], strides = [1, 1]} : vector<8x512xf32> to vector<2x512xf32>
    %12 = arith.truncf %10 : vector<2x128xf32> to vector<2x128xbf16>
    %cst_14 = arith.constant dense<0.000000e+00> : vector<2x512xf32>
    %13 = tpu.matmul %12, %0, %cst_14 {dimension_numbers = #tpu.dot_dimension_numbers<[1], [0], [0], [1], [0, 0, 1, 1], [], []>} : vector<2x128xbf16>, vector<128x512xbf16>, vector<2x512xf32> -> vector<2x512xf32>
    %14 = arith.addf %11, %13 : vector<2x512xf32>
    %15 = vector.extract_strided_slice %14 {offsets = [0, 0], sizes = [2, 128], strides = [1, 1]} : vector<2x512xf32> to vector<2x128xf32>
    %16 = arith.negf %15 : vector<2x128xf32>
    %17 = math.exp %16 : vector<2x128xf32>
    %cst_15 = arith.constant 1.000000e+00 : f32
    %18 = vector.broadcast %cst_15 : f32 to vector<2x128xf32>
    %19 = arith.addf %18, %17 : vector<2x128xf32>
    %20 = arith.divf %18, %19 : vector<2x128xf32>
    %21 = vector.extract_strided_slice %14 {offsets = [0, 128], sizes = [2, 128], strides = [1, 1]} : vector<2x512xf32> to vector<2x128xf32>
    %22 = arith.negf %21 : vector<2x128xf32>
    %23 = math.exp %22 : vector<2x128xf32>
    %cst_16 = arith.constant 1.000000e+00 : f32
    %24 = vector.broadcast %cst_16 : f32 to vector<2x128xf32>
    %25 = arith.addf %24, %23 : vector<2x128xf32>
    %26 = arith.divf %24, %25 : vector<2x128xf32>
    %27 = vector.extract_strided_slice %14 {offsets = [0, 256], sizes = [2, 128], strides = [1, 1]} : vector<2x512xf32> to vector<2x128xf32>
    %28 = math.tanh %27 : vector<2x128xf32>
    %29 = vector.extract_strided_slice %14 {offsets = [0, 384], sizes = [2, 128], strides = [1, 1]} : vector<2x512xf32> to vector<2x128xf32>
    %30 = arith.negf %29 : vector<2x128xf32>
    %31 = math.exp %30 : vector<2x128xf32>
    %cst_17 = arith.constant 1.000000e+00 : f32
    %32 = vector.broadcast %cst_17 : f32 to vector<2x128xf32>
    %33 = arith.addf %32, %31 : vector<2x128xf32>
    %34 = arith.divf %32, %33 : vector<2x128xf32>
    %35 = arith.mulf %26, %10 : vector<2x128xf32>
    %36 = arith.mulf %20, %28 : vector<2x128xf32>
    %37 = arith.addf %35, %36 : vector<2x128xf32>
    %38 = math.tanh %37 : vector<2x128xf32>
    %39 = arith.mulf %34, %38 : vector<2x128xf32>
    %40 = arith.truncf %39 : vector<2x128xf32> to vector<2x128xbf16>
    %cst_18 = arith.constant dense<0.000000e+00> : vector<2x512xf32>
    %41 = tpu.matmul %40, %1, %cst_18 {dimension_numbers = #tpu.dot_dimension_numbers<[1], [0], [0], [1], [0, 0, 1, 1], [], []>} : vector<2x128xbf16>, vector<128x512xbf16>, vector<2x512xf32> -> vector<2x512xf32>
    %42 = vector.broadcast %3 : vector<1x512xf32> to vector<2x512xf32>
    %43 = arith.addf %42, %41 : vector<2x512xf32>
    %44 = arith.truncf %10 : vector<2x128xf32> to vector<2x128xbf16>
    %cst_19 = arith.constant dense<0.000000e+00> : vector<2x512xf32>
    %45 = tpu.matmul %44, %2, %cst_19 {dimension_numbers = #tpu.dot_dimension_numbers<[1], [0], [0], [1], [0, 0, 1, 1], [], []>} : vector<2x128xbf16>, vector<128x512xbf16>, vector<2x512xf32> -> vector<2x512xf32>
    %46 = arith.addf %43, %45 : vector<2x512xf32>
    %47 = vector.extract_strided_slice %46 {offsets = [0, 0], sizes = [2, 128], strides = [1, 1]} : vector<2x512xf32> to vector<2x128xf32>
    %48 = arith.negf %47 : vector<2x128xf32>
    %49 = math.exp %48 : vector<2x128xf32>
    %cst_20 = arith.constant 1.000000e+00 : f32
    %50 = vector.broadcast %cst_20 : f32 to vector<2x128xf32>
    %51 = arith.addf %50, %49 : vector<2x128xf32>
    %52 = arith.divf %50, %51 : vector<2x128xf32>
    %53 = vector.extract_strided_slice %46 {offsets = [0, 128], sizes = [2, 128], strides = [1, 1]} : vector<2x512xf32> to vector<2x128xf32>
    %54 = arith.negf %53 : vector<2x128xf32>
    %55 = math.exp %54 : vector<2x128xf32>
    %cst_21 = arith.constant 1.000000e+00 : f32
    %56 = vector.broadcast %cst_21 : f32 to vector<2x128xf32>
    %57 = arith.addf %56, %55 : vector<2x128xf32>
    %58 = arith.divf %56, %57 : vector<2x128xf32>
    %59 = vector.extract_strided_slice %46 {offsets = [0, 256], sizes = [2, 128], strides = [1, 1]} : vector<2x512xf32> to vector<2x128xf32>
    %60 = math.tanh %59 : vector<2x128xf32>
    %61 = vector.extract_strided_slice %46 {offsets = [0, 384], sizes = [2, 128], strides = [1, 1]} : vector<2x512xf32> to vector<2x128xf32>
    %62 = arith.negf %61 : vector<2x128xf32>
    %63 = math.exp %62 : vector<2x128xf32>
    %cst_22 = arith.constant 1.000000e+00 : f32
    %64 = vector.broadcast %cst_22 : f32 to vector<2x128xf32>
    %65 = arith.addf %64, %63 : vector<2x128xf32>
    %66 = arith.divf %64, %65 : vector<2x128xf32>
    %67 = arith.mulf %58, %10 : vector<2x128xf32>
    %68 = arith.mulf %52, %60 : vector<2x128xf32>
    %69 = arith.addf %67, %68 : vector<2x128xf32>
    %70 = math.tanh %69 : vector<2x128xf32>
    %71 = arith.mulf %66, %70 : vector<2x128xf32>
    %72 = vector.extract_strided_slice %9 {offsets = [2, 0], sizes = [2, 512], strides = [1, 1]} : vector<8x512xf32> to vector<2x512xf32>
    %73 = arith.truncf %39 : vector<2x128xf32> to vector<2x128xbf16>
    %cst_23 = arith.constant dense<0.000000e+00> : vector<2x512xf32>
    %74 = tpu.matmul %73, %0, %cst_23 {dimension_numbers = #tpu.dot_dimension_numbers<[1], [0], [0], [1], [0, 0, 1, 1], [], []>} : vector<2x128xbf16>, vector<128x512xbf16>, vector<2x512xf32> -> vector<2x512xf32>
    %75 = arith.addf %72, %74 : vector<2x512xf32>
    %76 = vector.extract_strided_slice %75 {offsets = [0, 0], sizes = [2, 128], strides = [1, 1]} : vector<2x512xf32> to vector<2x128xf32>
    %77 = arith.negf %76 : vector<2x128xf32>
    %78 = math.exp %77 : vector<2x128xf32>
    %cst_24 = arith.constant 1.000000e+00 : f32
    %79 = vector.broadcast %cst_24 : f32 to vector<2x128xf32>
    %80 = arith.addf %79, %78 : vector<2x128xf32>
    %81 = arith.divf %79, %80 : vector<2x128xf32>
    %82 = vector.extract_strided_slice %75 {offsets = [0, 128], sizes = [2, 128], strides = [1, 1]} : vector<2x512xf32> to vector<2x128xf32>
    %83 = arith.negf %82 : vector<2x128xf32>
    %84 = math.exp %83 : vector<2x128xf32>
    %cst_25 = arith.constant 1.000000e+00 : f32
    %85 = vector.broadcast %cst_25 : f32 to vector<2x128xf32>
    %86 = arith.addf %85, %84 : vector<2x128xf32>
    %87 = arith.divf %85, %86 : vector<2x128xf32>
    %88 = vector.extract_strided_slice %75 {offsets = [0, 256], sizes = [2, 128], strides = [1, 1]} : vector<2x512xf32> to vector<2x128xf32>
    %89 = math.tanh %88 : vector<2x128xf32>
    %90 = vector.extract_strided_slice %75 {offsets = [0, 384], sizes = [2, 128], strides = [1, 1]} : vector<2x512xf32> to vector<2x128xf32>
    %91 = arith.negf %90 : vector<2x128xf32>
    %92 = math.exp %91 : vector<2x128xf32>
    %cst_26 = arith.constant 1.000000e+00 : f32
    %93 = vector.broadcast %cst_26 : f32 to vector<2x128xf32>
    %94 = arith.addf %93, %92 : vector<2x128xf32>
    %95 = arith.divf %93, %94 : vector<2x128xf32>
    %96 = arith.mulf %87, %37 : vector<2x128xf32>
    %97 = arith.mulf %81, %89 : vector<2x128xf32>
    %98 = arith.addf %96, %97 : vector<2x128xf32>
    %99 = math.tanh %98 : vector<2x128xf32>
    %100 = arith.mulf %95, %99 : vector<2x128xf32>
    %101 = arith.truncf %100 : vector<2x128xf32> to vector<2x128xbf16>
    %cst_27 = arith.constant dense<0.000000e+00> : vector<2x512xf32>
    %102 = tpu.matmul %101, %1, %cst_27 {dimension_numbers = #tpu.dot_dimension_numbers<[1], [0], [0], [1], [0, 0, 1, 1], [], []>} : vector<2x128xbf16>, vector<128x512xbf16>, vector<2x512xf32> -> vector<2x512xf32>
    %103 = vector.broadcast %3 : vector<1x512xf32> to vector<2x512xf32>
    %104 = arith.addf %103, %102 : vector<2x512xf32>
    %105 = arith.truncf %71 : vector<2x128xf32> to vector<2x128xbf16>
    %cst_28 = arith.constant dense<0.000000e+00> : vector<2x512xf32>
    %106 = tpu.matmul %105, %2, %cst_28 {dimension_numbers = #tpu.dot_dimension_numbers<[1], [0], [0], [1], [0, 0, 1, 1], [], []>} : vector<2x128xbf16>, vector<128x512xbf16>, vector<2x512xf32> -> vector<2x512xf32>
    %107 = arith.addf %104, %106 : vector<2x512xf32>
    %108 = vector.extract_strided_slice %107 {offsets = [0, 0], sizes = [2, 128], strides = [1, 1]} : vector<2x512xf32> to vector<2x128xf32>
    %109 = arith.negf %108 : vector<2x128xf32>
    %110 = math.exp %109 : vector<2x128xf32>
    %cst_29 = arith.constant 1.000000e+00 : f32
    %111 = vector.broadcast %cst_29 : f32 to vector<2x128xf32>
    %112 = arith.addf %111, %110 : vector<2x128xf32>
    %113 = arith.divf %111, %112 : vector<2x128xf32>
    %114 = vector.extract_strided_slice %107 {offsets = [0, 128], sizes = [2, 128], strides = [1, 1]} : vector<2x512xf32> to vector<2x128xf32>
    %115 = arith.negf %114 : vector<2x128xf32>
    %116 = math.exp %115 : vector<2x128xf32>
    %cst_30 = arith.constant 1.000000e+00 : f32
    %117 = vector.broadcast %cst_30 : f32 to vector<2x128xf32>
    %118 = arith.addf %117, %116 : vector<2x128xf32>
    %119 = arith.divf %117, %118 : vector<2x128xf32>
    %120 = vector.extract_strided_slice %107 {offsets = [0, 256], sizes = [2, 128], strides = [1, 1]} : vector<2x512xf32> to vector<2x128xf32>
    %121 = math.tanh %120 : vector<2x128xf32>
    %122 = vector.extract_strided_slice %107 {offsets = [0, 384], sizes = [2, 128], strides = [1, 1]} : vector<2x512xf32> to vector<2x128xf32>
    %123 = arith.negf %122 : vector<2x128xf32>
    %124 = math.exp %123 : vector<2x128xf32>
    %cst_31 = arith.constant 1.000000e+00 : f32
    %125 = vector.broadcast %cst_31 : f32 to vector<2x128xf32>
    %126 = arith.addf %125, %124 : vector<2x128xf32>
    %127 = arith.divf %125, %126 : vector<2x128xf32>
    %128 = arith.mulf %119, %69 : vector<2x128xf32>
    %129 = arith.mulf %113, %121 : vector<2x128xf32>
    %130 = arith.addf %128, %129 : vector<2x128xf32>
    %131 = math.tanh %130 : vector<2x128xf32>
    %132 = arith.mulf %127, %131 : vector<2x128xf32>
    %133 = vector.extract_strided_slice %9 {offsets = [4, 0], sizes = [2, 512], strides = [1, 1]} : vector<8x512xf32> to vector<2x512xf32>
    %134 = arith.truncf %100 : vector<2x128xf32> to vector<2x128xbf16>
    %cst_32 = arith.constant dense<0.000000e+00> : vector<2x512xf32>
    %135 = tpu.matmul %134, %0, %cst_32 {dimension_numbers = #tpu.dot_dimension_numbers<[1], [0], [0], [1], [0, 0, 1, 1], [], []>} : vector<2x128xbf16>, vector<128x512xbf16>, vector<2x512xf32> -> vector<2x512xf32>
    %136 = arith.addf %133, %135 : vector<2x512xf32>
    %137 = vector.extract_strided_slice %136 {offsets = [0, 0], sizes = [2, 128], strides = [1, 1]} : vector<2x512xf32> to vector<2x128xf32>
    %138 = arith.negf %137 : vector<2x128xf32>
    %139 = math.exp %138 : vector<2x128xf32>
    %cst_33 = arith.constant 1.000000e+00 : f32
    %140 = vector.broadcast %cst_33 : f32 to vector<2x128xf32>
    %141 = arith.addf %140, %139 : vector<2x128xf32>
    %142 = arith.divf %140, %141 : vector<2x128xf32>
    %143 = vector.extract_strided_slice %136 {offsets = [0, 128], sizes = [2, 128], strides = [1, 1]} : vector<2x512xf32> to vector<2x128xf32>
    %144 = arith.negf %143 : vector<2x128xf32>
    %145 = math.exp %144 : vector<2x128xf32>
    %cst_34 = arith.constant 1.000000e+00 : f32
    %146 = vector.broadcast %cst_34 : f32 to vector<2x128xf32>
    %147 = arith.addf %146, %145 : vector<2x128xf32>
    %148 = arith.divf %146, %147 : vector<2x128xf32>
    %149 = vector.extract_strided_slice %136 {offsets = [0, 256], sizes = [2, 128], strides = [1, 1]} : vector<2x512xf32> to vector<2x128xf32>
    %150 = math.tanh %149 : vector<2x128xf32>
    %151 = vector.extract_strided_slice %136 {offsets = [0, 384], sizes = [2, 128], strides = [1, 1]} : vector<2x512xf32> to vector<2x128xf32>
    %152 = arith.negf %151 : vector<2x128xf32>
    %153 = math.exp %152 : vector<2x128xf32>
    %cst_35 = arith.constant 1.000000e+00 : f32
    %154 = vector.broadcast %cst_35 : f32 to vector<2x128xf32>
    %155 = arith.addf %154, %153 : vector<2x128xf32>
    %156 = arith.divf %154, %155 : vector<2x128xf32>
    %157 = arith.mulf %148, %98 : vector<2x128xf32>
    %158 = arith.mulf %142, %150 : vector<2x128xf32>
    %159 = arith.addf %157, %158 : vector<2x128xf32>
    %160 = math.tanh %159 : vector<2x128xf32>
    %161 = arith.mulf %156, %160 : vector<2x128xf32>
    %162 = arith.truncf %161 : vector<2x128xf32> to vector<2x128xbf16>
    %cst_36 = arith.constant dense<0.000000e+00> : vector<2x512xf32>
    %163 = tpu.matmul %162, %1, %cst_36 {dimension_numbers = #tpu.dot_dimension_numbers<[1], [0], [0], [1], [0, 0, 1, 1], [], []>} : vector<2x128xbf16>, vector<128x512xbf16>, vector<2x512xf32> -> vector<2x512xf32>
    %164 = vector.broadcast %3 : vector<1x512xf32> to vector<2x512xf32>
    %165 = arith.addf %164, %163 : vector<2x512xf32>
    %166 = arith.truncf %132 : vector<2x128xf32> to vector<2x128xbf16>
    %cst_37 = arith.constant dense<0.000000e+00> : vector<2x512xf32>
    %167 = tpu.matmul %166, %2, %cst_37 {dimension_numbers = #tpu.dot_dimension_numbers<[1], [0], [0], [1], [0, 0, 1, 1], [], []>} : vector<2x128xbf16>, vector<128x512xbf16>, vector<2x512xf32> -> vector<2x512xf32>
    %168 = arith.addf %165, %167 : vector<2x512xf32>
    %169 = vector.extract_strided_slice %168 {offsets = [0, 0], sizes = [2, 128], strides = [1, 1]} : vector<2x512xf32> to vector<2x128xf32>
    %170 = arith.negf %169 : vector<2x128xf32>
    %171 = math.exp %170 : vector<2x128xf32>
    %cst_38 = arith.constant 1.000000e+00 : f32
    %172 = vector.broadcast %cst_38 : f32 to vector<2x128xf32>
    %173 = arith.addf %172, %171 : vector<2x128xf32>
    %174 = arith.divf %172, %173 : vector<2x128xf32>
    %175 = vector.extract_strided_slice %168 {offsets = [0, 128], sizes = [2, 128], strides = [1, 1]} : vector<2x512xf32> to vector<2x128xf32>
    %176 = arith.negf %175 : vector<2x128xf32>
    %177 = math.exp %176 : vector<2x128xf32>
    %cst_39 = arith.constant 1.000000e+00 : f32
    %178 = vector.broadcast %cst_39 : f32 to vector<2x128xf32>
    %179 = arith.addf %178, %177 : vector<2x128xf32>
    %180 = arith.divf %178, %179 : vector<2x128xf32>
    %181 = vector.extract_strided_slice %168 {offsets = [0, 256], sizes = [2, 128], strides = [1, 1]} : vector<2x512xf32> to vector<2x128xf32>
    %182 = math.tanh %181 : vector<2x128xf32>
    %183 = vector.extract_strided_slice %168 {offsets = [0, 384], sizes = [2, 128], strides = [1, 1]} : vector<2x512xf32> to vector<2x128xf32>
    %184 = arith.negf %183 : vector<2x128xf32>
    %185 = math.exp %184 : vector<2x128xf32>
    %cst_40 = arith.constant 1.000000e+00 : f32
    %186 = vector.broadcast %cst_40 : f32 to vector<2x128xf32>
    %187 = arith.addf %186, %185 : vector<2x128xf32>
    %188 = arith.divf %186, %187 : vector<2x128xf32>
    %189 = arith.mulf %180, %130 : vector<2x128xf32>
    %190 = arith.mulf %174, %182 : vector<2x128xf32>
    %191 = arith.addf %189, %190 : vector<2x128xf32>
    %192 = math.tanh %191 : vector<2x128xf32>
    %193 = arith.mulf %188, %192 : vector<2x128xf32>
    %194 = vector.extract_strided_slice %9 {offsets = [6, 0], sizes = [2, 512], strides = [1, 1]} : vector<8x512xf32> to vector<2x512xf32>
    %195 = arith.truncf %161 : vector<2x128xf32> to vector<2x128xbf16>
    %cst_41 = arith.constant dense<0.000000e+00> : vector<2x512xf32>
    %196 = tpu.matmul %195, %0, %cst_41 {dimension_numbers = #tpu.dot_dimension_numbers<[1], [0], [0], [1], [0, 0, 1, 1], [], []>} : vector<2x128xbf16>, vector<128x512xbf16>, vector<2x512xf32> -> vector<2x512xf32>
    %197 = arith.addf %194, %196 : vector<2x512xf32>
    %198 = vector.extract_strided_slice %197 {offsets = [0, 0], sizes = [2, 128], strides = [1, 1]} : vector<2x512xf32> to vector<2x128xf32>
    %199 = arith.negf %198 : vector<2x128xf32>
    %200 = math.exp %199 : vector<2x128xf32>
    %cst_42 = arith.constant 1.000000e+00 : f32
    %201 = vector.broadcast %cst_42 : f32 to vector<2x128xf32>
    %202 = arith.addf %201, %200 : vector<2x128xf32>
    %203 = arith.divf %201, %202 : vector<2x128xf32>
    %204 = vector.extract_strided_slice %197 {offsets = [0, 128], sizes = [2, 128], strides = [1, 1]} : vector<2x512xf32> to vector<2x128xf32>
    %205 = arith.negf %204 : vector<2x128xf32>
    %206 = math.exp %205 : vector<2x128xf32>
    %cst_43 = arith.constant 1.000000e+00 : f32
    %207 = vector.broadcast %cst_43 : f32 to vector<2x128xf32>
    %208 = arith.addf %207, %206 : vector<2x128xf32>
    %209 = arith.divf %207, %208 : vector<2x128xf32>
    %210 = vector.extract_strided_slice %197 {offsets = [0, 256], sizes = [2, 128], strides = [1, 1]} : vector<2x512xf32> to vector<2x128xf32>
    %211 = math.tanh %210 : vector<2x128xf32>
    %212 = vector.extract_strided_slice %197 {offsets = [0, 384], sizes = [2, 128], strides = [1, 1]} : vector<2x512xf32> to vector<2x128xf32>
    %213 = arith.negf %212 : vector<2x128xf32>
    %214 = math.exp %213 : vector<2x128xf32>
    %cst_44 = arith.constant 1.000000e+00 : f32
    %215 = vector.broadcast %cst_44 : f32 to vector<2x128xf32>
    %216 = arith.addf %215, %214 : vector<2x128xf32>
    %217 = arith.divf %215, %216 : vector<2x128xf32>
    %218 = arith.mulf %209, %159 : vector<2x128xf32>
    %219 = arith.mulf %203, %211 : vector<2x128xf32>
    %220 = arith.addf %218, %219 : vector<2x128xf32>
    %221 = math.tanh %220 : vector<2x128xf32>
    %222 = arith.mulf %217, %221 : vector<2x128xf32>
    %223 = arith.truncf %222 : vector<2x128xf32> to vector<2x128xbf16>
    %cst_45 = arith.constant dense<0.000000e+00> : vector<2x512xf32>
    %224 = tpu.matmul %223, %1, %cst_45 {dimension_numbers = #tpu.dot_dimension_numbers<[1], [0], [0], [1], [0, 0, 1, 1], [], []>} : vector<2x128xbf16>, vector<128x512xbf16>, vector<2x512xf32> -> vector<2x512xf32>
    %225 = vector.broadcast %3 : vector<1x512xf32> to vector<2x512xf32>
    %226 = arith.addf %225, %224 : vector<2x512xf32>
    %227 = arith.truncf %193 : vector<2x128xf32> to vector<2x128xbf16>
    %cst_46 = arith.constant dense<0.000000e+00> : vector<2x512xf32>
    %228 = tpu.matmul %227, %2, %cst_46 {dimension_numbers = #tpu.dot_dimension_numbers<[1], [0], [0], [1], [0, 0, 1, 1], [], []>} : vector<2x128xbf16>, vector<128x512xbf16>, vector<2x512xf32> -> vector<2x512xf32>
    %229 = arith.addf %226, %228 : vector<2x512xf32>
    %230 = vector.extract_strided_slice %229 {offsets = [0, 0], sizes = [2, 128], strides = [1, 1]} : vector<2x512xf32> to vector<2x128xf32>
    %231 = arith.negf %230 : vector<2x128xf32>
    %232 = math.exp %231 : vector<2x128xf32>
    %cst_47 = arith.constant 1.000000e+00 : f32
    %233 = vector.broadcast %cst_47 : f32 to vector<2x128xf32>
    %234 = arith.addf %233, %232 : vector<2x128xf32>
    %235 = arith.divf %233, %234 : vector<2x128xf32>
    %236 = vector.extract_strided_slice %229 {offsets = [0, 128], sizes = [2, 128], strides = [1, 1]} : vector<2x512xf32> to vector<2x128xf32>
    %237 = arith.negf %236 : vector<2x128xf32>
    %238 = math.exp %237 : vector<2x128xf32>
    %cst_48 = arith.constant 1.000000e+00 : f32
    %239 = vector.broadcast %cst_48 : f32 to vector<2x128xf32>
    %240 = arith.addf %239, %238 : vector<2x128xf32>
    %241 = arith.divf %239, %240 : vector<2x128xf32>
    %242 = vector.extract_strided_slice %229 {offsets = [0, 256], sizes = [2, 128], strides = [1, 1]} : vector<2x512xf32> to vector<2x128xf32>
    %243 = math.tanh %242 : vector<2x128xf32>
    %244 = vector.extract_strided_slice %229 {offsets = [0, 384], sizes = [2, 128], strides = [1, 1]} : vector<2x512xf32> to vector<2x128xf32>
    %245 = arith.negf %244 : vector<2x128xf32>
    %246 = math.exp %245 : vector<2x128xf32>
    %cst_49 = arith.constant 1.000000e+00 : f32
    %247 = vector.broadcast %cst_49 : f32 to vector<2x128xf32>
    %248 = arith.addf %247, %246 : vector<2x128xf32>
    %249 = arith.divf %247, %248 : vector<2x128xf32>
    %250 = arith.mulf %241, %191 : vector<2x128xf32>
    %251 = arith.mulf %235, %243 : vector<2x128xf32>
    %252 = arith.addf %250, %251 : vector<2x128xf32>
    %253 = math.tanh %252 : vector<2x128xf32>
    %254 = arith.mulf %249, %253 : vector<2x128xf32>
    %255 = arith.truncf %254 : vector<2x128xf32> to vector<2x128xbf16>
    %c0_50 = arith.constant 0 : index
    %c0_51 = arith.constant 0 : index
    %256 = vector.load %arg7[%c0_50, %c0_51] : memref<128x512xbf16, #tpu.memory_space<vmem>>, vector<128x512xbf16>
    %cst_52 = arith.constant dense<0.000000e+00> : vector<2x512xf32>
    %257 = tpu.matmul %255, %256, %cst_52 {dimension_numbers = #tpu.dot_dimension_numbers<[1], [0], [0], [1], [0, 0, 1, 1], [], []>} : vector<2x128xbf16>, vector<128x512xbf16>, vector<2x512xf32> -> vector<2x512xf32>
    %c0_53 = arith.constant 0 : index
    %c0_54 = arith.constant 0 : index
    %258 = vector.load %arg8[%c0_53, %c0_54] : memref<1x512xf32, #tpu.memory_space<vmem>>, vector<1x512xf32>
    %259 = vector.broadcast %258 : vector<1x512xf32> to vector<2x512xf32>
    %260 = arith.addf %257, %259 : vector<2x512xf32>
    %cst_55 = arith.constant 0.000000e+00 : f32
    %261 = vector.broadcast %cst_55 : f32 to vector<2x512xf32>
    %262 = arith.maximumf %260, %261 : vector<2x512xf32>
    %263 = arith.truncf %262 : vector<2x512xf32> to vector<2x512xbf16>
    %c0_56 = arith.constant 0 : index
    %c0_57 = arith.constant 0 : index
    %264 = vector.load %arg9[%c0_56, %c0_57] : memref<512x128xbf16, #tpu.memory_space<vmem>>, vector<512x128xbf16>
    %cst_58 = arith.constant dense<0.000000e+00> : vector<2x128xf32>
    %265 = tpu.matmul %263, %264, %cst_58 {dimension_numbers = #tpu.dot_dimension_numbers<[1], [0], [0], [1], [0, 0, 1, 1], [], []>} : vector<2x512xbf16>, vector<512x128xbf16>, vector<2x128xf32> -> vector<2x128xf32>
    %c0_59 = arith.constant 0 : index
    %c0_60 = arith.constant 0 : index
    %266 = vector.load %arg10[%c0_59, %c0_60] : memref<1x128xf32, #tpu.memory_space<vmem>>, vector<1x128xf32>
    %267 = vector.broadcast %266 : vector<1x128xf32> to vector<2x128xf32>
    %268 = arith.addf %265, %267 : vector<2x128xf32>
    %cst_61 = arith.constant 0.000000e+00 : f32
    %269 = vector.broadcast %cst_61 : f32 to vector<2x128xf32>
    %270 = arith.maximumf %268, %269 : vector<2x128xf32>
    %271 = arith.truncf %270 : vector<2x128xf32> to vector<2x128xbf16>
    %c0_62 = arith.constant 0 : index
    %c0_63 = arith.constant 0 : index
    %272 = vector.load %arg11[%c0_62, %c0_63] : memref<128x128xbf16, #tpu.memory_space<vmem>>, vector<128x128xbf16>
    %cst_64 = arith.constant dense<0.000000e+00> : vector<2x128xf32>
    %273 = tpu.matmul %271, %272, %cst_64 {dimension_numbers = #tpu.dot_dimension_numbers<[1], [0], [0], [1], [0, 0, 1, 1], [], []>} : vector<2x128xbf16>, vector<128x128xbf16>, vector<2x128xf32> -> vector<2x128xf32>
    %c0_65 = arith.constant 0 : index
    %c0_66 = arith.constant 0 : index
    %274 = vector.load %arg12[%c0_65, %c0_66] : memref<1x128xf32, #tpu.memory_space<vmem>>, vector<1x128xf32>
    %275 = vector.broadcast %274 : vector<1x128xf32> to vector<2x128xf32>
    %276 = arith.addf %273, %275 : vector<2x128xf32>
    %c0_67 = arith.constant 0 : index
    %c0_68 = arith.constant 0 : index
    %277 = vector.load %arg13[%c0_67, %c0_68] : memref<2x128xf32, #tpu.memory_space<vmem>>, vector<2x128xf32>
    tpu.vector_store %arg13[%c0_67, %c0_68], %276 {strides = array<i32>} : memref<2x128xf32, #tpu.memory_space<vmem>>, vector<2x128xf32>,
    return
  }
}

</mosaic_0001>

<llo_original>
// kernel: temporal3d_forward.8
$region0: #{temporal3d_forward.8}
  #allocation0 [shape = 'u32[]', space=smem, size = 0x4, offset = 0x4, fixed_abs, tag = 'smem constant byte address 0x4 - core index']
  #allocation1 [shape = 'u32[72,128]{1,0:T(1,128)}', space=vmem, size = 0x9000, scoped, tag = 'internal scratch']
  %s0 = inlined_call_operand.vmem [shape: bf16[4096,27], index: 0, kind: input, shape index: {}]
  %s1 = inlined_call_operand.vmem [shape: bf16[27,128], index: 1, kind: input, shape index: {}]
  %s2 = inlined_call_operand.vmem [shape: f32[1,128], index: 2, kind: input, shape index: {}]
  %s3 = inlined_call_operand.vmem [shape: bf16[4096,128], index: 3, kind: output, shape index: {}]
  %s4 = sld [smem:[#allocation0]]
  $region45: #{temporal3d_forward.8} parent=0
    _
  %s6 = ssub.s32 1, %s4
  %s7 = scalar_select 0, %s6, %s4
  loop: start=0, step=1, limit=6
  $region2: #{temporal3d_forward.8} parent=0 // loop_pre_header
    _
  $region3: #{temporal3d_forward.8} parent=0 // loop_header
    %s9 = sphi 0, %s13
    %p10 = scmp.ge.s32.totalorder %s9, 6
    %s19 = sphi 0, %s21
    %s22 = sphi 0, %s19
    %s23 = sphi 0, %s22
    %s39 = sphi 0, %s23
    %s43 = sphi 0, %s43
    %s45 = sphi 0, %s43
    %s46 = sphi 0, %s45
    %s60 = sphi 0, %s46
    %s64 = sphi 0, %s64
    %s66 = sphi 0, %s64
    %s67 = sphi 0, %s66
    %s81 = sphi 0, %s67
    %s87 = sphi 0, %s89
    %s90 = sphi 0, %s87
    %s91 = sphi 0, %s90
    %s107 = sphi 0, %s91
  $region4: #{temporal3d_forward.8} parent=0 // loop_header_branch
    %12 = sbr.rel (%p10) target = $region8
  $region5: #{temporal3d_forward.8} parent=0 // loop_body
    %s14 = ssub.s32 %s9, 1
    %s15 = ssub.s32 %s9, 2
    %s16 = sadd.s32 %s9, 1
    %s17 = ssub.s32 %s9, %s16
    %p18 = scmp.eq.s32.totalorder %s17, 0
    %s20 = sadd.s32 %s19, 1
    %s21 = scalar_select %p18, %s19, %s20
    %p24 = pneg %p18
    %p25 = scmp.eq.s32.totalorder %s9, 3
    %p26 = por %p24, %p25
    %p27 = scmp.ne.s32.totalorder %s19, %s22
    %p28 = scmp.eq.s32.totalorder %s9, 0
    %p29 = por %p27, %p28
    %p30 = scmp.ne.s32.totalorder %s19, %s22
    %p31 = scmp.eq.s32.totalorder %s14, 3
    %p32 = por %p30, %p31
    %p33 = scmp.ne.s32.totalorder %s22, %s23
    %p34 = scmp.eq.s32.totalorder %s14, 0
    %p35 = por %p33, %p34
    %p36 = scmp.ne.s32.totalorder %s22, %s23
    %p37 = scmp.eq.s32.totalorder %s15, 3
    %p38 = por %p36, %p37
    %p40 = scmp.ne.s32.totalorder %s23, %s39
    %p41 = scmp.eq.s32.totalorder %s15, 0
    %p42 = por %p40, %p41
    %s44 = sadd.s32 %s43, 1
    %p47 = scmp.eq.s32.totalorder %s9, 3
    %p48 = scmp.ne.s32.totalorder %s43, %s45
    %p49 = scmp.eq.s32.totalorder %s9, 0
    %p50 = por %p48, %p49
    %p51 = scmp.ne.s32.totalorder %s43, %s45
    %p52 = scmp.eq.s32.totalorder %s14, 3
    %p53 = por %p51, %p52
    %p54 = scmp.ne.s32.totalorder %s45, %s46
    %p55 = scmp.eq.s32.totalorder %s14, 0
    %p56 = por %p54, %p55
    %p57 = scmp.ne.s32.totalorder %s45, %s46
    %p58 = scmp.eq.s32.totalorder %s15, 3
    %p59 = por %p57, %p58
    %p61 = scmp.ne.s32.totalorder %s46, %s60
    %p62 = scmp.eq.s32.totalorder %s15, 0
    %p63 = por %p61, %p62
    %s65 = sadd.s32 %s64, 1
    %p68 = scmp.eq.s32.totalorder %s9, 3
    %p69 = scmp.ne.s32.totalorder %s64, %s66
    %p70 = scmp.eq.s32.totalorder %s9, 0
    %p71 = por %p69, %p70
    %p72 = scmp.ne.s32.totalorder %s64, %s66
    %p73 = scmp.eq.s32.totalorder %s14, 3
    %p74 = por %p72, %p73
    %p75 = scmp.ne.s32.totalorder %s66, %s67
    %p76 = scmp.eq.s32.totalorder %s14, 0
    %p77 = por %p75, %p76
    %p78 = scmp.ne.s32.totalorder %s66, %s67
    %p79 = scmp.eq.s32.totalorder %s15, 3
    %p80 = por %p78, %p79
    %p82 = scmp.ne.s32.totalorder %s67, %s81
    %p83 = scmp.eq.s32.totalorder %s15, 0
    %p84 = por %p82, %p83
    %s85 = ssub.s32 %s9, %s16
    %p86 = scmp.eq.s32.totalorder %s85, 0
    %s88 = sadd.s32 %s87, 1
    %s89 = scalar_select %p86, %s87, %s88
    %p92 = pneg %p86
    %p93 = scmp.eq.s32.totalorder %s9, 3
    %p94 = por %p92, %p93
    %p95 = scmp.ne.s32.totalorder %s87, %s90
    %p96 = scmp.eq.s32.totalorder %s9, 0
    %p97 = por %p95, %p96
    %p98 = scmp.ne.s32.totalorder %s87, %s90
    %p99 = scmp.eq.s32.totalorder %s14, 3
    %p100 = por %p98, %p99
    %p101 = scmp.ne.s32.totalorder %s90, %s91
    %p102 = scmp.eq.s32.totalorder %s14, 0
    %p103 = por %p101, %p102
    %p104 = scmp.ne.s32.totalorder %s90, %s91
    %p105 = scmp.eq.s32.totalorder %s15, 3
    %p106 = por %p104, %p105
    %p108 = scmp.ne.s32.totalorder %s91, %s107
    %p109 = scmp.eq.s32.totalorder %s15, 0
    %p110 = por %p108, %p109
    %p111 = scmp.le.s32.totalorder 1, %s9
    %p112 = scmp.lt.s32.totalorder %s9, 5
    %p113 = pnand %p111, %p112
    %p114 = pneg %p113
    // Predicated region
    $region9: #{temporal3d_forward.8} parent=5 // pred_check
      _
    $region10: #{temporal3d_forward.8} parent=5 // pred_check_branch
      %116 = sbr.rel (%p113) target = $region12
    $region11: #{temporal3d_forward.8} parent=5 // pred_region
      %s117 = ssub.s32 %s9, 1
      // Predicated region
      $region13: #{temporal3d_forward.8} parent=11 // pred_check
        %p118 = pneg %p56
      $region14: #{temporal3d_forward.8} parent=11 // pred_check_branch
        %120 = sbr.rel (%p118) target = $region16
      $region15: #{temporal3d_forward.8} parent=11 // pred_region
        _
      $region16: #{temporal3d_forward.8} parent=11 // pred_fallthru
        _
      // Predicated region
      $region17: #{temporal3d_forward.8} parent=11 // pred_check
        %p121 = pneg %p77
      $region18: #{temporal3d_forward.8} parent=11 // pred_check_branch
        %123 = sbr.rel (%p121) target = $region20
      $region19: #{temporal3d_forward.8} parent=11 // pred_region
        _
      $region20: #{temporal3d_forward.8} parent=11 // pred_fallthru
        _
    $region12: #{temporal3d_forward.8} parent=5 // pred_fallthru
      _
    %p124 = scmp.lt.s32.totalorder %s9, 4
    // Predicated region
    $region21: #{temporal3d_forward.8} parent=5 // pred_check
      %p125 = pneg %p124
    $region22: #{temporal3d_forward.8} parent=5 // pred_check_branch
      %127 = sbr.rel (%p125) target = $region24
    $region23: #{temporal3d_forward.8} parent=5 // pred_region
      // Predicated region
      $region25: #{temporal3d_forward.8} parent=23 // pred_check
        %p128 = pneg %p29
      $region26: #{temporal3d_forward.8} parent=23 // pred_check_branch
        %130 = sbr.rel (%p128) target = $region28
      $region27: #{temporal3d_forward.8} parent=23 // pred_region
        %s131 = smul.u32 128, %s9
        %p132 = scmp.lt.s32.totalorder %s131, 511
        %s133 = scalar_select %p132, %s131, 511
        %s134 = smul.addr %s133, 4
        %s135 = scalar_lea.vmem %s0, %s134
        %s136 = smul.u32 128, %s9
      $region28: #{temporal3d_forward.8} parent=23 // pred_fallthru
        _
    $region24: #{temporal3d_forward.8} parent=5 // pred_fallthru
      _
    %p137 = scmp.le.s32.totalorder 1, %s9
    %p138 = scmp.lt.s32.totalorder %s9, 5
    %p139 = pnand %p137, %p138
    %p140 = pneg %p139
    // Predicated region
    $region29: #{temporal3d_forward.8} parent=5 // pred_check
      _
    $region30: #{temporal3d_forward.8} parent=5 // pred_check_branch
      %142 = sbr.rel (%p139) target = $region32
    $region31: #{temporal3d_forward.8} parent=5 // pred_region
      %s143 = ssub.s32 %s9, 1
      %s144 = smul.u32 128, %s14
      %p145 = scmp.lt.s32.totalorder %s144, 511
      %s146 = scalar_select %p145, %s144, 511
      %s147 = smul.addr %s146, 4
      %s148 = scalar_lea.vmem %s0, %s147
      %p149 = pneg %p35
      %p150 = pneg %p32
      %p151 = pneg %p56
      %p152 = pneg %p53
      %p153 = pneg %p77
      %p154 = pneg %p74
      %p155 = pneg %p103
      %p156 = pneg %p100
      %s157 = smul.u32 128, %s14
      %p158 = scmp.lt.s32.totalorder %s157, 511
      %s159 = scalar_select %p158, %s157, 511
      %s160 = smul.addr %s159, 4
      %s161 = scalar_lea.vmem %s3, %s160
      %s162 = smul.u32 128, %s14
      %p163 = scmp.lt.s32.totalorder %s162, 511
      %s164 = scalar_select %p163, %s162, 511
      %s165 = smul.addr %s164, 4
      %s166 = scalar_lea.vmem %s0, %s165
      %s167 = smul.u32 128, %s14
      %s168 = smul.u32 128, %s14
      %p169 = scmp.lt.s32.totalorder %s168, 511
      %s170 = scalar_select %p169, %s168, 511
      %s171 = smul.addr %s170, 4
      %s172 = scalar_lea.vmem %s3, %s171
      %s173 = smul.u32 128, %s14
      %v175 = vld [vmem:[%s166] sm:$0xf]
      %v176 = vld [vmem:[%s166 + $0x4] sm:$0xf]
      %v177 = vld [vmem:[%s166 + $0x8] sm:$0xf]
      %v178 = vld [vmem:[%s166 + $0xc] sm:$0xf]
      %v179 = vld [vmem:[%s166 + $0x10] sm:$0xf]
      %v180 = vld [vmem:[%s166 + $0x14] sm:$0xf]
      %v181 = vld [vmem:[%s166 + $0x18] sm:$0xf]
      %v182 = vld [vmem:[%s166 + $0x1c] sm:$0xf]
      %v183 = vld [vmem:[%s166 + $0x20] sm:$0xf]
      %v184 = vld [vmem:[%s166 + $0x24] sm:$0xf]
      %v185 = vld [vmem:[%s166 + $0x28] sm:$0xf]
      %v186 = vld [vmem:[%s166 + $0x2c] sm:$0xf]
      %v187 = vld [vmem:[%s166 + $0x30] sm:$0xf]
      %v188 = vld [vmem:[%s166 + $0x34] sm:$0xf]
      %v189 = vld [vmem:[%s166 + $0x38] sm:$0xf]
      %v190 = vld [vmem:[%s166 + $0x3c] sm:$0xf]
      %v191 = vld [vmem:[%s166 + $0x40] sm:$0xf]
      %v192 = vld [vmem:[%s166 + $0x44] sm:$0xf]
      %v193 = vld [vmem:[%s166 + $0x48] sm:$0xf]
      %v194 = vld [vmem:[%s166 + $0x4c] sm:$0xf]
      %v195 = vld [vmem:[%s166 + $0x50] sm:$0xf]
      %v196 = vld [vmem:[%s166 + $0x54] sm:$0xf]
      %v197 = vld [vmem:[%s166 + $0x58] sm:$0xf]
      %v198 = vld [vmem:[%s166 + $0x5c] sm:$0xf]
      %v199 = vld [vmem:[%s166 + $0x60] sm:$0xf]
      %v200 = vld [vmem:[%s166 + $0x64] sm:$0xf]
      %v201 = vld [vmem:[%s166 + $0x68] sm:$0xf]
      %v202 = vld [vmem:[%s166 + $0x6c] sm:$0xf]
      %v203 = vld [vmem:[%s166 + $0x70] sm:$0xf]
      %v204 = vld [vmem:[%s166 + $0x74] sm:$0xf]
      %v205 = vld [vmem:[%s166 + $0x78] sm:$0xf]
      %v206 = vld [vmem:[%s166 + $0x7c] sm:$0xf]
      %v207 = vld [vmem:[%s166 + $0x80] sm:$0xf]
      %v208 = vld [vmem:[%s166 + $0x84] sm:$0xf]
      %v209 = vld [vmem:[%s166 + $0x88] sm:$0xf]
      %v210 = vld [vmem:[%s166 + $0x8c] sm:$0xf]
      %v211 = vld [vmem:[%s166 + $0x90] sm:$0xf]
      %v212 = vld [vmem:[%s166 + $0x94] sm:$0xf]
      %v213 = vld [vmem:[%s166 + $0x98] sm:$0xf]
      %v214 = vld [vmem:[%s166 + $0x9c] sm:$0xf]
      %v215 = vld [vmem:[%s166 + $0xa0] sm:$0xf]
      %v216 = vld [vmem:[%s166 + $0xa4] sm:$0xf]
      %v217 = vld [vmem:[%s166 + $0xa8] sm:$0xf]
      %v218 = vld [vmem:[%s166 + $0xac] sm:$0xf]
      %v219 = vld [vmem:[%s166 + $0xb0] sm:$0xf]
      %v220 = vld [vmem:[%s166 + $0xb4] sm:$0xf]
      %v221 = vld [vmem:[%s166 + $0xb8] sm:$0xf]
      %v222 = vld [vmem:[%s166 + $0xbc] sm:$0xf]
      %v223 = vld [vmem:[%s166 + $0xc0] sm:$0xf]
      %v224 = vld [vmem:[%s166 + $0xc4] sm:$0xf]
      %v225 = vld [vmem:[%s166 + $0xc8] sm:$0xf]
      %v226 = vld [vmem:[%s166 + $0xcc] sm:$0xf]
      %v227 = vld [vmem:[%s166 + $0xd0] sm:$0xf]
      %v228 = vld [vmem:[%s166 + $0xd4] sm:$0xf]
      %v229 = vld [vmem:[%s166 + $0xd8] sm:$0xf]
      %v230 = vld [vmem:[%s166 + $0xdc] sm:$0xf]
      %v231 = vld [vmem:[%s166 + $0xe0] sm:$0xf]
      %v232 = vld [vmem:[%s166 + $0xe4] sm:$0xf]
      %v233 = vld [vmem:[%s166 + $0xe8] sm:$0xf]
      %v234 = vld [vmem:[%s166 + $0xec] sm:$0xf]
      %v235 = vld [vmem:[%s166 + $0xf0] sm:$0xf]
      %v236 = vld [vmem:[%s166 + $0xf4] sm:$0xf]
      %v237 = vld [vmem:[%s166 + $0xf8] sm:$0xf]
      %v238 = vld [vmem:[%s166 + $0xfc] sm:$0xf]
      %v239 = vld [vmem:[%s166 + $0x100] sm:$0xf]
      %v240 = vld [vmem:[%s166 + $0x104] sm:$0xf]
      %v241 = vld [vmem:[%s166 + $0x108] sm:$0xf]
      %v242 = vld [vmem:[%s166 + $0x10c] sm:$0xf]
      %v243 = vld [vmem:[%s166 + $0x110] sm:$0xf]
      %v244 = vld [vmem:[%s166 + $0x114] sm:$0xf]
      %v245 = vld [vmem:[%s166 + $0x118] sm:$0xf]
      %v246 = vld [vmem:[%s166 + $0x11c] sm:$0xf]
      %v247 = vld [vmem:[%s166 + $0x120] sm:$0xf]
      %v248 = vld [vmem:[%s166 + $0x124] sm:$0xf]
      %v249 = vld [vmem:[%s166 + $0x128] sm:$0xf]
      %v250 = vld [vmem:[%s166 + $0x12c] sm:$0xf]
      %v251 = vld [vmem:[%s166 + $0x130] sm:$0xf]
      %v252 = vld [vmem:[%s166 + $0x134] sm:$0xf]
      %v253 = vld [vmem:[%s166 + $0x138] sm:$0xf]
      %v254 = vld [vmem:[%s166 + $0x13c] sm:$0xf]
      %v255 = vld [vmem:[%s166 + $0x140] sm:$0xf]
      %v256 = vld [vmem:[%s166 + $0x144] sm:$0xf]
      %v257 = vld [vmem:[%s166 + $0x148] sm:$0xf]
      %v258 = vld [vmem:[%s166 + $0x14c] sm:$0xf]
      %v259 = vld [vmem:[%s166 + $0x150] sm:$0xf]
      %v260 = vld [vmem:[%s166 + $0x154] sm:$0xf]
      %v261 = vld [vmem:[%s166 + $0x158] sm:$0xf]
      %v262 = vld [vmem:[%s166 + $0x15c] sm:$0xf]
      %v263 = vld [vmem:[%s166 + $0x160] sm:$0xf]
      %v264 = vld [vmem:[%s166 + $0x164] sm:$0xf]
      %v265 = vld [vmem:[%s166 + $0x168] sm:$0xf]
      %v266 = vld [vmem:[%s166 + $0x16c] sm:$0xf]
      %v267 = vld [vmem:[%s166 + $0x170] sm:$0xf]
      %v268 = vld [vmem:[%s166 + $0x174] sm:$0xf]
      %v269 = vld [vmem:[%s166 + $0x178] sm:$0xf]
      %v270 = vld [vmem:[%s166 + $0x17c] sm:$0xf]
      %v271 = vld [vmem:[%s166 + $0x180] sm:$0xf]
      %v272 = vld [vmem:[%s166 + $0x184] sm:$0xf]
      %v273 = vld [vmem:[%s166 + $0x188] sm:$0xf]
      %v274 = vld [vmem:[%s166 + $0x18c] sm:$0xf]
      %v275 = vld [vmem:[%s166 + $0x190] sm:$0xf]
      %v276 = vld [vmem:[%s166 + $0x194] sm:$0xf]
      %v277 = vld [vmem:[%s166 + $0x198] sm:$0xf]
      %v278 = vld [vmem:[%s166 + $0x19c] sm:$0xf]
      %v279 = vld [vmem:[%s166 + $0x1a0] sm:$0xf]
      %v280 = vld [vmem:[%s166 + $0x1a4] sm:$0xf]
      %v281 = vld [vmem:[%s166 + $0x1a8] sm:$0xf]
      %v282 = vld [vmem:[%s166 + $0x1ac] sm:$0xf]
      %v283 = vld [vmem:[%s166 + $0x1b0] sm:$0xf]
      %v284 = vld [vmem:[%s166 + $0x1b4] sm:$0xf]
      %v285 = vld [vmem:[%s166 + $0x1b8] sm:$0xf]
      %v286 = vld [vmem:[%s166 + $0x1bc] sm:$0xf]
      %v287 = vld [vmem:[%s166 + $0x1c0] sm:$0xf]
      %v288 = vld [vmem:[%s166 + $0x1c4] sm:$0xf]
      %v289 = vld [vmem:[%s166 + $0x1c8] sm:$0xf]
      %v290 = vld [vmem:[%s166 + $0x1cc] sm:$0xf]
      %v291 = vld [vmem:[%s166 + $0x1d0] sm:$0xf]
      %v292 = vld [vmem:[%s166 + $0x1d4] sm:$0xf]
      %v293 = vld [vmem:[%s166 + $0x1d8] sm:$0xf]
      %v294 = vld [vmem:[%s166 + $0x1dc] sm:$0xf]
      %v295 = vld [vmem:[%s166 + $0x1e0] sm:$0xf]
      %v296 = vld [vmem:[%s166 + $0x1e4] sm:$0xf]
      %v297 = vld [vmem:[%s166 + $0x1e8] sm:$0xf]
      %v298 = vld [vmem:[%s166 + $0x1ec] sm:$0xf]
      %v299 = vld [vmem:[%s166 + $0x1f0] sm:$0xf]
      %v300 = vld [vmem:[%s166 + $0x1f4] sm:$0xf]
      %v301 = vld [vmem:[%s166 + $0x1f8] sm:$0xf]
      %v302 = vld [vmem:[%s166 + $0x1fc] sm:$0xf]
      %v303 = vld [vmem:[%s1] sm:$0xf]
      %v304 = vld [vmem:[%s1 + $0x4] sm:$0xf]
      %v305 = vld [vmem:[%s1 + $0x8] sm:$0xf]
      %v306 = vld [vmem:[%s1 + $0xc] sm:$0x3]
      %v307 = vld [vmem:[%s2] sm:$0x1]
      %v309 = vperm.slane %v307, 0
      %v439 = vunpack.c.l.b16 %v175
      %v440 = vunpack.c.l.b16 %v176
      %v441 = vunpack.c.l.b16 %v177
      %v442 = vunpack.c.l.b16 %v178
      %v443 = vunpack.c.l.b16 %v179
      %v444 = vunpack.c.l.b16 %v180
      %v445 = vunpack.c.l.b16 %v181
      %v446 = vunpack.c.l.b16 %v182
      %v447 = vunpack.c.l.b16 %v183
      %v448 = vunpack.c.l.b16 %v184
      %v449 = vunpack.c.l.b16 %v185
      %v450 = vunpack.c.l.b16 %v186
      %v451 = vunpack.c.l.b16 %v187
      %v452 = vunpack.c.l.b16 %v188
      %v453 = vunpack.c.l.b16 %v189
      %v454 = vunpack.c.l.b16 %v190
      %v455 = vunpack.c.l.b16 %v191
      %v456 = vunpack.c.l.b16 %v192
      %v457 = vunpack.c.l.b16 %v193
      %v458 = vunpack.c.l.b16 %v194
      %v459 = vunpack.c.l.b16 %v195
      %v460 = vunpack.c.l.b16 %v196
      %v461 = vunpack.c.l.b16 %v197
      %v462 = vunpack.c.l.b16 %v198
      %v463 = vunpack.c.l.b16 %v199
      %v464 = vunpack.c.l.b16 %v200
      %v465 = vunpack.c.l.b16 %v201
      %v466 = vunpack.c.l.b16 %v202
      %v467 = vunpack.c.l.b16 %v203
      %v468 = vunpack.c.l.b16 %v204
      %v469 = vunpack.c.l.b16 %v205
      %v470 = vunpack.c.l.b16 %v206
      %v471 = vunpack.c.l.b16 %v207
      %v472 = vunpack.c.l.b16 %v208
      %v473 = vunpack.c.l.b16 %v209
      %v474 = vunpack.c.l.b16 %v210
      %v475 = vunpack.c.l.b16 %v211
      %v476 = vunpack.c.l.b16 %v212
      %v477 = vunpack.c.l.b16 %v213
      %v478 = vunpack.c.l.b16 %v214
      %v479 = vunpack.c.l.b16 %v215
      %v480 = vunpack.c.l.b16 %v216
      %v481 = vunpack.c.l.b16 %v217
      %v482 = vunpack.c.l.b16 %v218
      %v483 = vunpack.c.l.b16 %v219
      %v484 = vunpack.c.l.b16 %v220
      %v485 = vunpack.c.l.b16 %v221
      %v486 = vunpack.c.l.b16 %v222
      %v487 = vunpack.c.l.b16 %v223
      %v488 = vunpack.c.l.b16 %v224
      %v489 = vunpack.c.l.b16 %v225
      %v490 = vunpack.c.l.b16 %v226
      %v491 = vunpack.c.l.b16 %v227
      %v492 = vunpack.c.l.b16 %v228
      %v493 = vunpack.c.l.b16 %v229
      %v494 = vunpack.c.l.b16 %v230
      %v495 = vunpack.c.l.b16 %v231
      %v496 = vunpack.c.l.b16 %v232
      %v497 = vunpack.c.l.b16 %v233
      %v498 = vunpack.c.l.b16 %v234
      %v499 = vunpack.c.l.b16 %v235
      %v500 = vunpack.c.l.b16 %v236
      %v501 = vunpack.c.l.b16 %v237
      %v502 = vunpack.c.l.b16 %v238
      %v503 = vunpack.c.l.b16 %v239
      %v504 = vunpack.c.l.b16 %v240
      %v505 = vunpack.c.l.b16 %v241
      %v506 = vunpack.c.l.b16 %v242
      %v507 = vunpack.c.l.b16 %v243
      %v508 = vunpack.c.l.b16 %v244
      %v509 = vunpack.c.l.b16 %v245
      %v510 = vunpack.c.l.b16 %v246
      %v511 = vunpack.c.l.b16 %v247
      %v512 = vunpack.c.l.b16 %v248
      %v513 = vunpack.c.l.b16 %v249
      %v514 = vunpack.c.l.b16 %v250
      %v515 = vunpack.c.l.b16 %v251
      %v516 = vunpack.c.l.b16 %v252
      %v517 = vunpack.c.l.b16 %v253
      %v518 = vunpack.c.l.b16 %v254
      %v519 = vunpack.c.l.b16 %v255
      %v520 = vunpack.c.l.b16 %v256
      %v521 = vunpack.c.l.b16 %v257
      %v522 = vunpack.c.l.b16 %v258
      %v523 = vunpack.c.l.b16 %v259
      %v524 = vunpack.c.l.b16 %v260
      %v525 = vunpack.c.l.b16 %v261
      %v526 = vunpack.c.l.b16 %v262
      %v527 = vunpack.c.l.b16 %v263
      %v528 = vunpack.c.l.b16 %v264
      %v529 = vunpack.c.l.b16 %v265
      %v530 = vunpack.c.l.b16 %v266
      %v531 = vunpack.c.l.b16 %v267
      %v532 = vunpack.c.l.b16 %v268
      %v533 = vunpack.c.l.b16 %v269
      %v534 = vunpack.c.l.b16 %v270
      %v535 = vunpack.c.l.b16 %v271
      %v536 = vunpack.c.l.b16 %v272
      %v537 = vunpack.c.l.b16 %v273
      %v538 = vunpack.c.l.b16 %v274
      %v539 = vunpack.c.l.b16 %v275
      %v540 = vunpack.c.l.b16 %v276
      %v541 = vunpack.c.l.b16 %v277
      %v542 = vunpack.c.l.b16 %v278
      %v543 = vunpack.c.l.b16 %v279
      %v544 = vunpack.c.l.b16 %v280
      %v545 = vunpack.c.l.b16 %v281
      %v546 = vunpack.c.l.b16 %v282
      %v547 = vunpack.c.l.b16 %v283
      %v548 = vunpack.c.l.b16 %v284
      %v549 = vunpack.c.l.b16 %v285
      %v550 = vunpack.c.l.b16 %v286
      %v551 = vunpack.c.l.b16 %v287
      %v552 = vunpack.c.l.b16 %v288
      %v553 = vunpack.c.l.b16 %v289
      %v554 = vunpack.c.l.b16 %v290
      %v555 = vunpack.c.l.b16 %v291
      %v556 = vunpack.c.l.b16 %v292
      %v557 = vunpack.c.l.b16 %v293
      %v558 = vunpack.c.l.b16 %v294
      %v559 = vunpack.c.l.b16 %v295
      %v560 = vunpack.c.l.b16 %v296
      %v561 = vunpack.c.l.b16 %v297
      %v562 = vunpack.c.l.b16 %v298
      %v563 = vunpack.c.l.b16 %v299
      %v564 = vunpack.c.l.b16 %v300
      %v565 = vunpack.c.l.b16 %v301
      %v566 = vunpack.c.l.b16 %v302
      %v567 = vpack.c.b16 %v440, %v439
      %v568 = vpack.c.b16 %v442, %v441
      %v569 = vpack.c.b16 %v444, %v443
      %v570 = vpack.c.b16 %v446, %v445
      %v571 = vpack.c.b16 %v448, %v447
      %v572 = vpack.c.b16 %v450, %v449
      %v573 = vpack.c.b16 %v452, %v451
      %v574 = vpack.c.b16 %v454, %v453
      %v575 = vpack.c.b16 %v456, %v455
      %v576 = vpack.c.b16 %v458, %v457
      %v577 = vpack.c.b16 %v460, %v459
      %v578 = vpack.c.b16 %v462, %v461
      %v579 = vpack.c.b16 %v464, %v463
      %v580 = vpack.c.b16 %v466, %v465
      %v581 = vpack.c.b16 %v468, %v467
      %v582 = vpack.c.b16 %v470, %v469
      %v583 = vpack.c.b16 %v472, %v471
      %v584 = vpack.c.b16 %v474, %v473
      %v585 = vpack.c.b16 %v476, %v475
      %v586 = vpack.c.b16 %v478, %v477
      %v587 = vpack.c.b16 %v480, %v479
      %v588 = vpack.c.b16 %v482, %v481
      %v589 = vpack.c.b16 %v484, %v483
      %v590 = vpack.c.b16 %v486, %v485
      %v591 = vpack.c.b16 %v488, %v487
      %v592 = vpack.c.b16 %v490, %v489
      %v593 = vpack.c.b16 %v492, %v491
      %v594 = vpack.c.b16 %v494, %v493
      %v595 = vpack.c.b16 %v496, %v495
      %v596 = vpack.c.b16 %v498, %v497
      %v597 = vpack.c.b16 %v500, %v499
      %v598 = vpack.c.b16 %v502, %v501
      %v599 = vpack.c.b16 %v504, %v503
      %v600 = vpack.c.b16 %v506, %v505
      %v601 = vpack.c.b16 %v508, %v507
      %v602 = vpack.c.b16 %v510, %v509
      %v603 = vpack.c.b16 %v512, %v511
      %v604 = vpack.c.b16 %v514, %v513
      %v605 = vpack.c.b16 %v516, %v515
      %v606 = vpack.c.b16 %v518, %v517
      %v607 = vpack.c.b16 %v520, %v519
      %v608 = vpack.c.b16 %v522, %v521
      %v609 = vpack.c.b16 %v524, %v523
      %v610 = vpack.c.b16 %v526, %v525
      %v611 = vpack.c.b16 %v528, %v527
      %v612 = vpack.c.b16 %v530, %v529
      %v613 = vpack.c.b16 %v532, %v531
      %v614 = vpack.c.b16 %v534, %v533
      %v615 = vpack.c.b16 %v536, %v535
      %v616 = vpack.c.b16 %v538, %v537
      %v617 = vpack.c.b16 %v540, %v539
      %v618 = vpack.c.b16 %v542, %v541
      %v619 = vpack.c.b16 %v544, %v543
      %v620 = vpack.c.b16 %v546, %v545
      %v621 = vpack.c.b16 %v548, %v547
      %v622 = vpack.c.b16 %v550, %v549
      %v623 = vpack.c.b16 %v552, %v551
      %v624 = vpack.c.b16 %v554, %v553
      %v625 = vpack.c.b16 %v556, %v555
      %v626 = vpack.c.b16 %v558, %v557
      %v627 = vpack.c.b16 %v560, %v559
      %v628 = vpack.c.b16 %v562, %v561
      %v629 = vpack.c.b16 %v564, %v563
      %v630 = vpack.c.b16 %v566, %v565
      %v635 = vunpack.c.l.b16 %v303
      %v636 = vunpack.c.l.b16 %v304
      %v637 = vunpack.c.l.b16 %v305
      %v638 = vunpack.c.l.b16 %v306
      %v639 = vpack.c.b16 %v636, %v635
      %v640 = vpack.c.b16 %v638, %v637
      %vm642 = vcmask 220160
      %v644 = vsel %vm642, %v567, 0
      %v647 = vsel %vm642, %v568, 0
      %v650 = vsel %vm642, %v569, 0
      %v653 = vsel %vm642, %v570, 0
      %v656 = vsel %vm642, %v571, 0
      %v659 = vsel %vm642, %v572, 0
      %v662 = vsel %vm642, %v573, 0
      %v665 = vsel %vm642, %v574, 0
      %v668 = vsel %vm642, %v575, 0
      %v671 = vsel %vm642, %v576, 0
      %v674 = vsel %vm642, %v577, 0
      %v677 = vsel %vm642, %v578, 0
      %v680 = vsel %vm642, %v579, 0
      %v683 = vsel %vm642, %v580, 0
      %v686 = vsel %vm642, %v581, 0
      %v689 = vsel %vm642, %v582, 0
      %v692 = vsel %vm642, %v583, 0
      %v695 = vsel %vm642, %v584, 0
      %v698 = vsel %vm642, %v585, 0
      %v701 = vsel %vm642, %v586, 0
      %v704 = vsel %vm642, %v587, 0
      %v707 = vsel %vm642, %v588, 0
      %v710 = vsel %vm642, %v589, 0
      %v713 = vsel %vm642, %v590, 0
      %v716 = vsel %vm642, %v591, 0
      %v719 = vsel %vm642, %v592, 0
      %v722 = vsel %vm642, %v593, 0
      %v725 = vsel %vm642, %v594, 0
      %v728 = vsel %vm642, %v595, 0
      %v731 = vsel %vm642, %v596, 0
      %v734 = vsel %vm642, %v597, 0
      %v737 = vsel %vm642, %v598, 0
      %v740 = vsel %vm642, %v599, 0
      %v743 = vsel %vm642, %v600, 0
      %v746 = vsel %vm642, %v601, 0
      %v749 = vsel %vm642, %v602, 0
      %v752 = vsel %vm642, %v603, 0
      %v755 = vsel %vm642, %v604, 0
      %v758 = vsel %vm642, %v605, 0
      %v761 = vsel %vm642, %v606, 0
      %v764 = vsel %vm642, %v607, 0
      %v767 = vsel %vm642, %v608, 0
      %v770 = vsel %vm642, %v609, 0
      %v773 = vsel %vm642, %v610, 0
      %v776 = vsel %vm642, %v611, 0
      %v779 = vsel %vm642, %v612, 0
      %v782 = vsel %vm642, %v613, 0
      %v785 = vsel %vm642, %v614, 0
      %v788 = vsel %vm642, %v615, 0
      %v791 = vsel %vm642, %v616, 0
      %v794 = vsel %vm642, %v617, 0
      %v797 = vsel %vm642, %v618, 0
      %v800 = vsel %vm642, %v619, 0
      %v803 = vsel %vm642, %v620, 0
      %v806 = vsel %vm642, %v621, 0
      %v809 = vsel %vm642, %v622, 0
      %v812 = vsel %vm642, %v623, 0
      %v815 = vsel %vm642, %v624, 0
      %v818 = vsel %vm642, %v625, 0
      %v821 = vsel %vm642, %v626, 0
      %v824 = vsel %vm642, %v627, 0
      %v827 = vsel %vm642, %v628, 0
      %v830 = vsel %vm642, %v629, 0
      %v833 = vsel %vm642, %v630, 0
      %vm835 = vcmask 1044480
      %vm836 = vcmask 1045504
      %v837 = vsel %vm835, 4294967295, 65535
      %v838 = vsel %vm836, %v837, 0
      %v840 = vand.u32 %v640, %v838
      %842 = vmatpush.bf16.msra.mxu0 0
      %843 = vmatpush.bf16.msra.mxu0 0
      %844 = vmatpush.bf16.msra.mxu0 0
      %845 = vmatpush.bf16.msra.mxu0 0
      %846 = vmatpush.bf16.msra.mxu0 0
      %847 = vmatpush.bf16.msra.mxu0 0
      %848 = vmatpush.bf16.msra.mxu0 %v840
      %849 = vmatpush.bf16.msra.mxu0 %v639
      %850 = vmatmul.bf16.gmra.mxu0 %v644
      %v851 = vpop.f32.mrf.mxu0
      %v852 = vadd.f32 %v309, %v851
      %v853 = vpop.f32.mrf.mxu0
      %v854 = vadd.f32 %v309, %v853
      %855 = vmatmul.bf16.gmra.mxu0 %v647
      %v856 = vpop.f32.mrf.mxu0
      %v857 = vadd.f32 %v309, %v856
      %v858 = vpop.f32.mrf.mxu0
      %v859 = vadd.f32 %v309, %v858
      %860 = vmatmul.bf16.gmra.mxu0 %v650
      %v861 = vpop.f32.mrf.mxu0
      %v862 = vadd.f32 %v309, %v861
      %v863 = vpop.f32.mrf.mxu0
      %v864 = vadd.f32 %v309, %v863
      %865 = vmatmul.bf16.gmra.mxu0 %v653
      %v866 = vpop.f32.mrf.mxu0
      %v867 = vadd.f32 %v309, %v866
      %v868 = vpop.f32.mrf.mxu0
      %v869 = vadd.f32 %v309, %v868
      %870 = vmatmul.bf16.gmra.mxu0 %v656
      %v871 = vpop.f32.mrf.mxu0
      %v872 = vadd.f32 %v309, %v871
      %v873 = vpop.f32.mrf.mxu0
      %v874 = vadd.f32 %v309, %v873
      %875 = vmatmul.bf16.gmra.mxu0 %v659
      %v876 = vpop.f32.mrf.mxu0
      %v877 = vadd.f32 %v309, %v876
      %v878 = vpop.f32.mrf.mxu0
      %v879 = vadd.f32 %v309, %v878
      %880 = vmatmul.bf16.gmra.mxu0 %v662
      %v881 = vpop.f32.mrf.mxu0
      %v882 = vadd.f32 %v309, %v881
      %v883 = vpop.f32.mrf.mxu0
      %v884 = vadd.f32 %v309, %v883
      %885 = vmatmul.bf16.gmra.mxu0 %v665
      %v886 = vpop.f32.mrf.mxu0
      %v887 = vadd.f32 %v309, %v886
      %v888 = vpop.f32.mrf.mxu0
      %v889 = vadd.f32 %v309, %v888
      %890 = vmatmul.bf16.gmra.mxu0 %v668
      %v891 = vpop.f32.mrf.mxu0
      %v892 = vadd.f32 %v309, %v891
      %v893 = vpop.f32.mrf.mxu0
      %v894 = vadd.f32 %v309, %v893
      %895 = vmatmul.bf16.gmra.mxu0 %v671
      %v896 = vpop.f32.mrf.mxu0
      %v897 = vadd.f32 %v309, %v896
      %v898 = vpop.f32.mrf.mxu0
      %v899 = vadd.f32 %v309, %v898
      %900 = vmatmul.bf16.gmra.mxu0 %v674
      %v901 = vpop.f32.mrf.mxu0
      %v902 = vadd.f32 %v309, %v901
      %v903 = vpop.f32.mrf.mxu0
      %v904 = vadd.f32 %v309, %v903
      %905 = vmatmul.bf16.gmra.mxu0 %v677
      %v906 = vpop.f32.mrf.mxu0
      %v907 = vadd.f32 %v309, %v906
      %v908 = vpop.f32.mrf.mxu0
      %v909 = vadd.f32 %v309, %v908
      %910 = vmatmul.bf16.gmra.mxu0 %v680
      %v911 = vpop.f32.mrf.mxu0
      %v912 = vadd.f32 %v309, %v911
      %v913 = vpop.f32.mrf.mxu0
      %v914 = vadd.f32 %v309, %v913
      %915 = vmatmul.bf16.gmra.mxu0 %v683
      %v916 = vpop.f32.mrf.mxu0
      %v917 = vadd.f32 %v309, %v916
      %v918 = vpop.f32.mrf.mxu0
      %v919 = vadd.f32 %v309, %v918
      %920 = vmatmul.bf16.gmra.mxu0 %v686
      %v921 = vpop.f32.mrf.mxu0
      %v922 = vadd.f32 %v309, %v921
      %v923 = vpop.f32.mrf.mxu0
      %v924 = vadd.f32 %v309, %v923
      %925 = vmatmul.bf16.gmra.mxu0 %v689
      %v926 = vpop.f32.mrf.mxu0
      %v927 = vadd.f32 %v309, %v926
      %v928 = vpop.f32.mrf.mxu0
      %v929 = vadd.f32 %v309, %v928
      %930 = vmatmul.bf16.gmra.mxu0 %v692
      %v931 = vpop.f32.mrf.mxu0
      %v932 = vadd.f32 %v309, %v931
      %v933 = vpop.f32.mrf.mxu0
      %v934 = vadd.f32 %v309, %v933
      %935 = vmatmul.bf16.gmra.mxu0 %v695
      %v936 = vpop.f32.mrf.mxu0
      %v937 = vadd.f32 %v309, %v936
      %v938 = vpop.f32.mrf.mxu0
      %v939 = vadd.f32 %v309, %v938
      %940 = vmatmul.bf16.gmra.mxu0 %v698
      %v941 = vpop.f32.mrf.mxu0
      %v942 = vadd.f32 %v309, %v941
      %v943 = vpop.f32.mrf.mxu0
      %v944 = vadd.f32 %v309, %v943
      %945 = vmatmul.bf16.gmra.mxu0 %v701
      %v946 = vpop.f32.mrf.mxu0
      %v947 = vadd.f32 %v309, %v946
      %v948 = vpop.f32.mrf.mxu0
      %v949 = vadd.f32 %v309, %v948
      %950 = vmatmul.bf16.gmra.mxu0 %v704
      %v951 = vpop.f32.mrf.mxu0
      %v952 = vadd.f32 %v309, %v951
      %v953 = vpop.f32.mrf.mxu0
      %v954 = vadd.f32 %v309, %v953
      %955 = vmatmul.bf16.gmra.mxu0 %v707
      %v956 = vpop.f32.mrf.mxu0
      %v957 = vadd.f32 %v309, %v956
      %v958 = vpop.f32.mrf.mxu0
      %v959 = vadd.f32 %v309, %v958
      %960 = vmatmul.bf16.gmra.mxu0 %v710
      %v961 = vpop.f32.mrf.mxu0
      %v962 = vadd.f32 %v309, %v961
      %v963 = vpop.f32.mrf.mxu0
      %v964 = vadd.f32 %v309, %v963
      %965 = vmatmul.bf16.gmra.mxu0 %v713
      %v966 = vpop.f32.mrf.mxu0
      %v967 = vadd.f32 %v309, %v966
      %v968 = vpop.f32.mrf.mxu0
      %v969 = vadd.f32 %v309, %v968
      %970 = vmatmul.bf16.gmra.mxu0 %v716
      %v971 = vpop.f32.mrf.mxu0
      %v972 = vadd.f32 %v309, %v971
      %v973 = vpop.f32.mrf.mxu0
      %v974 = vadd.f32 %v309, %v973
      %975 = vmatmul.bf16.gmra.mxu0 %v719
      %v976 = vpop.f32.mrf.mxu0
      %v977 = vadd.f32 %v309, %v976
      %v978 = vpop.f32.mrf.mxu0
      %v979 = vadd.f32 %v309, %v978
      %980 = vmatmul.bf16.gmra.mxu0 %v722
      %v981 = vpop.f32.mrf.mxu0
      %v982 = vadd.f32 %v309, %v981
      %v983 = vpop.f32.mrf.mxu0
      %v984 = vadd.f32 %v309, %v983
      %985 = vmatmul.bf16.gmra.mxu0 %v725
      %v986 = vpop.f32.mrf.mxu0
      %v987 = vadd.f32 %v309, %v986
      %v988 = vpop.f32.mrf.mxu0
      %v989 = vadd.f32 %v309, %v988
      %990 = vmatmul.bf16.gmra.mxu0 %v728
      %v991 = vpop.f32.mrf.mxu0
      %v992 = vadd.f32 %v309, %v991
      %v993 = vpop.f32.mrf.mxu0
      %v994 = vadd.f32 %v309, %v993
      %995 = vmatmul.bf16.gmra.mxu0 %v731
      %v996 = vpop.f32.mrf.mxu0
      %v997 = vadd.f32 %v309, %v996
      %v998 = vpop.f32.mrf.mxu0
      %v999 = vadd.f32 %v309, %v998
      %1000 = vmatmul.bf16.gmra.mxu0 %v734
      %v1001 = vpop.f32.mrf.mxu0
      %v1002 = vadd.f32 %v309, %v1001
      %v1003 = vpop.f32.mrf.mxu0
      %v1004 = vadd.f32 %v309, %v1003
      %1005 = vmatmul.bf16.gmra.mxu0 %v737
      %v1006 = vpop.f32.mrf.mxu0
      %v1007 = vadd.f32 %v309, %v1006
      %v1008 = vpop.f32.mrf.mxu0
      %v1009 = vadd.f32 %v309, %v1008
      %1010 = vmatmul.bf16.gmra.mxu0 %v740
      %v1011 = vpop.f32.mrf.mxu0
      %v1012 = vadd.f32 %v309, %v1011
      %v1013 = vpop.f32.mrf.mxu0
      %v1014 = vadd.f32 %v309, %v1013
      %1015 = vmatmul.bf16.gmra.mxu0 %v743
      %v1016 = vpop.f32.mrf.mxu0
      %v1017 = vadd.f32 %v309, %v1016
      %v1018 = vpop.f32.mrf.mxu0
      %v1019 = vadd.f32 %v309, %v1018
      %1020 = vmatmul.bf16.gmra.mxu0 %v746
      %v1021 = vpop.f32.mrf.mxu0
      %v1022 = vadd.f32 %v309, %v1021
      %v1023 = vpop.f32.mrf.mxu0
      %v1024 = vadd.f32 %v309, %v1023
      %1025 = vmatmul.bf16.gmra.mxu0 %v749
      %v1026 = vpop.f32.mrf.mxu0
      %v1027 = vadd.f32 %v309, %v1026
      %v1028 = vpop.f32.mrf.mxu0
      %v1029 = vadd.f32 %v309, %v1028
      %1030 = vmatmul.bf16.gmra.mxu0 %v752
      %v1031 = vpop.f32.mrf.mxu0
      %v1032 = vadd.f32 %v309, %v1031
      %v1033 = vpop.f32.mrf.mxu0
      %v1034 = vadd.f32 %v309, %v1033
      %1035 = vmatmul.bf16.gmra.mxu0 %v755
      %v1036 = vpop.f32.mrf.mxu0
      %v1037 = vadd.f32 %v309, %v1036
      %v1038 = vpop.f32.mrf.mxu0
      %v1039 = vadd.f32 %v309, %v1038
      %1040 = vmatmul.bf16.gmra.mxu0 %v758
      %v1041 = vpop.f32.mrf.mxu0
      %v1042 = vadd.f32 %v309, %v1041
      %v1043 = vpop.f32.mrf.mxu0
      %v1044 = vadd.f32 %v309, %v1043
      %1045 = vmatmul.bf16.gmra.mxu0 %v761
      %v1046 = vpop.f32.mrf.mxu0
      %v1047 = vadd.f32 %v309, %v1046
      %v1048 = vpop.f32.mrf.mxu0
      %v1049 = vadd.f32 %v309, %v1048
      %1050 = vmatmul.bf16.gmra.mxu0 %v764
      %v1051 = vpop.f32.mrf.mxu0
      %v1052 = vadd.f32 %v309, %v1051
      %v1053 = vpop.f32.mrf.mxu0
      %v1054 = vadd.f32 %v309, %v1053
      %1055 = vmatmul.bf16.gmra.mxu0 %v767
      %v1056 = vpop.f32.mrf.mxu0
      %v1057 = vadd.f32 %v309, %v1056
      %v1058 = vpop.f32.mrf.mxu0
      %v1059 = vadd.f32 %v309, %v1058
      %1060 = vmatmul.bf16.gmra.mxu0 %v770
      %v1061 = vpop.f32.mrf.mxu0
      %v1062 = vadd.f32 %v309, %v1061
      %v1063 = vpop.f32.mrf.mxu0
      %v1064 = vadd.f32 %v309, %v1063
      %1065 = vmatmul.bf16.gmra.mxu0 %v773
      %v1066 = vpop.f32.mrf.mxu0
      %v1067 = vadd.f32 %v309, %v1066
      %v1068 = vpop.f32.mrf.mxu0
      %v1069 = vadd.f32 %v309, %v1068
      %1070 = vmatmul.bf16.gmra.mxu0 %v776
      %v1071 = vpop.f32.mrf.mxu0
      %v1072 = vadd.f32 %v309, %v1071
      %v1073 = vpop.f32.mrf.mxu0
      %v1074 = vadd.f32 %v309, %v1073
      %1075 = vmatmul.bf16.gmra.mxu0 %v779
      %v1076 = vpop.f32.mrf.mxu0
      %v1077 = vadd.f32 %v309, %v1076
      %v1078 = vpop.f32.mrf.mxu0
      %v1079 = vadd.f32 %v309, %v1078
      %1080 = vmatmul.bf16.gmra.mxu0 %v782
      %v1081 = vpop.f32.mrf.mxu0
      %v1082 = vadd.f32 %v309, %v1081
      %v1083 = vpop.f32.mrf.mxu0
      %v1084 = vadd.f32 %v309, %v1083
      %1085 = vmatmul.bf16.gmra.mxu0 %v785
      %v1086 = vpop.f32.mrf.mxu0
      %v1087 = vadd.f32 %v309, %v1086
      %v1088 = vpop.f32.mrf.mxu0
      %v1089 = vadd.f32 %v309, %v1088
      %1090 = vmatmul.bf16.gmra.mxu0 %v788
      %v1091 = vpop.f32.mrf.mxu0
      %v1092 = vadd.f32 %v309, %v1091
      %v1093 = vpop.f32.mrf.mxu0
      %v1094 = vadd.f32 %v309, %v1093
      %1095 = vmatmul.bf16.gmra.mxu0 %v791
      %v1096 = vpop.f32.mrf.mxu0
      %v1097 = vadd.f32 %v309, %v1096
      %v1098 = vpop.f32.mrf.mxu0
      %v1099 = vadd.f32 %v309, %v1098
      %1100 = vmatmul.bf16.gmra.mxu0 %v794
      %v1101 = vpop.f32.mrf.mxu0
      %v1102 = vadd.f32 %v309, %v1101
      %v1103 = vpop.f32.mrf.mxu0
      %v1104 = vadd.f32 %v309, %v1103
      %1105 = vmatmul.bf16.gmra.mxu0 %v797
      %v1106 = vpop.f32.mrf.mxu0
      %v1107 = vadd.f32 %v309, %v1106
      %v1108 = vpop.f32.mrf.mxu0
      %v1109 = vadd.f32 %v309, %v1108
      %1110 = vmatmul.bf16.gmra.mxu0 %v800
      %v1111 = vpop.f32.mrf.mxu0
      %v1112 = vadd.f32 %v309, %v1111
      %v1113 = vpop.f32.mrf.mxu0
      %v1114 = vadd.f32 %v309, %v1113
      %1115 = vmatmul.bf16.gmra.mxu0 %v803
      %v1116 = vpop.f32.mrf.mxu0
      %v1117 = vadd.f32 %v309, %v1116
      %v1118 = vpop.f32.mrf.mxu0
      %v1119 = vadd.f32 %v309, %v1118
      %1120 = vmatmul.bf16.gmra.mxu0 %v806
      %v1121 = vpop.f32.mrf.mxu0
      %v1122 = vadd.f32 %v309, %v1121
      %v1123 = vpop.f32.mrf.mxu0
      %v1124 = vadd.f32 %v309, %v1123
      %1125 = vmatmul.bf16.gmra.mxu0 %v809
      %v1126 = vpop.f32.mrf.mxu0
      %v1127 = vadd.f32 %v309, %v1126
      %v1128 = vpop.f32.mrf.mxu0
      %v1129 = vadd.f32 %v309, %v1128
      %1130 = vmatmul.bf16.gmra.mxu0 %v812
      %v1131 = vpop.f32.mrf.mxu0
      %v1132 = vadd.f32 %v309, %v1131
      %v1133 = vpop.f32.mrf.mxu0
      %v1134 = vadd.f32 %v309, %v1133
      %1135 = vmatmul.bf16.gmra.mxu0 %v815
      %v1136 = vpop.f32.mrf.mxu0
      %v1137 = vadd.f32 %v309, %v1136
      %v1138 = vpop.f32.mrf.mxu0
      %v1139 = vadd.f32 %v309, %v1138
      %1140 = vmatmul.bf16.gmra.mxu0 %v818
      %v1141 = vpop.f32.mrf.mxu0
      %v1142 = vadd.f32 %v309, %v1141
      %v1143 = vpop.f32.mrf.mxu0
      %v1144 = vadd.f32 %v309, %v1143
      %1145 = vmatmul.bf16.gmra.mxu0 %v821
      %v1146 = vpop.f32.mrf.mxu0
      %v1147 = vadd.f32 %v309, %v1146
      %v1148 = vpop.f32.mrf.mxu0
      %v1149 = vadd.f32 %v309, %v1148
      %1150 = vmatmul.bf16.gmra.mxu0 %v824
      %v1151 = vpop.f32.mrf.mxu0
      %v1152 = vadd.f32 %v309, %v1151
      %v1153 = vpop.f32.mrf.mxu0
      %v1154 = vadd.f32 %v309, %v1153
      %1155 = vmatmul.bf16.gmra.mxu0 %v827
      %v1156 = vpop.f32.mrf.mxu0
      %v1157 = vadd.f32 %v309, %v1156
      %v1158 = vpop.f32.mrf.mxu0
      %v1159 = vadd.f32 %v309, %v1158
      %1160 = vmatmul.bf16.gmra.mxu0 %v830
      %v1161 = vpop.f32.mrf.mxu0
      %v1162 = vadd.f32 %v309, %v1161
      %v1163 = vpop.f32.mrf.mxu0
      %v1164 = vadd.f32 %v309, %v1163
      %1165 = vmatmul.bf16.gmra.mxu0 %v833
      %v1166 = vpop.f32.mrf.mxu0
      %v1167 = vadd.f32 %v309, %v1166
      %v1168 = vpop.f32.mrf.mxu0
      %v1169 = vadd.f32 %v309, %v1168
      %1170 = vdwg.mxu0
      %v1171 = vmax.f32 %v852, 0.0
      %v1172 = vmax.f32 %v854, 0.0
      %v1173 = vmax.f32 %v857, 0.0
      %v1174 = vmax.f32 %v859, 0.0
      %v1175 = vmax.f32 %v862, 0.0
      %v1176 = vmax.f32 %v864, 0.0
      %v1177 = vmax.f32 %v867, 0.0
      %v1178 = vmax.f32 %v869, 0.0
      %v1179 = vmax.f32 %v872, 0.0
      %v1180 = vmax.f32 %v874, 0.0
      %v1181 = vmax.f32 %v877, 0.0
      %v1182 = vmax.f32 %v879, 0.0
      %v1183 = vmax.f32 %v882, 0.0
      %v1184 = vmax.f32 %v884, 0.0
      %v1185 = vmax.f32 %v887, 0.0
      %v1186 = vmax.f32 %v889, 0.0
      %v1187 = vmax.f32 %v892, 0.0
      %v1188 = vmax.f32 %v894, 0.0
      %v1189 = vmax.f32 %v897, 0.0
      %v1190 = vmax.f32 %v899, 0.0
      %v1191 = vmax.f32 %v902, 0.0
      %v1192 = vmax.f32 %v904, 0.0
      %v1193 = vmax.f32 %v907, 0.0
      %v1194 = vmax.f32 %v909, 0.0
      %v1195 = vmax.f32 %v912, 0.0
      %v1196 = vmax.f32 %v914, 0.0
      %v1197 = vmax.f32 %v917, 0.0
      %v1198 = vmax.f32 %v919, 0.0
      %v1199 = vmax.f32 %v922, 0.0
      %v1200 = vmax.f32 %v924, 0.0
      %v1201 = vmax.f32 %v927, 0.0
      %v1202 = vmax.f32 %v929, 0.0
      %v1203 = vmax.f32 %v932, 0.0
      %v1204 = vmax.f32 %v934, 0.0
      %v1205 = vmax.f32 %v937, 0.0
      %v1206 = vmax.f32 %v939, 0.0
      %v1207 = vmax.f32 %v942, 0.0
      %v1208 = vmax.f32 %v944, 0.0
      %v1209 = vmax.f32 %v947, 0.0
      %v1210 = vmax.f32 %v949, 0.0
      %v1211 = vmax.f32 %v952, 0.0
      %v1212 = vmax.f32 %v954, 0.0
      %v1213 = vmax.f32 %v957, 0.0
      %v1214 = vmax.f32 %v959, 0.0
      %v1215 = vmax.f32 %v962, 0.0
      %v1216 = vmax.f32 %v964, 0.0
      %v1217 = vmax.f32 %v967, 0.0
      %v1218 = vmax.f32 %v969, 0.0
      %v1219 = vmax.f32 %v972, 0.0
      %v1220 = vmax.f32 %v974, 0.0
      %v1221 = vmax.f32 %v977, 0.0
      %v1222 = vmax.f32 %v979, 0.0
      %v1223 = vmax.f32 %v982, 0.0
      %v1224 = vmax.f32 %v984, 0.0
      %v1225 = vmax.f32 %v987, 0.0
      %v1226 = vmax.f32 %v989, 0.0
      %v1227 = vmax.f32 %v992, 0.0
      %v1228 = vmax.f32 %v994, 0.0
      %v1229 = vmax.f32 %v997, 0.0
      %v1230 = vmax.f32 %v999, 0.0
      %v1231 = vmax.f32 %v1002, 0.0
      %v1232 = vmax.f32 %v1004, 0.0
      %v1233 = vmax.f32 %v1007, 0.0
      %v1234 = vmax.f32 %v1009, 0.0
      %v1235 = vmax.f32 %v1012, 0.0
      %v1236 = vmax.f32 %v1014, 0.0
      %v1237 = vmax.f32 %v1017, 0.0
      %v1238 = vmax.f32 %v1019, 0.0
      %v1239 = vmax.f32 %v1022, 0.0
      %v1240 = vmax.f32 %v1024, 0.0
      %v1241 = vmax.f32 %v1027, 0.0
      %v1242 = vmax.f32 %v1029, 0.0
      %v1243 = vmax.f32 %v1032, 0.0
      %v1244 = vmax.f32 %v1034, 0.0
      %v1245 = vmax.f32 %v1037, 0.0
      %v1246 = vmax.f32 %v1039, 0.0
      %v1247 = vmax.f32 %v1042, 0.0
      %v1248 = vmax.f32 %v1044, 0.0
      %v1249 = vmax.f32 %v1047, 0.0
      %v1250 = vmax.f32 %v1049, 0.0
      %v1251 = vmax.f32 %v1052, 0.0
      %v1252 = vmax.f32 %v1054, 0.0
      %v1253 = vmax.f32 %v1057, 0.0
      %v1254 = vmax.f32 %v1059, 0.0
      %v1255 = vmax.f32 %v1062, 0.0
      %v1256 = vmax.f32 %v1064, 0.0
      %v1257 = vmax.f32 %v1067, 0.0
      %v1258 = vmax.f32 %v1069, 0.0
      %v1259 = vmax.f32 %v1072, 0.0
      %v1260 = vmax.f32 %v1074, 0.0
      %v1261 = vmax.f32 %v1077, 0.0
      %v1262 = vmax.f32 %v1079, 0.0
      %v1263 = vmax.f32 %v1082, 0.0
      %v1264 = vmax.f32 %v1084, 0.0
      %v1265 = vmax.f32 %v1087, 0.0
      %v1266 = vmax.f32 %v1089, 0.0
      %v1267 = vmax.f32 %v1092, 0.0
      %v1268 = vmax.f32 %v1094, 0.0
      %v1269 = vmax.f32 %v1097, 0.0
      %v1270 = vmax.f32 %v1099, 0.0
      %v1271 = vmax.f32 %v1102, 0.0
      %v1272 = vmax.f32 %v1104, 0.0
      %v1273 = vmax.f32 %v1107, 0.0
      %v1274 = vmax.f32 %v1109, 0.0
      %v1275 = vmax.f32 %v1112, 0.0
      %v1276 = vmax.f32 %v1114, 0.0
      %v1277 = vmax.f32 %v1117, 0.0
      %v1278 = vmax.f32 %v1119, 0.0
      %v1279 = vmax.f32 %v1122, 0.0
      %v1280 = vmax.f32 %v1124, 0.0
      %v1281 = vmax.f32 %v1127, 0.0
      %v1282 = vmax.f32 %v1129, 0.0
      %v1283 = vmax.f32 %v1132, 0.0
      %v1284 = vmax.f32 %v1134, 0.0
      %v1285 = vmax.f32 %v1137, 0.0
      %v1286 = vmax.f32 %v1139, 0.0
      %v1287 = vmax.f32 %v1142, 0.0
      %v1288 = vmax.f32 %v1144, 0.0
      %v1289 = vmax.f32 %v1147, 0.0
      %v1290 = vmax.f32 %v1149, 0.0
      %v1291 = vmax.f32 %v1152, 0.0
      %v1292 = vmax.f32 %v1154, 0.0
      %v1293 = vmax.f32 %v1157, 0.0
      %v1294 = vmax.f32 %v1159, 0.0
      %v1295 = vmax.f32 %v1162, 0.0
      %v1296 = vmax.f32 %v1164, 0.0
      %v1297 = vmax.f32 %v1167, 0.0
      %v1298 = vmax.f32 %v1169, 0.0
      %v1299 = vpack.c.bf16 %v1171, %v1171
      %v1300 = vpack.c.bf16 %v1172, %v1172
      %v1301 = vpack.c.bf16 %v1173, %v1173
      %v1302 = vpack.c.bf16 %v1174, %v1174
      %v1303 = vpack.c.bf16 %v1175, %v1175
      %v1304 = vpack.c.bf16 %v1176, %v1176
      %v1305 = vpack.c.bf16 %v1177, %v1177
      %v1306 = vpack.c.bf16 %v1178, %v1178
      %v1307 = vpack.c.bf16 %v1179, %v1179
      %v1308 = vpack.c.bf16 %v1180, %v1180
      %v1309 = vpack.c.bf16 %v1181, %v1181
      %v1310 = vpack.c.bf16 %v1182, %v1182
      %v1311 = vpack.c.bf16 %v1183, %v1183
      %v1312 = vpack.c.bf16 %v1184, %v1184
      %v1313 = vpack.c.bf16 %v1185, %v1185
      %v1314 = vpack.c.bf16 %v1186, %v1186
      %v1315 = vpack.c.bf16 %v1187, %v1187
      %v1316 = vpack.c.bf16 %v1188, %v1188
      %v1317 = vpack.c.bf16 %v1189, %v1189
      %v1318 = vpack.c.bf16 %v1190, %v1190
      %v1319 = vpack.c.bf16 %v1191, %v1191
      %v1320 = vpack.c.bf16 %v1192, %v1192
      %v1321 = vpack.c.bf16 %v1193, %v1193
      %v1322 = vpack.c.bf16 %v1194, %v1194
      %v1323 = vpack.c.bf16 %v1195, %v1195
      %v1324 = vpack.c.bf16 %v1196, %v1196
      %v1325 = vpack.c.bf16 %v1197, %v1197
      %v1326 = vpack.c.bf16 %v1198, %v1198
      %v1327 = vpack.c.bf16 %v1199, %v1199
      %v1328 = vpack.c.bf16 %v1200, %v1200
      %v1329 = vpack.c.bf16 %v1201, %v1201
      %v1330 = vpack.c.bf16 %v1202, %v1202
      %v1331 = vpack.c.bf16 %v1203, %v1203
      %v1332 = vpack.c.bf16 %v1204, %v1204
      %v1333 = vpack.c.bf16 %v1205, %v1205
      %v1334 = vpack.c.bf16 %v1206, %v1206
      %v1335 = vpack.c.bf16 %v1207, %v1207
      %v1336 = vpack.c.bf16 %v1208, %v1208
      %v1337 = vpack.c.bf16 %v1209, %v1209
      %v1338 = vpack.c.bf16 %v1210, %v1210
      %v1339 = vpack.c.bf16 %v1211, %v1211
      %v1340 = vpack.c.bf16 %v1212, %v1212
      %v1341 = vpack.c.bf16 %v1213, %v1213
      %v1342 = vpack.c.bf16 %v1214, %v1214
      %v1343 = vpack.c.bf16 %v1215, %v1215
      %v1344 = vpack.c.bf16 %v1216, %v1216
      %v1345 = vpack.c.bf16 %v1217, %v1217
      %v1346 = vpack.c.bf16 %v1218, %v1218
      %v1347 = vpack.c.bf16 %v1219, %v1219
      %v1348 = vpack.c.bf16 %v1220, %v1220
      %v1349 = vpack.c.bf16 %v1221, %v1221
      %v1350 = vpack.c.bf16 %v1222, %v1222
      %v1351 = vpack.c.bf16 %v1223, %v1223
      %v1352 = vpack.c.bf16 %v1224, %v1224
      %v1353 = vpack.c.bf16 %v1225, %v1225
      %v1354 = vpack.c.bf16 %v1226, %v1226
      %v1355 = vpack.c.bf16 %v1227, %v1227
      %v1356 = vpack.c.bf16 %v1228, %v1228
      %v1357 = vpack.c.bf16 %v1229, %v1229
      %v1358 = vpack.c.bf16 %v1230, %v1230
      %v1359 = vpack.c.bf16 %v1231, %v1231
      %v1360 = vpack.c.bf16 %v1232, %v1232
      %v1361 = vpack.c.bf16 %v1233, %v1233
      %v1362 = vpack.c.bf16 %v1234, %v1234
      %v1363 = vpack.c.bf16 %v1235, %v1235
      %v1364 = vpack.c.bf16 %v1236, %v1236
      %v1365 = vpack.c.bf16 %v1237, %v1237
      %v1366 = vpack.c.bf16 %v1238, %v1238
      %v1367 = vpack.c.bf16 %v1239, %v1239
      %v1368 = vpack.c.bf16 %v1240, %v1240
      %v1369 = vpack.c.bf16 %v1241, %v1241
      %v1370 = vpack.c.bf16 %v1242, %v1242
      %v1371 = vpack.c.bf16 %v1243, %v1243
      %v1372 = vpack.c.bf16 %v1244, %v1244
      %v1373 = vpack.c.bf16 %v1245, %v1245
      %v1374 = vpack.c.bf16 %v1246, %v1246
      %v1375 = vpack.c.bf16 %v1247, %v1247
      %v1376 = vpack.c.bf16 %v1248, %v1248
      %v1377 = vpack.c.bf16 %v1249, %v1249
      %v1378 = vpack.c.bf16 %v1250, %v1250
      %v1379 = vpack.c.bf16 %v1251, %v1251
      %v1380 = vpack.c.bf16 %v1252, %v1252
      %v1381 = vpack.c.bf16 %v1253, %v1253
      %v1382 = vpack.c.bf16 %v1254, %v1254
      %v1383 = vpack.c.bf16 %v1255, %v1255
      %v1384 = vpack.c.bf16 %v1256, %v1256
      %v1385 = vpack.c.bf16 %v1257, %v1257
      %v1386 = vpack.c.bf16 %v1258, %v1258
      %v1387 = vpack.c.bf16 %v1259, %v1259
      %v1388 = vpack.c.bf16 %v1260, %v1260
      %v1389 = vpack.c.bf16 %v1261, %v1261
      %v1390 = vpack.c.bf16 %v1262, %v1262
      %v1391 = vpack.c.bf16 %v1263, %v1263
      %v1392 = vpack.c.bf16 %v1264, %v1264
      %v1393 = vpack.c.bf16 %v1265, %v1265
      %v1394 = vpack.c.bf16 %v1266, %v1266
      %v1395 = vpack.c.bf16 %v1267, %v1267
      %v1396 = vpack.c.bf16 %v1268, %v1268
      %v1397 = vpack.c.bf16 %v1269, %v1269
      %v1398 = vpack.c.bf16 %v1270, %v1270
      %v1399 = vpack.c.bf16 %v1271, %v1271
      %v1400 = vpack.c.bf16 %v1272, %v1272
      %v1401 = vpack.c.bf16 %v1273, %v1273
      %v1402 = vpack.c.bf16 %v1274, %v1274
      %v1403 = vpack.c.bf16 %v1275, %v1275
      %v1404 = vpack.c.bf16 %v1276, %v1276
      %v1405 = vpack.c.bf16 %v1277, %v1277
      %v1406 = vpack.c.bf16 %v1278, %v1278
      %v1407 = vpack.c.bf16 %v1279, %v1279
      %v1408 = vpack.c.bf16 %v1280, %v1280
      %v1409 = vpack.c.bf16 %v1281, %v1281
      %v1410 = vpack.c.bf16 %v1282, %v1282
      %v1411 = vpack.c.bf16 %v1283, %v1283
      %v1412 = vpack.c.bf16 %v1284, %v1284
      %v1413 = vpack.c.bf16 %v1285, %v1285
      %v1414 = vpack.c.bf16 %v1286, %v1286
      %v1415 = vpack.c.bf16 %v1287, %v1287
      %v1416 = vpack.c.bf16 %v1288, %v1288
      %v1417 = vpack.c.bf16 %v1289, %v1289
      %v1418 = vpack.c.bf16 %v1290, %v1290
      %v1419 = vpack.c.bf16 %v1291, %v1291
      %v1420 = vpack.c.bf16 %v1292, %v1292
      %v1421 = vpack.c.bf16 %v1293, %v1293
      %v1422 = vpack.c.bf16 %v1294, %v1294
      %v1423 = vpack.c.bf16 %v1295, %v1295
      %v1424 = vpack.c.bf16 %v1296, %v1296
      %v1425 = vpack.c.bf16 %v1297, %v1297
      %v1426 = vpack.c.bf16 %v1298, %v1298
      %1427 = vst [vmem:[%s172] sm:$0xf] %v1299
      %1428 = vst [vmem:[%s172 + $0x4] sm:$0xf] %v1300
      %1429 = vst [vmem:[%s172 + $0x8] sm:$0xf] %v1301
      %1430 = vst [vmem:[%s172 + $0xc] sm:$0xf] %v1302
      %1431 = vst [vmem:[%s172 + $0x10] sm:$0xf] %v1303
      %1432 = vst [vmem:[%s172 + $0x14] sm:$0xf] %v1304
      %1433 = vst [vmem:[%s172 + $0x18] sm:$0xf] %v1305
      %1434 = vst [vmem:[%s172 + $0x1c] sm:$0xf] %v1306
      %1435 = vst [vmem:[%s172 + $0x20] sm:$0xf] %v1307
      %1436 = vst [vmem:[%s172 + $0x24] sm:$0xf] %v1308
      %1437 = vst [vmem:[%s172 + $0x28] sm:$0xf] %v1309
      %1438 = vst [vmem:[%s172 + $0x2c] sm:$0xf] %v1310
      %1439 = vst [vmem:[%s172 + $0x30] sm:$0xf] %v1311
      %1440 = vst [vmem:[%s172 + $0x34] sm:$0xf] %v1312
      %1441 = vst [vmem:[%s172 + $0x38] sm:$0xf] %v1313
      %1442 = vst [vmem:[%s172 + $0x3c] sm:$0xf] %v1314
      %1443 = vst [vmem:[%s172 + $0x40] sm:$0xf] %v1315
      %1444 = vst [vmem:[%s172 + $0x44] sm:$0xf] %v1316
      %1445 = vst [vmem:[%s172 + $0x48] sm:$0xf] %v1317
      %1446 = vst [vmem:[%s172 + $0x4c] sm:$0xf] %v1318
      %1447 = vst [vmem:[%s172 + $0x50] sm:$0xf] %v1319
      %1448 = vst [vmem:[%s172 + $0x54] sm:$0xf] %v1320
      %1449 = vst [vmem:[%s172 + $0x58] sm:$0xf] %v1321
      %1450 = vst [vmem:[%s172 + $0x5c] sm:$0xf] %v1322
      %1451 = vst [vmem:[%s172 + $0x60] sm:$0xf] %v1323
      %1452 = vst [vmem:[%s172 + $0x64] sm:$0xf] %v1324
      %1453 = vst [vmem:[%s172 + $0x68] sm:$0xf] %v1325
      %1454 = vst [vmem:[%s172 + $0x6c] sm:$0xf] %v1326
      %1455 = vst [vmem:[%s172 + $0x70] sm:$0xf] %v1327
      %1456 = vst [vmem:[%s172 + $0x74] sm:$0xf] %v1328
      %1457 = vst [vmem:[%s172 + $0x78] sm:$0xf] %v1329
      %1458 = vst [vmem:[%s172 + $0x7c] sm:$0xf] %v1330
      %1459 = vst [vmem:[%s172 + $0x80] sm:$0xf] %v1331
      %1460 = vst [vmem:[%s172 + $0x84] sm:$0xf] %v1332
      %1461 = vst [vmem:[%s172 + $0x88] sm:$0xf] %v1333
      %1462 = vst [vmem:[%s172 + $0x8c] sm:$0xf] %v1334
      %1463 = vst [vmem:[%s172 + $0x90] sm:$0xf] %v1335
      %1464 = vst [vmem:[%s172 + $0x94] sm:$0xf] %v1336
      %1465 = vst [vmem:[%s172 + $0x98] sm:$0xf] %v1337
      %1466 = vst [vmem:[%s172 + $0x9c] sm:$0xf] %v1338
      %1467 = vst [vmem:[%s172 + $0xa0] sm:$0xf] %v1339
      %1468 = vst [vmem:[%s172 + $0xa4] sm:$0xf] %v1340
      %1469 = vst [vmem:[%s172 + $0xa8] sm:$0xf] %v1341
      %1470 = vst [vmem:[%s172 + $0xac] sm:$0xf] %v1342
      %1471 = vst [vmem:[%s172 + $0xb0] sm:$0xf] %v1343
      %1472 = vst [vmem:[%s172 + $0xb4] sm:$0xf] %v1344
      %1473 = vst [vmem:[%s172 + $0xb8] sm:$0xf] %v1345
      %1474 = vst [vmem:[%s172 + $0xbc] sm:$0xf] %v1346
      %1475 = vst [vmem:[%s172 + $0xc0] sm:$0xf] %v1347
      %1476 = vst [vmem:[%s172 + $0xc4] sm:$0xf] %v1348
      %1477 = vst [vmem:[%s172 + $0xc8] sm:$0xf] %v1349
      %1478 = vst [vmem:[%s172 + $0xcc] sm:$0xf] %v1350
      %1479 = vst [vmem:[%s172 + $0xd0] sm:$0xf] %v1351
      %1480 = vst [vmem:[%s172 + $0xd4] sm:$0xf] %v1352
      %1481 = vst [vmem:[%s172 + $0xd8] sm:$0xf] %v1353
      %1482 = vst [vmem:[%s172 + $0xdc] sm:$0xf] %v1354
      %1483 = vst [vmem:[%s172 + $0xe0] sm:$0xf] %v1355
      %1484 = vst [vmem:[%s172 + $0xe4] sm:$0xf] %v1356
      %1485 = vst [vmem:[%s172 + $0xe8] sm:$0xf] %v1357
      %1486 = vst [vmem:[%s172 + $0xec] sm:$0xf] %v1358
      %1487 = vst [vmem:[%s172 + $0xf0] sm:$0xf] %v1359
      %1488 = vst [vmem:[%s172 + $0xf4] sm:$0xf] %v1360
      %1489 = vst [vmem:[%s172 + $0xf8] sm:$0xf] %v1361
      %1490 = vst [vmem:[%s172 + $0xfc] sm:$0xf] %v1362
      %1491 = vst [vmem:[%s172 + $0x100] sm:$0xf] %v1363
      %1492 = vst [vmem:[%s172 + $0x104] sm:$0xf] %v1364
      %1493 = vst [vmem:[%s172 + $0x108] sm:$0xf] %v1365
      %1494 = vst [vmem:[%s172 + $0x10c] sm:$0xf] %v1366
      %1495 = vst [vmem:[%s172 + $0x110] sm:$0xf] %v1367
      %1496 = vst [vmem:[%s172 + $0x114] sm:$0xf] %v1368
      %1497 = vst [vmem:[%s172 + $0x118] sm:$0xf] %v1369
      %1498 = vst [vmem:[%s172 + $0x11c] sm:$0xf] %v1370
      %1499 = vst [vmem:[%s172 + $0x120] sm:$0xf] %v1371
      %1500 = vst [vmem:[%s172 + $0x124] sm:$0xf] %v1372
      %1501 = vst [vmem:[%s172 + $0x128] sm:$0xf] %v1373
      %1502 = vst [vmem:[%s172 + $0x12c] sm:$0xf] %v1374
      %1503 = vst [vmem:[%s172 + $0x130] sm:$0xf] %v1375
      %1504 = vst [vmem:[%s172 + $0x134] sm:$0xf] %v1376
      %1505 = vst [vmem:[%s172 + $0x138] sm:$0xf] %v1377
      %1506 = vst [vmem:[%s172 + $0x13c] sm:$0xf] %v1378
      %1507 = vst [vmem:[%s172 + $0x140] sm:$0xf] %v1379
      %1508 = vst [vmem:[%s172 + $0x144] sm:$0xf] %v1380
      %1509 = vst [vmem:[%s172 + $0x148] sm:$0xf] %v1381
      %1510 = vst [vmem:[%s172 + $0x14c] sm:$0xf] %v1382
      %1511 = vst [vmem:[%s172 + $0x150] sm:$0xf] %v1383
      %1512 = vst [vmem:[%s172 + $0x154] sm:$0xf] %v1384
      %1513 = vst [vmem:[%s172 + $0x158] sm:$0xf] %v1385
      %1514 = vst [vmem:[%s172 + $0x15c] sm:$0xf] %v1386
      %1515 = vst [vmem:[%s172 + $0x160] sm:$0xf] %v1387
      %1516 = vst [vmem:[%s172 + $0x164] sm:$0xf] %v1388
      %1517 = vst [vmem:[%s172 + $0x168] sm:$0xf] %v1389
      %1518 = vst [vmem:[%s172 + $0x16c] sm:$0xf] %v1390
      %1519 = vst [vmem:[%s172 + $0x170] sm:$0xf] %v1391
      %1520 = vst [vmem:[%s172 + $0x174] sm:$0xf] %v1392
      %1521 = vst [vmem:[%s172 + $0x178] sm:$0xf] %v1393
      %1522 = vst [vmem:[%s172 + $0x17c] sm:$0xf] %v1394
      %1523 = vst [vmem:[%s172 + $0x180] sm:$0xf] %v1395
      %1524 = vst [vmem:[%s172 + $0x184] sm:$0xf] %v1396
      %1525 = vst [vmem:[%s172 + $0x188] sm:$0xf] %v1397
      %1526 = vst [vmem:[%s172 + $0x18c] sm:$0xf] %v1398
      %1527 = vst [vmem:[%s172 + $0x190] sm:$0xf] %v1399
      %1528 = vst [vmem:[%s172 + $0x194] sm:$0xf] %v1400
      %1529 = vst [vmem:[%s172 + $0x198] sm:$0xf] %v1401
      %1530 = vst [vmem:[%s172 + $0x19c] sm:$0xf] %v1402
      %1531 = vst [vmem:[%s172 + $0x1a0] sm:$0xf] %v1403
      %1532 = vst [vmem:[%s172 + $0x1a4] sm:$0xf] %v1404
      %1533 = vst [vmem:[%s172 + $0x1a8] sm:$0xf] %v1405
      %1534 = vst [vmem:[%s172 + $0x1ac] sm:$0xf] %v1406
      %1535 = vst [vmem:[%s172 + $0x1b0] sm:$0xf] %v1407
      %1536 = vst [vmem:[%s172 + $0x1b4] sm:$0xf] %v1408
      %1537 = vst [vmem:[%s172 + $0x1b8] sm:$0xf] %v1409
      %1538 = vst [vmem:[%s172 + $0x1bc] sm:$0xf] %v1410
      %1539 = vst [vmem:[%s172 + $0x1c0] sm:$0xf] %v1411
      %1540 = vst [vmem:[%s172 + $0x1c4] sm:$0xf] %v1412
      %1541 = vst [vmem:[%s172 + $0x1c8] sm:$0xf] %v1413
      %1542 = vst [vmem:[%s172 + $0x1cc] sm:$0xf] %v1414
      %1543 = vst [vmem:[%s172 + $0x1d0] sm:$0xf] %v1415
      %1544 = vst [vmem:[%s172 + $0x1d4] sm:$0xf] %v1416
      %1545 = vst [vmem:[%s172 + $0x1d8] sm:$0xf] %v1417
      %1546 = vst [vmem:[%s172 + $0x1dc] sm:$0xf] %v1418
      %1547 = vst [vmem:[%s172 + $0x1e0] sm:$0xf] %v1419
      %1548 = vst [vmem:[%s172 + $0x1e4] sm:$0xf] %v1420
      %1549 = vst [vmem:[%s172 + $0x1e8] sm:$0xf] %v1421
      %1550 = vst [vmem:[%s172 + $0x1ec] sm:$0xf] %v1422
      %1551 = vst [vmem:[%s172 + $0x1f0] sm:$0xf] %v1423
      %1552 = vst [vmem:[%s172 + $0x1f4] sm:$0xf] %v1424
      %1553 = vst [vmem:[%s172 + $0x1f8] sm:$0xf] %v1425
      %1554 = vst [vmem:[%s172 + $0x1fc] sm:$0xf] %v1426
      %s1555 = smul.u32 128, %s14
      %p1556 = scmp.lt.s32.totalorder %s1555, 511
      %s1557 = scalar_select %p1556, %s1555, 511
      %s1558 = smul.addr %s1557, 4
      %s1559 = scalar_lea.vmem %s3, %s1558
      // Predicated region
      $region33: #{temporal3d_forward.8} parent=31 // pred_check
        %p1560 = pneg %p100
      $region34: #{temporal3d_forward.8} parent=31 // pred_check_branch
        %1562 = sbr.rel (%p1560) target = $region36
      $region35: #{temporal3d_forward.8} parent=31 // pred_region
        %s1563 = smul.u32 128, %s14
      $region36: #{temporal3d_forward.8} parent=31 // pred_fallthru
        _
    $region32: #{temporal3d_forward.8} parent=5 // pred_fallthru
      _
    %p1564 = scmp.le.s32.totalorder 2, %s9
    // Predicated region
    $region37: #{temporal3d_forward.8} parent=5 // pred_check
      %p1565 = pneg %p1564
    $region38: #{temporal3d_forward.8} parent=5 // pred_check_branch
      %1567 = sbr.rel (%p1565) target = $region40
    $region39: #{temporal3d_forward.8} parent=5 // pred_region
      %s1568 = ssub.s32 %s9, 2
      // Predicated region
      $region41: #{temporal3d_forward.8} parent=39 // pred_check
        %p1569 = pneg %p106
      $region42: #{temporal3d_forward.8} parent=39 // pred_check_branch
        %1571 = sbr.rel (%p1569) target = $region44
      $region43: #{temporal3d_forward.8} parent=39 // pred_region
        %s1572 = smul.u32 128, %s15
        %p1573 = scmp.lt.s32.totalorder %s1572, 511
        %s1574 = scalar_select %p1573, %s1572, 511
        %s1575 = smul.addr %s1574, 4
        %s1576 = scalar_lea.vmem %s3, %s1575
      $region44: #{temporal3d_forward.8} parent=39 // pred_fallthru
        _
    $region40: #{temporal3d_forward.8} parent=5 // pred_fallthru
      _
  $region6: #{temporal3d_forward.8} parent=0 // loop_footer
    %s13 = sadd.s32 1, %s9
  $region7: #{temporal3d_forward.8} parent=0 // loop_footer_branch
    %8 = sbr.rel target = $region3
  $region8: #{temporal3d_forward.8} parent=0 // loop_exit
    _

// kernel: temporal3d_forward.9
$region0: #{temporal3d_forward.9}
  #allocation0 [shape = 'u32[]', space=smem, size = 0x4, offset = 0x4, fixed_abs, tag = 'smem constant byte address 0x4 - core index']
  #allocation1 [shape = 'u32[72,128]{1,0:T(1,128)}', space=vmem, size = 0x9000, scoped, tag = 'internal scratch']
  %s0 = inlined_call_operand.vmem [shape: bf16[512,128], index: 0, kind: input, shape index: {}]
  %s1 = inlined_call_operand.vmem [shape: bf16[512,128], index: 1, kind: input, shape index: {}]
  %s2 = inlined_call_operand.vmem [shape: bf16[512,128], index: 2, kind: input, shape index: {}]
  %s3 = inlined_call_operand.vmem [shape: bf16[512,128], index: 3, kind: input, shape index: {}]
  %s4 = inlined_call_operand.vmem [shape: bf16[512,128], index: 4, kind: input, shape index: {}]
  %s5 = inlined_call_operand.vmem [shape: bf16[512,128], index: 5, kind: input, shape index: {}]
  %s6 = inlined_call_operand.vmem [shape: bf16[512,128], index: 6, kind: input, shape index: {}]
  %s7 = inlined_call_operand.vmem [shape: bf16[512,128], index: 7, kind: input, shape index: {}]
  %s8 = inlined_call_operand.vmem [shape: bf16[512,128], index: 8, kind: output, shape index: {}]
  %s9 = sld [smem:[#allocation0]]
  $region65: #{temporal3d_forward.9} parent=0
    _
  %s11 = ssub.s32 1, %s9
  %s12 = scalar_select 0, %s11, %s9
  loop: start=0, step=1, limit=4
  $region2: #{temporal3d_forward.9} parent=0 // loop_pre_header
    _
  $region3: #{temporal3d_forward.9} parent=0 // loop_header
    %s14 = sphi 0, %s18
    %p15 = scmp.ge.s32.totalorder %s14, 4
    %s24 = sphi 0, %s26
    %s27 = sphi 0, %s24
    %s28 = sphi 0, %s27
    %s44 = sphi 0, %s28
    %s50 = sphi 0, %s52
    %s53 = sphi 0, %s50
    %s54 = sphi 0, %s53
    %s70 = sphi 0, %s54
    %s76 = sphi 0, %s78
    %s79 = sphi 0, %s76
    %s80 = sphi 0, %s79
    %s96 = sphi 0, %s80
    %s102 = sphi 0, %s104
    %s105 = sphi 0, %s102
    %s106 = sphi 0, %s105
    %s122 = sphi 0, %s106
    %s128 = sphi 0, %s130
    %s131 = sphi 0, %s128
    %s132 = sphi 0, %s131
    %s148 = sphi 0, %s132
    %s154 = sphi 0, %s156
    %s157 = sphi 0, %s154
    %s158 = sphi 0, %s157
    %s174 = sphi 0, %s158
    %s180 = sphi 0, %s182
    %s183 = sphi 0, %s180
    %s184 = sphi 0, %s183
    %s200 = sphi 0, %s184
    %s206 = sphi 0, %s208
    %s209 = sphi 0, %s206
    %s210 = sphi 0, %s209
    %s226 = sphi 0, %s210
    %s232 = sphi 0, %s234
    %s235 = sphi 0, %s232
    %s236 = sphi 0, %s235
    %s252 = sphi 0, %s236
  $region4: #{temporal3d_forward.9} parent=0 // loop_header_branch
    %17 = sbr.rel (%p15) target = $region8
  $region5: #{temporal3d_forward.9} parent=0 // loop_body
    %s19 = ssub.s32 %s14, 1
    %s20 = ssub.s32 %s14, 2
    %s21 = sadd.s32 %s14, 1
    %s22 = ssub.s32 %s14, %s21
    %p23 = scmp.eq.s32.totalorder %s22, 0
    %s25 = sadd.s32 %s24, 1
    %s26 = scalar_select %p23, %s24, %s25
    %p29 = pneg %p23
    %p30 = scmp.eq.s32.totalorder %s14, 1
    %p31 = por %p29, %p30
    %p32 = scmp.ne.s32.totalorder %s24, %s27
    %p33 = scmp.eq.s32.totalorder %s14, 0
    %p34 = por %p32, %p33
    %p35 = scmp.ne.s32.totalorder %s24, %s27
    %p36 = scmp.eq.s32.totalorder %s19, 1
    %p37 = por %p35, %p36
    %p38 = scmp.ne.s32.totalorder %s27, %s28
    %p39 = scmp.eq.s32.totalorder %s19, 0
    %p40 = por %p38, %p39
    %p41 = scmp.ne.s32.totalorder %s27, %s28
    %p42 = scmp.eq.s32.totalorder %s20, 1
    %p43 = por %p41, %p42
    %p45 = scmp.ne.s32.totalorder %s28, %s44
    %p46 = scmp.eq.s32.totalorder %s20, 0
    %p47 = por %p45, %p46
    %s48 = ssub.s32 %s14, %s21
    %p49 = scmp.eq.s32.totalorder %s48, 0
    %s51 = sadd.s32 %s50, 1
    %s52 = scalar_select %p49, %s50, %s51
    %p55 = pneg %p49
    %p56 = scmp.eq.s32.totalorder %s14, 1
    %p57 = por %p55, %p56
    %p58 = scmp.ne.s32.totalorder %s50, %s53
    %p59 = scmp.eq.s32.totalorder %s14, 0
    %p60 = por %p58, %p59
    %p61 = scmp.ne.s32.totalorder %s50, %s53
    %p62 = scmp.eq.s32.totalorder %s19, 1
    %p63 = por %p61, %p62
    %p64 = scmp.ne.s32.totalorder %s53, %s54
    %p65 = scmp.eq.s32.totalorder %s19, 0
    %p66 = por %p64, %p65
    %p67 = scmp.ne.s32.totalorder %s53, %s54
    %p68 = scmp.eq.s32.totalorder %s20, 1
    %p69 = por %p67, %p68
    %p71 = scmp.ne.s32.totalorder %s54, %s70
    %p72 = scmp.eq.s32.totalorder %s20, 0
    %p73 = por %p71, %p72
    %s74 = ssub.s32 %s14, %s21
    %p75 = scmp.eq.s32.totalorder %s74, 0
    %s77 = sadd.s32 %s76, 1
    %s78 = scalar_select %p75, %s76, %s77
    %p81 = pneg %p75
    %p82 = scmp.eq.s32.totalorder %s14, 1
    %p83 = por %p81, %p82
    %p84 = scmp.ne.s32.totalorder %s76, %s79
    %p85 = scmp.eq.s32.totalorder %s14, 0
    %p86 = por %p84, %p85
    %p87 = scmp.ne.s32.totalorder %s76, %s79
    %p88 = scmp.eq.s32.totalorder %s19, 1
    %p89 = por %p87, %p88
    %p90 = scmp.ne.s32.totalorder %s79, %s80
    %p91 = scmp.eq.s32.totalorder %s19, 0
    %p92 = por %p90, %p91
    %p93 = scmp.ne.s32.totalorder %s79, %s80
    %p94 = scmp.eq.s32.totalorder %s20, 1
    %p95 = por %p93, %p94
    %p97 = scmp.ne.s32.totalorder %s80, %s96
    %p98 = scmp.eq.s32.totalorder %s20, 0
    %p99 = por %p97, %p98
    %s100 = ssub.s32 %s14, %s21
    %p101 = scmp.eq.s32.totalorder %s100, 0
    %s103 = sadd.s32 %s102, 1
    %s104 = scalar_select %p101, %s102, %s103
    %p107 = pneg %p101
    %p108 = scmp.eq.s32.totalorder %s14, 1
    %p109 = por %p107, %p108
    %p110 = scmp.ne.s32.totalorder %s102, %s105
    %p111 = scmp.eq.s32.totalorder %s14, 0
    %p112 = por %p110, %p111
    %p113 = scmp.ne.s32.totalorder %s102, %s105
    %p114 = scmp.eq.s32.totalorder %s19, 1
    %p115 = por %p113, %p114
    %p116 = scmp.ne.s32.totalorder %s105, %s106
    %p117 = scmp.eq.s32.totalorder %s19, 0
    %p118 = por %p116, %p117
    %p119 = scmp.ne.s32.totalorder %s105, %s106
    %p120 = scmp.eq.s32.totalorder %s20, 1
    %p121 = por %p119, %p120
    %p123 = scmp.ne.s32.totalorder %s106, %s122
    %p124 = scmp.eq.s32.totalorder %s20, 0
    %p125 = por %p123, %p124
    %s126 = ssub.s32 %s14, %s21
    %p127 = scmp.eq.s32.totalorder %s126, 0
    %s129 = sadd.s32 %s128, 1
    %s130 = scalar_select %p127, %s128, %s129
    %p133 = pneg %p127
    %p134 = scmp.eq.s32.totalorder %s14, 1
    %p135 = por %p133, %p134
    %p136 = scmp.ne.s32.totalorder %s128, %s131
    %p137 = scmp.eq.s32.totalorder %s14, 0
    %p138 = por %p136, %p137
    %p139 = scmp.ne.s32.totalorder %s128, %s131
    %p140 = scmp.eq.s32.totalorder %s19, 1
    %p141 = por %p139, %p140
    %p142 = scmp.ne.s32.totalorder %s131, %s132
    %p143 = scmp.eq.s32.totalorder %s19, 0
    %p144 = por %p142, %p143
    %p145 = scmp.ne.s32.totalorder %s131, %s132
    %p146 = scmp.eq.s32.totalorder %s20, 1
    %p147 = por %p145, %p146
    %p149 = scmp.ne.s32.totalorder %s132, %s148
    %p150 = scmp.eq.s32.totalorder %s20, 0
    %p151 = por %p149, %p150
    %s152 = ssub.s32 %s14, %s21
    %p153 = scmp.eq.s32.totalorder %s152, 0
    %s155 = sadd.s32 %s154, 1
    %s156 = scalar_select %p153, %s154, %s155
    %p159 = pneg %p153
    %p160 = scmp.eq.s32.totalorder %s14, 1
    %p161 = por %p159, %p160
    %p162 = scmp.ne.s32.totalorder %s154, %s157
    %p163 = scmp.eq.s32.totalorder %s14, 0
    %p164 = por %p162, %p163
    %p165 = scmp.ne.s32.totalorder %s154, %s157
    %p166 = scmp.eq.s32.totalorder %s19, 1
    %p167 = por %p165, %p166
    %p168 = scmp.ne.s32.totalorder %s157, %s158
    %p169 = scmp.eq.s32.totalorder %s19, 0
    %p170 = por %p168, %p169
    %p171 = scmp.ne.s32.totalorder %s157, %s158
    %p172 = scmp.eq.s32.totalorder %s20, 1
    %p173 = por %p171, %p172
    %p175 = scmp.ne.s32.totalorder %s158, %s174
    %p176 = scmp.eq.s32.totalorder %s20, 0
    %p177 = por %p175, %p176
    %s178 = ssub.s32 %s14, %s21
    %p179 = scmp.eq.s32.totalorder %s178, 0
    %s181 = sadd.s32 %s180, 1
    %s182 = scalar_select %p179, %s180, %s181
    %p185 = pneg %p179
    %p186 = scmp.eq.s32.totalorder %s14, 1
    %p187 = por %p185, %p186
    %p188 = scmp.ne.s32.totalorder %s180, %s183
    %p189 = scmp.eq.s32.totalorder %s14, 0
    %p190 = por %p188, %p189
    %p191 = scmp.ne.s32.totalorder %s180, %s183
    %p192 = scmp.eq.s32.totalorder %s19, 1
    %p193 = por %p191, %p192
    %p194 = scmp.ne.s32.totalorder %s183, %s184
    %p195 = scmp.eq.s32.totalorder %s19, 0
    %p196 = por %p194, %p195
    %p197 = scmp.ne.s32.totalorder %s183, %s184
    %p198 = scmp.eq.s32.totalorder %s20, 1
    %p199 = por %p197, %p198
    %p201 = scmp.ne.s32.totalorder %s184, %s200
    %p202 = scmp.eq.s32.totalorder %s20, 0
    %p203 = por %p201, %p202
    %s204 = ssub.s32 %s14, %s21
    %p205 = scmp.eq.s32.totalorder %s204, 0
    %s207 = sadd.s32 %s206, 1
    %s208 = scalar_select %p205, %s206, %s207
    %p211 = pneg %p205
    %p212 = scmp.eq.s32.totalorder %s14, 1
    %p213 = por %p211, %p212
    %p214 = scmp.ne.s32.totalorder %s206, %s209
    %p215 = scmp.eq.s32.totalorder %s14, 0
    %p216 = por %p214, %p215
    %p217 = scmp.ne.s32.totalorder %s206, %s209
    %p218 = scmp.eq.s32.totalorder %s19, 1
    %p219 = por %p217, %p218
    %p220 = scmp.ne.s32.totalorder %s209, %s210
    %p221 = scmp.eq.s32.totalorder %s19, 0
    %p222 = por %p220, %p221
    %p223 = scmp.ne.s32.totalorder %s209, %s210
    %p224 = scmp.eq.s32.totalorder %s20, 1
    %p225 = por %p223, %p224
    %p227 = scmp.ne.s32.totalorder %s210, %s226
    %p228 = scmp.eq.s32.totalorder %s20, 0
    %p229 = por %p227, %p228
    %s230 = ssub.s32 %s14, %s21
    %p231 = scmp.eq.s32.totalorder %s230, 0
    %s233 = sadd.s32 %s232, 1
    %s234 = scalar_select %p231, %s232, %s233
    %p237 = pneg %p231
    %p238 = scmp.eq.s32.totalorder %s14, 1
    %p239 = por %p237, %p238
    %p240 = scmp.ne.s32.totalorder %s232, %s235
    %p241 = scmp.eq.s32.totalorder %s14, 0
    %p242 = por %p240, %p241
    %p243 = scmp.ne.s32.totalorder %s232, %s235
    %p244 = scmp.eq.s32.totalorder %s19, 1
    %p245 = por %p243, %p244
    %p246 = scmp.ne.s32.totalorder %s235, %s236
    %p247 = scmp.eq.s32.totalorder %s19, 0
    %p248 = por %p246, %p247
    %p249 = scmp.ne.s32.totalorder %s235, %s236
    %p250 = scmp.eq.s32.totalorder %s20, 1
    %p251 = por %p249, %p250
    %p253 = scmp.ne.s32.totalorder %s236, %s252
    %p254 = scmp.eq.s32.totalorder %s20, 0
    %p255 = por %p253, %p254
    %p256 = scmp.le.s32.totalorder 1, %s14
    %p257 = scmp.lt.s32.totalorder %s14, 3
    %p258 = pnand %p256, %p257
    %p259 = pneg %p258
    // Predicated region
    $region9: #{temporal3d_forward.9} parent=5 // pred_check
      _
    $region10: #{temporal3d_forward.9} parent=5 // pred_check_branch
      %261 = sbr.rel (%p258) target = $region12
    $region11: #{temporal3d_forward.9} parent=5 // pred_region
      %s262 = ssub.s32 %s14, 1
    $region12: #{temporal3d_forward.9} parent=5 // pred_fallthru
      _
    %p263 = scmp.lt.s32.totalorder %s14, 2
    // Predicated region
    $region13: #{temporal3d_forward.9} parent=5 // pred_check
      %p264 = pneg %p263
    $region14: #{temporal3d_forward.9} parent=5 // pred_check_branch
      %266 = sbr.rel (%p264) target = $region16
    $region15: #{temporal3d_forward.9} parent=5 // pred_region
      // Predicated region
      $region17: #{temporal3d_forward.9} parent=15 // pred_check
        %p267 = pneg %p34
      $region18: #{temporal3d_forward.9} parent=15 // pred_check_branch
        %269 = sbr.rel (%p267) target = $region20
      $region19: #{temporal3d_forward.9} parent=15 // pred_region
        %s270 = smul.u32 32, %s14
        %p271 = scmp.lt.s32.totalorder %s270, 63
        %s272 = scalar_select %p271, %s270, 63
        %s273 = smul.addr %s272, 4
        %s274 = scalar_lea.vmem %s0, %s273
        %s275 = smul.u32 32, %s14
      $region20: #{temporal3d_forward.9} parent=15 // pred_fallthru
        _
      // Predicated region
      $region21: #{temporal3d_forward.9} parent=15 // pred_check
        %p276 = pneg %p60
      $region22: #{temporal3d_forward.9} parent=15 // pred_check_branch
        %278 = sbr.rel (%p276) target = $region24
      $region23: #{temporal3d_forward.9} parent=15 // pred_region
        %s279 = smul.u32 32, %s14
        %p280 = scmp.lt.s32.totalorder %s279, 63
        %s281 = scalar_select %p280, %s279, 63
        %s282 = smul.addr %s281, 4
        %s283 = scalar_lea.vmem %s1, %s282
        %s284 = smul.u32 32, %s14
      $region24: #{temporal3d_forward.9} parent=15 // pred_fallthru
        _
      // Predicated region
      $region25: #{temporal3d_forward.9} parent=15 // pred_check
        %p285 = pneg %p86
      $region26: #{temporal3d_forward.9} parent=15 // pred_check_branch
        %287 = sbr.rel (%p285) target = $region28
      $region27: #{temporal3d_forward.9} parent=15 // pred_region
        %s288 = smul.u32 32, %s14
        %p289 = scmp.lt.s32.totalorder %s288, 63
        %s290 = scalar_select %p289, %s288, 63
        %s291 = smul.addr %s290, 4
        %s292 = scalar_lea.vmem %s2, %s291
        %s293 = smul.u32 32, %s14
      $region28: #{temporal3d_forward.9} parent=15 // pred_fallthru
        _
      // Predicated region
      $region29: #{temporal3d_forward.9} parent=15 // pred_check
        %p294 = pneg %p112
      $region30: #{temporal3d_forward.9} parent=15 // pred_check_branch
        %296 = sbr.rel (%p294) target = $region32
      $region31: #{temporal3d_forward.9} parent=15 // pred_region
        %s297 = smul.u32 32, %s14
        %p298 = scmp.lt.s32.totalorder %s297, 63
        %s299 = scalar_select %p298, %s297, 63
        %s300 = smul.addr %s299, 4
        %s301 = scalar_lea.vmem %s3, %s300
        %s302 = smul.u32 32, %s14
      $region32: #{temporal3d_forward.9} parent=15 // pred_fallthru
        _
      // Predicated region
      $region33: #{temporal3d_forward.9} parent=15 // pred_check
        %p303 = pneg %p138
      $region34: #{temporal3d_forward.9} parent=15 // pred_check_branch
        %305 = sbr.rel (%p303) target = $region36
      $region35: #{temporal3d_forward.9} parent=15 // pred_region
        %s306 = smul.u32 32, %s14
        %p307 = scmp.lt.s32.totalorder %s306, 63
        %s308 = scalar_select %p307, %s306, 63
        %s309 = smul.addr %s308, 4
        %s310 = scalar_lea.vmem %s4, %s309
        %s311 = smul.u32 32, %s14
      $region36: #{temporal3d_forward.9} parent=15 // pred_fallthru
        _
      // Predicated region
      $region37: #{temporal3d_forward.9} parent=15 // pred_check
        %p312 = pneg %p164
      $region38: #{temporal3d_forward.9} parent=15 // pred_check_branch
        %314 = sbr.rel (%p312) target = $region40
      $region39: #{temporal3d_forward.9} parent=15 // pred_region
        %s315 = smul.u32 32, %s14
        %p316 = scmp.lt.s32.totalorder %s315, 63
        %s317 = scalar_select %p316, %s315, 63
        %s318 = smul.addr %s317, 4
        %s319 = scalar_lea.vmem %s5, %s318
        %s320 = smul.u32 32, %s14
      $region40: #{temporal3d_forward.9} parent=15 // pred_fallthru
        _
      // Predicated region
      $region41: #{temporal3d_forward.9} parent=15 // pred_check
        %p321 = pneg %p190
      $region42: #{temporal3d_forward.9} parent=15 // pred_check_branch
        %323 = sbr.rel (%p321) target = $region44
      $region43: #{temporal3d_forward.9} parent=15 // pred_region
        %s324 = smul.u32 32, %s14
        %p325 = scmp.lt.s32.totalorder %s324, 63
        %s326 = scalar_select %p325, %s324, 63
        %s327 = smul.addr %s326, 4
        %s328 = scalar_lea.vmem %s6, %s327
        %s329 = smul.u32 32, %s14
      $region44: #{temporal3d_forward.9} parent=15 // pred_fallthru
        _
      // Predicated region
      $region45: #{temporal3d_forward.9} parent=15 // pred_check
        %p330 = pneg %p216
      $region46: #{temporal3d_forward.9} parent=15 // pred_check_branch
        %332 = sbr.rel (%p330) target = $region48
      $region47: #{temporal3d_forward.9} parent=15 // pred_region
        %s333 = smul.u32 32, %s14
        %p334 = scmp.lt.s32.totalorder %s333, 63
        %s335 = scalar_select %p334, %s333, 63
        %s336 = smul.addr %s335, 4
        %s337 = scalar_lea.vmem %s7, %s336
        %s338 = smul.u32 32, %s14
      $region48: #{temporal3d_forward.9} parent=15 // pred_fallthru
        _
    $region16: #{temporal3d_forward.9} parent=5 // pred_fallthru
      _
    %p339 = scmp.le.s32.totalorder 1, %s14
    %p340 = scmp.lt.s32.totalorder %s14, 3
    %p341 = pnand %p339, %p340
    %p342 = pneg %p341
    // Predicated region
    $region49: #{temporal3d_forward.9} parent=5 // pred_check
      _
    $region50: #{temporal3d_forward.9} parent=5 // pred_check_branch
      %344 = sbr.rel (%p341) target = $region52
    $region51: #{temporal3d_forward.9} parent=5 // pred_region
      %s345 = ssub.s32 %s14, 1
      %s346 = smul.u32 32, %s19
      %p347 = scmp.lt.s32.totalorder %s346, 63
      %s348 = scalar_select %p347, %s346, 63
      %s349 = smul.addr %s348, 4
      %s350 = scalar_lea.vmem %s0, %s349
      %p351 = pneg %p40
      %p352 = pneg %p37
      %s353 = smul.u32 32, %s19
      %p354 = scmp.lt.s32.totalorder %s353, 63
      %s355 = scalar_select %p354, %s353, 63
      %s356 = smul.addr %s355, 4
      %s357 = scalar_lea.vmem %s1, %s356
      %p358 = pneg %p66
      %p359 = pneg %p63
      %s360 = smul.u32 32, %s19
      %p361 = scmp.lt.s32.totalorder %s360, 63
      %s362 = scalar_select %p361, %s360, 63
      %s363 = smul.addr %s362, 4
      %s364 = scalar_lea.vmem %s2, %s363
      %p365 = pneg %p92
      %p366 = pneg %p89
      %s367 = smul.u32 32, %s19
      %p368 = scmp.lt.s32.totalorder %s367, 63
      %s369 = scalar_select %p368, %s367, 63
      %s370 = smul.addr %s369, 4
      %s371 = scalar_lea.vmem %s3, %s370
      %p372 = pneg %p118
      %p373 = pneg %p115
      %s374 = smul.u32 32, %s19
      %p375 = scmp.lt.s32.totalorder %s374, 63
      %s376 = scalar_select %p375, %s374, 63
      %s377 = smul.addr %s376, 4
      %s378 = scalar_lea.vmem %s4, %s377
      %p379 = pneg %p144
      %p380 = pneg %p141
      %s381 = smul.u32 32, %s19
      %p382 = scmp.lt.s32.totalorder %s381, 63
      %s383 = scalar_select %p382, %s381, 63
      %s384 = smul.addr %s383, 4
      %s385 = scalar_lea.vmem %s5, %s384
      %p386 = pneg %p170
      %p387 = pneg %p167
      %s388 = smul.u32 32, %s19
      %p389 = scmp.lt.s32.totalorder %s388, 63
      %s390 = scalar_select %p389, %s388, 63
      %s391 = smul.addr %s390, 4
      %s392 = scalar_lea.vmem %s6, %s391
      %p393 = pneg %p196
      %p394 = pneg %p193
      %s395 = smul.u32 32, %s19
      %p396 = scmp.lt.s32.totalorder %s395, 63
      %s397 = scalar_select %p396, %s395, 63
      %s398 = smul.addr %s397, 4
      %s399 = scalar_lea.vmem %s7, %s398
      %p400 = pneg %p222
      %p401 = pneg %p219
      %p402 = pneg %p248
      %p403 = pneg %p245
      %s404 = smul.u32 32, %s19
      %p405 = scmp.lt.s32.totalorder %s404, 63
      %s406 = scalar_select %p405, %s404, 63
      %s407 = smul.addr %s406, 4
      %s408 = scalar_lea.vmem %s8, %s407
      %s409 = smul.u32 32, %s19
      %p410 = scmp.lt.s32.totalorder %s409, 63
      %s411 = scalar_select %p410, %s409, 63
      %s412 = smul.addr %s411, 4
      %s413 = scalar_lea.vmem %s0, %s412
      %s414 = smul.u32 32, %s19
      %s415 = smul.u32 32, %s19
      %p416 = scmp.lt.s32.totalorder %s415, 63
      %s417 = scalar_select %p416, %s415, 63
      %s418 = smul.addr %s417, 4
      %s419 = scalar_lea.vmem %s1, %s418
      %s420 = smul.u32 32, %s19
      %s421 = smul.u32 32, %s19
      %p422 = scmp.lt.s32.totalorder %s421, 63
      %s423 = scalar_select %p422, %s421, 63
      %s424 = smul.addr %s423, 4
      %s425 = scalar_lea.vmem %s2, %s424
      %s426 = smul.u32 32, %s19
      %s427 = smul.u32 32, %s19
      %p428 = scmp.lt.s32.totalorder %s427, 63
      %s429 = scalar_select %p428, %s427, 63
      %s430 = smul.addr %s429, 4
      %s431 = scalar_lea.vmem %s3, %s430
      %s432 = smul.u32 32, %s19
      %s433 = smul.u32 32, %s19
      %p434 = scmp.lt.s32.totalorder %s433, 63
      %s435 = scalar_select %p434, %s433, 63
      %s436 = smul.addr %s435, 4
      %s437 = scalar_lea.vmem %s4, %s436
      %s438 = smul.u32 32, %s19
      %s439 = smul.u32 32, %s19
      %p440 = scmp.lt.s32.totalorder %s439, 63
      %s441 = scalar_select %p440, %s439, 63
      %s442 = smul.addr %s441, 4
      %s443 = scalar_lea.vmem %s5, %s442
      %s444 = smul.u32 32, %s19
      %s445 = smul.u32 32, %s19
      %p446 = scmp.lt.s32.totalorder %s445, 63
      %s447 = scalar_select %p446, %s445, 63
      %s448 = smul.addr %s447, 4
      %s449 = scalar_lea.vmem %s6, %s448
      %s450 = smul.u32 32, %s19
      %s451 = smul.u32 32, %s19
      %p452 = scmp.lt.s32.totalorder %s451, 63
      %s453 = scalar_select %p452, %s451, 63
      %s454 = smul.addr %s453, 4
      %s455 = scalar_lea.vmem %s7, %s454
      %s456 = smul.u32 32, %s19
      %s457 = smul.u32 32, %s19
      %p458 = scmp.lt.s32.totalorder %s457, 63
      %s459 = scalar_select %p458, %s457, 63
      %s460 = smul.addr %s459, 4
      %s461 = scalar_lea.vmem %s8, %s460
      %s462 = smul.u32 32, %s19
      %v463 = vld [vmem:[%s413] sm:$0xf]
      %v464 = vld [vmem:[%s413 + $0x4] sm:$0xf]
      %v465 = vld [vmem:[%s413 + $0x8] sm:$0xf]
      %v466 = vld [vmem:[%s413 + $0xc] sm:$0xf]
      %v467 = vld [vmem:[%s413 + $0x10] sm:$0xf]
      %v468 = vld [vmem:[%s413 + $0x14] sm:$0xf]
      %v469 = vld [vmem:[%s413 + $0x18] sm:$0xf]
      %v470 = vld [vmem:[%s413 + $0x1c] sm:$0xf]
      %v471 = vld [vmem:[%s413 + $0x20] sm:$0xf]
      %v472 = vld [vmem:[%s413 + $0x24] sm:$0xf]
      %v473 = vld [vmem:[%s413 + $0x28] sm:$0xf]
      %v474 = vld [vmem:[%s413 + $0x2c] sm:$0xf]
      %v475 = vld [vmem:[%s413 + $0x30] sm:$0xf]
      %v476 = vld [vmem:[%s413 + $0x34] sm:$0xf]
      %v477 = vld [vmem:[%s413 + $0x38] sm:$0xf]
      %v478 = vld [vmem:[%s413 + $0x3c] sm:$0xf]
      %v479 = vld [vmem:[%s413 + $0x40] sm:$0xf]
      %v480 = vld [vmem:[%s413 + $0x44] sm:$0xf]
      %v481 = vld [vmem:[%s413 + $0x48] sm:$0xf]
      %v482 = vld [vmem:[%s413 + $0x4c] sm:$0xf]
      %v483 = vld [vmem:[%s413 + $0x50] sm:$0xf]
      %v484 = vld [vmem:[%s413 + $0x54] sm:$0xf]
      %v485 = vld [vmem:[%s413 + $0x58] sm:$0xf]
      %v486 = vld [vmem:[%s413 + $0x5c] sm:$0xf]
      %v487 = vld [vmem:[%s413 + $0x60] sm:$0xf]
      %v488 = vld [vmem:[%s413 + $0x64] sm:$0xf]
      %v489 = vld [vmem:[%s413 + $0x68] sm:$0xf]
      %v490 = vld [vmem:[%s413 + $0x6c] sm:$0xf]
      %v491 = vld [vmem:[%s413 + $0x70] sm:$0xf]
      %v492 = vld [vmem:[%s413 + $0x74] sm:$0xf]
      %v493 = vld [vmem:[%s413 + $0x78] sm:$0xf]
      %v494 = vld [vmem:[%s413 + $0x7c] sm:$0xf]
      %v495 = vunpack.c.l.bf16 %v463
      %v496 = vunpack.c.l.bf16 %v464
      %v497 = vunpack.c.l.bf16 %v465
      %v498 = vunpack.c.l.bf16 %v466
      %v499 = vunpack.c.l.bf16 %v467
      %v500 = vunpack.c.l.bf16 %v468
      %v501 = vunpack.c.l.bf16 %v469
      %v502 = vunpack.c.l.bf16 %v470
      %v503 = vunpack.c.l.bf16 %v471
      %v504 = vunpack.c.l.bf16 %v472
      %v505 = vunpack.c.l.bf16 %v473
      %v506 = vunpack.c.l.bf16 %v474
      %v507 = vunpack.c.l.bf16 %v475
      %v508 = vunpack.c.l.bf16 %v476
      %v509 = vunpack.c.l.bf16 %v477
      %v510 = vunpack.c.l.bf16 %v478
      %v511 = vunpack.c.l.bf16 %v479
      %v512 = vunpack.c.l.bf16 %v480
      %v513 = vunpack.c.l.bf16 %v481
      %v514 = vunpack.c.l.bf16 %v482
      %v515 = vunpack.c.l.bf16 %v483
      %v516 = vunpack.c.l.bf16 %v484
      %v517 = vunpack.c.l.bf16 %v485
      %v518 = vunpack.c.l.bf16 %v486
      %v519 = vunpack.c.l.bf16 %v487
      %v520 = vunpack.c.l.bf16 %v488
      %v521 = vunpack.c.l.bf16 %v489
      %v522 = vunpack.c.l.bf16 %v490
      %v523 = vunpack.c.l.bf16 %v491
      %v524 = vunpack.c.l.bf16 %v492
      %v525 = vunpack.c.l.bf16 %v493
      %v526 = vunpack.c.l.bf16 %v494
      %v527 = vld [vmem:[%s419] sm:$0xf]
      %v528 = vld [vmem:[%s419 + $0x4] sm:$0xf]
      %v529 = vld [vmem:[%s419 + $0x8] sm:$0xf]
      %v530 = vld [vmem:[%s419 + $0xc] sm:$0xf]
      %v531 = vld [vmem:[%s419 + $0x10] sm:$0xf]
      %v532 = vld [vmem:[%s419 + $0x14] sm:$0xf]
      %v533 = vld [vmem:[%s419 + $0x18] sm:$0xf]
      %v534 = vld [vmem:[%s419 + $0x1c] sm:$0xf]
      %v535 = vld [vmem:[%s419 + $0x20] sm:$0xf]
      %v536 = vld [vmem:[%s419 + $0x24] sm:$0xf]
      %v537 = vld [vmem:[%s419 + $0x28] sm:$0xf]
      %v538 = vld [vmem:[%s419 + $0x2c] sm:$0xf]
      %v539 = vld [vmem:[%s419 + $0x30] sm:$0xf]
      %v540 = vld [vmem:[%s419 + $0x34] sm:$0xf]
      %v541 = vld [vmem:[%s419 + $0x38] sm:$0xf]
      %v542 = vld [vmem:[%s419 + $0x3c] sm:$0xf]
      %v543 = vld [vmem:[%s419 + $0x40] sm:$0xf]
      %v544 = vld [vmem:[%s419 + $0x44] sm:$0xf]
      %v545 = vld [vmem:[%s419 + $0x48] sm:$0xf]
      %v546 = vld [vmem:[%s419 + $0x4c] sm:$0xf]
      %v547 = vld [vmem:[%s419 + $0x50] sm:$0xf]
      %v548 = vld [vmem:[%s419 + $0x54] sm:$0xf]
      %v549 = vld [vmem:[%s419 + $0x58] sm:$0xf]
      %v550 = vld [vmem:[%s419 + $0x5c] sm:$0xf]
      %v551 = vld [vmem:[%s419 + $0x60] sm:$0xf]
      %v552 = vld [vmem:[%s419 + $0x64] sm:$0xf]
      %v553 = vld [vmem:[%s419 + $0x68] sm:$0xf]
      %v554 = vld [vmem:[%s419 + $0x6c] sm:$0xf]
      %v555 = vld [vmem:[%s419 + $0x70] sm:$0xf]
      %v556 = vld [vmem:[%s419 + $0x74] sm:$0xf]
      %v557 = vld [vmem:[%s419 + $0x78] sm:$0xf]
      %v558 = vld [vmem:[%s419 + $0x7c] sm:$0xf]
      %v559 = vunpack.c.l.bf16 %v527
      %v560 = vunpack.c.l.bf16 %v528
      %v561 = vunpack.c.l.bf16 %v529
      %v562 = vunpack.c.l.bf16 %v530
      %v563 = vunpack.c.l.bf16 %v531
      %v564 = vunpack.c.l.bf16 %v532
      %v565 = vunpack.c.l.bf16 %v533
      %v566 = vunpack.c.l.bf16 %v534
      %v567 = vunpack.c.l.bf16 %v535
      %v568 = vunpack.c.l.bf16 %v536
      %v569 = vunpack.c.l.bf16 %v537
      %v570 = vunpack.c.l.bf16 %v538
      %v571 = vunpack.c.l.bf16 %v539
      %v572 = vunpack.c.l.bf16 %v540
      %v573 = vunpack.c.l.bf16 %v541
      %v574 = vunpack.c.l.bf16 %v542
      %v575 = vunpack.c.l.bf16 %v543
      %v576 = vunpack.c.l.bf16 %v544
      %v577 = vunpack.c.l.bf16 %v545
      %v578 = vunpack.c.l.bf16 %v546
      %v579 = vunpack.c.l.bf16 %v547
      %v580 = vunpack.c.l.bf16 %v548
      %v581 = vunpack.c.l.bf16 %v549
      %v582 = vunpack.c.l.bf16 %v550
      %v583 = vunpack.c.l.bf16 %v551
      %v584 = vunpack.c.l.bf16 %v552
      %v585 = vunpack.c.l.bf16 %v553
      %v586 = vunpack.c.l.bf16 %v554
      %v587 = vunpack.c.l.bf16 %v555
      %v588 = vunpack.c.l.bf16 %v556
      %v589 = vunpack.c.l.bf16 %v557
      %v590 = vunpack.c.l.bf16 %v558
      %v591 = vmax.f32 %v495, %v559
      %v592 = vmax.f32 %v496, %v560
      %v593 = vmax.f32 %v497, %v561
      %v594 = vmax.f32 %v498, %v562
      %v595 = vmax.f32 %v499, %v563
      %v596 = vmax.f32 %v500, %v564
      %v597 = vmax.f32 %v501, %v565
      %v598 = vmax.f32 %v502, %v566
      %v599 = vmax.f32 %v503, %v567
      %v600 = vmax.f32 %v504, %v568
      %v601 = vmax.f32 %v505, %v569
      %v602 = vmax.f32 %v506, %v570
      %v603 = vmax.f32 %v507, %v571
      %v604 = vmax.f32 %v508, %v572
      %v605 = vmax.f32 %v509, %v573
      %v606 = vmax.f32 %v510, %v574
      %v607 = vmax.f32 %v511, %v575
      %v608 = vmax.f32 %v512, %v576
      %v609 = vmax.f32 %v513, %v577
      %v610 = vmax.f32 %v514, %v578
      %v611 = vmax.f32 %v515, %v579
      %v612 = vmax.f32 %v516, %v580
      %v613 = vmax.f32 %v517, %v581
      %v614 = vmax.f32 %v518, %v582
      %v615 = vmax.f32 %v519, %v583
      %v616 = vmax.f32 %v520, %v584
      %v617 = vmax.f32 %v521, %v585
      %v618 = vmax.f32 %v522, %v586
      %v619 = vmax.f32 %v523, %v587
      %v620 = vmax.f32 %v524, %v588
      %v621 = vmax.f32 %v525, %v589
      %v622 = vmax.f32 %v526, %v590
      %v623 = vld [vmem:[%s425] sm:$0xf]
      %v624 = vld [vmem:[%s425 + $0x4] sm:$0xf]
      %v625 = vld [vmem:[%s425 + $0x8] sm:$0xf]
      %v626 = vld [vmem:[%s425 + $0xc] sm:$0xf]
      %v627 = vld [vmem:[%s425 + $0x10] sm:$0xf]
      %v628 = vld [vmem:[%s425 + $0x14] sm:$0xf]
      %v629 = vld [vmem:[%s425 + $0x18] sm:$0xf]
      %v630 = vld [vmem:[%s425 + $0x1c] sm:$0xf]
      %v631 = vld [vmem:[%s425 + $0x20] sm:$0xf]
      %v632 = vld [vmem:[%s425 + $0x24] sm:$0xf]
      %v633 = vld [vmem:[%s425 + $0x28] sm:$0xf]
      %v634 = vld [vmem:[%s425 + $0x2c] sm:$0xf]
      %v635 = vld [vmem:[%s425 + $0x30] sm:$0xf]
      %v636 = vld [vmem:[%s425 + $0x34] sm:$0xf]
      %v637 = vld [vmem:[%s425 + $0x38] sm:$0xf]
      %v638 = vld [vmem:[%s425 + $0x3c] sm:$0xf]
      %v639 = vld [vmem:[%s425 + $0x40] sm:$0xf]
      %v640 = vld [vmem:[%s425 + $0x44] sm:$0xf]
      %v641 = vld [vmem:[%s425 + $0x48] sm:$0xf]
      %v642 = vld [vmem:[%s425 + $0x4c] sm:$0xf]
      %v643 = vld [vmem:[%s425 + $0x50] sm:$0xf]
      %v644 = vld [vmem:[%s425 + $0x54] sm:$0xf]
      %v645 = vld [vmem:[%s425 + $0x58] sm:$0xf]
      %v646 = vld [vmem:[%s425 + $0x5c] sm:$0xf]
      %v647 = vld [vmem:[%s425 + $0x60] sm:$0xf]
      %v648 = vld [vmem:[%s425 + $0x64] sm:$0xf]
      %v649 = vld [vmem:[%s425 + $0x68] sm:$0xf]
      %v650 = vld [vmem:[%s425 + $0x6c] sm:$0xf]
      %v651 = vld [vmem:[%s425 + $0x70] sm:$0xf]
      %v652 = vld [vmem:[%s425 + $0x74] sm:$0xf]
      %v653 = vld [vmem:[%s425 + $0x78] sm:$0xf]
      %v654 = vld [vmem:[%s425 + $0x7c] sm:$0xf]
      %v655 = vunpack.c.l.bf16 %v623
      %v656 = vunpack.c.l.bf16 %v624
      %v657 = vunpack.c.l.bf16 %v625
      %v658 = vunpack.c.l.bf16 %v626
      %v659 = vunpack.c.l.bf16 %v627
      %v660 = vunpack.c.l.bf16 %v628
      %v661 = vunpack.c.l.bf16 %v629
      %v662 = vunpack.c.l.bf16 %v630
      %v663 = vunpack.c.l.bf16 %v631
      %v664 = vunpack.c.l.bf16 %v632
      %v665 = vunpack.c.l.bf16 %v633
      %v666 = vunpack.c.l.bf16 %v634
      %v667 = vunpack.c.l.bf16 %v635
      %v668 = vunpack.c.l.bf16 %v636
      %v669 = vunpack.c.l.bf16 %v637
      %v670 = vunpack.c.l.bf16 %v638
      %v671 = vunpack.c.l.bf16 %v639
      %v672 = vunpack.c.l.bf16 %v640
      %v673 = vunpack.c.l.bf16 %v641
      %v674 = vunpack.c.l.bf16 %v642
      %v675 = vunpack.c.l.bf16 %v643
      %v676 = vunpack.c.l.bf16 %v644
      %v677 = vunpack.c.l.bf16 %v645
      %v678 = vunpack.c.l.bf16 %v646
      %v679 = vunpack.c.l.bf16 %v647
      %v680 = vunpack.c.l.bf16 %v648
      %v681 = vunpack.c.l.bf16 %v649
      %v682 = vunpack.c.l.bf16 %v650
      %v683 = vunpack.c.l.bf16 %v651
      %v684 = vunpack.c.l.bf16 %v652
      %v685 = vunpack.c.l.bf16 %v653
      %v686 = vunpack.c.l.bf16 %v654
      %v687 = vld [vmem:[%s431] sm:$0xf]
      %v688 = vld [vmem:[%s431 + $0x4] sm:$0xf]
      %v689 = vld [vmem:[%s431 + $0x8] sm:$0xf]
      %v690 = vld [vmem:[%s431 + $0xc] sm:$0xf]
      %v691 = vld [vmem:[%s431 + $0x10] sm:$0xf]
      %v692 = vld [vmem:[%s431 + $0x14] sm:$0xf]
      %v693 = vld [vmem:[%s431 + $0x18] sm:$0xf]
      %v694 = vld [vmem:[%s431 + $0x1c] sm:$0xf]
      %v695 = vld [vmem:[%s431 + $0x20] sm:$0xf]
      %v696 = vld [vmem:[%s431 + $0x24] sm:$0xf]
      %v697 = vld [vmem:[%s431 + $0x28] sm:$0xf]
      %v698 = vld [vmem:[%s431 + $0x2c] sm:$0xf]
      %v699 = vld [vmem:[%s431 + $0x30] sm:$0xf]
      %v700 = vld [vmem:[%s431 + $0x34] sm:$0xf]
      %v701 = vld [vmem:[%s431 + $0x38] sm:$0xf]
      %v702 = vld [vmem:[%s431 + $0x3c] sm:$0xf]
      %v703 = vld [vmem:[%s431 + $0x40] sm:$0xf]
      %v704 = vld [vmem:[%s431 + $0x44] sm:$0xf]
      %v705 = vld [vmem:[%s431 + $0x48] sm:$0xf]
      %v706 = vld [vmem:[%s431 + $0x4c] sm:$0xf]
      %v707 = vld [vmem:[%s431 + $0x50] sm:$0xf]
      %v708 = vld [vmem:[%s431 + $0x54] sm:$0xf]
      %v709 = vld [vmem:[%s431 + $0x58] sm:$0xf]
      %v710 = vld [vmem:[%s431 + $0x5c] sm:$0xf]
      %v711 = vld [vmem:[%s431 + $0x60] sm:$0xf]
      %v712 = vld [vmem:[%s431 + $0x64] sm:$0xf]
      %v713 = vld [vmem:[%s431 + $0x68] sm:$0xf]
      %v714 = vld [vmem:[%s431 + $0x6c] sm:$0xf]
      %v715 = vld [vmem:[%s431 + $0x70] sm:$0xf]
      %v716 = vld [vmem:[%s431 + $0x74] sm:$0xf]
      %v717 = vld [vmem:[%s431 + $0x78] sm:$0xf]
      %v718 = vld [vmem:[%s431 + $0x7c] sm:$0xf]
      %v719 = vunpack.c.l.bf16 %v687
      %v720 = vunpack.c.l.bf16 %v688
      %v721 = vunpack.c.l.bf16 %v689
      %v722 = vunpack.c.l.bf16 %v690
      %v723 = vunpack.c.l.bf16 %v691
      %v724 = vunpack.c.l.bf16 %v692
      %v725 = vunpack.c.l.bf16 %v693
      %v726 = vunpack.c.l.bf16 %v694
      %v727 = vunpack.c.l.bf16 %v695
      %v728 = vunpack.c.l.bf16 %v696
      %v729 = vunpack.c.l.bf16 %v697
      %v730 = vunpack.c.l.bf16 %v698
      %v731 = vunpack.c.l.bf16 %v699
      %v732 = vunpack.c.l.bf16 %v700
      %v733 = vunpack.c.l.bf16 %v701
      %v734 = vunpack.c.l.bf16 %v702
      %v735 = vunpack.c.l.bf16 %v703
      %v736 = vunpack.c.l.bf16 %v704
      %v737 = vunpack.c.l.bf16 %v705
      %v738 = vunpack.c.l.bf16 %v706
      %v739 = vunpack.c.l.bf16 %v707
      %v740 = vunpack.c.l.bf16 %v708
      %v741 = vunpack.c.l.bf16 %v709
      %v742 = vunpack.c.l.bf16 %v710
      %v743 = vunpack.c.l.bf16 %v711
      %v744 = vunpack.c.l.bf16 %v712
      %v745 = vunpack.c.l.bf16 %v713
      %v746 = vunpack.c.l.bf16 %v714
      %v747 = vunpack.c.l.bf16 %v715
      %v748 = vunpack.c.l.bf16 %v716
      %v749 = vunpack.c.l.bf16 %v717
      %v750 = vunpack.c.l.bf16 %v718
      %v751 = vmax.f32 %v655, %v719
      %v752 = vmax.f32 %v656, %v720
      %v753 = vmax.f32 %v657, %v721
      %v754 = vmax.f32 %v658, %v722
      %v755 = vmax.f32 %v659, %v723
      %v756 = vmax.f32 %v660, %v724
      %v757 = vmax.f32 %v661, %v725
      %v758 = vmax.f32 %v662, %v726
      %v759 = vmax.f32 %v663, %v727
      %v760 = vmax.f32 %v664, %v728
      %v761 = vmax.f32 %v665, %v729
      %v762 = vmax.f32 %v666, %v730
      %v763 = vmax.f32 %v667, %v731
      %v764 = vmax.f32 %v668, %v732
      %v765 = vmax.f32 %v669, %v733
      %v766 = vmax.f32 %v670, %v734
      %v767 = vmax.f32 %v671, %v735
      %v768 = vmax.f32 %v672, %v736
      %v769 = vmax.f32 %v673, %v737
      %v770 = vmax.f32 %v674, %v738
      %v771 = vmax.f32 %v675, %v739
      %v772 = vmax.f32 %v676, %v740
      %v773 = vmax.f32 %v677, %v741
      %v774 = vmax.f32 %v678, %v742
      %v775 = vmax.f32 %v679, %v743
      %v776 = vmax.f32 %v680, %v744
      %v777 = vmax.f32 %v681, %v745
      %v778 = vmax.f32 %v682, %v746
      %v779 = vmax.f32 %v683, %v747
      %v780 = vmax.f32 %v684, %v748
      %v781 = vmax.f32 %v685, %v749
      %v782 = vmax.f32 %v686, %v750
      %v783 = vmax.f32 %v591, %v751
      %v784 = vmax.f32 %v592, %v752
      %v785 = vmax.f32 %v593, %v753
      %v786 = vmax.f32 %v594, %v754
      %v787 = vmax.f32 %v595, %v755
      %v788 = vmax.f32 %v596, %v756
      %v789 = vmax.f32 %v597, %v757
      %v790 = vmax.f32 %v598, %v758
      %v791 = vmax.f32 %v599, %v759
      %v792 = vmax.f32 %v600, %v760
      %v793 = vmax.f32 %v601, %v761
      %v794 = vmax.f32 %v602, %v762
      %v795 = vmax.f32 %v603, %v763
      %v796 = vmax.f32 %v604, %v764
      %v797 = vmax.f32 %v605, %v765
      %v798 = vmax.f32 %v606, %v766
      %v799 = vmax.f32 %v607, %v767
      %v800 = vmax.f32 %v608, %v768
      %v801 = vmax.f32 %v609, %v769
      %v802 = vmax.f32 %v610, %v770
      %v803 = vmax.f32 %v611, %v771
      %v804 = vmax.f32 %v612, %v772
      %v805 = vmax.f32 %v613, %v773
      %v806 = vmax.f32 %v614, %v774
      %v807 = vmax.f32 %v615, %v775
      %v808 = vmax.f32 %v616, %v776
      %v809 = vmax.f32 %v617, %v777
      %v810 = vmax.f32 %v618, %v778
      %v811 = vmax.f32 %v619, %v779
      %v812 = vmax.f32 %v620, %v780
      %v813 = vmax.f32 %v621, %v781
      %v814 = vmax.f32 %v622, %v782
      %v815 = vld [vmem:[%s437] sm:$0xf]
      %v816 = vld [vmem:[%s437 + $0x4] sm:$0xf]
      %v817 = vld [vmem:[%s437 + $0x8] sm:$0xf]
      %v818 = vld [vmem:[%s437 + $0xc] sm:$0xf]
      %v819 = vld [vmem:[%s437 + $0x10] sm:$0xf]
      %v820 = vld [vmem:[%s437 + $0x14] sm:$0xf]
      %v821 = vld [vmem:[%s437 + $0x18] sm:$0xf]
      %v822 = vld [vmem:[%s437 + $0x1c] sm:$0xf]
      %v823 = vld [vmem:[%s437 + $0x20] sm:$0xf]
      %v824 = vld [vmem:[%s437 + $0x24] sm:$0xf]
      %v825 = vld [vmem:[%s437 + $0x28] sm:$0xf]
      %v826 = vld [vmem:[%s437 + $0x2c] sm:$0xf]
      %v827 = vld [vmem:[%s437 + $0x30] sm:$0xf]
      %v828 = vld [vmem:[%s437 + $0x34] sm:$0xf]
      %v829 = vld [vmem:[%s437 + $0x38] sm:$0xf]
      %v830 = vld [vmem:[%s437 + $0x3c] sm:$0xf]
      %v831 = vld [vmem:[%s437 + $0x40] sm:$0xf]
      %v832 = vld [vmem:[%s437 + $0x44] sm:$0xf]
      %v833 = vld [vmem:[%s437 + $0x48] sm:$0xf]
      %v834 = vld [vmem:[%s437 + $0x4c] sm:$0xf]
      %v835 = vld [vmem:[%s437 + $0x50] sm:$0xf]
      %v836 = vld [vmem:[%s437 + $0x54] sm:$0xf]
      %v837 = vld [vmem:[%s437 + $0x58] sm:$0xf]
      %v838 = vld [vmem:[%s437 + $0x5c] sm:$0xf]
      %v839 = vld [vmem:[%s437 + $0x60] sm:$0xf]
      %v840 = vld [vmem:[%s437 + $0x64] sm:$0xf]
      %v841 = vld [vmem:[%s437 + $0x68] sm:$0xf]
      %v842 = vld [vmem:[%s437 + $0x6c] sm:$0xf]
      %v843 = vld [vmem:[%s437 + $0x70] sm:$0xf]
      %v844 = vld [vmem:[%s437 + $0x74] sm:$0xf]
      %v845 = vld [vmem:[%s437 + $0x78] sm:$0xf]
      %v846 = vld [vmem:[%s437 + $0x7c] sm:$0xf]
      %v847 = vunpack.c.l.bf16 %v815
      %v848 = vunpack.c.l.bf16 %v816
      %v849 = vunpack.c.l.bf16 %v817
      %v850 = vunpack.c.l.bf16 %v818
      %v851 = vunpack.c.l.bf16 %v819
      %v852 = vunpack.c.l.bf16 %v820
      %v853 = vunpack.c.l.bf16 %v821
      %v854 = vunpack.c.l.bf16 %v822
      %v855 = vunpack.c.l.bf16 %v823
      %v856 = vunpack.c.l.bf16 %v824
      %v857 = vunpack.c.l.bf16 %v825
      %v858 = vunpack.c.l.bf16 %v826
      %v859 = vunpack.c.l.bf16 %v827
      %v860 = vunpack.c.l.bf16 %v828
      %v861 = vunpack.c.l.bf16 %v829
      %v862 = vunpack.c.l.bf16 %v830
      %v863 = vunpack.c.l.bf16 %v831
      %v864 = vunpack.c.l.bf16 %v832
      %v865 = vunpack.c.l.bf16 %v833
      %v866 = vunpack.c.l.bf16 %v834
      %v867 = vunpack.c.l.bf16 %v835
      %v868 = vunpack.c.l.bf16 %v836
      %v869 = vunpack.c.l.bf16 %v837
      %v870 = vunpack.c.l.bf16 %v838
      %v871 = vunpack.c.l.bf16 %v839
      %v872 = vunpack.c.l.bf16 %v840
      %v873 = vunpack.c.l.bf16 %v841
      %v874 = vunpack.c.l.bf16 %v842
      %v875 = vunpack.c.l.bf16 %v843
      %v876 = vunpack.c.l.bf16 %v844
      %v877 = vunpack.c.l.bf16 %v845
      %v878 = vunpack.c.l.bf16 %v846
      %v879 = vld [vmem:[%s443] sm:$0xf]
      %v880 = vld [vmem:[%s443 + $0x4] sm:$0xf]
      %v881 = vld [vmem:[%s443 + $0x8] sm:$0xf]
      %v882 = vld [vmem:[%s443 + $0xc] sm:$0xf]
      %v883 = vld [vmem:[%s443 + $0x10] sm:$0xf]
      %v884 = vld [vmem:[%s443 + $0x14] sm:$0xf]
      %v885 = vld [vmem:[%s443 + $0x18] sm:$0xf]
      %v886 = vld [vmem:[%s443 + $0x1c] sm:$0xf]
      %v887 = vld [vmem:[%s443 + $0x20] sm:$0xf]
      %v888 = vld [vmem:[%s443 + $0x24] sm:$0xf]
      %v889 = vld [vmem:[%s443 + $0x28] sm:$0xf]
      %v890 = vld [vmem:[%s443 + $0x2c] sm:$0xf]
      %v891 = vld [vmem:[%s443 + $0x30] sm:$0xf]
      %v892 = vld [vmem:[%s443 + $0x34] sm:$0xf]
      %v893 = vld [vmem:[%s443 + $0x38] sm:$0xf]
      %v894 = vld [vmem:[%s443 + $0x3c] sm:$0xf]
      %v895 = vld [vmem:[%s443 + $0x40] sm:$0xf]
      %v896 = vld [vmem:[%s443 + $0x44] sm:$0xf]
      %v897 = vld [vmem:[%s443 + $0x48] sm:$0xf]
      %v898 = vld [vmem:[%s443 + $0x4c] sm:$0xf]
      %v899 = vld [vmem:[%s443 + $0x50] sm:$0xf]
      %v900 = vld [vmem:[%s443 + $0x54] sm:$0xf]
      %v901 = vld [vmem:[%s443 + $0x58] sm:$0xf]
      %v902 = vld [vmem:[%s443 + $0x5c] sm:$0xf]
      %v903 = vld [vmem:[%s443 + $0x60] sm:$0xf]
      %v904 = vld [vmem:[%s443 + $0x64] sm:$0xf]
      %v905 = vld [vmem:[%s443 + $0x68] sm:$0xf]
      %v906 = vld [vmem:[%s443 + $0x6c] sm:$0xf]
      %v907 = vld [vmem:[%s443 + $0x70] sm:$0xf]
      %v908 = vld [vmem:[%s443 + $0x74] sm:$0xf]
      %v909 = vld [vmem:[%s443 + $0x78] sm:$0xf]
      %v910 = vld [vmem:[%s443 + $0x7c] sm:$0xf]
      %v911 = vunpack.c.l.bf16 %v879
      %v912 = vunpack.c.l.bf16 %v880
      %v913 = vunpack.c.l.bf16 %v881
      %v914 = vunpack.c.l.bf16 %v882
      %v915 = vunpack.c.l.bf16 %v883
      %v916 = vunpack.c.l.bf16 %v884
      %v917 = vunpack.c.l.bf16 %v885
      %v918 = vunpack.c.l.bf16 %v886
      %v919 = vunpack.c.l.bf16 %v887
      %v920 = vunpack.c.l.bf16 %v888
      %v921 = vunpack.c.l.bf16 %v889
      %v922 = vunpack.c.l.bf16 %v890
      %v923 = vunpack.c.l.bf16 %v891
      %v924 = vunpack.c.l.bf16 %v892
      %v925 = vunpack.c.l.bf16 %v893
      %v926 = vunpack.c.l.bf16 %v894
      %v927 = vunpack.c.l.bf16 %v895
      %v928 = vunpack.c.l.bf16 %v896
      %v929 = vunpack.c.l.bf16 %v897
      %v930 = vunpack.c.l.bf16 %v898
      %v931 = vunpack.c.l.bf16 %v899
      %v932 = vunpack.c.l.bf16 %v900
      %v933 = vunpack.c.l.bf16 %v901
      %v934 = vunpack.c.l.bf16 %v902
      %v935 = vunpack.c.l.bf16 %v903
      %v936 = vunpack.c.l.bf16 %v904
      %v937 = vunpack.c.l.bf16 %v905
      %v938 = vunpack.c.l.bf16 %v906
      %v939 = vunpack.c.l.bf16 %v907
      %v940 = vunpack.c.l.bf16 %v908
      %v941 = vunpack.c.l.bf16 %v909
      %v942 = vunpack.c.l.bf16 %v910
      %v943 = vmax.f32 %v847, %v911
      %v944 = vmax.f32 %v848, %v912
      %v945 = vmax.f32 %v849, %v913
      %v946 = vmax.f32 %v850, %v914
      %v947 = vmax.f32 %v851, %v915
      %v948 = vmax.f32 %v852, %v916
      %v949 = vmax.f32 %v853, %v917
      %v950 = vmax.f32 %v854, %v918
      %v951 = vmax.f32 %v855, %v919
      %v952 = vmax.f32 %v856, %v920
      %v953 = vmax.f32 %v857, %v921
      %v954 = vmax.f32 %v858, %v922
      %v955 = vmax.f32 %v859, %v923
      %v956 = vmax.f32 %v860, %v924
      %v957 = vmax.f32 %v861, %v925
      %v958 = vmax.f32 %v862, %v926
      %v959 = vmax.f32 %v863, %v927
      %v960 = vmax.f32 %v864, %v928
      %v961 = vmax.f32 %v865, %v929
      %v962 = vmax.f32 %v866, %v930
      %v963 = vmax.f32 %v867, %v931
      %v964 = vmax.f32 %v868, %v932
      %v965 = vmax.f32 %v869, %v933
      %v966 = vmax.f32 %v870, %v934
      %v967 = vmax.f32 %v871, %v935
      %v968 = vmax.f32 %v872, %v936
      %v969 = vmax.f32 %v873, %v937
      %v970 = vmax.f32 %v874, %v938
      %v971 = vmax.f32 %v875, %v939
      %v972 = vmax.f32 %v876, %v940
      %v973 = vmax.f32 %v877, %v941
      %v974 = vmax.f32 %v878, %v942
      %v975 = vld [vmem:[%s449] sm:$0xf]
      %v976 = vld [vmem:[%s449 + $0x4] sm:$0xf]
      %v977 = vld [vmem:[%s449 + $0x8] sm:$0xf]
      %v978 = vld [vmem:[%s449 + $0xc] sm:$0xf]
      %v979 = vld [vmem:[%s449 + $0x10] sm:$0xf]
      %v980 = vld [vmem:[%s449 + $0x14] sm:$0xf]
      %v981 = vld [vmem:[%s449 + $0x18] sm:$0xf]
      %v982 = vld [vmem:[%s449 + $0x1c] sm:$0xf]
      %v983 = vld [vmem:[%s449 + $0x20] sm:$0xf]
      %v984 = vld [vmem:[%s449 + $0x24] sm:$0xf]
      %v985 = vld [vmem:[%s449 + $0x28] sm:$0xf]
      %v986 = vld [vmem:[%s449 + $0x2c] sm:$0xf]
      %v987 = vld [vmem:[%s449 + $0x30] sm:$0xf]
      %v988 = vld [vmem:[%s449 + $0x34] sm:$0xf]
      %v989 = vld [vmem:[%s449 + $0x38] sm:$0xf]
      %v990 = vld [vmem:[%s449 + $0x3c] sm:$0xf]
      %v991 = vld [vmem:[%s449 + $0x40] sm:$0xf]
      %v992 = vld [vmem:[%s449 + $0x44] sm:$0xf]
      %v993 = vld [vmem:[%s449 + $0x48] sm:$0xf]
      %v994 = vld [vmem:[%s449 + $0x4c] sm:$0xf]
      %v995 = vld [vmem:[%s449 + $0x50] sm:$0xf]
      %v996 = vld [vmem:[%s449 + $0x54] sm:$0xf]
      %v997 = vld [vmem:[%s449 + $0x58] sm:$0xf]
      %v998 = vld [vmem:[%s449 + $0x5c] sm:$0xf]
      %v999 = vld [vmem:[%s449 + $0x60] sm:$0xf]
      %v1000 = vld [vmem:[%s449 + $0x64] sm:$0xf]
      %v1001 = vld [vmem:[%s449 + $0x68] sm:$0xf]
      %v1002 = vld [vmem:[%s449 + $0x6c] sm:$0xf]
      %v1003 = vld [vmem:[%s449 + $0x70] sm:$0xf]
      %v1004 = vld [vmem:[%s449 + $0x74] sm:$0xf]
      %v1005 = vld [vmem:[%s449 + $0x78] sm:$0xf]
      %v1006 = vld [vmem:[%s449 + $0x7c] sm:$0xf]
      %v1007 = vunpack.c.l.bf16 %v975
      %v1008 = vunpack.c.l.bf16 %v976
      %v1009 = vunpack.c.l.bf16 %v977
      %v1010 = vunpack.c.l.bf16 %v978
      %v1011 = vunpack.c.l.bf16 %v979
      %v1012 = vunpack.c.l.bf16 %v980
      %v1013 = vunpack.c.l.bf16 %v981
      %v1014 = vunpack.c.l.bf16 %v982
      %v1015 = vunpack.c.l.bf16 %v983
      %v1016 = vunpack.c.l.bf16 %v984
      %v1017 = vunpack.c.l.bf16 %v985
      %v1018 = vunpack.c.l.bf16 %v986
      %v1019 = vunpack.c.l.bf16 %v987
      %v1020 = vunpack.c.l.bf16 %v988
      %v1021 = vunpack.c.l.bf16 %v989
      %v1022 = vunpack.c.l.bf16 %v990
      %v1023 = vunpack.c.l.bf16 %v991
      %v1024 = vunpack.c.l.bf16 %v992
      %v1025 = vunpack.c.l.bf16 %v993
      %v1026 = vunpack.c.l.bf16 %v994
      %v1027 = vunpack.c.l.bf16 %v995
      %v1028 = vunpack.c.l.bf16 %v996
      %v1029 = vunpack.c.l.bf16 %v997
      %v1030 = vunpack.c.l.bf16 %v998
      %v1031 = vunpack.c.l.bf16 %v999
      %v1032 = vunpack.c.l.bf16 %v1000
      %v1033 = vunpack.c.l.bf16 %v1001
      %v1034 = vunpack.c.l.bf16 %v1002
      %v1035 = vunpack.c.l.bf16 %v1003
      %v1036 = vunpack.c.l.bf16 %v1004
      %v1037 = vunpack.c.l.bf16 %v1005
      %v1038 = vunpack.c.l.bf16 %v1006
      %v1039 = vld [vmem:[%s455] sm:$0xf]
      %v1040 = vld [vmem:[%s455 + $0x4] sm:$0xf]
      %v1041 = vld [vmem:[%s455 + $0x8] sm:$0xf]
      %v1042 = vld [vmem:[%s455 + $0xc] sm:$0xf]
      %v1043 = vld [vmem:[%s455 + $0x10] sm:$0xf]
      %v1044 = vld [vmem:[%s455 + $0x14] sm:$0xf]
      %v1045 = vld [vmem:[%s455 + $0x18] sm:$0xf]
      %v1046 = vld [vmem:[%s455 + $0x1c] sm:$0xf]
      %v1047 = vld [vmem:[%s455 + $0x20] sm:$0xf]
      %v1048 = vld [vmem:[%s455 + $0x24] sm:$0xf]
      %v1049 = vld [vmem:[%s455 + $0x28] sm:$0xf]
      %v1050 = vld [vmem:[%s455 + $0x2c] sm:$0xf]
      %v1051 = vld [vmem:[%s455 + $0x30] sm:$0xf]
      %v1052 = vld [vmem:[%s455 + $0x34] sm:$0xf]
      %v1053 = vld [vmem:[%s455 + $0x38] sm:$0xf]
      %v1054 = vld [vmem:[%s455 + $0x3c] sm:$0xf]
      %v1055 = vld [vmem:[%s455 + $0x40] sm:$0xf]
      %v1056 = vld [vmem:[%s455 + $0x44] sm:$0xf]
      %v1057 = vld [vmem:[%s455 + $0x48] sm:$0xf]
      %v1058 = vld [vmem:[%s455 + $0x4c] sm:$0xf]
      %v1059 = vld [vmem:[%s455 + $0x50] sm:$0xf]
      %v1060 = vld [vmem:[%s455 + $0x54] sm:$0xf]
      %v1061 = vld [vmem:[%s455 + $0x58] sm:$0xf]
      %v1062 = vld [vmem:[%s455 + $0x5c] sm:$0xf]
      %v1063 = vld [vmem:[%s455 + $0x60] sm:$0xf]
      %v1064 = vld [vmem:[%s455 + $0x64] sm:$0xf]
      %v1065 = vld [vmem:[%s455 + $0x68] sm:$0xf]
      %v1066 = vld [vmem:[%s455 + $0x6c] sm:$0xf]
      %v1067 = vld [vmem:[%s455 + $0x70] sm:$0xf]
      %v1068 = vld [vmem:[%s455 + $0x74] sm:$0xf]
      %v1069 = vld [vmem:[%s455 + $0x78] sm:$0xf]
      %v1070 = vld [vmem:[%s455 + $0x7c] sm:$0xf]
      %v1071 = vunpack.c.l.bf16 %v1039
      %v1072 = vunpack.c.l.bf16 %v1040
      %v1073 = vunpack.c.l.bf16 %v1041
      %v1074 = vunpack.c.l.bf16 %v1042
      %v1075 = vunpack.c.l.bf16 %v1043
      %v1076 = vunpack.c.l.bf16 %v1044
      %v1077 = vunpack.c.l.bf16 %v1045
      %v1078 = vunpack.c.l.bf16 %v1046
      %v1079 = vunpack.c.l.bf16 %v1047
      %v1080 = vunpack.c.l.bf16 %v1048
      %v1081 = vunpack.c.l.bf16 %v1049
      %v1082 = vunpack.c.l.bf16 %v1050
      %v1083 = vunpack.c.l.bf16 %v1051
      %v1084 = vunpack.c.l.bf16 %v1052
      %v1085 = vunpack.c.l.bf16 %v1053
      %v1086 = vunpack.c.l.bf16 %v1054
      %v1087 = vunpack.c.l.bf16 %v1055
      %v1088 = vunpack.c.l.bf16 %v1056
      %v1089 = vunpack.c.l.bf16 %v1057
      %v1090 = vunpack.c.l.bf16 %v1058
      %v1091 = vunpack.c.l.bf16 %v1059
      %v1092 = vunpack.c.l.bf16 %v1060
      %v1093 = vunpack.c.l.bf16 %v1061
      %v1094 = vunpack.c.l.bf16 %v1062
      %v1095 = vunpack.c.l.bf16 %v1063
      %v1096 = vunpack.c.l.bf16 %v1064
      %v1097 = vunpack.c.l.bf16 %v1065
      %v1098 = vunpack.c.l.bf16 %v1066
      %v1099 = vunpack.c.l.bf16 %v1067
      %v1100 = vunpack.c.l.bf16 %v1068
      %v1101 = vunpack.c.l.bf16 %v1069
      %v1102 = vunpack.c.l.bf16 %v1070
      %v1103 = vmax.f32 %v1007, %v1071
      %v1104 = vmax.f32 %v1008, %v1072
      %v1105 = vmax.f32 %v1009, %v1073
      %v1106 = vmax.f32 %v1010, %v1074
      %v1107 = vmax.f32 %v1011, %v1075
      %v1108 = vmax.f32 %v1012, %v1076
      %v1109 = vmax.f32 %v1013, %v1077
      %v1110 = vmax.f32 %v1014, %v1078
      %v1111 = vmax.f32 %v1015, %v1079
      %v1112 = vmax.f32 %v1016, %v1080
      %v1113 = vmax.f32 %v1017, %v1081
      %v1114 = vmax.f32 %v1018, %v1082
      %v1115 = vmax.f32 %v1019, %v1083
      %v1116 = vmax.f32 %v1020, %v1084
      %v1117 = vmax.f32 %v1021, %v1085
      %v1118 = vmax.f32 %v1022, %v1086
      %v1119 = vmax.f32 %v1023, %v1087
      %v1120 = vmax.f32 %v1024, %v1088
      %v1121 = vmax.f32 %v1025, %v1089
      %v1122 = vmax.f32 %v1026, %v1090
      %v1123 = vmax.f32 %v1027, %v1091
      %v1124 = vmax.f32 %v1028, %v1092
      %v1125 = vmax.f32 %v1029, %v1093
      %v1126 = vmax.f32 %v1030, %v1094
      %v1127 = vmax.f32 %v1031, %v1095
      %v1128 = vmax.f32 %v1032, %v1096
      %v1129 = vmax.f32 %v1033, %v1097
      %v1130 = vmax.f32 %v1034, %v1098
      %v1131 = vmax.f32 %v1035, %v1099
      %v1132 = vmax.f32 %v1036, %v1100
      %v1133 = vmax.f32 %v1037, %v1101
      %v1134 = vmax.f32 %v1038, %v1102
      %v1135 = vmax.f32 %v943, %v1103
      %v1136 = vmax.f32 %v944, %v1104
      %v1137 = vmax.f32 %v945, %v1105
      %v1138 = vmax.f32 %v946, %v1106
      %v1139 = vmax.f32 %v947, %v1107
      %v1140 = vmax.f32 %v948, %v1108
      %v1141 = vmax.f32 %v949, %v1109
      %v1142 = vmax.f32 %v950, %v1110
      %v1143 = vmax.f32 %v951, %v1111
      %v1144 = vmax.f32 %v952, %v1112
      %v1145 = vmax.f32 %v953, %v1113
      %v1146 = vmax.f32 %v954, %v1114
      %v1147 = vmax.f32 %v955, %v1115
      %v1148 = vmax.f32 %v956, %v1116
      %v1149 = vmax.f32 %v957, %v1117
      %v1150 = vmax.f32 %v958, %v1118
      %v1151 = vmax.f32 %v959, %v1119
      %v1152 = vmax.f32 %v960, %v1120
      %v1153 = vmax.f32 %v961, %v1121
      %v1154 = vmax.f32 %v962, %v1122
      %v1155 = vmax.f32 %v963, %v1123
      %v1156 = vmax.f32 %v964, %v1124
      %v1157 = vmax.f32 %v965, %v1125
      %v1158 = vmax.f32 %v966, %v1126
      %v1159 = vmax.f32 %v967, %v1127
      %v1160 = vmax.f32 %v968, %v1128
      %v1161 = vmax.f32 %v969, %v1129
      %v1162 = vmax.f32 %v970, %v1130
      %v1163 = vmax.f32 %v971, %v1131
      %v1164 = vmax.f32 %v972, %v1132
      %v1165 = vmax.f32 %v973, %v1133
      %v1166 = vmax.f32 %v974, %v1134
      %v1167 = vmax.f32 %v783, %v1135
      %v1168 = vmax.f32 %v784, %v1136
      %v1169 = vmax.f32 %v785, %v1137
      %v1170 = vmax.f32 %v786, %v1138
      %v1171 = vmax.f32 %v787, %v1139
      %v1172 = vmax.f32 %v788, %v1140
      %v1173 = vmax.f32 %v789, %v1141
      %v1174 = vmax.f32 %v790, %v1142
      %v1175 = vmax.f32 %v791, %v1143
      %v1176 = vmax.f32 %v792, %v1144
      %v1177 = vmax.f32 %v793, %v1145
      %v1178 = vmax.f32 %v794, %v1146
      %v1179 = vmax.f32 %v795, %v1147
      %v1180 = vmax.f32 %v796, %v1148
      %v1181 = vmax.f32 %v797, %v1149
      %v1182 = vmax.f32 %v798, %v1150
      %v1183 = vmax.f32 %v799, %v1151
      %v1184 = vmax.f32 %v800, %v1152
      %v1185 = vmax.f32 %v801, %v1153
      %v1186 = vmax.f32 %v802, %v1154
      %v1187 = vmax.f32 %v803, %v1155
      %v1188 = vmax.f32 %v804, %v1156
      %v1189 = vmax.f32 %v805, %v1157
      %v1190 = vmax.f32 %v806, %v1158
      %v1191 = vmax.f32 %v807, %v1159
      %v1192 = vmax.f32 %v808, %v1160
      %v1193 = vmax.f32 %v809, %v1161
      %v1194 = vmax.f32 %v810, %v1162
      %v1195 = vmax.f32 %v811, %v1163
      %v1196 = vmax.f32 %v812, %v1164
      %v1197 = vmax.f32 %v813, %v1165
      %v1198 = vmax.f32 %v814, %v1166
      %v1199 = vpack.c.bf16 %v1167, %v1167
      %v1200 = vpack.c.bf16 %v1168, %v1168
      %v1201 = vpack.c.bf16 %v1169, %v1169
      %v1202 = vpack.c.bf16 %v1170, %v1170
      %v1203 = vpack.c.bf16 %v1171, %v1171
      %v1204 = vpack.c.bf16 %v1172, %v1172
      %v1205 = vpack.c.bf16 %v1173, %v1173
      %v1206 = vpack.c.bf16 %v1174, %v1174
      %v1207 = vpack.c.bf16 %v1175, %v1175
      %v1208 = vpack.c.bf16 %v1176, %v1176
      %v1209 = vpack.c.bf16 %v1177, %v1177
      %v1210 = vpack.c.bf16 %v1178, %v1178
      %v1211 = vpack.c.bf16 %v1179, %v1179
      %v1212 = vpack.c.bf16 %v1180, %v1180
      %v1213 = vpack.c.bf16 %v1181, %v1181
      %v1214 = vpack.c.bf16 %v1182, %v1182
      %v1215 = vpack.c.bf16 %v1183, %v1183
      %v1216 = vpack.c.bf16 %v1184, %v1184
      %v1217 = vpack.c.bf16 %v1185, %v1185
      %v1218 = vpack.c.bf16 %v1186, %v1186
      %v1219 = vpack.c.bf16 %v1187, %v1187
      %v1220 = vpack.c.bf16 %v1188, %v1188
      %v1221 = vpack.c.bf16 %v1189, %v1189
      %v1222 = vpack.c.bf16 %v1190, %v1190
      %v1223 = vpack.c.bf16 %v1191, %v1191
      %v1224 = vpack.c.bf16 %v1192, %v1192
      %v1225 = vpack.c.bf16 %v1193, %v1193
      %v1226 = vpack.c.bf16 %v1194, %v1194
      %v1227 = vpack.c.bf16 %v1195, %v1195
      %v1228 = vpack.c.bf16 %v1196, %v1196
      %v1229 = vpack.c.bf16 %v1197, %v1197
      %v1230 = vpack.c.bf16 %v1198, %v1198
      %1231 = vst [vmem:[%s461] sm:$0xf] %v1199
      %1232 = vst [vmem:[%s461 + $0x4] sm:$0xf] %v1200
      %1233 = vst [vmem:[%s461 + $0x8] sm:$0xf] %v1201
      %1234 = vst [vmem:[%s461 + $0xc] sm:$0xf] %v1202
      %1235 = vst [vmem:[%s461 + $0x10] sm:$0xf] %v1203
      %1236 = vst [vmem:[%s461 + $0x14] sm:$0xf] %v1204
      %1237 = vst [vmem:[%s461 + $0x18] sm:$0xf] %v1205
      %1238 = vst [vmem:[%s461 + $0x1c] sm:$0xf] %v1206
      %1239 = vst [vmem:[%s461 + $0x20] sm:$0xf] %v1207
      %1240 = vst [vmem:[%s461 + $0x24] sm:$0xf] %v1208
      %1241 = vst [vmem:[%s461 + $0x28] sm:$0xf] %v1209
      %1242 = vst [vmem:[%s461 + $0x2c] sm:$0xf] %v1210
      %1243 = vst [vmem:[%s461 + $0x30] sm:$0xf] %v1211
      %1244 = vst [vmem:[%s461 + $0x34] sm:$0xf] %v1212
      %1245 = vst [vmem:[%s461 + $0x38] sm:$0xf] %v1213
      %1246 = vst [vmem:[%s461 + $0x3c] sm:$0xf] %v1214
      %1247 = vst [vmem:[%s461 + $0x40] sm:$0xf] %v1215
      %1248 = vst [vmem:[%s461 + $0x44] sm:$0xf] %v1216
      %1249 = vst [vmem:[%s461 + $0x48] sm:$0xf] %v1217
      %1250 = vst [vmem:[%s461 + $0x4c] sm:$0xf] %v1218
      %1251 = vst [vmem:[%s461 + $0x50] sm:$0xf] %v1219
      %1252 = vst [vmem:[%s461 + $0x54] sm:$0xf] %v1220
      %1253 = vst [vmem:[%s461 + $0x58] sm:$0xf] %v1221
      %1254 = vst [vmem:[%s461 + $0x5c] sm:$0xf] %v1222
      %1255 = vst [vmem:[%s461 + $0x60] sm:$0xf] %v1223
      %1256 = vst [vmem:[%s461 + $0x64] sm:$0xf] %v1224
      %1257 = vst [vmem:[%s461 + $0x68] sm:$0xf] %v1225
      %1258 = vst [vmem:[%s461 + $0x6c] sm:$0xf] %v1226
      %1259 = vst [vmem:[%s461 + $0x70] sm:$0xf] %v1227
      %1260 = vst [vmem:[%s461 + $0x74] sm:$0xf] %v1228
      %1261 = vst [vmem:[%s461 + $0x78] sm:$0xf] %v1229
      %1262 = vst [vmem:[%s461 + $0x7c] sm:$0xf] %v1230
      %s1263 = smul.u32 32, %s19
      %p1264 = scmp.lt.s32.totalorder %s1263, 63
      %s1265 = scalar_select %p1264, %s1263, 63
      %s1266 = smul.addr %s1265, 4
      %s1267 = scalar_lea.vmem %s8, %s1266
      // Predicated region
      $region53: #{temporal3d_forward.9} parent=51 // pred_check
        %p1268 = pneg %p245
      $region54: #{temporal3d_forward.9} parent=51 // pred_check_branch
        %1270 = sbr.rel (%p1268) target = $region56
      $region55: #{temporal3d_forward.9} parent=51 // pred_region
        %s1271 = smul.u32 32, %s19
      $region56: #{temporal3d_forward.9} parent=51 // pred_fallthru
        _
    $region52: #{temporal3d_forward.9} parent=5 // pred_fallthru
      _
    %p1272 = scmp.le.s32.totalorder 2, %s14
    // Predicated region
    $region57: #{temporal3d_forward.9} parent=5 // pred_check
      %p1273 = pneg %p1272
    $region58: #{temporal3d_forward.9} parent=5 // pred_check_branch
      %1275 = sbr.rel (%p1273) target = $region60
    $region59: #{temporal3d_forward.9} parent=5 // pred_region
      %s1276 = ssub.s32 %s14, 2
      // Predicated region
      $region61: #{temporal3d_forward.9} parent=59 // pred_check
        %p1277 = pneg %p251
      $region62: #{temporal3d_forward.9} parent=59 // pred_check_branch
        %1279 = sbr.rel (%p1277) target = $region64
      $region63: #{temporal3d_forward.9} parent=59 // pred_region
        %s1280 = smul.u32 32, %s20
        %p1281 = scmp.lt.s32.totalorder %s1280, 63
        %s1282 = scalar_select %p1281, %s1280, 63
        %s1283 = smul.addr %s1282, 4
        %s1284 = scalar_lea.vmem %s8, %s1283
      $region64: #{temporal3d_forward.9} parent=59 // pred_fallthru
        _
    $region60: #{temporal3d_forward.9} parent=5 // pred_fallthru
      _
  $region6: #{temporal3d_forward.9} parent=0 // loop_footer
    %s18 = sadd.s32 1, %s14
  $region7: #{temporal3d_forward.9} parent=0 // loop_footer_branch
    %13 = sbr.rel target = $region3
  $region8: #{temporal3d_forward.9} parent=0 // loop_exit
    _

// kernel: temporal3d_forward.10
$region0: #{temporal3d_forward.10}
  #allocation0 [shape = 'u32[]', space=smem, size = 0x4, offset = 0x4, fixed_abs, tag = 'smem constant byte address 0x4 - core index']
  #allocation1 [shape = 'u32[72,128]{1,0:T(1,128)}', space=vmem, size = 0x9000, scoped, tag = 'internal scratch']
  %s0 = inlined_call_operand.vmem [shape: bf16[512,432], index: 0, kind: input, shape index: {}]
  %s1 = inlined_call_operand.vmem [shape: bf16[432,128], index: 1, kind: input, shape index: {}]
  %s2 = inlined_call_operand.vmem [shape: f32[1,128], index: 2, kind: input, shape index: {}]
  %s3 = inlined_call_operand.vmem [shape: bf16[512,128], index: 3, kind: output, shape index: {}]
  %s4 = sld [smem:[#allocation0]]
  $region45: #{temporal3d_forward.10} parent=0
    _
  %s6 = ssub.s32 1, %s4
  %s7 = scalar_select 0, %s6, %s4
  loop: start=0, step=1, limit=4
  $region2: #{temporal3d_forward.10} parent=0 // loop_pre_header
    _
  $region3: #{temporal3d_forward.10} parent=0 // loop_header
    %s9 = sphi 0, %s13
    %p10 = scmp.ge.s32.totalorder %s9, 4
    %s19 = sphi 0, %s21
    %s22 = sphi 0, %s19
    %s23 = sphi 0, %s22
    %s39 = sphi 0, %s23
    %s43 = sphi 0, %s43
    %s45 = sphi 0, %s43
    %s46 = sphi 0, %s45
    %s60 = sphi 0, %s46
    %s64 = sphi 0, %s64
    %s66 = sphi 0, %s64
    %s67 = sphi 0, %s66
    %s81 = sphi 0, %s67
    %s87 = sphi 0, %s89
    %s90 = sphi 0, %s87
    %s91 = sphi 0, %s90
    %s107 = sphi 0, %s91
  $region4: #{temporal3d_forward.10} parent=0 // loop_header_branch
    %12 = sbr.rel (%p10) target = $region8
  $region5: #{temporal3d_forward.10} parent=0 // loop_body
    %s14 = ssub.s32 %s9, 1
    %s15 = ssub.s32 %s9, 2
    %s16 = sadd.s32 %s9, 1
    %s17 = ssub.s32 %s9, %s16
    %p18 = scmp.eq.s32.totalorder %s17, 0
    %s20 = sadd.s32 %s19, 1
    %s21 = scalar_select %p18, %s19, %s20
    %p24 = pneg %p18
    %p25 = scmp.eq.s32.totalorder %s9, 1
    %p26 = por %p24, %p25
    %p27 = scmp.ne.s32.totalorder %s19, %s22
    %p28 = scmp.eq.s32.totalorder %s9, 0
    %p29 = por %p27, %p28
    %p30 = scmp.ne.s32.totalorder %s19, %s22
    %p31 = scmp.eq.s32.totalorder %s14, 1
    %p32 = por %p30, %p31
    %p33 = scmp.ne.s32.totalorder %s22, %s23
    %p34 = scmp.eq.s32.totalorder %s14, 0
    %p35 = por %p33, %p34
    %p36 = scmp.ne.s32.totalorder %s22, %s23
    %p37 = scmp.eq.s32.totalorder %s15, 1
    %p38 = por %p36, %p37
    %p40 = scmp.ne.s32.totalorder %s23, %s39
    %p41 = scmp.eq.s32.totalorder %s15, 0
    %p42 = por %p40, %p41
    %s44 = sadd.s32 %s43, 1
    %p47 = scmp.eq.s32.totalorder %s9, 1
    %p48 = scmp.ne.s32.totalorder %s43, %s45
    %p49 = scmp.eq.s32.totalorder %s9, 0
    %p50 = por %p48, %p49
    %p51 = scmp.ne.s32.totalorder %s43, %s45
    %p52 = scmp.eq.s32.totalorder %s14, 1
    %p53 = por %p51, %p52
    %p54 = scmp.ne.s32.totalorder %s45, %s46
    %p55 = scmp.eq.s32.totalorder %s14, 0
    %p56 = por %p54, %p55
    %p57 = scmp.ne.s32.totalorder %s45, %s46
    %p58 = scmp.eq.s32.totalorder %s15, 1
    %p59 = por %p57, %p58
    %p61 = scmp.ne.s32.totalorder %s46, %s60
    %p62 = scmp.eq.s32.totalorder %s15, 0
    %p63 = por %p61, %p62
    %s65 = sadd.s32 %s64, 1
    %p68 = scmp.eq.s32.totalorder %s9, 1
    %p69 = scmp.ne.s32.totalorder %s64, %s66
    %p70 = scmp.eq.s32.totalorder %s9, 0
    %p71 = por %p69, %p70
    %p72 = scmp.ne.s32.totalorder %s64, %s66
    %p73 = scmp.eq.s32.totalorder %s14, 1
    %p74 = por %p72, %p73
    %p75 = scmp.ne.s32.totalorder %s66, %s67
    %p76 = scmp.eq.s32.totalorder %s14, 0
    %p77 = por %p75, %p76
    %p78 = scmp.ne.s32.totalorder %s66, %s67
    %p79 = scmp.eq.s32.totalorder %s15, 1
    %p80 = por %p78, %p79
    %p82 = scmp.ne.s32.totalorder %s67, %s81
    %p83 = scmp.eq.s32.totalorder %s15, 0
    %p84 = por %p82, %p83
    %s85 = ssub.s32 %s9, %s16
    %p86 = scmp.eq.s32.totalorder %s85, 0
    %s88 = sadd.s32 %s87, 1
    %s89 = scalar_select %p86, %s87, %s88
    %p92 = pneg %p86
    %p93 = scmp.eq.s32.totalorder %s9, 1
    %p94 = por %p92, %p93
    %p95 = scmp.ne.s32.totalorder %s87, %s90
    %p96 = scmp.eq.s32.totalorder %s9, 0
    %p97 = por %p95, %p96
    %p98 = scmp.ne.s32.totalorder %s87, %s90
    %p99 = scmp.eq.s32.totalorder %s14, 1
    %p100 = por %p98, %p99
    %p101 = scmp.ne.s32.totalorder %s90, %s91
    %p102 = scmp.eq.s32.totalorder %s14, 0
    %p103 = por %p101, %p102
    %p104 = scmp.ne.s32.totalorder %s90, %s91
    %p105 = scmp.eq.s32.totalorder %s15, 1
    %p106 = por %p104, %p105
    %p108 = scmp.ne.s32.totalorder %s91, %s107
    %p109 = scmp.eq.s32.totalorder %s15, 0
    %p110 = por %p108, %p109
    %p111 = scmp.le.s32.totalorder 1, %s9
    %p112 = scmp.lt.s32.totalorder %s9, 3
    %p113 = pnand %p111, %p112
    %p114 = pneg %p113
    // Predicated region
    $region9: #{temporal3d_forward.10} parent=5 // pred_check
      _
    $region10: #{temporal3d_forward.10} parent=5 // pred_check_branch
      %116 = sbr.rel (%p113) target = $region12
    $region11: #{temporal3d_forward.10} parent=5 // pred_region
      %s117 = ssub.s32 %s9, 1
      // Predicated region
      $region13: #{temporal3d_forward.10} parent=11 // pred_check
        %p118 = pneg %p56
      $region14: #{temporal3d_forward.10} parent=11 // pred_check_branch
        %120 = sbr.rel (%p118) target = $region16
      $region15: #{temporal3d_forward.10} parent=11 // pred_region
        _
      $region16: #{temporal3d_forward.10} parent=11 // pred_fallthru
        _
      // Predicated region
      $region17: #{temporal3d_forward.10} parent=11 // pred_check
        %p121 = pneg %p77
      $region18: #{temporal3d_forward.10} parent=11 // pred_check_branch
        %123 = sbr.rel (%p121) target = $region20
      $region19: #{temporal3d_forward.10} parent=11 // pred_region
        _
      $region20: #{temporal3d_forward.10} parent=11 // pred_fallthru
        _
    $region12: #{temporal3d_forward.10} parent=5 // pred_fallthru
      _
    %p124 = scmp.lt.s32.totalorder %s9, 2
    // Predicated region
    $region21: #{temporal3d_forward.10} parent=5 // pred_check
      %p125 = pneg %p124
    $region22: #{temporal3d_forward.10} parent=5 // pred_check_branch
      %127 = sbr.rel (%p125) target = $region24
    $region23: #{temporal3d_forward.10} parent=5 // pred_region
      // Predicated region
      $region25: #{temporal3d_forward.10} parent=23 // pred_check
        %p128 = pneg %p29
      $region26: #{temporal3d_forward.10} parent=23 // pred_check_branch
        %130 = sbr.rel (%p128) target = $region28
      $region27: #{temporal3d_forward.10} parent=23 // pred_region
        %s131 = smul.u32 32, %s9
        %p132 = scmp.lt.s32.totalorder %s131, 63
        %s133 = scalar_select %p132, %s131, 63
        %s134 = smul.addr %s133, 4
        %s135 = smul.addr %s134, 4
        %s136 = scalar_lea.vmem %s0, %s135
        %s137 = smul.u32 32, %s9
      $region28: #{temporal3d_forward.10} parent=23 // pred_fallthru
        _
    $region24: #{temporal3d_forward.10} parent=5 // pred_fallthru
      _
    %p138 = scmp.le.s32.totalorder 1, %s9
    %p139 = scmp.lt.s32.totalorder %s9, 3
    %p140 = pnand %p138, %p139
    %p141 = pneg %p140
    // Predicated region
    $region29: #{temporal3d_forward.10} parent=5 // pred_check
      _
    $region30: #{temporal3d_forward.10} parent=5 // pred_check_branch
      %143 = sbr.rel (%p140) target = $region32
    $region31: #{temporal3d_forward.10} parent=5 // pred_region
      %s144 = ssub.s32 %s9, 1
      %s145 = smul.u32 32, %s14
      %p146 = scmp.lt.s32.totalorder %s145, 63
      %s147 = scalar_select %p146, %s145, 63
      %s148 = smul.addr %s147, 4
      %s149 = smul.addr %s148, 4
      %s150 = scalar_lea.vmem %s0, %s149
      %p151 = pneg %p35
      %p152 = pneg %p32
      %p153 = pneg %p56
      %p154 = pneg %p53
      %p155 = pneg %p77
      %p156 = pneg %p74
      %p157 = pneg %p103
      %p158 = pneg %p100
      %s159 = smul.u32 32, %s14
      %p160 = scmp.lt.s32.totalorder %s159, 63
      %s161 = scalar_select %p160, %s159, 63
      %s162 = smul.addr %s161, 4
      %s163 = scalar_lea.vmem %s3, %s162
      %s164 = smul.u32 32, %s14
      %p165 = scmp.lt.s32.totalorder %s164, 63
      %s166 = scalar_select %p165, %s164, 63
      %s167 = smul.addr %s166, 4
      %s168 = smul.addr %s167, 4
      %s169 = scalar_lea.vmem %s0, %s168
      %s170 = smul.u32 32, %s14
      %s171 = smul.u32 32, %s14
      %p172 = scmp.lt.s32.totalorder %s171, 63
      %s173 = scalar_select %p172, %s171, 63
      %s174 = smul.addr %s173, 4
      %s175 = scalar_lea.vmem %s3, %s174
      %s176 = smul.u32 32, %s14
      %v178 = vld [vmem:[%s169] sm:$0xff]
      %v179 = vld [vmem:[%s169 + $0x8] sm:$0xff]
      %v180 = vld [vmem:[%s169 + $0x10] sm:$0xff]
      %v181 = vld [vmem:[%s169 + $0x18] sm:$0xff]
      %v182 = vld [vmem:[%s169 + $0x20] sm:$0xff]
      %v183 = vld [vmem:[%s169 + $0x28] sm:$0xff]
      %v184 = vld [vmem:[%s169 + $0x30] sm:$0xff]
      %v185 = vld [vmem:[%s169 + $0x38] sm:$0xff]
      %v186 = vld [vmem:[%s169 + $0x40] sm:$0xff]
      %v187 = vld [vmem:[%s169 + $0x48] sm:$0xff]
      %v188 = vld [vmem:[%s169 + $0x50] sm:$0xff]
      %v189 = vld [vmem:[%s169 + $0x58] sm:$0xff]
      %v190 = vld [vmem:[%s169 + $0x60] sm:$0xff]
      %v191 = vld [vmem:[%s169 + $0x68] sm:$0xff]
      %v192 = vld [vmem:[%s169 + $0x70] sm:$0xff]
      %v193 = vld [vmem:[%s169 + $0x78] sm:$0xff]
      %v194 = vld [vmem:[%s169 + $0x80] sm:$0xff]
      %v195 = vld [vmem:[%s169 + $0x88] sm:$0xff]
      %v196 = vld [vmem:[%s169 + $0x90] sm:$0xff]
      %v197 = vld [vmem:[%s169 + $0x98] sm:$0xff]
      %v198 = vld [vmem:[%s169 + $0xa0] sm:$0xff]
      %v199 = vld [vmem:[%s169 + $0xa8] sm:$0xff]
      %v200 = vld [vmem:[%s169 + $0xb0] sm:$0xff]
      %v201 = vld [vmem:[%s169 + $0xb8] sm:$0xff]
      %v202 = vld [vmem:[%s169 + $0xc0] sm:$0xff]
      %v203 = vld [vmem:[%s169 + $0xc8] sm:$0xff]
      %v204 = vld [vmem:[%s169 + $0xd0] sm:$0xff]
      %v205 = vld [vmem:[%s169 + $0xd8] sm:$0xff]
      %v206 = vld [vmem:[%s169 + $0xe0] sm:$0xff]
      %v207 = vld [vmem:[%s169 + $0xe8] sm:$0xff]
      %v208 = vld [vmem:[%s169 + $0xf0] sm:$0xff]
      %v209 = vld [vmem:[%s169 + $0xf8] sm:$0xff]
      %v210 = vld [vmem:[%s169 + $0x100] sm:$0xff]
      %v211 = vld [vmem:[%s169 + $0x108] sm:$0xff]
      %v212 = vld [vmem:[%s169 + $0x110] sm:$0xff]
      %v213 = vld [vmem:[%s169 + $0x118] sm:$0xff]
      %v214 = vld [vmem:[%s169 + $0x120] sm:$0xff]
      %v215 = vld [vmem:[%s169 + $0x128] sm:$0xff]
      %v216 = vld [vmem:[%s169 + $0x130] sm:$0xff]
      %v217 = vld [vmem:[%s169 + $0x138] sm:$0xff]
      %v218 = vld [vmem:[%s169 + $0x140] sm:$0xff]
      %v219 = vld [vmem:[%s169 + $0x148] sm:$0xff]
      %v220 = vld [vmem:[%s169 + $0x150] sm:$0xff]
      %v221 = vld [vmem:[%s169 + $0x158] sm:$0xff]
      %v222 = vld [vmem:[%s169 + $0x160] sm:$0xff]
      %v223 = vld [vmem:[%s169 + $0x168] sm:$0xff]
      %v224 = vld [vmem:[%s169 + $0x170] sm:$0xff]
      %v225 = vld [vmem:[%s169 + $0x178] sm:$0xff]
      %v226 = vld [vmem:[%s169 + $0x180] sm:$0xff]
      %v227 = vld [vmem:[%s169 + $0x188] sm:$0xff]
      %v228 = vld [vmem:[%s169 + $0x190] sm:$0xff]
      %v229 = vld [vmem:[%s169 + $0x198] sm:$0xff]
      %v230 = vld [vmem:[%s169 + $0x1a0] sm:$0xff]
      %v231 = vld [vmem:[%s169 + $0x1a8] sm:$0xff]
      %v232 = vld [vmem:[%s169 + $0x1b0] sm:$0xff]
      %v233 = vld [vmem:[%s169 + $0x1b8] sm:$0xff]
      %v234 = vld [vmem:[%s169 + $0x1c0] sm:$0xff]
      %v235 = vld [vmem:[%s169 + $0x1c8] sm:$0xff]
      %v236 = vld [vmem:[%s169 + $0x1d0] sm:$0xff]
      %v237 = vld [vmem:[%s169 + $0x1d8] sm:$0xff]
      %v238 = vld [vmem:[%s169 + $0x1e0] sm:$0xff]
      %v239 = vld [vmem:[%s169 + $0x1e8] sm:$0xff]
      %v240 = vld [vmem:[%s169 + $0x1f0] sm:$0xff]
      %v241 = vld [vmem:[%s169 + $0x1f8] sm:$0xff]
      %v242 = vld [vmem:[%s1] sm:$0xf]
      %v243 = vld [vmem:[%s1 + $0x4] sm:$0xf]
      %v244 = vld [vmem:[%s1 + $0x8] sm:$0xf]
      %v245 = vld [vmem:[%s1 + $0xc] sm:$0xf]
      %v246 = vld [vmem:[%s1 + $0x10] sm:$0xf]
      %v247 = vld [vmem:[%s1 + $0x14] sm:$0xf]
      %v248 = vld [vmem:[%s1 + $0x18] sm:$0xf]
      %v249 = vld [vmem:[%s1 + $0x1c] sm:$0xf]
      %v250 = vld [vmem:[%s1 + $0x20] sm:$0xf]
      %v251 = vld [vmem:[%s1 + $0x24] sm:$0xf]
      %v252 = vld [vmem:[%s1 + $0x28] sm:$0xf]
      %v253 = vld [vmem:[%s1 + $0x2c] sm:$0xf]
      %v254 = vld [vmem:[%s1 + $0x30] sm:$0xf]
      %v255 = vld [vmem:[%s1 + $0x34] sm:$0xf]
      %v256 = vld [vmem:[%s1 + $0x38] sm:$0xf]
      %v257 = vld [vmem:[%s1 + $0x3c] sm:$0xf]
      %v258 = vld [vmem:[%s1 + $0x40] sm:$0xf]
      %v259 = vld [vmem:[%s1 + $0x44] sm:$0xf]
      %v260 = vld [vmem:[%s1 + $0x48] sm:$0xf]
      %v261 = vld [vmem:[%s1 + $0x4c] sm:$0xf]
      %v262 = vld [vmem:[%s1 + $0x50] sm:$0xf]
      %v263 = vld [vmem:[%s1 + $0x54] sm:$0xf]
      %v264 = vld [vmem:[%s1 + $0x58] sm:$0xf]
      %v265 = vld [vmem:[%s1 + $0x5c] sm:$0xf]
      %v266 = vld [vmem:[%s1 + $0x60] sm:$0xf]
      %v267 = vld [vmem:[%s1 + $0x64] sm:$0xf]
      %v268 = vld [vmem:[%s1 + $0x68] sm:$0xf]
      %v269 = vld [vmem:[%s1 + $0x6c] sm:$0xf]
      %v270 = vld [vmem:[%s1 + $0x70] sm:$0xf]
      %v271 = vld [vmem:[%s1 + $0x74] sm:$0xf]
      %v272 = vld [vmem:[%s1 + $0x78] sm:$0xf]
      %v273 = vld [vmem:[%s1 + $0x7c] sm:$0xf]
      %v274 = vld [vmem:[%s1 + $0x80] sm:$0xf]
      %v275 = vld [vmem:[%s1 + $0x84] sm:$0xf]
      %v276 = vld [vmem:[%s1 + $0x88] sm:$0xf]
      %v277 = vld [vmem:[%s1 + $0x8c] sm:$0xf]
      %v278 = vld [vmem:[%s1 + $0x90] sm:$0xf]
      %v279 = vld [vmem:[%s1 + $0x94] sm:$0xf]
      %v280 = vld [vmem:[%s1 + $0x98] sm:$0xf]
      %v281 = vld [vmem:[%s1 + $0x9c] sm:$0xf]
      %v282 = vld [vmem:[%s1 + $0xa0] sm:$0xf]
      %v283 = vld [vmem:[%s1 + $0xa4] sm:$0xf]
      %v284 = vld [vmem:[%s1 + $0xa8] sm:$0xf]
      %v285 = vld [vmem:[%s1 + $0xac] sm:$0xf]
      %v286 = vld [vmem:[%s1 + $0xb0] sm:$0xf]
      %v287 = vld [vmem:[%s1 + $0xb4] sm:$0xf]
      %v288 = vld [vmem:[%s1 + $0xb8] sm:$0xf]
      %v289 = vld [vmem:[%s1 + $0xbc] sm:$0xf]
      %v290 = vld [vmem:[%s1 + $0xc0] sm:$0xf]
      %v291 = vld [vmem:[%s1 + $0xc4] sm:$0xf]
      %v292 = vld [vmem:[%s1 + $0xc8] sm:$0xf]
      %v293 = vld [vmem:[%s1 + $0xcc] sm:$0xf]
      %v294 = vld [vmem:[%s1 + $0xd0] sm:$0xf]
      %v295 = vld [vmem:[%s1 + $0xd4] sm:$0xf]
      %v296 = vld [vmem:[%s2] sm:$0x1]
      %v298 = vperm.slane %v296, 0
      %v364 = vunpack.c.l.b16 %v178
      %v365 = vunpack.c.h.b16 %v178
      %v366 = vunpack.c.l.b16 %v179
      %v367 = vunpack.c.h.b16 %v179
      %v368 = vunpack.c.l.b16 %v180
      %v369 = vunpack.c.h.b16 %v180
      %v370 = vunpack.c.l.b16 %v181
      %v371 = vunpack.c.h.b16 %v181
      %v372 = vunpack.c.l.b16 %v182
      %v373 = vunpack.c.h.b16 %v182
      %v374 = vunpack.c.l.b16 %v183
      %v375 = vunpack.c.h.b16 %v183
      %v376 = vunpack.c.l.b16 %v184
      %v377 = vunpack.c.h.b16 %v184
      %v378 = vunpack.c.l.b16 %v185
      %v379 = vunpack.c.h.b16 %v185
      %v380 = vunpack.c.l.b16 %v186
      %v381 = vunpack.c.h.b16 %v186
      %v382 = vunpack.c.l.b16 %v187
      %v383 = vunpack.c.h.b16 %v187
      %v384 = vunpack.c.l.b16 %v188
      %v385 = vunpack.c.h.b16 %v188
      %v386 = vunpack.c.l.b16 %v189
      %v387 = vunpack.c.h.b16 %v189
      %v388 = vunpack.c.l.b16 %v190
      %v389 = vunpack.c.h.b16 %v190
      %v390 = vunpack.c.l.b16 %v191
      %v391 = vunpack.c.h.b16 %v191
      %v392 = vunpack.c.l.b16 %v192
      %v393 = vunpack.c.h.b16 %v192
      %v394 = vunpack.c.l.b16 %v193
      %v395 = vunpack.c.h.b16 %v193
      %v396 = vunpack.c.l.b16 %v194
      %v397 = vunpack.c.h.b16 %v194
      %v398 = vunpack.c.l.b16 %v195
      %v399 = vunpack.c.h.b16 %v195
      %v400 = vunpack.c.l.b16 %v196
      %v401 = vunpack.c.h.b16 %v196
      %v402 = vunpack.c.l.b16 %v197
      %v403 = vunpack.c.h.b16 %v197
      %v404 = vunpack.c.l.b16 %v198
      %v405 = vunpack.c.h.b16 %v198
      %v406 = vunpack.c.l.b16 %v199
      %v407 = vunpack.c.h.b16 %v199
      %v408 = vunpack.c.l.b16 %v200
      %v409 = vunpack.c.h.b16 %v200
      %v410 = vunpack.c.l.b16 %v201
      %v411 = vunpack.c.h.b16 %v201
      %v412 = vunpack.c.l.b16 %v202
      %v413 = vunpack.c.h.b16 %v202
      %v414 = vunpack.c.l.b16 %v203
      %v415 = vunpack.c.h.b16 %v203
      %v416 = vunpack.c.l.b16 %v204
      %v417 = vunpack.c.h.b16 %v204
      %v418 = vunpack.c.l.b16 %v205
      %v419 = vunpack.c.h.b16 %v205
      %v420 = vunpack.c.l.b16 %v206
      %v421 = vunpack.c.h.b16 %v206
      %v422 = vunpack.c.l.b16 %v207
      %v423 = vunpack.c.h.b16 %v207
      %v424 = vunpack.c.l.b16 %v208
      %v425 = vunpack.c.h.b16 %v208
      %v426 = vunpack.c.l.b16 %v209
      %v427 = vunpack.c.h.b16 %v209
      %v428 = vunpack.c.l.b16 %v210
      %v429 = vunpack.c.h.b16 %v210
      %v430 = vunpack.c.l.b16 %v211
      %v431 = vunpack.c.h.b16 %v211
      %v432 = vunpack.c.l.b16 %v212
      %v433 = vunpack.c.h.b16 %v212
      %v434 = vunpack.c.l.b16 %v213
      %v435 = vunpack.c.h.b16 %v213
      %v436 = vunpack.c.l.b16 %v214
      %v437 = vunpack.c.h.b16 %v214
      %v438 = vunpack.c.l.b16 %v215
      %v439 = vunpack.c.h.b16 %v215
      %v440 = vunpack.c.l.b16 %v216
      %v441 = vunpack.c.h.b16 %v216
      %v442 = vunpack.c.l.b16 %v217
      %v443 = vunpack.c.h.b16 %v217
      %v444 = vunpack.c.l.b16 %v218
      %v445 = vunpack.c.h.b16 %v218
      %v446 = vunpack.c.l.b16 %v219
      %v447 = vunpack.c.h.b16 %v219
      %v448 = vunpack.c.l.b16 %v220
      %v449 = vunpack.c.h.b16 %v220
      %v450 = vunpack.c.l.b16 %v221
      %v451 = vunpack.c.h.b16 %v221
      %v452 = vunpack.c.l.b16 %v222
      %v453 = vunpack.c.h.b16 %v222
      %v454 = vunpack.c.l.b16 %v223
      %v455 = vunpack.c.h.b16 %v223
      %v456 = vunpack.c.l.b16 %v224
      %v457 = vunpack.c.h.b16 %v224
      %v458 = vunpack.c.l.b16 %v225
      %v459 = vunpack.c.h.b16 %v225
      %v460 = vunpack.c.l.b16 %v226
      %v461 = vunpack.c.h.b16 %v226
      %v462 = vunpack.c.l.b16 %v227
      %v463 = vunpack.c.h.b16 %v227
      %v464 = vunpack.c.l.b16 %v228
      %v465 = vunpack.c.h.b16 %v228
      %v466 = vunpack.c.l.b16 %v229
      %v467 = vunpack.c.h.b16 %v229
      %v468 = vunpack.c.l.b16 %v230
      %v469 = vunpack.c.h.b16 %v230
      %v470 = vunpack.c.l.b16 %v231
      %v471 = vunpack.c.h.b16 %v231
      %v472 = vunpack.c.l.b16 %v232
      %v473 = vunpack.c.h.b16 %v232
      %v474 = vunpack.c.l.b16 %v233
      %v475 = vunpack.c.h.b16 %v233
      %v476 = vunpack.c.l.b16 %v234
      %v477 = vunpack.c.h.b16 %v234
      %v478 = vunpack.c.l.b16 %v235
      %v479 = vunpack.c.h.b16 %v235
      %v480 = vunpack.c.l.b16 %v236
      %v481 = vunpack.c.h.b16 %v236
      %v482 = vunpack.c.l.b16 %v237
      %v483 = vunpack.c.h.b16 %v237
      %v484 = vunpack.c.l.b16 %v238
      %v485 = vunpack.c.h.b16 %v238
      %v486 = vunpack.c.l.b16 %v239
      %v487 = vunpack.c.h.b16 %v239
      %v488 = vunpack.c.l.b16 %v240
      %v489 = vunpack.c.h.b16 %v240
      %v490 = vunpack.c.l.b16 %v241
      %v491 = vunpack.c.h.b16 %v241
      %v492 = vpack.c.b16 %v368, %v364
      %v493 = vpack.c.b16 %v369, %v365
      %v494 = vpack.c.b16 %v370, %v366
      %v495 = vpack.c.b16 %v371, %v367
      %v496 = vpack.c.b16 %v376, %v372
      %v497 = vpack.c.b16 %v377, %v373
      %v498 = vpack.c.b16 %v378, %v374
      %v499 = vpack.c.b16 %v379, %v375
      %v500 = vpack.c.b16 %v384, %v380
      %v501 = vpack.c.b16 %v385, %v381
      %v502 = vpack.c.b16 %v386, %v382
      %v503 = vpack.c.b16 %v387, %v383
      %v504 = vpack.c.b16 %v392, %v388
      %v505 = vpack.c.b16 %v393, %v389
      %v506 = vpack.c.b16 %v394, %v390
      %v507 = vpack.c.b16 %v395, %v391
      %v508 = vpack.c.b16 %v400, %v396
      %v509 = vpack.c.b16 %v401, %v397
      %v510 = vpack.c.b16 %v402, %v398
      %v511 = vpack.c.b16 %v403, %v399
      %v512 = vpack.c.b16 %v408, %v404
      %v513 = vpack.c.b16 %v409, %v405
      %v514 = vpack.c.b16 %v410, %v406
      %v515 = vpack.c.b16 %v411, %v407
      %v516 = vpack.c.b16 %v416, %v412
      %v517 = vpack.c.b16 %v417, %v413
      %v518 = vpack.c.b16 %v418, %v414
      %v519 = vpack.c.b16 %v419, %v415
      %v520 = vpack.c.b16 %v424, %v420
      %v521 = vpack.c.b16 %v425, %v421
      %v522 = vpack.c.b16 %v426, %v422
      %v523 = vpack.c.b16 %v427, %v423
      %v524 = vpack.c.b16 %v432, %v428
      %v525 = vpack.c.b16 %v433, %v429
      %v526 = vpack.c.b16 %v434, %v430
      %v527 = vpack.c.b16 %v435, %v431
      %v528 = vpack.c.b16 %v440, %v436
      %v529 = vpack.c.b16 %v441, %v437
      %v530 = vpack.c.b16 %v442, %v438
      %v531 = vpack.c.b16 %v443, %v439
      %v532 = vpack.c.b16 %v448, %v444
      %v533 = vpack.c.b16 %v449, %v445
      %v534 = vpack.c.b16 %v450, %v446
      %v535 = vpack.c.b16 %v451, %v447
      %v536 = vpack.c.b16 %v456, %v452
      %v537 = vpack.c.b16 %v457, %v453
      %v538 = vpack.c.b16 %v458, %v454
      %v539 = vpack.c.b16 %v459, %v455
      %v540 = vpack.c.b16 %v464, %v460
      %v541 = vpack.c.b16 %v465, %v461
      %v542 = vpack.c.b16 %v466, %v462
      %v543 = vpack.c.b16 %v467, %v463
      %v544 = vpack.c.b16 %v472, %v468
      %v545 = vpack.c.b16 %v473, %v469
      %v546 = vpack.c.b16 %v474, %v470
      %v547 = vpack.c.b16 %v475, %v471
      %v548 = vpack.c.b16 %v480, %v476
      %v549 = vpack.c.b16 %v481, %v477
      %v550 = vpack.c.b16 %v482, %v478
      %v551 = vpack.c.b16 %v483, %v479
      %v552 = vpack.c.b16 %v488, %v484
      %v553 = vpack.c.b16 %v489, %v485
      %v554 = vpack.c.b16 %v490, %v486
      %v555 = vpack.c.b16 %v491, %v487
      %v658 = vunpack.c.l.b16 %v242
      %v659 = vunpack.c.l.b16 %v243
      %v660 = vunpack.c.l.b16 %v244
      %v661 = vunpack.c.l.b16 %v245
      %v662 = vunpack.c.l.b16 %v246
      %v663 = vunpack.c.l.b16 %v247
      %v664 = vunpack.c.l.b16 %v248
      %v665 = vunpack.c.l.b16 %v249
      %v666 = vunpack.c.l.b16 %v250
      %v667 = vunpack.c.l.b16 %v251
      %v668 = vunpack.c.l.b16 %v252
      %v669 = vunpack.c.l.b16 %v253
      %v670 = vunpack.c.l.b16 %v254
      %v671 = vunpack.c.l.b16 %v255
      %v672 = vunpack.c.l.b16 %v256
      %v673 = vunpack.c.l.b16 %v257
      %v674 = vunpack.c.l.b16 %v258
      %v675 = vunpack.c.l.b16 %v259
      %v676 = vunpack.c.l.b16 %v260
      %v677 = vunpack.c.l.b16 %v261
      %v678 = vunpack.c.l.b16 %v262
      %v679 = vunpack.c.l.b16 %v263
      %v680 = vunpack.c.l.b16 %v264
      %v681 = vunpack.c.l.b16 %v265
      %v682 = vunpack.c.l.b16 %v266
      %v683 = vunpack.c.l.b16 %v267
      %v684 = vunpack.c.l.b16 %v268
      %v685 = vunpack.c.l.b16 %v269
      %v686 = vunpack.c.l.b16 %v270
      %v687 = vunpack.c.l.b16 %v271
      %v688 = vunpack.c.l.b16 %v272
      %v689 = vunpack.c.l.b16 %v273
      %v690 = vunpack.c.l.b16 %v274
      %v691 = vunpack.c.l.b16 %v275
      %v692 = vunpack.c.l.b16 %v276
      %v693 = vunpack.c.l.b16 %v277
      %v694 = vunpack.c.l.b16 %v278
      %v695 = vunpack.c.l.b16 %v279
      %v696 = vunpack.c.l.b16 %v280
      %v697 = vunpack.c.l.b16 %v281
      %v698 = vunpack.c.l.b16 %v282
      %v699 = vunpack.c.l.b16 %v283
      %v700 = vunpack.c.l.b16 %v284
      %v701 = vunpack.c.l.b16 %v285
      %v702 = vunpack.c.l.b16 %v286
      %v703 = vunpack.c.l.b16 %v287
      %v704 = vunpack.c.l.b16 %v288
      %v705 = vunpack.c.l.b16 %v289
      %v706 = vunpack.c.l.b16 %v290
      %v707 = vunpack.c.l.b16 %v291
      %v708 = vunpack.c.l.b16 %v292
      %v709 = vunpack.c.l.b16 %v293
      %v710 = vunpack.c.l.b16 %v294
      %v711 = vunpack.c.l.b16 %v295
      %v712 = vpack.c.b16 %v659, %v658
      %v713 = vpack.c.b16 %v661, %v660
      %v714 = vpack.c.b16 %v663, %v662
      %v715 = vpack.c.b16 %v665, %v664
      %v716 = vpack.c.b16 %v667, %v666
      %v717 = vpack.c.b16 %v669, %v668
      %v718 = vpack.c.b16 %v671, %v670
      %v719 = vpack.c.b16 %v673, %v672
      %v720 = vpack.c.b16 %v675, %v674
      %v721 = vpack.c.b16 %v677, %v676
      %v722 = vpack.c.b16 %v679, %v678
      %v723 = vpack.c.b16 %v681, %v680
      %v724 = vpack.c.b16 %v683, %v682
      %v725 = vpack.c.b16 %v685, %v684
      %v726 = vpack.c.b16 %v687, %v686
      %v727 = vpack.c.b16 %v689, %v688
      %v728 = vpack.c.b16 %v691, %v690
      %v729 = vpack.c.b16 %v693, %v692
      %v730 = vpack.c.b16 %v695, %v694
      %v731 = vpack.c.b16 %v697, %v696
      %v732 = vpack.c.b16 %v699, %v698
      %v733 = vpack.c.b16 %v701, %v700
      %v734 = vpack.c.b16 %v703, %v702
      %v735 = vpack.c.b16 %v705, %v704
      %v736 = vpack.c.b16 %v707, %v706
      %v737 = vpack.c.b16 %v709, %v708
      %v738 = vpack.c.b16 %v711, %v710
      %vm766 = vcmask 392192
      %v768 = vsel %vm766, %v495, 0
      %v771 = vsel %vm766, %v499, 0
      %v774 = vsel %vm766, %v503, 0
      %v777 = vsel %vm766, %v507, 0
      %v780 = vsel %vm766, %v511, 0
      %v783 = vsel %vm766, %v515, 0
      %v786 = vsel %vm766, %v519, 0
      %v789 = vsel %vm766, %v523, 0
      %v792 = vsel %vm766, %v527, 0
      %v795 = vsel %vm766, %v531, 0
      %v798 = vsel %vm766, %v535, 0
      %v801 = vsel %vm766, %v539, 0
      %v804 = vsel %vm766, %v543, 0
      %v807 = vsel %vm766, %v547, 0
      %v810 = vsel %vm766, %v551, 0
      %v813 = vsel %vm766, %v555, 0
      %815 = vmatpush.bf16.msra.mxu0 %v719
      %816 = vmatpush.bf16.msra.mxu0 %v718
      %817 = vmatpush.bf16.msra.mxu0 %v717
      %818 = vmatpush.bf16.msra.mxu0 %v716
      %819 = vmatpush.bf16.msra.mxu0 %v715
      %820 = vmatpush.bf16.msra.mxu0 %v714
      %821 = vmatpush.bf16.msra.mxu0 %v713
      %822 = vmatpush.bf16.msra.mxu0 %v712
      %823 = vmatmul.bf16.gmra.mxu0 %v492
      %v824 = vpop.f32.mrf.mxu0
      %v825 = vadd.f32 %v298, %v824
      %v826 = vpop.f32.mrf.mxu0
      %v827 = vadd.f32 %v298, %v826
      %828 = vmatmul.bf16.gmra.mxu0 %v496
      %v829 = vpop.f32.mrf.mxu0
      %v830 = vadd.f32 %v298, %v829
      %v831 = vpop.f32.mrf.mxu0
      %v832 = vadd.f32 %v298, %v831
      %833 = vmatmul.bf16.gmra.mxu0 %v500
      %v834 = vpop.f32.mrf.mxu0
      %v835 = vadd.f32 %v298, %v834
      %v836 = vpop.f32.mrf.mxu0
      %v837 = vadd.f32 %v298, %v836
      %838 = vmatmul.bf16.gmra.mxu0 %v504
      %v839 = vpop.f32.mrf.mxu0
      %v840 = vadd.f32 %v298, %v839
      %v841 = vpop.f32.mrf.mxu0
      %v842 = vadd.f32 %v298, %v841
      %843 = vmatmul.bf16.gmra.mxu0 %v508
      %v844 = vpop.f32.mrf.mxu0
      %v845 = vadd.f32 %v298, %v844
      %v846 = vpop.f32.mrf.mxu0
      %v847 = vadd.f32 %v298, %v846
      %848 = vmatmul.bf16.gmra.mxu0 %v512
      %v849 = vpop.f32.mrf.mxu0
      %v850 = vadd.f32 %v298, %v849
      %v851 = vpop.f32.mrf.mxu0
      %v852 = vadd.f32 %v298, %v851
      %853 = vmatmul.bf16.gmra.mxu0 %v516
      %v854 = vpop.f32.mrf.mxu0
      %v855 = vadd.f32 %v298, %v854
      %v856 = vpop.f32.mrf.mxu0
      %v857 = vadd.f32 %v298, %v856
      %858 = vmatmul.bf16.gmra.mxu0 %v520
      %v859 = vpop.f32.mrf.mxu0
      %v860 = vadd.f32 %v298, %v859
      %v861 = vpop.f32.mrf.mxu0
      %v862 = vadd.f32 %v298, %v861
      %863 = vmatmul.bf16.gmra.mxu0 %v524
      %v864 = vpop.f32.mrf.mxu0
      %v865 = vadd.f32 %v298, %v864
      %v866 = vpop.f32.mrf.mxu0
      %v867 = vadd.f32 %v298, %v866
      %868 = vmatmul.bf16.gmra.mxu0 %v528
      %v869 = vpop.f32.mrf.mxu0
      %v870 = vadd.f32 %v298, %v869
      %v871 = vpop.f32.mrf.mxu0
      %v872 = vadd.f32 %v298, %v871
      %873 = vmatmul.bf16.gmra.mxu0 %v532
      %v874 = vpop.f32.mrf.mxu0
      %v875 = vadd.f32 %v298, %v874
      %v876 = vpop.f32.mrf.mxu0
      %v877 = vadd.f32 %v298, %v876
      %878 = vmatmul.bf16.gmra.mxu0 %v536
      %v879 = vpop.f32.mrf.mxu0
      %v880 = vadd.f32 %v298, %v879
      %v881 = vpop.f32.mrf.mxu0
      %v882 = vadd.f32 %v298, %v881
      %883 = vmatmul.bf16.gmra.mxu0 %v540
      %v884 = vpop.f32.mrf.mxu0
      %v885 = vadd.f32 %v298, %v884
      %v886 = vpop.f32.mrf.mxu0
      %v887 = vadd.f32 %v298, %v886
      %888 = vmatmul.bf16.gmra.mxu0 %v544
      %v889 = vpop.f32.mrf.mxu0
      %v890 = vadd.f32 %v298, %v889
      %v891 = vpop.f32.mrf.mxu0
      %v892 = vadd.f32 %v298, %v891
      %893 = vmatmul.bf16.gmra.mxu0 %v548
      %v894 = vpop.f32.mrf.mxu0
      %v895 = vadd.f32 %v298, %v894
      %v896 = vpop.f32.mrf.mxu0
      %v897 = vadd.f32 %v298, %v896
      %898 = vmatmul.bf16.gmra.mxu0 %v552
      %v899 = vpop.f32.mrf.mxu0
      %v900 = vadd.f32 %v298, %v899
      %v901 = vpop.f32.mrf.mxu0
      %v902 = vadd.f32 %v298, %v901
      %903 = vdwg.mxu0
      %904 = vmatpush.bf16.msra.mxu0 %v727
      %905 = vmatpush.bf16.msra.mxu0 %v726
      %906 = vmatpush.bf16.msra.mxu0 %v725
      %907 = vmatpush.bf16.msra.mxu0 %v724
      %908 = vmatpush.bf16.msra.mxu0 %v723
      %909 = vmatpush.bf16.msra.mxu0 %v722
      %910 = vmatpush.bf16.msra.mxu0 %v721
      %911 = vmatpush.bf16.msra.mxu0 %v720
      %912 = vmatmul.bf16.gmra.mxu0 %v493
      %v913 = vpop.f32.mrf.mxu0
      %v914 = vadd.f32 %v825, %v913
      %v915 = vpop.f32.mrf.mxu0
      %v916 = vadd.f32 %v827, %v915
      %917 = vmatmul.bf16.gmra.mxu0 %v497
      %v918 = vpop.f32.mrf.mxu0
      %v919 = vadd.f32 %v830, %v918
      %v920 = vpop.f32.mrf.mxu0
      %v921 = vadd.f32 %v832, %v920
      %922 = vmatmul.bf16.gmra.mxu0 %v501
      %v923 = vpop.f32.mrf.mxu0
      %v924 = vadd.f32 %v835, %v923
      %v925 = vpop.f32.mrf.mxu0
      %v926 = vadd.f32 %v837, %v925
      %927 = vmatmul.bf16.gmra.mxu0 %v505
      %v928 = vpop.f32.mrf.mxu0
      %v929 = vadd.f32 %v840, %v928
      %v930 = vpop.f32.mrf.mxu0
      %v931 = vadd.f32 %v842, %v930
      %932 = vmatmul.bf16.gmra.mxu0 %v509
      %v933 = vpop.f32.mrf.mxu0
      %v934 = vadd.f32 %v845, %v933
      %v935 = vpop.f32.mrf.mxu0
      %v936 = vadd.f32 %v847, %v935
      %937 = vmatmul.bf16.gmra.mxu0 %v513
      %v938 = vpop.f32.mrf.mxu0
      %v939 = vadd.f32 %v850, %v938
      %v940 = vpop.f32.mrf.mxu0
      %v941 = vadd.f32 %v852, %v940
      %942 = vmatmul.bf16.gmra.mxu0 %v517
      %v943 = vpop.f32.mrf.mxu0
      %v944 = vadd.f32 %v855, %v943
      %v945 = vpop.f32.mrf.mxu0
      %v946 = vadd.f32 %v857, %v945
      %947 = vmatmul.bf16.gmra.mxu0 %v521
      %v948 = vpop.f32.mrf.mxu0
      %v949 = vadd.f32 %v860, %v948
      %v950 = vpop.f32.mrf.mxu0
      %v951 = vadd.f32 %v862, %v950
      %952 = vmatmul.bf16.gmra.mxu0 %v525
      %v953 = vpop.f32.mrf.mxu0
      %v954 = vadd.f32 %v865, %v953
      %v955 = vpop.f32.mrf.mxu0
      %v956 = vadd.f32 %v867, %v955
      %957 = vmatmul.bf16.gmra.mxu0 %v529
      %v958 = vpop.f32.mrf.mxu0
      %v959 = vadd.f32 %v870, %v958
      %v960 = vpop.f32.mrf.mxu0
      %v961 = vadd.f32 %v872, %v960
      %962 = vmatmul.bf16.gmra.mxu0 %v533
      %v963 = vpop.f32.mrf.mxu0
      %v964 = vadd.f32 %v875, %v963
      %v965 = vpop.f32.mrf.mxu0
      %v966 = vadd.f32 %v877, %v965
      %967 = vmatmul.bf16.gmra.mxu0 %v537
      %v968 = vpop.f32.mrf.mxu0
      %v969 = vadd.f32 %v880, %v968
      %v970 = vpop.f32.mrf.mxu0
      %v971 = vadd.f32 %v882, %v970
      %972 = vmatmul.bf16.gmra.mxu0 %v541
      %v973 = vpop.f32.mrf.mxu0
      %v974 = vadd.f32 %v885, %v973
      %v975 = vpop.f32.mrf.mxu0
      %v976 = vadd.f32 %v887, %v975
      %977 = vmatmul.bf16.gmra.mxu0 %v545
      %v978 = vpop.f32.mrf.mxu0
      %v979 = vadd.f32 %v890, %v978
      %v980 = vpop.f32.mrf.mxu0
      %v981 = vadd.f32 %v892, %v980
      %982 = vmatmul.bf16.gmra.mxu0 %v549
      %v983 = vpop.f32.mrf.mxu0
      %v984 = vadd.f32 %v895, %v983
      %v985 = vpop.f32.mrf.mxu0
      %v986 = vadd.f32 %v897, %v985
      %987 = vmatmul.bf16.gmra.mxu0 %v553
      %v988 = vpop.f32.mrf.mxu0
      %v989 = vadd.f32 %v900, %v988
      %v990 = vpop.f32.mrf.mxu0
      %v991 = vadd.f32 %v902, %v990
      %992 = vdwg.mxu0
      %993 = vmatpush.bf16.msra.mxu0 %v735
      %994 = vmatpush.bf16.msra.mxu0 %v734
      %995 = vmatpush.bf16.msra.mxu0 %v733
      %996 = vmatpush.bf16.msra.mxu0 %v732
      %997 = vmatpush.bf16.msra.mxu0 %v731
      %998 = vmatpush.bf16.msra.mxu0 %v730
      %999 = vmatpush.bf16.msra.mxu0 %v729
      %1000 = vmatpush.bf16.msra.mxu0 %v728
      %1001 = vmatmul.bf16.gmra.mxu0 %v494
      %v1002 = vpop.f32.mrf.mxu0
      %v1003 = vadd.f32 %v914, %v1002
      %v1004 = vpop.f32.mrf.mxu0
      %v1005 = vadd.f32 %v916, %v1004
      %1006 = vmatmul.bf16.gmra.mxu0 %v498
      %v1007 = vpop.f32.mrf.mxu0
      %v1008 = vadd.f32 %v919, %v1007
      %v1009 = vpop.f32.mrf.mxu0
      %v1010 = vadd.f32 %v921, %v1009
      %1011 = vmatmul.bf16.gmra.mxu0 %v502
      %v1012 = vpop.f32.mrf.mxu0
      %v1013 = vadd.f32 %v924, %v1012
      %v1014 = vpop.f32.mrf.mxu0
      %v1015 = vadd.f32 %v926, %v1014
      %1016 = vmatmul.bf16.gmra.mxu0 %v506
      %v1017 = vpop.f32.mrf.mxu0
      %v1018 = vadd.f32 %v929, %v1017
      %v1019 = vpop.f32.mrf.mxu0
      %v1020 = vadd.f32 %v931, %v1019
      %1021 = vmatmul.bf16.gmra.mxu0 %v510
      %v1022 = vpop.f32.mrf.mxu0
      %v1023 = vadd.f32 %v934, %v1022
      %v1024 = vpop.f32.mrf.mxu0
      %v1025 = vadd.f32 %v936, %v1024
      %1026 = vmatmul.bf16.gmra.mxu0 %v514
      %v1027 = vpop.f32.mrf.mxu0
      %v1028 = vadd.f32 %v939, %v1027
      %v1029 = vpop.f32.mrf.mxu0
      %v1030 = vadd.f32 %v941, %v1029
      %1031 = vmatmul.bf16.gmra.mxu0 %v518
      %v1032 = vpop.f32.mrf.mxu0
      %v1033 = vadd.f32 %v944, %v1032
      %v1034 = vpop.f32.mrf.mxu0
      %v1035 = vadd.f32 %v946, %v1034
      %1036 = vmatmul.bf16.gmra.mxu0 %v522
      %v1037 = vpop.f32.mrf.mxu0
      %v1038 = vadd.f32 %v949, %v1037
      %v1039 = vpop.f32.mrf.mxu0
      %v1040 = vadd.f32 %v951, %v1039
      %1041 = vmatmul.bf16.gmra.mxu0 %v526
      %v1042 = vpop.f32.mrf.mxu0
      %v1043 = vadd.f32 %v954, %v1042
      %v1044 = vpop.f32.mrf.mxu0
      %v1045 = vadd.f32 %v956, %v1044
      %1046 = vmatmul.bf16.gmra.mxu0 %v530
      %v1047 = vpop.f32.mrf.mxu0
      %v1048 = vadd.f32 %v959, %v1047
      %v1049 = vpop.f32.mrf.mxu0
      %v1050 = vadd.f32 %v961, %v1049
      %1051 = vmatmul.bf16.gmra.mxu0 %v534
      %v1052 = vpop.f32.mrf.mxu0
      %v1053 = vadd.f32 %v964, %v1052
      %v1054 = vpop.f32.mrf.mxu0
      %v1055 = vadd.f32 %v966, %v1054
      %1056 = vmatmul.bf16.gmra.mxu0 %v538
      %v1057 = vpop.f32.mrf.mxu0
      %v1058 = vadd.f32 %v969, %v1057
      %v1059 = vpop.f32.mrf.mxu0
      %v1060 = vadd.f32 %v971, %v1059
      %1061 = vmatmul.bf16.gmra.mxu0 %v542
      %v1062 = vpop.f32.mrf.mxu0
      %v1063 = vadd.f32 %v974, %v1062
      %v1064 = vpop.f32.mrf.mxu0
      %v1065 = vadd.f32 %v976, %v1064
      %1066 = vmatmul.bf16.gmra.mxu0 %v546
      %v1067 = vpop.f32.mrf.mxu0
      %v1068 = vadd.f32 %v979, %v1067
      %v1069 = vpop.f32.mrf.mxu0
      %v1070 = vadd.f32 %v981, %v1069
      %1071 = vmatmul.bf16.gmra.mxu0 %v550
      %v1072 = vpop.f32.mrf.mxu0
      %v1073 = vadd.f32 %v984, %v1072
      %v1074 = vpop.f32.mrf.mxu0
      %v1075 = vadd.f32 %v986, %v1074
      %1076 = vmatmul.bf16.gmra.mxu0 %v554
      %v1077 = vpop.f32.mrf.mxu0
      %v1078 = vadd.f32 %v989, %v1077
      %v1079 = vpop.f32.mrf.mxu0
      %v1080 = vadd.f32 %v991, %v1079
      %1081 = vdwg.mxu0
      %1082 = vmatpush.bf16.msra.mxu0 0
      %1083 = vmatpush.bf16.msra.mxu0 0
      %1084 = vmatpush.bf16.msra.mxu0 0
      %1085 = vmatpush.bf16.msra.mxu0 0
      %1086 = vmatpush.bf16.msra.mxu0 0
      %1087 = vmatpush.bf16.msra.mxu0 %v738
      %1088 = vmatpush.bf16.msra.mxu0 %v737
      %1089 = vmatpush.bf16.msra.mxu0 %v736
      %1090 = vmatmul.bf16.gmra.mxu0 %v768
      %v1091 = vpop.f32.mrf.mxu0
      %v1092 = vadd.f32 %v1003, %v1091
      %v1093 = vpop.f32.mrf.mxu0
      %v1094 = vadd.f32 %v1005, %v1093
      %1095 = vmatmul.bf16.gmra.mxu0 %v771
      %v1096 = vpop.f32.mrf.mxu0
      %v1097 = vadd.f32 %v1008, %v1096
      %v1098 = vpop.f32.mrf.mxu0
      %v1099 = vadd.f32 %v1010, %v1098
      %1100 = vmatmul.bf16.gmra.mxu0 %v774
      %v1101 = vpop.f32.mrf.mxu0
      %v1102 = vadd.f32 %v1013, %v1101
      %v1103 = vpop.f32.mrf.mxu0
      %v1104 = vadd.f32 %v1015, %v1103
      %1105 = vmatmul.bf16.gmra.mxu0 %v777
      %v1106 = vpop.f32.mrf.mxu0
      %v1107 = vadd.f32 %v1018, %v1106
      %v1108 = vpop.f32.mrf.mxu0
      %v1109 = vadd.f32 %v1020, %v1108
      %1110 = vmatmul.bf16.gmra.mxu0 %v780
      %v1111 = vpop.f32.mrf.mxu0
      %v1112 = vadd.f32 %v1023, %v1111
      %v1113 = vpop.f32.mrf.mxu0
      %v1114 = vadd.f32 %v1025, %v1113
      %1115 = vmatmul.bf16.gmra.mxu0 %v783
      %v1116 = vpop.f32.mrf.mxu0
      %v1117 = vadd.f32 %v1028, %v1116
      %v1118 = vpop.f32.mrf.mxu0
      %v1119 = vadd.f32 %v1030, %v1118
      %1120 = vmatmul.bf16.gmra.mxu0 %v786
      %v1121 = vpop.f32.mrf.mxu0
      %v1122 = vadd.f32 %v1033, %v1121
      %v1123 = vpop.f32.mrf.mxu0
      %v1124 = vadd.f32 %v1035, %v1123
      %1125 = vmatmul.bf16.gmra.mxu0 %v789
      %v1126 = vpop.f32.mrf.mxu0
      %v1127 = vadd.f32 %v1038, %v1126
      %v1128 = vpop.f32.mrf.mxu0
      %v1129 = vadd.f32 %v1040, %v1128
      %1130 = vmatmul.bf16.gmra.mxu0 %v792
      %v1131 = vpop.f32.mrf.mxu0
      %v1132 = vadd.f32 %v1043, %v1131
      %v1133 = vpop.f32.mrf.mxu0
      %v1134 = vadd.f32 %v1045, %v1133
      %1135 = vmatmul.bf16.gmra.mxu0 %v795
      %v1136 = vpop.f32.mrf.mxu0
      %v1137 = vadd.f32 %v1048, %v1136
      %v1138 = vpop.f32.mrf.mxu0
      %v1139 = vadd.f32 %v1050, %v1138
      %1140 = vmatmul.bf16.gmra.mxu0 %v798
      %v1141 = vpop.f32.mrf.mxu0
      %v1142 = vadd.f32 %v1053, %v1141
      %v1143 = vpop.f32.mrf.mxu0
      %v1144 = vadd.f32 %v1055, %v1143
      %1145 = vmatmul.bf16.gmra.mxu0 %v801
      %v1146 = vpop.f32.mrf.mxu0
      %v1147 = vadd.f32 %v1058, %v1146
      %v1148 = vpop.f32.mrf.mxu0
      %v1149 = vadd.f32 %v1060, %v1148
      %1150 = vmatmul.bf16.gmra.mxu0 %v804
      %v1151 = vpop.f32.mrf.mxu0
      %v1152 = vadd.f32 %v1063, %v1151
      %v1153 = vpop.f32.mrf.mxu0
      %v1154 = vadd.f32 %v1065, %v1153
      %1155 = vmatmul.bf16.gmra.mxu0 %v807
      %v1156 = vpop.f32.mrf.mxu0
      %v1157 = vadd.f32 %v1068, %v1156
      %v1158 = vpop.f32.mrf.mxu0
      %v1159 = vadd.f32 %v1070, %v1158
      %1160 = vmatmul.bf16.gmra.mxu0 %v810
      %v1161 = vpop.f32.mrf.mxu0
      %v1162 = vadd.f32 %v1073, %v1161
      %v1163 = vpop.f32.mrf.mxu0
      %v1164 = vadd.f32 %v1075, %v1163
      %1165 = vmatmul.bf16.gmra.mxu0 %v813
      %v1166 = vpop.f32.mrf.mxu0
      %v1167 = vadd.f32 %v1078, %v1166
      %v1168 = vpop.f32.mrf.mxu0
      %v1169 = vadd.f32 %v1080, %v1168
      %1170 = vdwg.mxu0
      %v1171 = vmax.f32 %v1092, 0.0
      %v1172 = vmax.f32 %v1094, 0.0
      %v1173 = vmax.f32 %v1097, 0.0
      %v1174 = vmax.f32 %v1099, 0.0
      %v1175 = vmax.f32 %v1102, 0.0
      %v1176 = vmax.f32 %v1104, 0.0
      %v1177 = vmax.f32 %v1107, 0.0
      %v1178 = vmax.f32 %v1109, 0.0
      %v1179 = vmax.f32 %v1112, 0.0
      %v1180 = vmax.f32 %v1114, 0.0
      %v1181 = vmax.f32 %v1117, 0.0
      %v1182 = vmax.f32 %v1119, 0.0
      %v1183 = vmax.f32 %v1122, 0.0
      %v1184 = vmax.f32 %v1124, 0.0
      %v1185 = vmax.f32 %v1127, 0.0
      %v1186 = vmax.f32 %v1129, 0.0
      %v1187 = vmax.f32 %v1132, 0.0
      %v1188 = vmax.f32 %v1134, 0.0
      %v1189 = vmax.f32 %v1137, 0.0
      %v1190 = vmax.f32 %v1139, 0.0
      %v1191 = vmax.f32 %v1142, 0.0
      %v1192 = vmax.f32 %v1144, 0.0
      %v1193 = vmax.f32 %v1147, 0.0
      %v1194 = vmax.f32 %v1149, 0.0
      %v1195 = vmax.f32 %v1152, 0.0
      %v1196 = vmax.f32 %v1154, 0.0
      %v1197 = vmax.f32 %v1157, 0.0
      %v1198 = vmax.f32 %v1159, 0.0
      %v1199 = vmax.f32 %v1162, 0.0
      %v1200 = vmax.f32 %v1164, 0.0
      %v1201 = vmax.f32 %v1167, 0.0
      %v1202 = vmax.f32 %v1169, 0.0
      %v1203 = vpack.c.bf16 %v1171, %v1171
      %v1204 = vpack.c.bf16 %v1172, %v1172
      %v1205 = vpack.c.bf16 %v1173, %v1173
      %v1206 = vpack.c.bf16 %v1174, %v1174
      %v1207 = vpack.c.bf16 %v1175, %v1175
      %v1208 = vpack.c.bf16 %v1176, %v1176
      %v1209 = vpack.c.bf16 %v1177, %v1177
      %v1210 = vpack.c.bf16 %v1178, %v1178
      %v1211 = vpack.c.bf16 %v1179, %v1179
      %v1212 = vpack.c.bf16 %v1180, %v1180
      %v1213 = vpack.c.bf16 %v1181, %v1181
      %v1214 = vpack.c.bf16 %v1182, %v1182
      %v1215 = vpack.c.bf16 %v1183, %v1183
      %v1216 = vpack.c.bf16 %v1184, %v1184
      %v1217 = vpack.c.bf16 %v1185, %v1185
      %v1218 = vpack.c.bf16 %v1186, %v1186
      %v1219 = vpack.c.bf16 %v1187, %v1187
      %v1220 = vpack.c.bf16 %v1188, %v1188
      %v1221 = vpack.c.bf16 %v1189, %v1189
      %v1222 = vpack.c.bf16 %v1190, %v1190
      %v1223 = vpack.c.bf16 %v1191, %v1191
      %v1224 = vpack.c.bf16 %v1192, %v1192
      %v1225 = vpack.c.bf16 %v1193, %v1193
      %v1226 = vpack.c.bf16 %v1194, %v1194
      %v1227 = vpack.c.bf16 %v1195, %v1195
      %v1228 = vpack.c.bf16 %v1196, %v1196
      %v1229 = vpack.c.bf16 %v1197, %v1197
      %v1230 = vpack.c.bf16 %v1198, %v1198
      %v1231 = vpack.c.bf16 %v1199, %v1199
      %v1232 = vpack.c.bf16 %v1200, %v1200
      %v1233 = vpack.c.bf16 %v1201, %v1201
      %v1234 = vpack.c.bf16 %v1202, %v1202
      %1235 = vst [vmem:[%s175] sm:$0xf] %v1203
      %1236 = vst [vmem:[%s175 + $0x4] sm:$0xf] %v1204
      %1237 = vst [vmem:[%s175 + $0x8] sm:$0xf] %v1205
      %1238 = vst [vmem:[%s175 + $0xc] sm:$0xf] %v1206
      %1239 = vst [vmem:[%s175 + $0x10] sm:$0xf] %v1207
      %1240 = vst [vmem:[%s175 + $0x14] sm:$0xf] %v1208
      %1241 = vst [vmem:[%s175 + $0x18] sm:$0xf] %v1209
      %1242 = vst [vmem:[%s175 + $0x1c] sm:$0xf] %v1210
      %1243 = vst [vmem:[%s175 + $0x20] sm:$0xf] %v1211
      %1244 = vst [vmem:[%s175 + $0x24] sm:$0xf] %v1212
      %1245 = vst [vmem:[%s175 + $0x28] sm:$0xf] %v1213
      %1246 = vst [vmem:[%s175 + $0x2c] sm:$0xf] %v1214
      %1247 = vst [vmem:[%s175 + $0x30] sm:$0xf] %v1215
      %1248 = vst [vmem:[%s175 + $0x34] sm:$0xf] %v1216
      %1249 = vst [vmem:[%s175 + $0x38] sm:$0xf] %v1217
      %1250 = vst [vmem:[%s175 + $0x3c] sm:$0xf] %v1218
      %1251 = vst [vmem:[%s175 + $0x40] sm:$0xf] %v1219
      %1252 = vst [vmem:[%s175 + $0x44] sm:$0xf] %v1220
      %1253 = vst [vmem:[%s175 + $0x48] sm:$0xf] %v1221
      %1254 = vst [vmem:[%s175 + $0x4c] sm:$0xf] %v1222
      %1255 = vst [vmem:[%s175 + $0x50] sm:$0xf] %v1223
      %1256 = vst [vmem:[%s175 + $0x54] sm:$0xf] %v1224
      %1257 = vst [vmem:[%s175 + $0x58] sm:$0xf] %v1225
      %1258 = vst [vmem:[%s175 + $0x5c] sm:$0xf] %v1226
      %1259 = vst [vmem:[%s175 + $0x60] sm:$0xf] %v1227
      %1260 = vst [vmem:[%s175 + $0x64] sm:$0xf] %v1228
      %1261 = vst [vmem:[%s175 + $0x68] sm:$0xf] %v1229
      %1262 = vst [vmem:[%s175 + $0x6c] sm:$0xf] %v1230
      %1263 = vst [vmem:[%s175 + $0x70] sm:$0xf] %v1231
      %1264 = vst [vmem:[%s175 + $0x74] sm:$0xf] %v1232
      %1265 = vst [vmem:[%s175 + $0x78] sm:$0xf] %v1233
      %1266 = vst [vmem:[%s175 + $0x7c] sm:$0xf] %v1234
      %s1267 = smul.u32 32, %s14
      %p1268 = scmp.lt.s32.totalorder %s1267, 63
      %s1269 = scalar_select %p1268, %s1267, 63
      %s1270 = smul.addr %s1269, 4
      %s1271 = scalar_lea.vmem %s3, %s1270
      // Predicated region
      $region33: #{temporal3d_forward.10} parent=31 // pred_check
        %p1272 = pneg %p100
      $region34: #{temporal3d_forward.10} parent=31 // pred_check_branch
        %1274 = sbr.rel (%p1272) target = $region36
      $region35: #{temporal3d_forward.10} parent=31 // pred_region
        %s1275 = smul.u32 32, %s14
      $region36: #{temporal3d_forward.10} parent=31 // pred_fallthru
        _
    $region32: #{temporal3d_forward.10} parent=5 // pred_fallthru
      _
    %p1276 = scmp.le.s32.totalorder 2, %s9
    // Predicated region
    $region37: #{temporal3d_forward.10} parent=5 // pred_check
      %p1277 = pneg %p1276
    $region38: #{temporal3d_forward.10} parent=5 // pred_check_branch
      %1279 = sbr.rel (%p1277) target = $region40
    $region39: #{temporal3d_forward.10} parent=5 // pred_region
      %s1280 = ssub.s32 %s9, 2
      // Predicated region
      $region41: #{temporal3d_forward.10} parent=39 // pred_check
        %p1281 = pneg %p106
      $region42: #{temporal3d_forward.10} parent=39 // pred_check_branch
        %1283 = sbr.rel (%p1281) target = $region44
      $region43: #{temporal3d_forward.10} parent=39 // pred_region
        %s1284 = smul.u32 32, %s15
        %p1285 = scmp.lt.s32.totalorder %s1284, 63
        %s1286 = scalar_select %p1285, %s1284, 63
        %s1287 = smul.addr %s1286, 4
        %s1288 = scalar_lea.vmem %s3, %s1287
      $region44: #{temporal3d_forward.10} parent=39 // pred_fallthru
        _
    $region40: #{temporal3d_forward.10} parent=5 // pred_fallthru
      _
  $region6: #{temporal3d_forward.10} parent=0 // loop_footer
    %s13 = sadd.s32 1, %s9
  $region7: #{temporal3d_forward.10} parent=0 // loop_footer_branch
    %8 = sbr.rel target = $region3
  $region8: #{temporal3d_forward.10} parent=0 // loop_exit
    _

// kernel: temporal3d_forward.11
$region0: #{temporal3d_forward.11}
  #allocation0 [shape = 'u32[]', space=smem, size = 0x4, offset = 0x4, fixed_abs, tag = 'smem constant byte address 0x4 - core index']
  #allocation1 [shape = 'u32[72,128]{1,0:T(1,128)}', space=vmem, size = 0x9000, scoped, tag = 'internal scratch']
  %s0 = inlined_call_operand.vmem [shape: bf16[64,128], index: 0, kind: input, shape index: {}]
  %s1 = inlined_call_operand.vmem [shape: bf16[64,128], index: 1, kind: input, shape index: {}]
  %s2 = inlined_call_operand.vmem [shape: bf16[64,128], index: 2, kind: input, shape index: {}]
  %s3 = inlined_call_operand.vmem [shape: bf16[64,128], index: 3, kind: input, shape index: {}]
  %s4 = inlined_call_operand.vmem [shape: bf16[64,128], index: 4, kind: input, shape index: {}]
  %s5 = inlined_call_operand.vmem [shape: bf16[64,128], index: 5, kind: input, shape index: {}]
  %s6 = inlined_call_operand.vmem [shape: bf16[64,128], index: 6, kind: input, shape index: {}]
  %s7 = inlined_call_operand.vmem [shape: bf16[64,128], index: 7, kind: input, shape index: {}]
  %s8 = inlined_call_operand.vmem [shape: bf16[64,128], index: 8, kind: output, shape index: {}]
  %s9 = sld [smem:[#allocation0]]
  $region42: #{temporal3d_forward.11} parent=0
    _
  %s11 = ssub.s32 1, %s9
  %s12 = scalar_select 0, %s11, %s9
  // Predicated region
  $region2: #{temporal3d_forward.11} parent=0 // pred_check
    _
  $region3: #{temporal3d_forward.11} parent=0 // pred_check_branch
    %14 = sbr.rel (0) target = $region5
  $region4: #{temporal3d_forward.11} parent=0 // pred_region
    _
  $region5: #{temporal3d_forward.11} parent=0 // pred_fallthru
    _
  // Predicated region
  $region6: #{temporal3d_forward.11} parent=0 // pred_check
    _
  $region7: #{temporal3d_forward.11} parent=0 // pred_check_branch
    %16 = sbr.rel (0) target = $region9
  $region8: #{temporal3d_forward.11} parent=0 // pred_region
    _
  $region9: #{temporal3d_forward.11} parent=0 // pred_fallthru
    _
  // Predicated region
  $region10: #{temporal3d_forward.11} parent=0 // pred_check
    _
  $region11: #{temporal3d_forward.11} parent=0 // pred_check_branch
    %18 = sbr.rel (0) target = $region13
  $region12: #{temporal3d_forward.11} parent=0 // pred_region
    _
  $region13: #{temporal3d_forward.11} parent=0 // pred_fallthru
    _
  // Predicated region
  $region14: #{temporal3d_forward.11} parent=0 // pred_check
    _
  $region15: #{temporal3d_forward.11} parent=0 // pred_check_branch
    %20 = sbr.rel (0) target = $region17
  $region16: #{temporal3d_forward.11} parent=0 // pred_region
    _
  $region17: #{temporal3d_forward.11} parent=0 // pred_fallthru
    _
  // Predicated region
  $region18: #{temporal3d_forward.11} parent=0 // pred_check
    _
  $region19: #{temporal3d_forward.11} parent=0 // pred_check_branch
    %22 = sbr.rel (0) target = $region21
  $region20: #{temporal3d_forward.11} parent=0 // pred_region
    _
  $region21: #{temporal3d_forward.11} parent=0 // pred_fallthru
    _
  // Predicated region
  $region22: #{temporal3d_forward.11} parent=0 // pred_check
    _
  $region23: #{temporal3d_forward.11} parent=0 // pred_check_branch
    %24 = sbr.rel (0) target = $region25
  $region24: #{temporal3d_forward.11} parent=0 // pred_region
    _
  $region25: #{temporal3d_forward.11} parent=0 // pred_fallthru
    _
  // Predicated region
  $region26: #{temporal3d_forward.11} parent=0 // pred_check
    _
  $region27: #{temporal3d_forward.11} parent=0 // pred_check_branch
    %26 = sbr.rel (0) target = $region29
  $region28: #{temporal3d_forward.11} parent=0 // pred_region
    _
  $region29: #{temporal3d_forward.11} parent=0 // pred_fallthru
    _
  // Predicated region
  $region30: #{temporal3d_forward.11} parent=0 // pred_check
    _
  $region31: #{temporal3d_forward.11} parent=0 // pred_check_branch
    %28 = sbr.rel (0) target = $region33
  $region32: #{temporal3d_forward.11} parent=0 // pred_region
    _
  $region33: #{temporal3d_forward.11} parent=0 // pred_fallthru
    _
  %v29 = vld [vmem:[%s0] sm:$0xf]
  %v30 = vld [vmem:[%s0 + $0x4] sm:$0xf]
  %v31 = vld [vmem:[%s0 + $0x8] sm:$0xf]
  %v32 = vld [vmem:[%s0 + $0xc] sm:$0xf]
  %v33 = vld [vmem:[%s0 + $0x10] sm:$0xf]
  %v34 = vld [vmem:[%s0 + $0x14] sm:$0xf]
  %v35 = vld [vmem:[%s0 + $0x18] sm:$0xf]
  %v36 = vld [vmem:[%s0 + $0x1c] sm:$0xf]
  %v37 = vunpack.c.l.bf16 %v29
  %v38 = vunpack.c.l.bf16 %v30
  %v39 = vunpack.c.l.bf16 %v31
  %v40 = vunpack.c.l.bf16 %v32
  %v41 = vunpack.c.l.bf16 %v33
  %v42 = vunpack.c.l.bf16 %v34
  %v43 = vunpack.c.l.bf16 %v35
  %v44 = vunpack.c.l.bf16 %v36
  %v45 = vld [vmem:[%s1] sm:$0xf]
  %v46 = vld [vmem:[%s1 + $0x4] sm:$0xf]
  %v47 = vld [vmem:[%s1 + $0x8] sm:$0xf]
  %v48 = vld [vmem:[%s1 + $0xc] sm:$0xf]
  %v49 = vld [vmem:[%s1 + $0x10] sm:$0xf]
  %v50 = vld [vmem:[%s1 + $0x14] sm:$0xf]
  %v51 = vld [vmem:[%s1 + $0x18] sm:$0xf]
  %v52 = vld [vmem:[%s1 + $0x1c] sm:$0xf]
  %v53 = vunpack.c.l.bf16 %v45
  %v54 = vunpack.c.l.bf16 %v46
  %v55 = vunpack.c.l.bf16 %v47
  %v56 = vunpack.c.l.bf16 %v48
  %v57 = vunpack.c.l.bf16 %v49
  %v58 = vunpack.c.l.bf16 %v50
  %v59 = vunpack.c.l.bf16 %v51
  %v60 = vunpack.c.l.bf16 %v52
  %v61 = vmax.f32 %v37, %v53
  %v62 = vmax.f32 %v38, %v54
  %v63 = vmax.f32 %v39, %v55
  %v64 = vmax.f32 %v40, %v56
  %v65 = vmax.f32 %v41, %v57
  %v66 = vmax.f32 %v42, %v58
  %v67 = vmax.f32 %v43, %v59
  %v68 = vmax.f32 %v44, %v60
  %v69 = vld [vmem:[%s2] sm:$0xf]
  %v70 = vld [vmem:[%s2 + $0x4] sm:$0xf]
  %v71 = vld [vmem:[%s2 + $0x8] sm:$0xf]
  %v72 = vld [vmem:[%s2 + $0xc] sm:$0xf]
  %v73 = vld [vmem:[%s2 + $0x10] sm:$0xf]
  %v74 = vld [vmem:[%s2 + $0x14] sm:$0xf]
  %v75 = vld [vmem:[%s2 + $0x18] sm:$0xf]
  %v76 = vld [vmem:[%s2 + $0x1c] sm:$0xf]
  %v77 = vunpack.c.l.bf16 %v69
  %v78 = vunpack.c.l.bf16 %v70
  %v79 = vunpack.c.l.bf16 %v71
  %v80 = vunpack.c.l.bf16 %v72
  %v81 = vunpack.c.l.bf16 %v73
  %v82 = vunpack.c.l.bf16 %v74
  %v83 = vunpack.c.l.bf16 %v75
  %v84 = vunpack.c.l.bf16 %v76
  %v85 = vld [vmem:[%s3] sm:$0xf]
  %v86 = vld [vmem:[%s3 + $0x4] sm:$0xf]
  %v87 = vld [vmem:[%s3 + $0x8] sm:$0xf]
  %v88 = vld [vmem:[%s3 + $0xc] sm:$0xf]
  %v89 = vld [vmem:[%s3 + $0x10] sm:$0xf]
  %v90 = vld [vmem:[%s3 + $0x14] sm:$0xf]
  %v91 = vld [vmem:[%s3 + $0x18] sm:$0xf]
  %v92 = vld [vmem:[%s3 + $0x1c] sm:$0xf]
  %v93 = vunpack.c.l.bf16 %v85
  %v94 = vunpack.c.l.bf16 %v86
  %v95 = vunpack.c.l.bf16 %v87
  %v96 = vunpack.c.l.bf16 %v88
  %v97 = vunpack.c.l.bf16 %v89
  %v98 = vunpack.c.l.bf16 %v90
  %v99 = vunpack.c.l.bf16 %v91
  %v100 = vunpack.c.l.bf16 %v92
  %v101 = vmax.f32 %v77, %v93
  %v102 = vmax.f32 %v78, %v94
  %v103 = vmax.f32 %v79, %v95
  %v104 = vmax.f32 %v80, %v96
  %v105 = vmax.f32 %v81, %v97
  %v106 = vmax.f32 %v82, %v98
  %v107 = vmax.f32 %v83, %v99
  %v108 = vmax.f32 %v84, %v100
  %v109 = vmax.f32 %v61, %v101
  %v110 = vmax.f32 %v62, %v102
  %v111 = vmax.f32 %v63, %v103
  %v112 = vmax.f32 %v64, %v104
  %v113 = vmax.f32 %v65, %v105
  %v114 = vmax.f32 %v66, %v106
  %v115 = vmax.f32 %v67, %v107
  %v116 = vmax.f32 %v68, %v108
  %v117 = vld [vmem:[%s4] sm:$0xf]
  %v118 = vld [vmem:[%s4 + $0x4] sm:$0xf]
  %v119 = vld [vmem:[%s4 + $0x8] sm:$0xf]
  %v120 = vld [vmem:[%s4 + $0xc] sm:$0xf]
  %v121 = vld [vmem:[%s4 + $0x10] sm:$0xf]
  %v122 = vld [vmem:[%s4 + $0x14] sm:$0xf]
  %v123 = vld [vmem:[%s4 + $0x18] sm:$0xf]
  %v124 = vld [vmem:[%s4 + $0x1c] sm:$0xf]
  %v125 = vunpack.c.l.bf16 %v117
  %v126 = vunpack.c.l.bf16 %v118
  %v127 = vunpack.c.l.bf16 %v119
  %v128 = vunpack.c.l.bf16 %v120
  %v129 = vunpack.c.l.bf16 %v121
  %v130 = vunpack.c.l.bf16 %v122
  %v131 = vunpack.c.l.bf16 %v123
  %v132 = vunpack.c.l.bf16 %v124
  %v133 = vld [vmem:[%s5] sm:$0xf]
  %v134 = vld [vmem:[%s5 + $0x4] sm:$0xf]
  %v135 = vld [vmem:[%s5 + $0x8] sm:$0xf]
  %v136 = vld [vmem:[%s5 + $0xc] sm:$0xf]
  %v137 = vld [vmem:[%s5 + $0x10] sm:$0xf]
  %v138 = vld [vmem:[%s5 + $0x14] sm:$0xf]
  %v139 = vld [vmem:[%s5 + $0x18] sm:$0xf]
  %v140 = vld [vmem:[%s5 + $0x1c] sm:$0xf]
  %v141 = vunpack.c.l.bf16 %v133
  %v142 = vunpack.c.l.bf16 %v134
  %v143 = vunpack.c.l.bf16 %v135
  %v144 = vunpack.c.l.bf16 %v136
  %v145 = vunpack.c.l.bf16 %v137
  %v146 = vunpack.c.l.bf16 %v138
  %v147 = vunpack.c.l.bf16 %v139
  %v148 = vunpack.c.l.bf16 %v140
  %v149 = vmax.f32 %v125, %v141
  %v150 = vmax.f32 %v126, %v142
  %v151 = vmax.f32 %v127, %v143
  %v152 = vmax.f32 %v128, %v144
  %v153 = vmax.f32 %v129, %v145
  %v154 = vmax.f32 %v130, %v146
  %v155 = vmax.f32 %v131, %v147
  %v156 = vmax.f32 %v132, %v148
  %v157 = vld [vmem:[%s6] sm:$0xf]
  %v158 = vld [vmem:[%s6 + $0x4] sm:$0xf]
  %v159 = vld [vmem:[%s6 + $0x8] sm:$0xf]
  %v160 = vld [vmem:[%s6 + $0xc] sm:$0xf]
  %v161 = vld [vmem:[%s6 + $0x10] sm:$0xf]
  %v162 = vld [vmem:[%s6 + $0x14] sm:$0xf]
  %v163 = vld [vmem:[%s6 + $0x18] sm:$0xf]
  %v164 = vld [vmem:[%s6 + $0x1c] sm:$0xf]
  %v165 = vunpack.c.l.bf16 %v157
  %v166 = vunpack.c.l.bf16 %v158
  %v167 = vunpack.c.l.bf16 %v159
  %v168 = vunpack.c.l.bf16 %v160
  %v169 = vunpack.c.l.bf16 %v161
  %v170 = vunpack.c.l.bf16 %v162
  %v171 = vunpack.c.l.bf16 %v163
  %v172 = vunpack.c.l.bf16 %v164
  %v173 = vld [vmem:[%s7] sm:$0xf]
  %v174 = vld [vmem:[%s7 + $0x4] sm:$0xf]
  %v175 = vld [vmem:[%s7 + $0x8] sm:$0xf]
  %v176 = vld [vmem:[%s7 + $0xc] sm:$0xf]
  %v177 = vld [vmem:[%s7 + $0x10] sm:$0xf]
  %v178 = vld [vmem:[%s7 + $0x14] sm:$0xf]
  %v179 = vld [vmem:[%s7 + $0x18] sm:$0xf]
  %v180 = vld [vmem:[%s7 + $0x1c] sm:$0xf]
  %v181 = vunpack.c.l.bf16 %v173
  %v182 = vunpack.c.l.bf16 %v174
  %v183 = vunpack.c.l.bf16 %v175
  %v184 = vunpack.c.l.bf16 %v176
  %v185 = vunpack.c.l.bf16 %v177
  %v186 = vunpack.c.l.bf16 %v178
  %v187 = vunpack.c.l.bf16 %v179
  %v188 = vunpack.c.l.bf16 %v180
  %v189 = vmax.f32 %v165, %v181
  %v190 = vmax.f32 %v166, %v182
  %v191 = vmax.f32 %v167, %v183
  %v192 = vmax.f32 %v168, %v184
  %v193 = vmax.f32 %v169, %v185
  %v194 = vmax.f32 %v170, %v186
  %v195 = vmax.f32 %v171, %v187
  %v196 = vmax.f32 %v172, %v188
  %v197 = vmax.f32 %v149, %v189
  %v198 = vmax.f32 %v150, %v190
  %v199 = vmax.f32 %v151, %v191
  %v200 = vmax.f32 %v152, %v192
  %v201 = vmax.f32 %v153, %v193
  %v202 = vmax.f32 %v154, %v194
  %v203 = vmax.f32 %v155, %v195
  %v204 = vmax.f32 %v156, %v196
  %v205 = vmax.f32 %v109, %v197
  %v206 = vmax.f32 %v110, %v198
  %v207 = vmax.f32 %v111, %v199
  %v208 = vmax.f32 %v112, %v200
  %v209 = vmax.f32 %v113, %v201
  %v210 = vmax.f32 %v114, %v202
  %v211 = vmax.f32 %v115, %v203
  %v212 = vmax.f32 %v116, %v204
  %v213 = vpack.c.bf16 %v205, %v205
  %v214 = vpack.c.bf16 %v206, %v206
  %v215 = vpack.c.bf16 %v207, %v207
  %v216 = vpack.c.bf16 %v208, %v208
  %v217 = vpack.c.bf16 %v209, %v209
  %v218 = vpack.c.bf16 %v210, %v210
  %v219 = vpack.c.bf16 %v211, %v211
  %v220 = vpack.c.bf16 %v212, %v212
  %221 = vst [vmem:[%s8] sm:$0xf] %v213
  %222 = vst [vmem:[%s8 + $0x4] sm:$0xf] %v214
  %223 = vst [vmem:[%s8 + $0x8] sm:$0xf] %v215
  %224 = vst [vmem:[%s8 + $0xc] sm:$0xf] %v216
  %225 = vst [vmem:[%s8 + $0x10] sm:$0xf] %v217
  %226 = vst [vmem:[%s8 + $0x14] sm:$0xf] %v218
  %227 = vst [vmem:[%s8 + $0x18] sm:$0xf] %v219
  %228 = vst [vmem:[%s8 + $0x1c] sm:$0xf] %v220
  // Predicated region
  $region34: #{temporal3d_forward.11} parent=0 // pred_check
    _
  $region35: #{temporal3d_forward.11} parent=0 // pred_check_branch
    %230 = sbr.rel (0) target = $region37
  $region36: #{temporal3d_forward.11} parent=0 // pred_region
    _
  $region37: #{temporal3d_forward.11} parent=0 // pred_fallthru
    _
  // Predicated region
  $region38: #{temporal3d_forward.11} parent=0 // pred_check
    _
  $region39: #{temporal3d_forward.11} parent=0 // pred_check_branch
    %232 = sbr.rel (0) target = $region41
  $region40: #{temporal3d_forward.11} parent=0 // pred_region
    _
  $region41: #{temporal3d_forward.11} parent=0 // pred_fallthru
    _

// kernel: temporal3d_forward.13
$region0: #{temporal3d_forward.13}
  #allocation0 [shape = 'u32[]', space=smem, size = 0x4, offset = 0x4, fixed_abs, tag = 'smem constant byte address 0x4 - core index']
  #allocation1 [shape = 'u32[72,128]{1,0:T(1,128)}', space=vmem, size = 0x9000, scoped, tag = 'internal scratch']
  %s0 = inlined_call_operand.vmem [shape: bf16[8,128], index: 0, kind: input, shape index: {}]
  %s1 = inlined_call_operand.vmem [shape: bf16[8,128], index: 1, kind: input, shape index: {}]
  %s2 = inlined_call_operand.vmem [shape: bf16[8,128], index: 2, kind: input, shape index: {}]
  %s3 = inlined_call_operand.vmem [shape: bf16[8,128], index: 3, kind: input, shape index: {}]
  %s4 = inlined_call_operand.vmem [shape: bf16[8,128], index: 4, kind: input, shape index: {}]
  %s5 = inlined_call_operand.vmem [shape: bf16[8,128], index: 5, kind: input, shape index: {}]
  %s6 = inlined_call_operand.vmem [shape: bf16[8,128], index: 6, kind: input, shape index: {}]
  %s7 = inlined_call_operand.vmem [shape: bf16[8,128], index: 7, kind: input, shape index: {}]
  %s8 = inlined_call_operand.vmem [shape: bf16[8,128], index: 8, kind: output, shape index: {}]
  %s9 = sld [smem:[#allocation0]]
  $region42: #{temporal3d_forward.13} parent=0
    _
  %s11 = ssub.s32 1, %s9
  %s12 = scalar_select 0, %s11, %s9
  // Predicated region
  $region2: #{temporal3d_forward.13} parent=0 // pred_check
    _
  $region3: #{temporal3d_forward.13} parent=0 // pred_check_branch
    %14 = sbr.rel (0) target = $region5
  $region4: #{temporal3d_forward.13} parent=0 // pred_region
    _
  $region5: #{temporal3d_forward.13} parent=0 // pred_fallthru
    _
  // Predicated region
  $region6: #{temporal3d_forward.13} parent=0 // pred_check
    _
  $region7: #{temporal3d_forward.13} parent=0 // pred_check_branch
    %16 = sbr.rel (0) target = $region9
  $region8: #{temporal3d_forward.13} parent=0 // pred_region
    _
  $region9: #{temporal3d_forward.13} parent=0 // pred_fallthru
    _
  // Predicated region
  $region10: #{temporal3d_forward.13} parent=0 // pred_check
    _
  $region11: #{temporal3d_forward.13} parent=0 // pred_check_branch
    %18 = sbr.rel (0) target = $region13
  $region12: #{temporal3d_forward.13} parent=0 // pred_region
    _
  $region13: #{temporal3d_forward.13} parent=0 // pred_fallthru
    _
  // Predicated region
  $region14: #{temporal3d_forward.13} parent=0 // pred_check
    _
  $region15: #{temporal3d_forward.13} parent=0 // pred_check_branch
    %20 = sbr.rel (0) target = $region17
  $region16: #{temporal3d_forward.13} parent=0 // pred_region
    _
  $region17: #{temporal3d_forward.13} parent=0 // pred_fallthru
    _
  // Predicated region
  $region18: #{temporal3d_forward.13} parent=0 // pred_check
    _
  $region19: #{temporal3d_forward.13} parent=0 // pred_check_branch
    %22 = sbr.rel (0) target = $region21
  $region20: #{temporal3d_forward.13} parent=0 // pred_region
    _
  $region21: #{temporal3d_forward.13} parent=0 // pred_fallthru
    _
  // Predicated region
  $region22: #{temporal3d_forward.13} parent=0 // pred_check
    _
  $region23: #{temporal3d_forward.13} parent=0 // pred_check_branch
    %24 = sbr.rel (0) target = $region25
  $region24: #{temporal3d_forward.13} parent=0 // pred_region
    _
  $region25: #{temporal3d_forward.13} parent=0 // pred_fallthru
    _
  // Predicated region
  $region26: #{temporal3d_forward.13} parent=0 // pred_check
    _
  $region27: #{temporal3d_forward.13} parent=0 // pred_check_branch
    %26 = sbr.rel (0) target = $region29
  $region28: #{temporal3d_forward.13} parent=0 // pred_region
    _
  $region29: #{temporal3d_forward.13} parent=0 // pred_fallthru
    _
  // Predicated region
  $region30: #{temporal3d_forward.13} parent=0 // pred_check
    _
  $region31: #{temporal3d_forward.13} parent=0 // pred_check_branch
    %28 = sbr.rel (0) target = $region33
  $region32: #{temporal3d_forward.13} parent=0 // pred_region
    _
  $region33: #{temporal3d_forward.13} parent=0 // pred_fallthru
    _
  %v29 = vld [vmem:[%s0] sm:$0xf]
  %v30 = vunpack.c.l.bf16 %v29
  %v31 = vld [vmem:[%s1] sm:$0xf]
  %v32 = vunpack.c.l.bf16 %v31
  %v33 = vmax.f32 %v30, %v32
  %v34 = vld [vmem:[%s2] sm:$0xf]
  %v35 = vunpack.c.l.bf16 %v34
  %v36 = vld [vmem:[%s3] sm:$0xf]
  %v37 = vunpack.c.l.bf16 %v36
  %v38 = vmax.f32 %v35, %v37
  %v39 = vmax.f32 %v33, %v38
  %v40 = vld [vmem:[%s4] sm:$0xf]
  %v41 = vunpack.c.l.bf16 %v40
  %v42 = vld [vmem:[%s5] sm:$0xf]
  %v43 = vunpack.c.l.bf16 %v42
  %v44 = vmax.f32 %v41, %v43
  %v45 = vld [vmem:[%s6] sm:$0xf]
  %v46 = vunpack.c.l.bf16 %v45
  %v47 = vld [vmem:[%s7] sm:$0xf]
  %v48 = vunpack.c.l.bf16 %v47
  %v49 = vmax.f32 %v46, %v48
  %v50 = vmax.f32 %v44, %v49
  %v51 = vmax.f32 %v39, %v50
  %v52 = vpack.c.bf16 %v51, %v51
  %53 = vst [vmem:[%s8] sm:$0xf] %v52
  // Predicated region
  $region34: #{temporal3d_forward.13} parent=0 // pred_check
    _
  $region35: #{temporal3d_forward.13} parent=0 // pred_check_branch
    %55 = sbr.rel (0) target = $region37
  $region36: #{temporal3d_forward.13} parent=0 // pred_region
    _
  $region37: #{temporal3d_forward.13} parent=0 // pred_fallthru
    _
  // Predicated region
  $region38: #{temporal3d_forward.13} parent=0 // pred_check
    _
  $region39: #{temporal3d_forward.13} parent=0 // pred_check_branch
    %57 = sbr.rel (0) target = $region41
  $region40: #{temporal3d_forward.13} parent=0 // pred_region
    _
  $region41: #{temporal3d_forward.13} parent=0 // pred_fallthru
    _

// kernel: temporal3d_forward.12
$region0: #{temporal3d_forward.12}
  #allocation0 [shape = 'u32[]', space=smem, size = 0x4, offset = 0x4, fixed_abs, tag = 'smem constant byte address 0x4 - core index']
  #allocation1 [shape = 'u32[72,128]{1,0:T(1,128)}', space=vmem, size = 0x9000, scoped, tag = 'internal scratch']
  %s0 = inlined_call_operand.vmem [shape: bf16[64,864], index: 0, kind: input, shape index: {}]
  %s1 = inlined_call_operand.vmem [shape: bf16[864,128], index: 1, kind: input, shape index: {}]
  %s2 = inlined_call_operand.vmem [shape: f32[1,128], index: 2, kind: input, shape index: {}]
  %s3 = inlined_call_operand.vmem [shape: bf16[64,128], index: 3, kind: output, shape index: {}]
  %s4 = sld [smem:[#allocation0]]
  $region22: #{temporal3d_forward.12} parent=0
    _
  %s6 = ssub.s32 1, %s4
  %s7 = scalar_select 0, %s6, %s4
  // Predicated region
  $region2: #{temporal3d_forward.12} parent=0 // pred_check
    _
  $region3: #{temporal3d_forward.12} parent=0 // pred_check_branch
    %9 = sbr.rel (0) target = $region5
  $region4: #{temporal3d_forward.12} parent=0 // pred_region
    _
  $region5: #{temporal3d_forward.12} parent=0 // pred_fallthru
    _
  // Predicated region
  $region6: #{temporal3d_forward.12} parent=0 // pred_check
    _
  $region7: #{temporal3d_forward.12} parent=0 // pred_check_branch
    %11 = sbr.rel (0) target = $region9
  $region8: #{temporal3d_forward.12} parent=0 // pred_region
    _
  $region9: #{temporal3d_forward.12} parent=0 // pred_fallthru
    _
  // Predicated region
  $region10: #{temporal3d_forward.12} parent=0 // pred_check
    _
  $region11: #{temporal3d_forward.12} parent=0 // pred_check_branch
    %13 = sbr.rel (0) target = $region13
  $region12: #{temporal3d_forward.12} parent=0 // pred_region
    _
  $region13: #{temporal3d_forward.12} parent=0 // pred_fallthru
    _
  %v15 = vld [vmem:[%s0] sm:$0xff]
  %v16 = vld [vmem:[%s0 + $0x8] sm:$0xff]
  %v17 = vld [vmem:[%s0 + $0x10] sm:$0xff]
  %v18 = vld [vmem:[%s0 + $0x18] sm:$0xf]
  %v19 = vld [vmem:[%s0 + $0x1c] sm:$0xff]
  %v20 = vld [vmem:[%s0 + $0x24] sm:$0xff]
  %v21 = vld [vmem:[%s0 + $0x2c] sm:$0xff]
  %v22 = vld [vmem:[%s0 + $0x34] sm:$0xf]
  %v23 = vld [vmem:[%s0 + $0x38] sm:$0xff]
  %v24 = vld [vmem:[%s0 + $0x40] sm:$0xff]
  %v25 = vld [vmem:[%s0 + $0x48] sm:$0xff]
  %v26 = vld [vmem:[%s0 + $0x50] sm:$0xf]
  %v27 = vld [vmem:[%s0 + $0x54] sm:$0xff]
  %v28 = vld [vmem:[%s0 + $0x5c] sm:$0xff]
  %v29 = vld [vmem:[%s0 + $0x64] sm:$0xff]
  %v30 = vld [vmem:[%s0 + $0x6c] sm:$0xf]
  %v31 = vld [vmem:[%s0 + $0x70] sm:$0xff]
  %v32 = vld [vmem:[%s0 + $0x78] sm:$0xff]
  %v33 = vld [vmem:[%s0 + $0x80] sm:$0xff]
  %v34 = vld [vmem:[%s0 + $0x88] sm:$0xf]
  %v35 = vld [vmem:[%s0 + $0x8c] sm:$0xff]
  %v36 = vld [vmem:[%s0 + $0x94] sm:$0xff]
  %v37 = vld [vmem:[%s0 + $0x9c] sm:$0xff]
  %v38 = vld [vmem:[%s0 + $0xa4] sm:$0xf]
  %v39 = vld [vmem:[%s0 + $0xa8] sm:$0xff]
  %v40 = vld [vmem:[%s0 + $0xb0] sm:$0xff]
  %v41 = vld [vmem:[%s0 + $0xb8] sm:$0xff]
  %v42 = vld [vmem:[%s0 + $0xc0] sm:$0xf]
  %v43 = vld [vmem:[%s0 + $0xc4] sm:$0xff]
  %v44 = vld [vmem:[%s0 + $0xcc] sm:$0xff]
  %v45 = vld [vmem:[%s0 + $0xd4] sm:$0xff]
  %v46 = vld [vmem:[%s0 + $0xdc] sm:$0xf]
  %v47 = vld [vmem:[%s1] sm:$0xf]
  %v48 = vld [vmem:[%s1 + $0x4] sm:$0xf]
  %v49 = vld [vmem:[%s1 + $0x8] sm:$0xf]
  %v50 = vld [vmem:[%s1 + $0xc] sm:$0xf]
  %v51 = vld [vmem:[%s1 + $0x10] sm:$0xf]
  %v52 = vld [vmem:[%s1 + $0x14] sm:$0xf]
  %v53 = vld [vmem:[%s1 + $0x18] sm:$0xf]
  %v54 = vld [vmem:[%s1 + $0x1c] sm:$0xf]
  %v55 = vld [vmem:[%s1 + $0x20] sm:$0xf]
  %v56 = vld [vmem:[%s1 + $0x24] sm:$0xf]
  %v57 = vld [vmem:[%s1 + $0x28] sm:$0xf]
  %v58 = vld [vmem:[%s1 + $0x2c] sm:$0xf]
  %v59 = vld [vmem:[%s1 + $0x30] sm:$0xf]
  %v60 = vld [vmem:[%s1 + $0x34] sm:$0xf]
  %v61 = vld [vmem:[%s1 + $0x38] sm:$0xf]
  %v62 = vld [vmem:[%s1 + $0x3c] sm:$0xf]
  %v63 = vld [vmem:[%s1 + $0x40] sm:$0xf]
  %v64 = vld [vmem:[%s1 + $0x44] sm:$0xf]
  %v65 = vld [vmem:[%s1 + $0x48] sm:$0xf]
  %v66 = vld [vmem:[%s1 + $0x4c] sm:$0xf]
  %v67 = vld [vmem:[%s1 + $0x50] sm:$0xf]
  %v68 = vld [vmem:[%s1 + $0x54] sm:$0xf]
  %v69 = vld [vmem:[%s1 + $0x58] sm:$0xf]
  %v70 = vld [vmem:[%s1 + $0x5c] sm:$0xf]
  %v71 = vld [vmem:[%s1 + $0x60] sm:$0xf]
  %v72 = vld [vmem:[%s1 + $0x64] sm:$0xf]
  %v73 = vld [vmem:[%s1 + $0x68] sm:$0xf]
  %v74 = vld [vmem:[%s1 + $0x6c] sm:$0xf]
  %v75 = vld [vmem:[%s1 + $0x70] sm:$0xf]
  %v76 = vld [vmem:[%s1 + $0x74] sm:$0xf]
  %v77 = vld [vmem:[%s1 + $0x78] sm:$0xf]
  %v78 = vld [vmem:[%s1 + $0x7c] sm:$0xf]
  %v79 = vld [vmem:[%s1 + $0x80] sm:$0xf]
  %v80 = vld [vmem:[%s1 + $0x84] sm:$0xf]
  %v81 = vld [vmem:[%s1 + $0x88] sm:$0xf]
  %v82 = vld [vmem:[%s1 + $0x8c] sm:$0xf]
  %v83 = vld [vmem:[%s1 + $0x90] sm:$0xf]
  %v84 = vld [vmem:[%s1 + $0x94] sm:$0xf]
  %v85 = vld [vmem:[%s1 + $0x98] sm:$0xf]
  %v86 = vld [vmem:[%s1 + $0x9c] sm:$0xf]
  %v87 = vld [vmem:[%s1 + $0xa0] sm:$0xf]
  %v88 = vld [vmem:[%s1 + $0xa4] sm:$0xf]
  %v89 = vld [vmem:[%s1 + $0xa8] sm:$0xf]
  %v90 = vld [vmem:[%s1 + $0xac] sm:$0xf]
  %v91 = vld [vmem:[%s1 + $0xb0] sm:$0xf]
  %v92 = vld [vmem:[%s1 + $0xb4] sm:$0xf]
  %v93 = vld [vmem:[%s1 + $0xb8] sm:$0xf]
  %v94 = vld [vmem:[%s1 + $0xbc] sm:$0xf]
  %v95 = vld [vmem:[%s1 + $0xc0] sm:$0xf]
  %v96 = vld [vmem:[%s1 + $0xc4] sm:$0xf]
  %v97 = vld [vmem:[%s1 + $0xc8] sm:$0xf]
  %v98 = vld [vmem:[%s1 + $0xcc] sm:$0xf]
  %v99 = vld [vmem:[%s1 + $0xd0] sm:$0xf]
  %v100 = vld [vmem:[%s1 + $0xd4] sm:$0xf]
  %v101 = vld [vmem:[%s1 + $0xd8] sm:$0xf]
  %v102 = vld [vmem:[%s1 + $0xdc] sm:$0xf]
  %v103 = vld [vmem:[%s1 + $0xe0] sm:$0xf]
  %v104 = vld [vmem:[%s1 + $0xe4] sm:$0xf]
  %v105 = vld [vmem:[%s1 + $0xe8] sm:$0xf]
  %v106 = vld [vmem:[%s1 + $0xec] sm:$0xf]
  %v107 = vld [vmem:[%s1 + $0xf0] sm:$0xf]
  %v108 = vld [vmem:[%s1 + $0xf4] sm:$0xf]
  %v109 = vld [vmem:[%s1 + $0xf8] sm:$0xf]
  %v110 = vld [vmem:[%s1 + $0xfc] sm:$0xf]
  %v111 = vld [vmem:[%s1 + $0x100] sm:$0xf]
  %v112 = vld [vmem:[%s1 + $0x104] sm:$0xf]
  %v113 = vld [vmem:[%s1 + $0x108] sm:$0xf]
  %v114 = vld [vmem:[%s1 + $0x10c] sm:$0xf]
  %v115 = vld [vmem:[%s1 + $0x110] sm:$0xf]
  %v116 = vld [vmem:[%s1 + $0x114] sm:$0xf]
  %v117 = vld [vmem:[%s1 + $0x118] sm:$0xf]
  %v118 = vld [vmem:[%s1 + $0x11c] sm:$0xf]
  %v119 = vld [vmem:[%s1 + $0x120] sm:$0xf]
  %v120 = vld [vmem:[%s1 + $0x124] sm:$0xf]
  %v121 = vld [vmem:[%s1 + $0x128] sm:$0xf]
  %v122 = vld [vmem:[%s1 + $0x12c] sm:$0xf]
  %v123 = vld [vmem:[%s1 + $0x130] sm:$0xf]
  %v124 = vld [vmem:[%s1 + $0x134] sm:$0xf]
  %v125 = vld [vmem:[%s1 + $0x138] sm:$0xf]
  %v126 = vld [vmem:[%s1 + $0x13c] sm:$0xf]
  %v127 = vld [vmem:[%s1 + $0x140] sm:$0xf]
  %v128 = vld [vmem:[%s1 + $0x144] sm:$0xf]
  %v129 = vld [vmem:[%s1 + $0x148] sm:$0xf]
  %v130 = vld [vmem:[%s1 + $0x14c] sm:$0xf]
  %v131 = vld [vmem:[%s1 + $0x150] sm:$0xf]
  %v132 = vld [vmem:[%s1 + $0x154] sm:$0xf]
  %v133 = vld [vmem:[%s1 + $0x158] sm:$0xf]
  %v134 = vld [vmem:[%s1 + $0x15c] sm:$0xf]
  %v135 = vld [vmem:[%s1 + $0x160] sm:$0xf]
  %v136 = vld [vmem:[%s1 + $0x164] sm:$0xf]
  %v137 = vld [vmem:[%s1 + $0x168] sm:$0xf]
  %v138 = vld [vmem:[%s1 + $0x16c] sm:$0xf]
  %v139 = vld [vmem:[%s1 + $0x170] sm:$0xf]
  %v140 = vld [vmem:[%s1 + $0x174] sm:$0xf]
  %v141 = vld [vmem:[%s1 + $0x178] sm:$0xf]
  %v142 = vld [vmem:[%s1 + $0x17c] sm:$0xf]
  %v143 = vld [vmem:[%s1 + $0x180] sm:$0xf]
  %v144 = vld [vmem:[%s1 + $0x184] sm:$0xf]
  %v145 = vld [vmem:[%s1 + $0x188] sm:$0xf]
  %v146 = vld [vmem:[%s1 + $0x18c] sm:$0xf]
  %v147 = vld [vmem:[%s1 + $0x190] sm:$0xf]
  %v148 = vld [vmem:[%s1 + $0x194] sm:$0xf]
  %v149 = vld [vmem:[%s1 + $0x198] sm:$0xf]
  %v150 = vld [vmem:[%s1 + $0x19c] sm:$0xf]
  %v151 = vld [vmem:[%s1 + $0x1a0] sm:$0xf]
  %v152 = vld [vmem:[%s1 + $0x1a4] sm:$0xf]
  %v153 = vld [vmem:[%s1 + $0x1a8] sm:$0xf]
  %v154 = vld [vmem:[%s1 + $0x1ac] sm:$0xf]
  %v155 = vld [vmem:[%s2] sm:$0x1]
  %v157 = vperm.slane %v155, 0
  %v191 = vunpack.c.l.b16 %v15
  %v192 = vunpack.c.h.b16 %v15
  %v193 = vunpack.c.l.b16 %v16
  %v194 = vunpack.c.h.b16 %v16
  %v195 = vunpack.c.l.b16 %v17
  %v196 = vunpack.c.h.b16 %v17
  %v197 = vunpack.c.l.b16 %v18
  %v198 = vunpack.c.l.b16 %v19
  %v199 = vunpack.c.h.b16 %v19
  %v200 = vunpack.c.l.b16 %v20
  %v201 = vunpack.c.h.b16 %v20
  %v202 = vunpack.c.l.b16 %v21
  %v203 = vunpack.c.h.b16 %v21
  %v204 = vunpack.c.l.b16 %v22
  %v205 = vunpack.c.l.b16 %v23
  %v206 = vunpack.c.h.b16 %v23
  %v207 = vunpack.c.l.b16 %v24
  %v208 = vunpack.c.h.b16 %v24
  %v209 = vunpack.c.l.b16 %v25
  %v210 = vunpack.c.h.b16 %v25
  %v211 = vunpack.c.l.b16 %v26
  %v212 = vunpack.c.l.b16 %v27
  %v213 = vunpack.c.h.b16 %v27
  %v214 = vunpack.c.l.b16 %v28
  %v215 = vunpack.c.h.b16 %v28
  %v216 = vunpack.c.l.b16 %v29
  %v217 = vunpack.c.h.b16 %v29
  %v218 = vunpack.c.l.b16 %v30
  %v219 = vunpack.c.l.b16 %v31
  %v220 = vunpack.c.h.b16 %v31
  %v221 = vunpack.c.l.b16 %v32
  %v222 = vunpack.c.h.b16 %v32
  %v223 = vunpack.c.l.b16 %v33
  %v224 = vunpack.c.h.b16 %v33
  %v225 = vunpack.c.l.b16 %v34
  %v226 = vunpack.c.l.b16 %v35
  %v227 = vunpack.c.h.b16 %v35
  %v228 = vunpack.c.l.b16 %v36
  %v229 = vunpack.c.h.b16 %v36
  %v230 = vunpack.c.l.b16 %v37
  %v231 = vunpack.c.h.b16 %v37
  %v232 = vunpack.c.l.b16 %v38
  %v233 = vunpack.c.l.b16 %v39
  %v234 = vunpack.c.h.b16 %v39
  %v235 = vunpack.c.l.b16 %v40
  %v236 = vunpack.c.h.b16 %v40
  %v237 = vunpack.c.l.b16 %v41
  %v238 = vunpack.c.h.b16 %v41
  %v239 = vunpack.c.l.b16 %v42
  %v240 = vunpack.c.l.b16 %v43
  %v241 = vunpack.c.h.b16 %v43
  %v242 = vunpack.c.l.b16 %v44
  %v243 = vunpack.c.h.b16 %v44
  %v244 = vunpack.c.l.b16 %v45
  %v245 = vunpack.c.h.b16 %v45
  %v246 = vunpack.c.l.b16 %v46
  %v247 = vpack.c.b16 %v198, %v191
  %v248 = vpack.c.b16 %v199, %v192
  %v249 = vpack.c.b16 %v200, %v193
  %v250 = vpack.c.b16 %v201, %v194
  %v251 = vpack.c.b16 %v202, %v195
  %v252 = vpack.c.b16 %v203, %v196
  %v253 = vpack.c.b16 %v204, %v197
  %v254 = vpack.c.b16 %v212, %v205
  %v255 = vpack.c.b16 %v213, %v206
  %v256 = vpack.c.b16 %v214, %v207
  %v257 = vpack.c.b16 %v215, %v208
  %v258 = vpack.c.b16 %v216, %v209
  %v259 = vpack.c.b16 %v217, %v210
  %v260 = vpack.c.b16 %v218, %v211
  %v261 = vpack.c.b16 %v226, %v219
  %v262 = vpack.c.b16 %v227, %v220
  %v263 = vpack.c.b16 %v228, %v221
  %v264 = vpack.c.b16 %v229, %v222
  %v265 = vpack.c.b16 %v230, %v223
  %v266 = vpack.c.b16 %v231, %v224
  %v267 = vpack.c.b16 %v232, %v225
  %v268 = vpack.c.b16 %v240, %v233
  %v269 = vpack.c.b16 %v241, %v234
  %v270 = vpack.c.b16 %v242, %v235
  %v271 = vpack.c.b16 %v243, %v236
  %v272 = vpack.c.b16 %v244, %v237
  %v273 = vpack.c.b16 %v245, %v238
  %v274 = vpack.c.b16 %v246, %v239
  %v407 = vunpack.c.l.b16 %v47
  %v408 = vunpack.c.l.b16 %v48
  %v409 = vunpack.c.l.b16 %v49
  %v410 = vunpack.c.l.b16 %v50
  %v411 = vunpack.c.l.b16 %v51
  %v412 = vunpack.c.l.b16 %v52
  %v413 = vunpack.c.l.b16 %v53
  %v414 = vunpack.c.l.b16 %v54
  %v415 = vunpack.c.l.b16 %v55
  %v416 = vunpack.c.l.b16 %v56
  %v417 = vunpack.c.l.b16 %v57
  %v418 = vunpack.c.l.b16 %v58
  %v419 = vunpack.c.l.b16 %v59
  %v420 = vunpack.c.l.b16 %v60
  %v421 = vunpack.c.l.b16 %v61
  %v422 = vunpack.c.l.b16 %v62
  %v423 = vunpack.c.l.b16 %v63
  %v424 = vunpack.c.l.b16 %v64
  %v425 = vunpack.c.l.b16 %v65
  %v426 = vunpack.c.l.b16 %v66
  %v427 = vunpack.c.l.b16 %v67
  %v428 = vunpack.c.l.b16 %v68
  %v429 = vunpack.c.l.b16 %v69
  %v430 = vunpack.c.l.b16 %v70
  %v431 = vunpack.c.l.b16 %v71
  %v432 = vunpack.c.l.b16 %v72
  %v433 = vunpack.c.l.b16 %v73
  %v434 = vunpack.c.l.b16 %v74
  %v435 = vunpack.c.l.b16 %v75
  %v436 = vunpack.c.l.b16 %v76
  %v437 = vunpack.c.l.b16 %v77
  %v438 = vunpack.c.l.b16 %v78
  %v439 = vunpack.c.l.b16 %v79
  %v440 = vunpack.c.l.b16 %v80
  %v441 = vunpack.c.l.b16 %v81
  %v442 = vunpack.c.l.b16 %v82
  %v443 = vunpack.c.l.b16 %v83
  %v444 = vunpack.c.l.b16 %v84
  %v445 = vunpack.c.l.b16 %v85
  %v446 = vunpack.c.l.b16 %v86
  %v447 = vunpack.c.l.b16 %v87
  %v448 = vunpack.c.l.b16 %v88
  %v449 = vunpack.c.l.b16 %v89
  %v450 = vunpack.c.l.b16 %v90
  %v451 = vunpack.c.l.b16 %v91
  %v452 = vunpack.c.l.b16 %v92
  %v453 = vunpack.c.l.b16 %v93
  %v454 = vunpack.c.l.b16 %v94
  %v455 = vunpack.c.l.b16 %v95
  %v456 = vunpack.c.l.b16 %v96
  %v457 = vunpack.c.l.b16 %v97
  %v458 = vunpack.c.l.b16 %v98
  %v459 = vunpack.c.l.b16 %v99
  %v460 = vunpack.c.l.b16 %v100
  %v461 = vunpack.c.l.b16 %v101
  %v462 = vunpack.c.l.b16 %v102
  %v463 = vunpack.c.l.b16 %v103
  %v464 = vunpack.c.l.b16 %v104
  %v465 = vunpack.c.l.b16 %v105
  %v466 = vunpack.c.l.b16 %v106
  %v467 = vunpack.c.l.b16 %v107
  %v468 = vunpack.c.l.b16 %v108
  %v469 = vunpack.c.l.b16 %v109
  %v470 = vunpack.c.l.b16 %v110
  %v471 = vunpack.c.l.b16 %v111
  %v472 = vunpack.c.l.b16 %v112
  %v473 = vunpack.c.l.b16 %v113
  %v474 = vunpack.c.l.b16 %v114
  %v475 = vunpack.c.l.b16 %v115
  %v476 = vunpack.c.l.b16 %v116
  %v477 = vunpack.c.l.b16 %v117
  %v478 = vunpack.c.l.b16 %v118
  %v479 = vunpack.c.l.b16 %v119
  %v480 = vunpack.c.l.b16 %v120
  %v481 = vunpack.c.l.b16 %v121
  %v482 = vunpack.c.l.b16 %v122
  %v483 = vunpack.c.l.b16 %v123
  %v484 = vunpack.c.l.b16 %v124
  %v485 = vunpack.c.l.b16 %v125
  %v486 = vunpack.c.l.b16 %v126
  %v487 = vunpack.c.l.b16 %v127
  %v488 = vunpack.c.l.b16 %v128
  %v489 = vunpack.c.l.b16 %v129
  %v490 = vunpack.c.l.b16 %v130
  %v491 = vunpack.c.l.b16 %v131
  %v492 = vunpack.c.l.b16 %v132
  %v493 = vunpack.c.l.b16 %v133
  %v494 = vunpack.c.l.b16 %v134
  %v495 = vunpack.c.l.b16 %v135
  %v496 = vunpack.c.l.b16 %v136
  %v497 = vunpack.c.l.b16 %v137
  %v498 = vunpack.c.l.b16 %v138
  %v499 = vunpack.c.l.b16 %v139
  %v500 = vunpack.c.l.b16 %v140
  %v501 = vunpack.c.l.b16 %v141
  %v502 = vunpack.c.l.b16 %v142
  %v503 = vunpack.c.l.b16 %v143
  %v504 = vunpack.c.l.b16 %v144
  %v505 = vunpack.c.l.b16 %v145
  %v506 = vunpack.c.l.b16 %v146
  %v507 = vunpack.c.l.b16 %v147
  %v508 = vunpack.c.l.b16 %v148
  %v509 = vunpack.c.l.b16 %v149
  %v510 = vunpack.c.l.b16 %v150
  %v511 = vunpack.c.l.b16 %v151
  %v512 = vunpack.c.l.b16 %v152
  %v513 = vunpack.c.l.b16 %v153
  %v514 = vunpack.c.l.b16 %v154
  %v515 = vpack.c.b16 %v408, %v407
  %v516 = vpack.c.b16 %v410, %v409
  %v517 = vpack.c.b16 %v412, %v411
  %v518 = vpack.c.b16 %v414, %v413
  %v519 = vpack.c.b16 %v416, %v415
  %v520 = vpack.c.b16 %v418, %v417
  %v521 = vpack.c.b16 %v420, %v419
  %v522 = vpack.c.b16 %v422, %v421
  %v523 = vpack.c.b16 %v424, %v423
  %v524 = vpack.c.b16 %v426, %v425
  %v525 = vpack.c.b16 %v428, %v427
  %v526 = vpack.c.b16 %v430, %v429
  %v527 = vpack.c.b16 %v432, %v431
  %v528 = vpack.c.b16 %v434, %v433
  %v529 = vpack.c.b16 %v436, %v435
  %v530 = vpack.c.b16 %v438, %v437
  %v531 = vpack.c.b16 %v440, %v439
  %v532 = vpack.c.b16 %v442, %v441
  %v533 = vpack.c.b16 %v444, %v443
  %v534 = vpack.c.b16 %v446, %v445
  %v535 = vpack.c.b16 %v448, %v447
  %v536 = vpack.c.b16 %v450, %v449
  %v537 = vpack.c.b16 %v452, %v451
  %v538 = vpack.c.b16 %v454, %v453
  %v539 = vpack.c.b16 %v456, %v455
  %v540 = vpack.c.b16 %v458, %v457
  %v541 = vpack.c.b16 %v460, %v459
  %v542 = vpack.c.b16 %v462, %v461
  %v543 = vpack.c.b16 %v464, %v463
  %v544 = vpack.c.b16 %v466, %v465
  %v545 = vpack.c.b16 %v468, %v467
  %v546 = vpack.c.b16 %v470, %v469
  %v547 = vpack.c.b16 %v472, %v471
  %v548 = vpack.c.b16 %v474, %v473
  %v549 = vpack.c.b16 %v476, %v475
  %v550 = vpack.c.b16 %v478, %v477
  %v551 = vpack.c.b16 %v480, %v479
  %v552 = vpack.c.b16 %v482, %v481
  %v553 = vpack.c.b16 %v484, %v483
  %v554 = vpack.c.b16 %v486, %v485
  %v555 = vpack.c.b16 %v488, %v487
  %v556 = vpack.c.b16 %v490, %v489
  %v557 = vpack.c.b16 %v492, %v491
  %v558 = vpack.c.b16 %v494, %v493
  %v559 = vpack.c.b16 %v496, %v495
  %v560 = vpack.c.b16 %v498, %v497
  %v561 = vpack.c.b16 %v500, %v499
  %v562 = vpack.c.b16 %v502, %v501
  %v563 = vpack.c.b16 %v504, %v503
  %v564 = vpack.c.b16 %v506, %v505
  %v565 = vpack.c.b16 %v508, %v507
  %v566 = vpack.c.b16 %v510, %v509
  %v567 = vpack.c.b16 %v512, %v511
  %v568 = vpack.c.b16 %v514, %v513
  %vm623 = vcmask 785408
  %v625 = vsel %vm623, %v253, 0
  %v628 = vsel %vm623, %v260, 0
  %v631 = vsel %vm623, %v267, 0
  %v634 = vsel %vm623, %v274, 0
  %636 = vmatpush.bf16.msra.mxu0 %v522
  %637 = vmatpush.bf16.msra.mxu0 %v521
  %638 = vmatpush.bf16.msra.mxu0 %v520
  %639 = vmatpush.bf16.msra.mxu0 %v519
  %640 = vmatpush.bf16.msra.mxu0 %v518
  %641 = vmatpush.bf16.msra.mxu0 %v517
  %642 = vmatpush.bf16.msra.mxu0 %v516
  %643 = vmatpush.bf16.msra.mxu0 %v515
  %644 = vmatmul.bf16.gmra.mxu0 %v247
  %v645 = vpop.f32.mrf.mxu0
  %v646 = vadd.f32 %v157, %v645
  %v647 = vpop.f32.mrf.mxu0
  %v648 = vadd.f32 %v157, %v647
  %649 = vmatmul.bf16.gmra.mxu0 %v254
  %v650 = vpop.f32.mrf.mxu0
  %v651 = vadd.f32 %v157, %v650
  %v652 = vpop.f32.mrf.mxu0
  %v653 = vadd.f32 %v157, %v652
  %654 = vmatmul.bf16.gmra.mxu0 %v261
  %v655 = vpop.f32.mrf.mxu0
  %v656 = vadd.f32 %v157, %v655
  %v657 = vpop.f32.mrf.mxu0
  %v658 = vadd.f32 %v157, %v657
  %659 = vmatmul.bf16.gmra.mxu0 %v268
  %v660 = vpop.f32.mrf.mxu0
  %v661 = vadd.f32 %v157, %v660
  %v662 = vpop.f32.mrf.mxu0
  %v663 = vadd.f32 %v157, %v662
  %664 = vdwg.mxu0
  %665 = vmatpush.bf16.msra.mxu0 %v530
  %666 = vmatpush.bf16.msra.mxu0 %v529
  %667 = vmatpush.bf16.msra.mxu0 %v528
  %668 = vmatpush.bf16.msra.mxu0 %v527
  %669 = vmatpush.bf16.msra.mxu0 %v526
  %670 = vmatpush.bf16.msra.mxu0 %v525
  %671 = vmatpush.bf16.msra.mxu0 %v524
  %672 = vmatpush.bf16.msra.mxu0 %v523
  %673 = vmatmul.bf16.gmra.mxu0 %v248
  %v674 = vpop.f32.mrf.mxu0
  %v675 = vadd.f32 %v646, %v674
  %v676 = vpop.f32.mrf.mxu0
  %v677 = vadd.f32 %v648, %v676
  %678 = vmatmul.bf16.gmra.mxu0 %v255
  %v679 = vpop.f32.mrf.mxu0
  %v680 = vadd.f32 %v651, %v679
  %v681 = vpop.f32.mrf.mxu0
  %v682 = vadd.f32 %v653, %v681
  %683 = vmatmul.bf16.gmra.mxu0 %v262
  %v684 = vpop.f32.mrf.mxu0
  %v685 = vadd.f32 %v656, %v684
  %v686 = vpop.f32.mrf.mxu0
  %v687 = vadd.f32 %v658, %v686
  %688 = vmatmul.bf16.gmra.mxu0 %v269
  %v689 = vpop.f32.mrf.mxu0
  %v690 = vadd.f32 %v661, %v689
  %v691 = vpop.f32.mrf.mxu0
  %v692 = vadd.f32 %v663, %v691
  %693 = vdwg.mxu0
  %694 = vmatpush.bf16.msra.mxu0 %v538
  %695 = vmatpush.bf16.msra.mxu0 %v537
  %696 = vmatpush.bf16.msra.mxu0 %v536
  %697 = vmatpush.bf16.msra.mxu0 %v535
  %698 = vmatpush.bf16.msra.mxu0 %v534
  %699 = vmatpush.bf16.msra.mxu0 %v533
  %700 = vmatpush.bf16.msra.mxu0 %v532
  %701 = vmatpush.bf16.msra.mxu0 %v531
  %702 = vmatmul.bf16.gmra.mxu0 %v249
  %v703 = vpop.f32.mrf.mxu0
  %v704 = vadd.f32 %v675, %v703
  %v705 = vpop.f32.mrf.mxu0
  %v706 = vadd.f32 %v677, %v705
  %707 = vmatmul.bf16.gmra.mxu0 %v256
  %v708 = vpop.f32.mrf.mxu0
  %v709 = vadd.f32 %v680, %v708
  %v710 = vpop.f32.mrf.mxu0
  %v711 = vadd.f32 %v682, %v710
  %712 = vmatmul.bf16.gmra.mxu0 %v263
  %v713 = vpop.f32.mrf.mxu0
  %v714 = vadd.f32 %v685, %v713
  %v715 = vpop.f32.mrf.mxu0
  %v716 = vadd.f32 %v687, %v715
  %717 = vmatmul.bf16.gmra.mxu0 %v270
  %v718 = vpop.f32.mrf.mxu0
  %v719 = vadd.f32 %v690, %v718
  %v720 = vpop.f32.mrf.mxu0
  %v721 = vadd.f32 %v692, %v720
  %722 = vdwg.mxu0
  %723 = vmatpush.bf16.msra.mxu0 %v546
  %724 = vmatpush.bf16.msra.mxu0 %v545
  %725 = vmatpush.bf16.msra.mxu0 %v544
  %726 = vmatpush.bf16.msra.mxu0 %v543
  %727 = vmatpush.bf16.msra.mxu0 %v542
  %728 = vmatpush.bf16.msra.mxu0 %v541
  %729 = vmatpush.bf16.msra.mxu0 %v540
  %730 = vmatpush.bf16.msra.mxu0 %v539
  %731 = vmatmul.bf16.gmra.mxu0 %v250
  %v732 = vpop.f32.mrf.mxu0
  %v733 = vadd.f32 %v704, %v732
  %v734 = vpop.f32.mrf.mxu0
  %v735 = vadd.f32 %v706, %v734
  %736 = vmatmul.bf16.gmra.mxu0 %v257
  %v737 = vpop.f32.mrf.mxu0
  %v738 = vadd.f32 %v709, %v737
  %v739 = vpop.f32.mrf.mxu0
  %v740 = vadd.f32 %v711, %v739
  %741 = vmatmul.bf16.gmra.mxu0 %v264
  %v742 = vpop.f32.mrf.mxu0
  %v743 = vadd.f32 %v714, %v742
  %v744 = vpop.f32.mrf.mxu0
  %v745 = vadd.f32 %v716, %v744
  %746 = vmatmul.bf16.gmra.mxu0 %v271
  %v747 = vpop.f32.mrf.mxu0
  %v748 = vadd.f32 %v719, %v747
  %v749 = vpop.f32.mrf.mxu0
  %v750 = vadd.f32 %v721, %v749
  %751 = vdwg.mxu0
  %752 = vmatpush.bf16.msra.mxu0 %v554
  %753 = vmatpush.bf16.msra.mxu0 %v553
  %754 = vmatpush.bf16.msra.mxu0 %v552
  %755 = vmatpush.bf16.msra.mxu0 %v551
  %756 = vmatpush.bf16.msra.mxu0 %v550
  %757 = vmatpush.bf16.msra.mxu0 %v549
  %758 = vmatpush.bf16.msra.mxu0 %v548
  %759 = vmatpush.bf16.msra.mxu0 %v547
  %760 = vmatmul.bf16.gmra.mxu0 %v251
  %v761 = vpop.f32.mrf.mxu0
  %v762 = vadd.f32 %v733, %v761
  %v763 = vpop.f32.mrf.mxu0
  %v764 = vadd.f32 %v735, %v763
  %765 = vmatmul.bf16.gmra.mxu0 %v258
  %v766 = vpop.f32.mrf.mxu0
  %v767 = vadd.f32 %v738, %v766
  %v768 = vpop.f32.mrf.mxu0
  %v769 = vadd.f32 %v740, %v768
  %770 = vmatmul.bf16.gmra.mxu0 %v265
  %v771 = vpop.f32.mrf.mxu0
  %v772 = vadd.f32 %v743, %v771
  %v773 = vpop.f32.mrf.mxu0
  %v774 = vadd.f32 %v745, %v773
  %775 = vmatmul.bf16.gmra.mxu0 %v272
  %v776 = vpop.f32.mrf.mxu0
  %v777 = vadd.f32 %v748, %v776
  %v778 = vpop.f32.mrf.mxu0
  %v779 = vadd.f32 %v750, %v778
  %780 = vdwg.mxu0
  %781 = vmatpush.bf16.msra.mxu0 %v562
  %782 = vmatpush.bf16.msra.mxu0 %v561
  %783 = vmatpush.bf16.msra.mxu0 %v560
  %784 = vmatpush.bf16.msra.mxu0 %v559
  %785 = vmatpush.bf16.msra.mxu0 %v558
  %786 = vmatpush.bf16.msra.mxu0 %v557
  %787 = vmatpush.bf16.msra.mxu0 %v556
  %788 = vmatpush.bf16.msra.mxu0 %v555
  %789 = vmatmul.bf16.gmra.mxu0 %v252
  %v790 = vpop.f32.mrf.mxu0
  %v791 = vadd.f32 %v762, %v790
  %v792 = vpop.f32.mrf.mxu0
  %v793 = vadd.f32 %v764, %v792
  %794 = vmatmul.bf16.gmra.mxu0 %v259
  %v795 = vpop.f32.mrf.mxu0
  %v796 = vadd.f32 %v767, %v795
  %v797 = vpop.f32.mrf.mxu0
  %v798 = vadd.f32 %v769, %v797
  %799 = vmatmul.bf16.gmra.mxu0 %v266
  %v800 = vpop.f32.mrf.mxu0
  %v801 = vadd.f32 %v772, %v800
  %v802 = vpop.f32.mrf.mxu0
  %v803 = vadd.f32 %v774, %v802
  %804 = vmatmul.bf16.gmra.mxu0 %v273
  %v805 = vpop.f32.mrf.mxu0
  %v806 = vadd.f32 %v777, %v805
  %v807 = vpop.f32.mrf.mxu0
  %v808 = vadd.f32 %v779, %v807
  %809 = vdwg.mxu0
  %810 = vmatpush.bf16.msra.mxu0 0
  %811 = vmatpush.bf16.msra.mxu0 0
  %812 = vmatpush.bf16.msra.mxu0 %v568
  %813 = vmatpush.bf16.msra.mxu0 %v567
  %814 = vmatpush.bf16.msra.mxu0 %v566
  %815 = vmatpush.bf16.msra.mxu0 %v565
  %816 = vmatpush.bf16.msra.mxu0 %v564
  %817 = vmatpush.bf16.msra.mxu0 %v563
  %818 = vmatmul.bf16.gmra.mxu0 %v625
  %v819 = vpop.f32.mrf.mxu0
  %v820 = vadd.f32 %v791, %v819
  %v821 = vpop.f32.mrf.mxu0
  %v822 = vadd.f32 %v793, %v821
  %823 = vmatmul.bf16.gmra.mxu0 %v628
  %v824 = vpop.f32.mrf.mxu0
  %v825 = vadd.f32 %v796, %v824
  %v826 = vpop.f32.mrf.mxu0
  %v827 = vadd.f32 %v798, %v826
  %828 = vmatmul.bf16.gmra.mxu0 %v631
  %v829 = vpop.f32.mrf.mxu0
  %v830 = vadd.f32 %v801, %v829
  %v831 = vpop.f32.mrf.mxu0
  %v832 = vadd.f32 %v803, %v831
  %833 = vmatmul.bf16.gmra.mxu0 %v634
  %v834 = vpop.f32.mrf.mxu0
  %v835 = vadd.f32 %v806, %v834
  %v836 = vpop.f32.mrf.mxu0
  %v837 = vadd.f32 %v808, %v836
  %838 = vdwg.mxu0
  %v839 = vmax.f32 %v820, 0.0
  %v840 = vmax.f32 %v822, 0.0
  %v841 = vmax.f32 %v825, 0.0
  %v842 = vmax.f32 %v827, 0.0
  %v843 = vmax.f32 %v830, 0.0
  %v844 = vmax.f32 %v832, 0.0
  %v845 = vmax.f32 %v835, 0.0
  %v846 = vmax.f32 %v837, 0.0
  %v847 = vpack.c.bf16 %v839, %v839
  %v848 = vpack.c.bf16 %v840, %v840
  %v849 = vpack.c.bf16 %v841, %v841
  %v850 = vpack.c.bf16 %v842, %v842
  %v851 = vpack.c.bf16 %v843, %v843
  %v852 = vpack.c.bf16 %v844, %v844
  %v853 = vpack.c.bf16 %v845, %v845
  %v854 = vpack.c.bf16 %v846, %v846
  %855 = vst [vmem:[%s3] sm:$0xf] %v847
  %856 = vst [vmem:[%s3 + $0x4] sm:$0xf] %v848
  %857 = vst [vmem:[%s3 + $0x8] sm:$0xf] %v849
  %858 = vst [vmem:[%s3 + $0xc] sm:$0xf] %v850
  %859 = vst [vmem:[%s3 + $0x10] sm:$0xf] %v851
  %860 = vst [vmem:[%s3 + $0x14] sm:$0xf] %v852
  %861 = vst [vmem:[%s3 + $0x18] sm:$0xf] %v853
  %862 = vst [vmem:[%s3 + $0x1c] sm:$0xf] %v854
  // Predicated region
  $region14: #{temporal3d_forward.12} parent=0 // pred_check
    _
  $region15: #{temporal3d_forward.12} parent=0 // pred_check_branch
    %864 = sbr.rel (0) target = $region17
  $region16: #{temporal3d_forward.12} parent=0 // pred_region
    _
  $region17: #{temporal3d_forward.12} parent=0 // pred_fallthru
    _
  // Predicated region
  $region18: #{temporal3d_forward.12} parent=0 // pred_check
    _
  $region19: #{temporal3d_forward.12} parent=0 // pred_check_branch
    %866 = sbr.rel (0) target = $region21
  $region20: #{temporal3d_forward.12} parent=0 // pred_region
    _
  $region21: #{temporal3d_forward.12} parent=0 // pred_fallthru
    _

// kernel: temporal3d_forward.14
$region0: #{temporal3d_forward.14}
  #allocation0 [shape = 'u32[]', space=smem, size = 0x4, offset = 0x4, fixed_abs, tag = 'smem constant byte address 0x4 - core index']
  #allocation1 [shape = 'u32[72,128]{1,0:T(1,128)}', space=vmem, size = 0x9000, scoped, tag = 'internal scratch']
  %s0 = inlined_call_operand.vmem [shape: bf16[8,1728], index: 0, kind: input, shape index: {}]
  %s1 = inlined_call_operand.vmem [shape: bf16[1728,128], index: 1, kind: input, shape index: {}]
  %s2 = inlined_call_operand.vmem [shape: f32[1,128], index: 2, kind: input, shape index: {}]
  %s3 = inlined_call_operand.vmem [shape: bf16[8,128], index: 3, kind: output, shape index: {}]
  %s4 = sld [smem:[#allocation0]]
  $region22: #{temporal3d_forward.14} parent=0
    _
  %s6 = ssub.s32 1, %s4
  %s7 = scalar_select 0, %s6, %s4
  // Predicated region
  $region2: #{temporal3d_forward.14} parent=0 // pred_check
    _
  $region3: #{temporal3d_forward.14} parent=0 // pred_check_branch
    %9 = sbr.rel (0) target = $region5
  $region4: #{temporal3d_forward.14} parent=0 // pred_region
    _
  $region5: #{temporal3d_forward.14} parent=0 // pred_fallthru
    _
  // Predicated region
  $region6: #{temporal3d_forward.14} parent=0 // pred_check
    _
  $region7: #{temporal3d_forward.14} parent=0 // pred_check_branch
    %11 = sbr.rel (0) target = $region9
  $region8: #{temporal3d_forward.14} parent=0 // pred_region
    _
  $region9: #{temporal3d_forward.14} parent=0 // pred_fallthru
    _
  // Predicated region
  $region10: #{temporal3d_forward.14} parent=0 // pred_check
    _
  $region11: #{temporal3d_forward.14} parent=0 // pred_check_branch
    %13 = sbr.rel (0) target = $region13
  $region12: #{temporal3d_forward.14} parent=0 // pred_region
    _
  $region13: #{temporal3d_forward.14} parent=0 // pred_fallthru
    _
  %v15 = vld [vmem:[%s0] sm:$0xff]
  %v16 = vld [vmem:[%s0 + $0x8] sm:$0xff]
  %v17 = vld [vmem:[%s0 + $0x10] sm:$0xff]
  %v18 = vld [vmem:[%s0 + $0x18] sm:$0xff]
  %v19 = vld [vmem:[%s0 + $0x20] sm:$0xff]
  %v20 = vld [vmem:[%s0 + $0x28] sm:$0xff]
  %v21 = vld [vmem:[%s0 + $0x30] sm:$0xff]
  %v22 = vld [vmem:[%s1] sm:$0xf]
  %v23 = vld [vmem:[%s1 + $0x4] sm:$0xf]
  %v24 = vld [vmem:[%s1 + $0x8] sm:$0xf]
  %v25 = vld [vmem:[%s1 + $0xc] sm:$0xf]
  %v26 = vld [vmem:[%s1 + $0x10] sm:$0xf]
  %v27 = vld [vmem:[%s1 + $0x14] sm:$0xf]
  %v28 = vld [vmem:[%s1 + $0x18] sm:$0xf]
  %v29 = vld [vmem:[%s1 + $0x1c] sm:$0xf]
  %v30 = vld [vmem:[%s1 + $0x20] sm:$0xf]
  %v31 = vld [vmem:[%s1 + $0x24] sm:$0xf]
  %v32 = vld [vmem:[%s1 + $0x28] sm:$0xf]
  %v33 = vld [vmem:[%s1 + $0x2c] sm:$0xf]
  %v34 = vld [vmem:[%s1 + $0x30] sm:$0xf]
  %v35 = vld [vmem:[%s1 + $0x34] sm:$0xf]
  %v36 = vld [vmem:[%s1 + $0x38] sm:$0xf]
  %v37 = vld [vmem:[%s1 + $0x3c] sm:$0xf]
  %v38 = vld [vmem:[%s1 + $0x40] sm:$0xf]
  %v39 = vld [vmem:[%s1 + $0x44] sm:$0xf]
  %v40 = vld [vmem:[%s1 + $0x48] sm:$0xf]
  %v41 = vld [vmem:[%s1 + $0x4c] sm:$0xf]
  %v42 = vld [vmem:[%s1 + $0x50] sm:$0xf]
  %v43 = vld [vmem:[%s1 + $0x54] sm:$0xf]
  %v44 = vld [vmem:[%s1 + $0x58] sm:$0xf]
  %v45 = vld [vmem:[%s1 + $0x5c] sm:$0xf]
  %v46 = vld [vmem:[%s1 + $0x60] sm:$0xf]
  %v47 = vld [vmem:[%s1 + $0x64] sm:$0xf]
  %v48 = vld [vmem:[%s1 + $0x68] sm:$0xf]
  %v49 = vld [vmem:[%s1 + $0x6c] sm:$0xf]
  %v50 = vld [vmem:[%s1 + $0x70] sm:$0xf]
  %v51 = vld [vmem:[%s1 + $0x74] sm:$0xf]
  %v52 = vld [vmem:[%s1 + $0x78] sm:$0xf]
  %v53 = vld [vmem:[%s1 + $0x7c] sm:$0xf]
  %v54 = vld [vmem:[%s1 + $0x80] sm:$0xf]
  %v55 = vld [vmem:[%s1 + $0x84] sm:$0xf]
  %v56 = vld [vmem:[%s1 + $0x88] sm:$0xf]
  %v57 = vld [vmem:[%s1 + $0x8c] sm:$0xf]
  %v58 = vld [vmem:[%s1 + $0x90] sm:$0xf]
  %v59 = vld [vmem:[%s1 + $0x94] sm:$0xf]
  %v60 = vld [vmem:[%s1 + $0x98] sm:$0xf]
  %v61 = vld [vmem:[%s1 + $0x9c] sm:$0xf]
  %v62 = vld [vmem:[%s1 + $0xa0] sm:$0xf]
  %v63 = vld [vmem:[%s1 + $0xa4] sm:$0xf]
  %v64 = vld [vmem:[%s1 + $0xa8] sm:$0xf]
  %v65 = vld [vmem:[%s1 + $0xac] sm:$0xf]
  %v66 = vld [vmem:[%s1 + $0xb0] sm:$0xf]
  %v67 = vld [vmem:[%s1 + $0xb4] sm:$0xf]
  %v68 = vld [vmem:[%s1 + $0xb8] sm:$0xf]
  %v69 = vld [vmem:[%s1 + $0xbc] sm:$0xf]
  %v70 = vld [vmem:[%s1 + $0xc0] sm:$0xf]
  %v71 = vld [vmem:[%s1 + $0xc4] sm:$0xf]
  %v72 = vld [vmem:[%s1 + $0xc8] sm:$0xf]
  %v73 = vld [vmem:[%s1 + $0xcc] sm:$0xf]
  %v74 = vld [vmem:[%s1 + $0xd0] sm:$0xf]
  %v75 = vld [vmem:[%s1 + $0xd4] sm:$0xf]
  %v76 = vld [vmem:[%s1 + $0xd8] sm:$0xf]
  %v77 = vld [vmem:[%s1 + $0xdc] sm:$0xf]
  %v78 = vld [vmem:[%s1 + $0xe0] sm:$0xf]
  %v79 = vld [vmem:[%s1 + $0xe4] sm:$0xf]
  %v80 = vld [vmem:[%s1 + $0xe8] sm:$0xf]
  %v81 = vld [vmem:[%s1 + $0xec] sm:$0xf]
  %v82 = vld [vmem:[%s1 + $0xf0] sm:$0xf]
  %v83 = vld [vmem:[%s1 + $0xf4] sm:$0xf]
  %v84 = vld [vmem:[%s1 + $0xf8] sm:$0xf]
  %v85 = vld [vmem:[%s1 + $0xfc] sm:$0xf]
  %v86 = vld [vmem:[%s1 + $0x100] sm:$0xf]
  %v87 = vld [vmem:[%s1 + $0x104] sm:$0xf]
  %v88 = vld [vmem:[%s1 + $0x108] sm:$0xf]
  %v89 = vld [vmem:[%s1 + $0x10c] sm:$0xf]
  %v90 = vld [vmem:[%s1 + $0x110] sm:$0xf]
  %v91 = vld [vmem:[%s1 + $0x114] sm:$0xf]
  %v92 = vld [vmem:[%s1 + $0x118] sm:$0xf]
  %v93 = vld [vmem:[%s1 + $0x11c] sm:$0xf]
  %v94 = vld [vmem:[%s1 + $0x120] sm:$0xf]
  %v95 = vld [vmem:[%s1 + $0x124] sm:$0xf]
  %v96 = vld [vmem:[%s1 + $0x128] sm:$0xf]
  %v97 = vld [vmem:[%s1 + $0x12c] sm:$0xf]
  %v98 = vld [vmem:[%s1 + $0x130] sm:$0xf]
  %v99 = vld [vmem:[%s1 + $0x134] sm:$0xf]
  %v100 = vld [vmem:[%s1 + $0x138] sm:$0xf]
  %v101 = vld [vmem:[%s1 + $0x13c] sm:$0xf]
  %v102 = vld [vmem:[%s1 + $0x140] sm:$0xf]
  %v103 = vld [vmem:[%s1 + $0x144] sm:$0xf]
  %v104 = vld [vmem:[%s1 + $0x148] sm:$0xf]
  %v105 = vld [vmem:[%s1 + $0x14c] sm:$0xf]
  %v106 = vld [vmem:[%s1 + $0x150] sm:$0xf]
  %v107 = vld [vmem:[%s1 + $0x154] sm:$0xf]
  %v108 = vld [vmem:[%s1 + $0x158] sm:$0xf]
  %v109 = vld [vmem:[%s1 + $0x15c] sm:$0xf]
  %v110 = vld [vmem:[%s1 + $0x160] sm:$0xf]
  %v111 = vld [vmem:[%s1 + $0x164] sm:$0xf]
  %v112 = vld [vmem:[%s1 + $0x168] sm:$0xf]
  %v113 = vld [vmem:[%s1 + $0x16c] sm:$0xf]
  %v114 = vld [vmem:[%s1 + $0x170] sm:$0xf]
  %v115 = vld [vmem:[%s1 + $0x174] sm:$0xf]
  %v116 = vld [vmem:[%s1 + $0x178] sm:$0xf]
  %v117 = vld [vmem:[%s1 + $0x17c] sm:$0xf]
  %v118 = vld [vmem:[%s1 + $0x180] sm:$0xf]
  %v119 = vld [vmem:[%s1 + $0x184] sm:$0xf]
  %v120 = vld [vmem:[%s1 + $0x188] sm:$0xf]
  %v121 = vld [vmem:[%s1 + $0x18c] sm:$0xf]
  %v122 = vld [vmem:[%s1 + $0x190] sm:$0xf]
  %v123 = vld [vmem:[%s1 + $0x194] sm:$0xf]
  %v124 = vld [vmem:[%s1 + $0x198] sm:$0xf]
  %v125 = vld [vmem:[%s1 + $0x19c] sm:$0xf]
  %v126 = vld [vmem:[%s1 + $0x1a0] sm:$0xf]
  %v127 = vld [vmem:[%s1 + $0x1a4] sm:$0xf]
  %v128 = vld [vmem:[%s1 + $0x1a8] sm:$0xf]
  %v129 = vld [vmem:[%s1 + $0x1ac] sm:$0xf]
  %v130 = vld [vmem:[%s1 + $0x1b0] sm:$0xf]
  %v131 = vld [vmem:[%s1 + $0x1b4] sm:$0xf]
  %v132 = vld [vmem:[%s1 + $0x1b8] sm:$0xf]
  %v133 = vld [vmem:[%s1 + $0x1bc] sm:$0xf]
  %v134 = vld [vmem:[%s1 + $0x1c0] sm:$0xf]
  %v135 = vld [vmem:[%s1 + $0x1c4] sm:$0xf]
  %v136 = vld [vmem:[%s1 + $0x1c8] sm:$0xf]
  %v137 = vld [vmem:[%s1 + $0x1cc] sm:$0xf]
  %v138 = vld [vmem:[%s1 + $0x1d0] sm:$0xf]
  %v139 = vld [vmem:[%s1 + $0x1d4] sm:$0xf]
  %v140 = vld [vmem:[%s1 + $0x1d8] sm:$0xf]
  %v141 = vld [vmem:[%s1 + $0x1dc] sm:$0xf]
  %v142 = vld [vmem:[%s1 + $0x1e0] sm:$0xf]
  %v143 = vld [vmem:[%s1 + $0x1e4] sm:$0xf]
  %v144 = vld [vmem:[%s1 + $0x1e8] sm:$0xf]
  %v145 = vld [vmem:[%s1 + $0x1ec] sm:$0xf]
  %v146 = vld [vmem:[%s1 + $0x1f0] sm:$0xf]
  %v147 = vld [vmem:[%s1 + $0x1f4] sm:$0xf]
  %v148 = vld [vmem:[%s1 + $0x1f8] sm:$0xf]
  %v149 = vld [vmem:[%s1 + $0x1fc] sm:$0xf]
  %v150 = vld [vmem:[%s1 + $0x200] sm:$0xf]
  %v151 = vld [vmem:[%s1 + $0x204] sm:$0xf]
  %v152 = vld [vmem:[%s1 + $0x208] sm:$0xf]
  %v153 = vld [vmem:[%s1 + $0x20c] sm:$0xf]
  %v154 = vld [vmem:[%s1 + $0x210] sm:$0xf]
  %v155 = vld [vmem:[%s1 + $0x214] sm:$0xf]
  %v156 = vld [vmem:[%s1 + $0x218] sm:$0xf]
  %v157 = vld [vmem:[%s1 + $0x21c] sm:$0xf]
  %v158 = vld [vmem:[%s1 + $0x220] sm:$0xf]
  %v159 = vld [vmem:[%s1 + $0x224] sm:$0xf]
  %v160 = vld [vmem:[%s1 + $0x228] sm:$0xf]
  %v161 = vld [vmem:[%s1 + $0x22c] sm:$0xf]
  %v162 = vld [vmem:[%s1 + $0x230] sm:$0xf]
  %v163 = vld [vmem:[%s1 + $0x234] sm:$0xf]
  %v164 = vld [vmem:[%s1 + $0x238] sm:$0xf]
  %v165 = vld [vmem:[%s1 + $0x23c] sm:$0xf]
  %v166 = vld [vmem:[%s1 + $0x240] sm:$0xf]
  %v167 = vld [vmem:[%s1 + $0x244] sm:$0xf]
  %v168 = vld [vmem:[%s1 + $0x248] sm:$0xf]
  %v169 = vld [vmem:[%s1 + $0x24c] sm:$0xf]
  %v170 = vld [vmem:[%s1 + $0x250] sm:$0xf]
  %v171 = vld [vmem:[%s1 + $0x254] sm:$0xf]
  %v172 = vld [vmem:[%s1 + $0x258] sm:$0xf]
  %v173 = vld [vmem:[%s1 + $0x25c] sm:$0xf]
  %v174 = vld [vmem:[%s1 + $0x260] sm:$0xf]
  %v175 = vld [vmem:[%s1 + $0x264] sm:$0xf]
  %v176 = vld [vmem:[%s1 + $0x268] sm:$0xf]
  %v177 = vld [vmem:[%s1 + $0x26c] sm:$0xf]
  %v178 = vld [vmem:[%s1 + $0x270] sm:$0xf]
  %v179 = vld [vmem:[%s1 + $0x274] sm:$0xf]
  %v180 = vld [vmem:[%s1 + $0x278] sm:$0xf]
  %v181 = vld [vmem:[%s1 + $0x27c] sm:$0xf]
  %v182 = vld [vmem:[%s1 + $0x280] sm:$0xf]
  %v183 = vld [vmem:[%s1 + $0x284] sm:$0xf]
  %v184 = vld [vmem:[%s1 + $0x288] sm:$0xf]
  %v185 = vld [vmem:[%s1 + $0x28c] sm:$0xf]
  %v186 = vld [vmem:[%s1 + $0x290] sm:$0xf]
  %v187 = vld [vmem:[%s1 + $0x294] sm:$0xf]
  %v188 = vld [vmem:[%s1 + $0x298] sm:$0xf]
  %v189 = vld [vmem:[%s1 + $0x29c] sm:$0xf]
  %v190 = vld [vmem:[%s1 + $0x2a0] sm:$0xf]
  %v191 = vld [vmem:[%s1 + $0x2a4] sm:$0xf]
  %v192 = vld [vmem:[%s1 + $0x2a8] sm:$0xf]
  %v193 = vld [vmem:[%s1 + $0x2ac] sm:$0xf]
  %v194 = vld [vmem:[%s1 + $0x2b0] sm:$0xf]
  %v195 = vld [vmem:[%s1 + $0x2b4] sm:$0xf]
  %v196 = vld [vmem:[%s1 + $0x2b8] sm:$0xf]
  %v197 = vld [vmem:[%s1 + $0x2bc] sm:$0xf]
  %v198 = vld [vmem:[%s1 + $0x2c0] sm:$0xf]
  %v199 = vld [vmem:[%s1 + $0x2c4] sm:$0xf]
  %v200 = vld [vmem:[%s1 + $0x2c8] sm:$0xf]
  %v201 = vld [vmem:[%s1 + $0x2cc] sm:$0xf]
  %v202 = vld [vmem:[%s1 + $0x2d0] sm:$0xf]
  %v203 = vld [vmem:[%s1 + $0x2d4] sm:$0xf]
  %v204 = vld [vmem:[%s1 + $0x2d8] sm:$0xf]
  %v205 = vld [vmem:[%s1 + $0x2dc] sm:$0xf]
  %v206 = vld [vmem:[%s1 + $0x2e0] sm:$0xf]
  %v207 = vld [vmem:[%s1 + $0x2e4] sm:$0xf]
  %v208 = vld [vmem:[%s1 + $0x2e8] sm:$0xf]
  %v209 = vld [vmem:[%s1 + $0x2ec] sm:$0xf]
  %v210 = vld [vmem:[%s1 + $0x2f0] sm:$0xf]
  %v211 = vld [vmem:[%s1 + $0x2f4] sm:$0xf]
  %v212 = vld [vmem:[%s1 + $0x2f8] sm:$0xf]
  %v213 = vld [vmem:[%s1 + $0x2fc] sm:$0xf]
  %v214 = vld [vmem:[%s1 + $0x300] sm:$0xf]
  %v215 = vld [vmem:[%s1 + $0x304] sm:$0xf]
  %v216 = vld [vmem:[%s1 + $0x308] sm:$0xf]
  %v217 = vld [vmem:[%s1 + $0x30c] sm:$0xf]
  %v218 = vld [vmem:[%s1 + $0x310] sm:$0xf]
  %v219 = vld [vmem:[%s1 + $0x314] sm:$0xf]
  %v220 = vld [vmem:[%s1 + $0x318] sm:$0xf]
  %v221 = vld [vmem:[%s1 + $0x31c] sm:$0xf]
  %v222 = vld [vmem:[%s1 + $0x320] sm:$0xf]
  %v223 = vld [vmem:[%s1 + $0x324] sm:$0xf]
  %v224 = vld [vmem:[%s1 + $0x328] sm:$0xf]
  %v225 = vld [vmem:[%s1 + $0x32c] sm:$0xf]
  %v226 = vld [vmem:[%s1 + $0x330] sm:$0xf]
  %v227 = vld [vmem:[%s1 + $0x334] sm:$0xf]
  %v228 = vld [vmem:[%s1 + $0x338] sm:$0xf]
  %v229 = vld [vmem:[%s1 + $0x33c] sm:$0xf]
  %v230 = vld [vmem:[%s1 + $0x340] sm:$0xf]
  %v231 = vld [vmem:[%s1 + $0x344] sm:$0xf]
  %v232 = vld [vmem:[%s1 + $0x348] sm:$0xf]
  %v233 = vld [vmem:[%s1 + $0x34c] sm:$0xf]
  %v234 = vld [vmem:[%s1 + $0x350] sm:$0xf]
  %v235 = vld [vmem:[%s1 + $0x354] sm:$0xf]
  %v236 = vld [vmem:[%s1 + $0x358] sm:$0xf]
  %v237 = vld [vmem:[%s1 + $0x35c] sm:$0xf]
  %v238 = vld [vmem:[%s2] sm:$0x1]
  %v240 = vperm.slane %v238, 0
  %v249 = vunpack.c.l.b16 %v15
  %v250 = vunpack.c.h.b16 %v15
  %v251 = vunpack.c.l.b16 %v16
  %v252 = vunpack.c.h.b16 %v16
  %v253 = vunpack.c.l.b16 %v17
  %v254 = vunpack.c.h.b16 %v17
  %v255 = vunpack.c.l.b16 %v18
  %v256 = vunpack.c.h.b16 %v18
  %v257 = vunpack.c.l.b16 %v19
  %v258 = vunpack.c.h.b16 %v19
  %v259 = vunpack.c.l.b16 %v20
  %v260 = vunpack.c.h.b16 %v20
  %v261 = vunpack.c.l.b16 %v21
  %v262 = vunpack.c.h.b16 %v21
  %v263 = vpack.c.b16 %v249, %v249
  %v264 = vpack.c.b16 %v250, %v250
  %v265 = vpack.c.b16 %v251, %v251
  %v266 = vpack.c.b16 %v252, %v252
  %v267 = vpack.c.b16 %v253, %v253
  %v268 = vpack.c.b16 %v254, %v254
  %v269 = vpack.c.b16 %v255, %v255
  %v270 = vpack.c.b16 %v256, %v256
  %v271 = vpack.c.b16 %v257, %v257
  %v272 = vpack.c.b16 %v258, %v258
  %v273 = vpack.c.b16 %v259, %v259
  %v274 = vpack.c.b16 %v260, %v260
  %v275 = vpack.c.b16 %v261, %v261
  %v276 = vpack.c.b16 %v262, %v262
  %v506 = vunpack.c.l.b16 %v22
  %v507 = vunpack.c.l.b16 %v23
  %v508 = vunpack.c.l.b16 %v24
  %v509 = vunpack.c.l.b16 %v25
  %v510 = vunpack.c.l.b16 %v26
  %v511 = vunpack.c.l.b16 %v27
  %v512 = vunpack.c.l.b16 %v28
  %v513 = vunpack.c.l.b16 %v29
  %v514 = vunpack.c.l.b16 %v30
  %v515 = vunpack.c.l.b16 %v31
  %v516 = vunpack.c.l.b16 %v32
  %v517 = vunpack.c.l.b16 %v33
  %v518 = vunpack.c.l.b16 %v34
  %v519 = vunpack.c.l.b16 %v35
  %v520 = vunpack.c.l.b16 %v36
  %v521 = vunpack.c.l.b16 %v37
  %v522 = vunpack.c.l.b16 %v38
  %v523 = vunpack.c.l.b16 %v39
  %v524 = vunpack.c.l.b16 %v40
  %v525 = vunpack.c.l.b16 %v41
  %v526 = vunpack.c.l.b16 %v42
  %v527 = vunpack.c.l.b16 %v43
  %v528 = vunpack.c.l.b16 %v44
  %v529 = vunpack.c.l.b16 %v45
  %v530 = vunpack.c.l.b16 %v46
  %v531 = vunpack.c.l.b16 %v47
  %v532 = vunpack.c.l.b16 %v48
  %v533 = vunpack.c.l.b16 %v49
  %v534 = vunpack.c.l.b16 %v50
  %v535 = vunpack.c.l.b16 %v51
  %v536 = vunpack.c.l.b16 %v52
  %v537 = vunpack.c.l.b16 %v53
  %v538 = vunpack.c.l.b16 %v54
  %v539 = vunpack.c.l.b16 %v55
  %v540 = vunpack.c.l.b16 %v56
  %v541 = vunpack.c.l.b16 %v57
  %v542 = vunpack.c.l.b16 %v58
  %v543 = vunpack.c.l.b16 %v59
  %v544 = vunpack.c.l.b16 %v60
  %v545 = vunpack.c.l.b16 %v61
  %v546 = vunpack.c.l.b16 %v62
  %v547 = vunpack.c.l.b16 %v63
  %v548 = vunpack.c.l.b16 %v64
  %v549 = vunpack.c.l.b16 %v65
  %v550 = vunpack.c.l.b16 %v66
  %v551 = vunpack.c.l.b16 %v67
  %v552 = vunpack.c.l.b16 %v68
  %v553 = vunpack.c.l.b16 %v69
  %v554 = vunpack.c.l.b16 %v70
  %v555 = vunpack.c.l.b16 %v71
  %v556 = vunpack.c.l.b16 %v72
  %v557 = vunpack.c.l.b16 %v73
  %v558 = vunpack.c.l.b16 %v74
  %v559 = vunpack.c.l.b16 %v75
  %v560 = vunpack.c.l.b16 %v76
  %v561 = vunpack.c.l.b16 %v77
  %v562 = vunpack.c.l.b16 %v78
  %v563 = vunpack.c.l.b16 %v79
  %v564 = vunpack.c.l.b16 %v80
  %v565 = vunpack.c.l.b16 %v81
  %v566 = vunpack.c.l.b16 %v82
  %v567 = vunpack.c.l.b16 %v83
  %v568 = vunpack.c.l.b16 %v84
  %v569 = vunpack.c.l.b16 %v85
  %v570 = vunpack.c.l.b16 %v86
  %v571 = vunpack.c.l.b16 %v87
  %v572 = vunpack.c.l.b16 %v88
  %v573 = vunpack.c.l.b16 %v89
  %v574 = vunpack.c.l.b16 %v90
  %v575 = vunpack.c.l.b16 %v91
  %v576 = vunpack.c.l.b16 %v92
  %v577 = vunpack.c.l.b16 %v93
  %v578 = vunpack.c.l.b16 %v94
  %v579 = vunpack.c.l.b16 %v95
  %v580 = vunpack.c.l.b16 %v96
  %v581 = vunpack.c.l.b16 %v97
  %v582 = vunpack.c.l.b16 %v98
  %v583 = vunpack.c.l.b16 %v99
  %v584 = vunpack.c.l.b16 %v100
  %v585 = vunpack.c.l.b16 %v101
  %v586 = vunpack.c.l.b16 %v102
  %v587 = vunpack.c.l.b16 %v103
  %v588 = vunpack.c.l.b16 %v104
  %v589 = vunpack.c.l.b16 %v105
  %v590 = vunpack.c.l.b16 %v106
  %v591 = vunpack.c.l.b16 %v107
  %v592 = vunpack.c.l.b16 %v108
  %v593 = vunpack.c.l.b16 %v109
  %v594 = vunpack.c.l.b16 %v110
  %v595 = vunpack.c.l.b16 %v111
  %v596 = vunpack.c.l.b16 %v112
  %v597 = vunpack.c.l.b16 %v113
  %v598 = vunpack.c.l.b16 %v114
  %v599 = vunpack.c.l.b16 %v115
  %v600 = vunpack.c.l.b16 %v116
  %v601 = vunpack.c.l.b16 %v117
  %v602 = vunpack.c.l.b16 %v118
  %v603 = vunpack.c.l.b16 %v119
  %v604 = vunpack.c.l.b16 %v120
  %v605 = vunpack.c.l.b16 %v121
  %v606 = vunpack.c.l.b16 %v122
  %v607 = vunpack.c.l.b16 %v123
  %v608 = vunpack.c.l.b16 %v124
  %v609 = vunpack.c.l.b16 %v125
  %v610 = vunpack.c.l.b16 %v126
  %v611 = vunpack.c.l.b16 %v127
  %v612 = vunpack.c.l.b16 %v128
  %v613 = vunpack.c.l.b16 %v129
  %v614 = vunpack.c.l.b16 %v130
  %v615 = vunpack.c.l.b16 %v131
  %v616 = vunpack.c.l.b16 %v132
  %v617 = vunpack.c.l.b16 %v133
  %v618 = vunpack.c.l.b16 %v134
  %v619 = vunpack.c.l.b16 %v135
  %v620 = vunpack.c.l.b16 %v136
  %v621 = vunpack.c.l.b16 %v137
  %v622 = vunpack.c.l.b16 %v138
  %v623 = vunpack.c.l.b16 %v139
  %v624 = vunpack.c.l.b16 %v140
  %v625 = vunpack.c.l.b16 %v141
  %v626 = vunpack.c.l.b16 %v142
  %v627 = vunpack.c.l.b16 %v143
  %v628 = vunpack.c.l.b16 %v144
  %v629 = vunpack.c.l.b16 %v145
  %v630 = vunpack.c.l.b16 %v146
  %v631 = vunpack.c.l.b16 %v147
  %v632 = vunpack.c.l.b16 %v148
  %v633 = vunpack.c.l.b16 %v149
  %v634 = vunpack.c.l.b16 %v150
  %v635 = vunpack.c.l.b16 %v151
  %v636 = vunpack.c.l.b16 %v152
  %v637 = vunpack.c.l.b16 %v153
  %v638 = vunpack.c.l.b16 %v154
  %v639 = vunpack.c.l.b16 %v155
  %v640 = vunpack.c.l.b16 %v156
  %v641 = vunpack.c.l.b16 %v157
  %v642 = vunpack.c.l.b16 %v158
  %v643 = vunpack.c.l.b16 %v159
  %v644 = vunpack.c.l.b16 %v160
  %v645 = vunpack.c.l.b16 %v161
  %v646 = vunpack.c.l.b16 %v162
  %v647 = vunpack.c.l.b16 %v163
  %v648 = vunpack.c.l.b16 %v164
  %v649 = vunpack.c.l.b16 %v165
  %v650 = vunpack.c.l.b16 %v166
  %v651 = vunpack.c.l.b16 %v167
  %v652 = vunpack.c.l.b16 %v168
  %v653 = vunpack.c.l.b16 %v169
  %v654 = vunpack.c.l.b16 %v170
  %v655 = vunpack.c.l.b16 %v171
  %v656 = vunpack.c.l.b16 %v172
  %v657 = vunpack.c.l.b16 %v173
  %v658 = vunpack.c.l.b16 %v174
  %v659 = vunpack.c.l.b16 %v175
  %v660 = vunpack.c.l.b16 %v176
  %v661 = vunpack.c.l.b16 %v177
  %v662 = vunpack.c.l.b16 %v178
  %v663 = vunpack.c.l.b16 %v179
  %v664 = vunpack.c.l.b16 %v180
  %v665 = vunpack.c.l.b16 %v181
  %v666 = vunpack.c.l.b16 %v182
  %v667 = vunpack.c.l.b16 %v183
  %v668 = vunpack.c.l.b16 %v184
  %v669 = vunpack.c.l.b16 %v185
  %v670 = vunpack.c.l.b16 %v186
  %v671 = vunpack.c.l.b16 %v187
  %v672 = vunpack.c.l.b16 %v188
  %v673 = vunpack.c.l.b16 %v189
  %v674 = vunpack.c.l.b16 %v190
  %v675 = vunpack.c.l.b16 %v191
  %v676 = vunpack.c.l.b16 %v192
  %v677 = vunpack.c.l.b16 %v193
  %v678 = vunpack.c.l.b16 %v194
  %v679 = vunpack.c.l.b16 %v195
  %v680 = vunpack.c.l.b16 %v196
  %v681 = vunpack.c.l.b16 %v197
  %v682 = vunpack.c.l.b16 %v198
  %v683 = vunpack.c.l.b16 %v199
  %v684 = vunpack.c.l.b16 %v200
  %v685 = vunpack.c.l.b16 %v201
  %v686 = vunpack.c.l.b16 %v202
  %v687 = vunpack.c.l.b16 %v203
  %v688 = vunpack.c.l.b16 %v204
  %v689 = vunpack.c.l.b16 %v205
  %v690 = vunpack.c.l.b16 %v206
  %v691 = vunpack.c.l.b16 %v207
  %v692 = vunpack.c.l.b16 %v208
  %v693 = vunpack.c.l.b16 %v209
  %v694 = vunpack.c.l.b16 %v210
  %v695 = vunpack.c.l.b16 %v211
  %v696 = vunpack.c.l.b16 %v212
  %v697 = vunpack.c.l.b16 %v213
  %v698 = vunpack.c.l.b16 %v214
  %v699 = vunpack.c.l.b16 %v215
  %v700 = vunpack.c.l.b16 %v216
  %v701 = vunpack.c.l.b16 %v217
  %v702 = vunpack.c.l.b16 %v218
  %v703 = vunpack.c.l.b16 %v219
  %v704 = vunpack.c.l.b16 %v220
  %v705 = vunpack.c.l.b16 %v221
  %v706 = vunpack.c.l.b16 %v222
  %v707 = vunpack.c.l.b16 %v223
  %v708 = vunpack.c.l.b16 %v224
  %v709 = vunpack.c.l.b16 %v225
  %v710 = vunpack.c.l.b16 %v226
  %v711 = vunpack.c.l.b16 %v227
  %v712 = vunpack.c.l.b16 %v228
  %v713 = vunpack.c.l.b16 %v229
  %v714 = vunpack.c.l.b16 %v230
  %v715 = vunpack.c.l.b16 %v231
  %v716 = vunpack.c.l.b16 %v232
  %v717 = vunpack.c.l.b16 %v233
  %v718 = vunpack.c.l.b16 %v234
  %v719 = vunpack.c.l.b16 %v235
  %v720 = vunpack.c.l.b16 %v236
  %v721 = vunpack.c.l.b16 %v237
  %v722 = vpack.c.b16 %v507, %v506
  %v723 = vpack.c.b16 %v509, %v508
  %v724 = vpack.c.b16 %v511, %v510
  %v725 = vpack.c.b16 %v513, %v512
  %v726 = vpack.c.b16 %v515, %v514
  %v727 = vpack.c.b16 %v517, %v516
  %v728 = vpack.c.b16 %v519, %v518
  %v729 = vpack.c.b16 %v521, %v520
  %v730 = vpack.c.b16 %v523, %v522
  %v731 = vpack.c.b16 %v525, %v524
  %v732 = vpack.c.b16 %v527, %v526
  %v733 = vpack.c.b16 %v529, %v528
  %v734 = vpack.c.b16 %v531, %v530
  %v735 = vpack.c.b16 %v533, %v532
  %v736 = vpack.c.b16 %v535, %v534
  %v737 = vpack.c.b16 %v537, %v536
  %v738 = vpack.c.b16 %v539, %v538
  %v739 = vpack.c.b16 %v541, %v540
  %v740 = vpack.c.b16 %v543, %v542
  %v741 = vpack.c.b16 %v545, %v544
  %v742 = vpack.c.b16 %v547, %v546
  %v743 = vpack.c.b16 %v549, %v548
  %v744 = vpack.c.b16 %v551, %v550
  %v745 = vpack.c.b16 %v553, %v552
  %v746 = vpack.c.b16 %v555, %v554
  %v747 = vpack.c.b16 %v557, %v556
  %v748 = vpack.c.b16 %v559, %v558
  %v749 = vpack.c.b16 %v561, %v560
  %v750 = vpack.c.b16 %v563, %v562
  %v751 = vpack.c.b16 %v565, %v564
  %v752 = vpack.c.b16 %v567, %v566
  %v753 = vpack.c.b16 %v569, %v568
  %v754 = vpack.c.b16 %v571, %v570
  %v755 = vpack.c.b16 %v573, %v572
  %v756 = vpack.c.b16 %v575, %v574
  %v757 = vpack.c.b16 %v577, %v576
  %v758 = vpack.c.b16 %v579, %v578
  %v759 = vpack.c.b16 %v581, %v580
  %v760 = vpack.c.b16 %v583, %v582
  %v761 = vpack.c.b16 %v585, %v584
  %v762 = vpack.c.b16 %v587, %v586
  %v763 = vpack.c.b16 %v589, %v588
  %v764 = vpack.c.b16 %v591, %v590
  %v765 = vpack.c.b16 %v593, %v592
  %v766 = vpack.c.b16 %v595, %v594
  %v767 = vpack.c.b16 %v597, %v596
  %v768 = vpack.c.b16 %v599, %v598
  %v769 = vpack.c.b16 %v601, %v600
  %v770 = vpack.c.b16 %v603, %v602
  %v771 = vpack.c.b16 %v605, %v604
  %v772 = vpack.c.b16 %v607, %v606
  %v773 = vpack.c.b16 %v609, %v608
  %v774 = vpack.c.b16 %v611, %v610
  %v775 = vpack.c.b16 %v613, %v612
  %v776 = vpack.c.b16 %v615, %v614
  %v777 = vpack.c.b16 %v617, %v616
  %v778 = vpack.c.b16 %v619, %v618
  %v779 = vpack.c.b16 %v621, %v620
  %v780 = vpack.c.b16 %v623, %v622
  %v781 = vpack.c.b16 %v625, %v624
  %v782 = vpack.c.b16 %v627, %v626
  %v783 = vpack.c.b16 %v629, %v628
  %v784 = vpack.c.b16 %v631, %v630
  %v785 = vpack.c.b16 %v633, %v632
  %v786 = vpack.c.b16 %v635, %v634
  %v787 = vpack.c.b16 %v637, %v636
  %v788 = vpack.c.b16 %v639, %v638
  %v789 = vpack.c.b16 %v641, %v640
  %v790 = vpack.c.b16 %v643, %v642
  %v791 = vpack.c.b16 %v645, %v644
  %v792 = vpack.c.b16 %v647, %v646
  %v793 = vpack.c.b16 %v649, %v648
  %v794 = vpack.c.b16 %v651, %v650
  %v795 = vpack.c.b16 %v653, %v652
  %v796 = vpack.c.b16 %v655, %v654
  %v797 = vpack.c.b16 %v657, %v656
  %v798 = vpack.c.b16 %v659, %v658
  %v799 = vpack.c.b16 %v661, %v660
  %v800 = vpack.c.b16 %v663, %v662
  %v801 = vpack.c.b16 %v665, %v664
  %v802 = vpack.c.b16 %v667, %v666
  %v803 = vpack.c.b16 %v669, %v668
  %v804 = vpack.c.b16 %v671, %v670
  %v805 = vpack.c.b16 %v673, %v672
  %v806 = vpack.c.b16 %v675, %v674
  %v807 = vpack.c.b16 %v677, %v676
  %v808 = vpack.c.b16 %v679, %v678
  %v809 = vpack.c.b16 %v681, %v680
  %v810 = vpack.c.b16 %v683, %v682
  %v811 = vpack.c.b16 %v685, %v684
  %v812 = vpack.c.b16 %v687, %v686
  %v813 = vpack.c.b16 %v689, %v688
  %v814 = vpack.c.b16 %v691, %v690
  %v815 = vpack.c.b16 %v693, %v692
  %v816 = vpack.c.b16 %v695, %v694
  %v817 = vpack.c.b16 %v697, %v696
  %v818 = vpack.c.b16 %v699, %v698
  %v819 = vpack.c.b16 %v701, %v700
  %v820 = vpack.c.b16 %v703, %v702
  %v821 = vpack.c.b16 %v705, %v704
  %v822 = vpack.c.b16 %v707, %v706
  %v823 = vpack.c.b16 %v709, %v708
  %v824 = vpack.c.b16 %v711, %v710
  %v825 = vpack.c.b16 %v713, %v712
  %v826 = vpack.c.b16 %v715, %v714
  %v827 = vpack.c.b16 %v717, %v716
  %v828 = vpack.c.b16 %v719, %v718
  %v829 = vpack.c.b16 %v721, %v720
  %vm938 = vcmask 523264
  %v940 = vsel %vm938, %v276, 0
  %942 = vmatpush.bf16.msra.mxu0 %v729
  %943 = vmatpush.bf16.msra.mxu0 %v728
  %944 = vmatpush.bf16.msra.mxu0 %v727
  %945 = vmatpush.bf16.msra.mxu0 %v726
  %946 = vmatpush.bf16.msra.mxu0 %v725
  %947 = vmatpush.bf16.msra.mxu0 %v724
  %948 = vmatpush.bf16.msra.mxu0 %v723
  %949 = vmatpush.bf16.msra.mxu0 %v722
  %950 = vmatmul.bf16.gmra.mxu0 %v263
  %v951 = vpop.f32.mrf.mxu0
  %v952 = vadd.f32 %v240, %v951
  %v953 = vpop.f32.mrf.mxu0
  %954 = vdwg.mxu0
  %955 = vmatpush.bf16.msra.mxu0 %v737
  %956 = vmatpush.bf16.msra.mxu0 %v736
  %957 = vmatpush.bf16.msra.mxu0 %v735
  %958 = vmatpush.bf16.msra.mxu0 %v734
  %959 = vmatpush.bf16.msra.mxu0 %v733
  %960 = vmatpush.bf16.msra.mxu0 %v732
  %961 = vmatpush.bf16.msra.mxu0 %v731
  %962 = vmatpush.bf16.msra.mxu0 %v730
  %963 = vmatmul.bf16.gmra.mxu0 %v264
  %v964 = vpop.f32.mrf.mxu0
  %v965 = vadd.f32 %v952, %v964
  %v966 = vpop.f32.mrf.mxu0
  %967 = vdwg.mxu0
  %968 = vmatpush.bf16.msra.mxu0 %v745
  %969 = vmatpush.bf16.msra.mxu0 %v744
  %970 = vmatpush.bf16.msra.mxu0 %v743
  %971 = vmatpush.bf16.msra.mxu0 %v742
  %972 = vmatpush.bf16.msra.mxu0 %v741
  %973 = vmatpush.bf16.msra.mxu0 %v740
  %974 = vmatpush.bf16.msra.mxu0 %v739
  %975 = vmatpush.bf16.msra.mxu0 %v738
  %976 = vmatmul.bf16.gmra.mxu0 %v265
  %v977 = vpop.f32.mrf.mxu0
  %v978 = vadd.f32 %v965, %v977
  %v979 = vpop.f32.mrf.mxu0
  %980 = vdwg.mxu0
  %981 = vmatpush.bf16.msra.mxu0 %v753
  %982 = vmatpush.bf16.msra.mxu0 %v752
  %983 = vmatpush.bf16.msra.mxu0 %v751
  %984 = vmatpush.bf16.msra.mxu0 %v750
  %985 = vmatpush.bf16.msra.mxu0 %v749
  %986 = vmatpush.bf16.msra.mxu0 %v748
  %987 = vmatpush.bf16.msra.mxu0 %v747
  %988 = vmatpush.bf16.msra.mxu0 %v746
  %989 = vmatmul.bf16.gmra.mxu0 %v266
  %v990 = vpop.f32.mrf.mxu0
  %v991 = vadd.f32 %v978, %v990
  %v992 = vpop.f32.mrf.mxu0
  %993 = vdwg.mxu0
  %994 = vmatpush.bf16.msra.mxu0 %v761
  %995 = vmatpush.bf16.msra.mxu0 %v760
  %996 = vmatpush.bf16.msra.mxu0 %v759
  %997 = vmatpush.bf16.msra.mxu0 %v758
  %998 = vmatpush.bf16.msra.mxu0 %v757
  %999 = vmatpush.bf16.msra.mxu0 %v756
  %1000 = vmatpush.bf16.msra.mxu0 %v755
  %1001 = vmatpush.bf16.msra.mxu0 %v754
  %1002 = vmatmul.bf16.gmra.mxu0 %v267
  %v1003 = vpop.f32.mrf.mxu0
  %v1004 = vadd.f32 %v991, %v1003
  %v1005 = vpop.f32.mrf.mxu0
  %1006 = vdwg.mxu0
  %1007 = vmatpush.bf16.msra.mxu0 %v769
  %1008 = vmatpush.bf16.msra.mxu0 %v768
  %1009 = vmatpush.bf16.msra.mxu0 %v767
  %1010 = vmatpush.bf16.msra.mxu0 %v766
  %1011 = vmatpush.bf16.msra.mxu0 %v765
  %1012 = vmatpush.bf16.msra.mxu0 %v764
  %1013 = vmatpush.bf16.msra.mxu0 %v763
  %1014 = vmatpush.bf16.msra.mxu0 %v762
  %1015 = vmatmul.bf16.gmra.mxu0 %v268
  %v1016 = vpop.f32.mrf.mxu0
  %v1017 = vadd.f32 %v1004, %v1016
  %v1018 = vpop.f32.mrf.mxu0
  %1019 = vdwg.mxu0
  %1020 = vmatpush.bf16.msra.mxu0 %v777
  %1021 = vmatpush.bf16.msra.mxu0 %v776
  %1022 = vmatpush.bf16.msra.mxu0 %v775
  %1023 = vmatpush.bf16.msra.mxu0 %v774
  %1024 = vmatpush.bf16.msra.mxu0 %v773
  %1025 = vmatpush.bf16.msra.mxu0 %v772
  %1026 = vmatpush.bf16.msra.mxu0 %v771
  %1027 = vmatpush.bf16.msra.mxu0 %v770
  %1028 = vmatmul.bf16.gmra.mxu0 %v269
  %v1029 = vpop.f32.mrf.mxu0
  %v1030 = vadd.f32 %v1017, %v1029
  %v1031 = vpop.f32.mrf.mxu0
  %1032 = vdwg.mxu0
  %1033 = vmatpush.bf16.msra.mxu0 %v785
  %1034 = vmatpush.bf16.msra.mxu0 %v784
  %1035 = vmatpush.bf16.msra.mxu0 %v783
  %1036 = vmatpush.bf16.msra.mxu0 %v782
  %1037 = vmatpush.bf16.msra.mxu0 %v781
  %1038 = vmatpush.bf16.msra.mxu0 %v780
  %1039 = vmatpush.bf16.msra.mxu0 %v779
  %1040 = vmatpush.bf16.msra.mxu0 %v778
  %1041 = vmatmul.bf16.gmra.mxu0 %v270
  %v1042 = vpop.f32.mrf.mxu0
  %v1043 = vadd.f32 %v1030, %v1042
  %v1044 = vpop.f32.mrf.mxu0
  %1045 = vdwg.mxu0
  %1046 = vmatpush.bf16.msra.mxu0 %v793
  %1047 = vmatpush.bf16.msra.mxu0 %v792
  %1048 = vmatpush.bf16.msra.mxu0 %v791
  %1049 = vmatpush.bf16.msra.mxu0 %v790
  %1050 = vmatpush.bf16.msra.mxu0 %v789
  %1051 = vmatpush.bf16.msra.mxu0 %v788
  %1052 = vmatpush.bf16.msra.mxu0 %v787
  %1053 = vmatpush.bf16.msra.mxu0 %v786
  %1054 = vmatmul.bf16.gmra.mxu0 %v271
  %v1055 = vpop.f32.mrf.mxu0
  %v1056 = vadd.f32 %v1043, %v1055
  %v1057 = vpop.f32.mrf.mxu0
  %1058 = vdwg.mxu0
  %1059 = vmatpush.bf16.msra.mxu0 %v801
  %1060 = vmatpush.bf16.msra.mxu0 %v800
  %1061 = vmatpush.bf16.msra.mxu0 %v799
  %1062 = vmatpush.bf16.msra.mxu0 %v798
  %1063 = vmatpush.bf16.msra.mxu0 %v797
  %1064 = vmatpush.bf16.msra.mxu0 %v796
  %1065 = vmatpush.bf16.msra.mxu0 %v795
  %1066 = vmatpush.bf16.msra.mxu0 %v794
  %1067 = vmatmul.bf16.gmra.mxu0 %v272
  %v1068 = vpop.f32.mrf.mxu0
  %v1069 = vadd.f32 %v1056, %v1068
  %v1070 = vpop.f32.mrf.mxu0
  %1071 = vdwg.mxu0
  %1072 = vmatpush.bf16.msra.mxu0 %v809
  %1073 = vmatpush.bf16.msra.mxu0 %v808
  %1074 = vmatpush.bf16.msra.mxu0 %v807
  %1075 = vmatpush.bf16.msra.mxu0 %v806
  %1076 = vmatpush.bf16.msra.mxu0 %v805
  %1077 = vmatpush.bf16.msra.mxu0 %v804
  %1078 = vmatpush.bf16.msra.mxu0 %v803
  %1079 = vmatpush.bf16.msra.mxu0 %v802
  %1080 = vmatmul.bf16.gmra.mxu0 %v273
  %v1081 = vpop.f32.mrf.mxu0
  %v1082 = vadd.f32 %v1069, %v1081
  %v1083 = vpop.f32.mrf.mxu0
  %1084 = vdwg.mxu0
  %1085 = vmatpush.bf16.msra.mxu0 %v817
  %1086 = vmatpush.bf16.msra.mxu0 %v816
  %1087 = vmatpush.bf16.msra.mxu0 %v815
  %1088 = vmatpush.bf16.msra.mxu0 %v814
  %1089 = vmatpush.bf16.msra.mxu0 %v813
  %1090 = vmatpush.bf16.msra.mxu0 %v812
  %1091 = vmatpush.bf16.msra.mxu0 %v811
  %1092 = vmatpush.bf16.msra.mxu0 %v810
  %1093 = vmatmul.bf16.gmra.mxu0 %v274
  %v1094 = vpop.f32.mrf.mxu0
  %v1095 = vadd.f32 %v1082, %v1094
  %v1096 = vpop.f32.mrf.mxu0
  %1097 = vdwg.mxu0
  %1098 = vmatpush.bf16.msra.mxu0 %v825
  %1099 = vmatpush.bf16.msra.mxu0 %v824
  %1100 = vmatpush.bf16.msra.mxu0 %v823
  %1101 = vmatpush.bf16.msra.mxu0 %v822
  %1102 = vmatpush.bf16.msra.mxu0 %v821
  %1103 = vmatpush.bf16.msra.mxu0 %v820
  %1104 = vmatpush.bf16.msra.mxu0 %v819
  %1105 = vmatpush.bf16.msra.mxu0 %v818
  %1106 = vmatmul.bf16.gmra.mxu0 %v275
  %v1107 = vpop.f32.mrf.mxu0
  %v1108 = vadd.f32 %v1095, %v1107
  %v1109 = vpop.f32.mrf.mxu0
  %1110 = vdwg.mxu0
  %1111 = vmatpush.bf16.msra.mxu0 0
  %1112 = vmatpush.bf16.msra.mxu0 0
  %1113 = vmatpush.bf16.msra.mxu0 0
  %1114 = vmatpush.bf16.msra.mxu0 0
  %1115 = vmatpush.bf16.msra.mxu0 %v829
  %1116 = vmatpush.bf16.msra.mxu0 %v828
  %1117 = vmatpush.bf16.msra.mxu0 %v827
  %1118 = vmatpush.bf16.msra.mxu0 %v826
  %1119 = vmatmul.bf16.gmra.mxu0 %v940
  %v1120 = vpop.f32.mrf.mxu0
  %v1121 = vadd.f32 %v1108, %v1120
  %v1122 = vpop.f32.mrf.mxu0
  %1123 = vdwg.mxu0
  %v1124 = vmax.f32 %v1121, 0.0
  %v1125 = vpack.c.bf16 %v1124, %v1124
  %1126 = vst [vmem:[%s3] sm:$0xf] %v1125
  // Predicated region
  $region14: #{temporal3d_forward.14} parent=0 // pred_check
    _
  $region15: #{temporal3d_forward.14} parent=0 // pred_check_branch
    %1128 = sbr.rel (0) target = $region17
  $region16: #{temporal3d_forward.14} parent=0 // pred_region
    _
  $region17: #{temporal3d_forward.14} parent=0 // pred_fallthru
    _
  // Predicated region
  $region18: #{temporal3d_forward.14} parent=0 // pred_check
    _
  $region19: #{temporal3d_forward.14} parent=0 // pred_check_branch
    %1130 = sbr.rel (0) target = $region21
  $region20: #{temporal3d_forward.14} parent=0 // pred_region
    _
  $region21: #{temporal3d_forward.14} parent=0 // pred_fallthru
    _

// kernel: temporal3d_forward.15
$region0: #{temporal3d_forward.15}
  #allocation0 [shape = 'u32[]', space=smem, size = 0x4, offset = 0x4, fixed_abs, tag = 'smem constant byte address 0x4 - core index']
  #allocation1 [shape = 'u32[72,128]{1,0:T(1,128)}', space=vmem, size = 0x9000, scoped, tag = 'internal scratch']
  %s0 = inlined_call_operand.vmem [shape: bf16[8,128], index: 0, kind: input, shape index: {}]
  %s1 = inlined_call_operand.vmem [shape: bf16[128,512], index: 1, kind: input, shape index: {}]
  %s2 = inlined_call_operand.vmem [shape: bf16[128,512], index: 2, kind: input, shape index: {}]
  %s3 = inlined_call_operand.vmem [shape: f32[1,512], index: 3, kind: input, shape index: {}]
  %s4 = inlined_call_operand.vmem [shape: bf16[128,512], index: 4, kind: input, shape index: {}]
  %s5 = inlined_call_operand.vmem [shape: bf16[128,512], index: 5, kind: input, shape index: {}]
  %s6 = inlined_call_operand.vmem [shape: f32[1,512], index: 6, kind: input, shape index: {}]
  %s7 = inlined_call_operand.vmem [shape: bf16[128,512], index: 7, kind: input, shape index: {}]
  %s8 = inlined_call_operand.vmem [shape: f32[1,512], index: 8, kind: input, shape index: {}]
  %s9 = inlined_call_operand.vmem [shape: bf16[512,128], index: 9, kind: input, shape index: {}]
  %s10 = inlined_call_operand.vmem [shape: f32[1,128], index: 10, kind: input, shape index: {}]
  %s11 = inlined_call_operand.vmem [shape: bf16[128,128], index: 11, kind: input, shape index: {}]
  %s12 = inlined_call_operand.vmem [shape: f32[1,128], index: 12, kind: input, shape index: {}]
  %s13 = inlined_call_operand.hbm [shape: f32[2,128], index: 13, kind: output, shape index: {}]
  %s14 = sld [smem:[#allocation0]]
  $region62: #{temporal3d_forward.15} parent=0
    _
  %s16 = ssub.s32 1, %s14
  %s17 = scalar_select 0, %s16, %s14
  $region1: #{temporal3d_forward.15} parent=0
    #allocation2 [shape = 'u8[1024]{0}', space=vmem, size = 0x400, scoped, tag = 'output window, operand 0, single buffered']
    #allocation3 [shape = 's32[1]{0}', space=sflag, size = 0x4, scoped, tag = 'scoped memory for temporal3d_forward.15']
    %18 = vsyncpa [#allocation3], 0
    // Predicated region
    $region2: #{temporal3d_forward.15} parent=1 // pred_check
      _
    $region3: #{temporal3d_forward.15} parent=1 // pred_check_branch
      %20 = sbr.rel (0) target = $region5
    $region4: #{temporal3d_forward.15} parent=1 // pred_region
      _
    $region5: #{temporal3d_forward.15} parent=1 // pred_fallthru
      _
    // Predicated region
    $region6: #{temporal3d_forward.15} parent=1 // pred_check
      _
    $region7: #{temporal3d_forward.15} parent=1 // pred_check_branch
      %22 = sbr.rel (0) target = $region9
    $region8: #{temporal3d_forward.15} parent=1 // pred_region
      _
    $region9: #{temporal3d_forward.15} parent=1 // pred_fallthru
      _
    // Predicated region
    $region10: #{temporal3d_forward.15} parent=1 // pred_check
      _
    $region11: #{temporal3d_forward.15} parent=1 // pred_check_branch
      %24 = sbr.rel (0) target = $region13
    $region12: #{temporal3d_forward.15} parent=1 // pred_region
      _
    $region13: #{temporal3d_forward.15} parent=1 // pred_fallthru
      _
    // Predicated region
    $region14: #{temporal3d_forward.15} parent=1 // pred_check
      _
    $region15: #{temporal3d_forward.15} parent=1 // pred_check_branch
      %26 = sbr.rel (0) target = $region17
    $region16: #{temporal3d_forward.15} parent=1 // pred_region
      _
    $region17: #{temporal3d_forward.15} parent=1 // pred_fallthru
      _
    // Predicated region
    $region18: #{temporal3d_forward.15} parent=1 // pred_check
      _
    $region19: #{temporal3d_forward.15} parent=1 // pred_check_branch
      %28 = sbr.rel (0) target = $region21
    $region20: #{temporal3d_forward.15} parent=1 // pred_region
      _
    $region21: #{temporal3d_forward.15} parent=1 // pred_fallthru
      _
    // Predicated region
    $region22: #{temporal3d_forward.15} parent=1 // pred_check
      _
    $region23: #{temporal3d_forward.15} parent=1 // pred_check_branch
      %30 = sbr.rel (0) target = $region25
    $region24: #{temporal3d_forward.15} parent=1 // pred_region
      _
    $region25: #{temporal3d_forward.15} parent=1 // pred_fallthru
      _
    // Predicated region
    $region26: #{temporal3d_forward.15} parent=1 // pred_check
      _
    $region27: #{temporal3d_forward.15} parent=1 // pred_check_branch
      %32 = sbr.rel (0) target = $region29
    $region28: #{temporal3d_forward.15} parent=1 // pred_region
      _
    $region29: #{temporal3d_forward.15} parent=1 // pred_fallthru
      _
    // Predicated region
    $region30: #{temporal3d_forward.15} parent=1 // pred_check
      _
    $region31: #{temporal3d_forward.15} parent=1 // pred_check_branch
      %34 = sbr.rel (0) target = $region33
    $region32: #{temporal3d_forward.15} parent=1 // pred_region
      _
    $region33: #{temporal3d_forward.15} parent=1 // pred_fallthru
      _
    // Predicated region
    $region34: #{temporal3d_forward.15} parent=1 // pred_check
      _
    $region35: #{temporal3d_forward.15} parent=1 // pred_check_branch
      %36 = sbr.rel (0) target = $region37
    $region36: #{temporal3d_forward.15} parent=1 // pred_region
      _
    $region37: #{temporal3d_forward.15} parent=1 // pred_fallthru
      _
    // Predicated region
    $region38: #{temporal3d_forward.15} parent=1 // pred_check
      _
    $region39: #{temporal3d_forward.15} parent=1 // pred_check_branch
      %38 = sbr.rel (0) target = $region41
    $region40: #{temporal3d_forward.15} parent=1 // pred_region
      _
    $region41: #{temporal3d_forward.15} parent=1 // pred_fallthru
      _
    // Predicated region
    $region42: #{temporal3d_forward.15} parent=1 // pred_check
      _
    $region43: #{temporal3d_forward.15} parent=1 // pred_check_branch
      %40 = sbr.rel (0) target = $region45
    $region44: #{temporal3d_forward.15} parent=1 // pred_region
      _
    $region45: #{temporal3d_forward.15} parent=1 // pred_fallthru
      _
    // Predicated region
    $region46: #{temporal3d_forward.15} parent=1 // pred_check
      _
    $region47: #{temporal3d_forward.15} parent=1 // pred_check_branch
      %42 = sbr.rel (0) target = $region49
    $region48: #{temporal3d_forward.15} parent=1 // pred_region
      _
    $region49: #{temporal3d_forward.15} parent=1 // pred_fallthru
      _
    // Predicated region
    $region50: #{temporal3d_forward.15} parent=1 // pred_check
      _
    $region51: #{temporal3d_forward.15} parent=1 // pred_check_branch
      %44 = sbr.rel (0) target = $region53
    $region52: #{temporal3d_forward.15} parent=1 // pred_region
      _
    $region53: #{temporal3d_forward.15} parent=1 // pred_fallthru
      _
    %v46 = vld [vmem:[%s2] sm:$0xff]
    %v47 = vld [vmem:[%s2 + $0x8] sm:$0xff]
    %v48 = vld [vmem:[%s2 + $0x10] sm:$0xff]
    %v49 = vld [vmem:[%s2 + $0x18] sm:$0xff]
    %v50 = vld [vmem:[%s2 + $0x20] sm:$0xff]
    %v51 = vld [vmem:[%s2 + $0x28] sm:$0xff]
    %v52 = vld [vmem:[%s2 + $0x30] sm:$0xff]
    %v53 = vld [vmem:[%s2 + $0x38] sm:$0xff]
    %v54 = vld [vmem:[%s2 + $0x40] sm:$0xff]
    %v55 = vld [vmem:[%s2 + $0x48] sm:$0xff]
    %v56 = vld [vmem:[%s2 + $0x50] sm:$0xff]
    %v57 = vld [vmem:[%s2 + $0x58] sm:$0xff]
    %v58 = vld [vmem:[%s2 + $0x60] sm:$0xff]
    %v59 = vld [vmem:[%s2 + $0x68] sm:$0xff]
    %v60 = vld [vmem:[%s2 + $0x70] sm:$0xff]
    %v61 = vld [vmem:[%s2 + $0x78] sm:$0xff]
    %v62 = vld [vmem:[%s2 + $0x80] sm:$0xff]
    %v63 = vld [vmem:[%s2 + $0x88] sm:$0xff]
    %v64 = vld [vmem:[%s2 + $0x90] sm:$0xff]
    %v65 = vld [vmem:[%s2 + $0x98] sm:$0xff]
    %v66 = vld [vmem:[%s2 + $0xa0] sm:$0xff]
    %v67 = vld [vmem:[%s2 + $0xa8] sm:$0xff]
    %v68 = vld [vmem:[%s2 + $0xb0] sm:$0xff]
    %v69 = vld [vmem:[%s2 + $0xb8] sm:$0xff]
    %v70 = vld [vmem:[%s2 + $0xc0] sm:$0xff]
    %v71 = vld [vmem:[%s2 + $0xc8] sm:$0xff]
    %v72 = vld [vmem:[%s2 + $0xd0] sm:$0xff]
    %v73 = vld [vmem:[%s2 + $0xd8] sm:$0xff]
    %v74 = vld [vmem:[%s2 + $0xe0] sm:$0xff]
    %v75 = vld [vmem:[%s2 + $0xe8] sm:$0xff]
    %v76 = vld [vmem:[%s2 + $0xf0] sm:$0xff]
    %v77 = vld [vmem:[%s2 + $0xf8] sm:$0xff]
    %v78 = vld [vmem:[%s4] sm:$0xff]
    %v79 = vld [vmem:[%s4 + $0x8] sm:$0xff]
    %v80 = vld [vmem:[%s4 + $0x10] sm:$0xff]
    %v81 = vld [vmem:[%s4 + $0x18] sm:$0xff]
    %v82 = vld [vmem:[%s4 + $0x20] sm:$0xff]
    %v83 = vld [vmem:[%s4 + $0x28] sm:$0xff]
    %v84 = vld [vmem:[%s4 + $0x30] sm:$0xff]
    %v85 = vld [vmem:[%s4 + $0x38] sm:$0xff]
    %v86 = vld [vmem:[%s4 + $0x40] sm:$0xff]
    %v87 = vld [vmem:[%s4 + $0x48] sm:$0xff]
    %v88 = vld [vmem:[%s4 + $0x50] sm:$0xff]
    %v89 = vld [vmem:[%s4 + $0x58] sm:$0xff]
    %v90 = vld [vmem:[%s4 + $0x60] sm:$0xff]
    %v91 = vld [vmem:[%s4 + $0x68] sm:$0xff]
    %v92 = vld [vmem:[%s4 + $0x70] sm:$0xff]
    %v93 = vld [vmem:[%s4 + $0x78] sm:$0xff]
    %v94 = vld [vmem:[%s4 + $0x80] sm:$0xff]
    %v95 = vld [vmem:[%s4 + $0x88] sm:$0xff]
    %v96 = vld [vmem:[%s4 + $0x90] sm:$0xff]
    %v97 = vld [vmem:[%s4 + $0x98] sm:$0xff]
    %v98 = vld [vmem:[%s4 + $0xa0] sm:$0xff]
    %v99 = vld [vmem:[%s4 + $0xa8] sm:$0xff]
    %v100 = vld [vmem:[%s4 + $0xb0] sm:$0xff]
    %v101 = vld [vmem:[%s4 + $0xb8] sm:$0xff]
    %v102 = vld [vmem:[%s4 + $0xc0] sm:$0xff]
    %v103 = vld [vmem:[%s4 + $0xc8] sm:$0xff]
    %v104 = vld [vmem:[%s4 + $0xd0] sm:$0xff]
    %v105 = vld [vmem:[%s4 + $0xd8] sm:$0xff]
    %v106 = vld [vmem:[%s4 + $0xe0] sm:$0xff]
    %v107 = vld [vmem:[%s4 + $0xe8] sm:$0xff]
    %v108 = vld [vmem:[%s4 + $0xf0] sm:$0xff]
    %v109 = vld [vmem:[%s4 + $0xf8] sm:$0xff]
    %v110 = vld [vmem:[%s5] sm:$0xff]
    %v111 = vld [vmem:[%s5 + $0x8] sm:$0xff]
    %v112 = vld [vmem:[%s5 + $0x10] sm:$0xff]
    %v113 = vld [vmem:[%s5 + $0x18] sm:$0xff]
    %v114 = vld [vmem:[%s5 + $0x20] sm:$0xff]
    %v115 = vld [vmem:[%s5 + $0x28] sm:$0xff]
    %v116 = vld [vmem:[%s5 + $0x30] sm:$0xff]
    %v117 = vld [vmem:[%s5 + $0x38] sm:$0xff]
    %v118 = vld [vmem:[%s5 + $0x40] sm:$0xff]
    %v119 = vld [vmem:[%s5 + $0x48] sm:$0xff]
    %v120 = vld [vmem:[%s5 + $0x50] sm:$0xff]
    %v121 = vld [vmem:[%s5 + $0x58] sm:$0xff]
    %v122 = vld [vmem:[%s5 + $0x60] sm:$0xff]
    %v123 = vld [vmem:[%s5 + $0x68] sm:$0xff]
    %v124 = vld [vmem:[%s5 + $0x70] sm:$0xff]
    %v125 = vld [vmem:[%s5 + $0x78] sm:$0xff]
    %v126 = vld [vmem:[%s5 + $0x80] sm:$0xff]
    %v127 = vld [vmem:[%s5 + $0x88] sm:$0xff]
    %v128 = vld [vmem:[%s5 + $0x90] sm:$0xff]
    %v129 = vld [vmem:[%s5 + $0x98] sm:$0xff]
    %v130 = vld [vmem:[%s5 + $0xa0] sm:$0xff]
    %v131 = vld [vmem:[%s5 + $0xa8] sm:$0xff]
    %v132 = vld [vmem:[%s5 + $0xb0] sm:$0xff]
    %v133 = vld [vmem:[%s5 + $0xb8] sm:$0xff]
    %v134 = vld [vmem:[%s5 + $0xc0] sm:$0xff]
    %v135 = vld [vmem:[%s5 + $0xc8] sm:$0xff]
    %v136 = vld [vmem:[%s5 + $0xd0] sm:$0xff]
    %v137 = vld [vmem:[%s5 + $0xd8] sm:$0xff]
    %v138 = vld [vmem:[%s5 + $0xe0] sm:$0xff]
    %v139 = vld [vmem:[%s5 + $0xe8] sm:$0xff]
    %v140 = vld [vmem:[%s5 + $0xf0] sm:$0xff]
    %v141 = vld [vmem:[%s5 + $0xf8] sm:$0xff]
    %v142 = vld [vmem:[%s6] sm:$0xf]
    %v143 = vld [vmem:[%s0] sm:$0xf]
    %v144 = vld [vmem:[%s1] sm:$0xff]
    %v145 = vld [vmem:[%s1 + $0x8] sm:$0xff]
    %v146 = vld [vmem:[%s1 + $0x10] sm:$0xff]
    %v147 = vld [vmem:[%s1 + $0x18] sm:$0xff]
    %v148 = vld [vmem:[%s1 + $0x20] sm:$0xff]
    %v149 = vld [vmem:[%s1 + $0x28] sm:$0xff]
    %v150 = vld [vmem:[%s1 + $0x30] sm:$0xff]
    %v151 = vld [vmem:[%s1 + $0x38] sm:$0xff]
    %v152 = vld [vmem:[%s1 + $0x40] sm:$0xff]
    %v153 = vld [vmem:[%s1 + $0x48] sm:$0xff]
    %v154 = vld [vmem:[%s1 + $0x50] sm:$0xff]
    %v155 = vld [vmem:[%s1 + $0x58] sm:$0xff]
    %v156 = vld [vmem:[%s1 + $0x60] sm:$0xff]
    %v157 = vld [vmem:[%s1 + $0x68] sm:$0xff]
    %v158 = vld [vmem:[%s1 + $0x70] sm:$0xff]
    %v159 = vld [vmem:[%s1 + $0x78] sm:$0xff]
    %v160 = vld [vmem:[%s1 + $0x80] sm:$0xff]
    %v161 = vld [vmem:[%s1 + $0x88] sm:$0xff]
    %v162 = vld [vmem:[%s1 + $0x90] sm:$0xff]
    %v163 = vld [vmem:[%s1 + $0x98] sm:$0xff]
    %v164 = vld [vmem:[%s1 + $0xa0] sm:$0xff]
    %v165 = vld [vmem:[%s1 + $0xa8] sm:$0xff]
    %v166 = vld [vmem:[%s1 + $0xb0] sm:$0xff]
    %v167 = vld [vmem:[%s1 + $0xb8] sm:$0xff]
    %v168 = vld [vmem:[%s1 + $0xc0] sm:$0xff]
    %v169 = vld [vmem:[%s1 + $0xc8] sm:$0xff]
    %v170 = vld [vmem:[%s1 + $0xd0] sm:$0xff]
    %v171 = vld [vmem:[%s1 + $0xd8] sm:$0xff]
    %v172 = vld [vmem:[%s1 + $0xe0] sm:$0xff]
    %v173 = vld [vmem:[%s1 + $0xe8] sm:$0xff]
    %v174 = vld [vmem:[%s1 + $0xf0] sm:$0xff]
    %v175 = vld [vmem:[%s1 + $0xf8] sm:$0xff]
    %v176 = vld [vmem:[%s3] sm:$0xf]
    %v178 = vperm.slane %v176, 0
    %v179 = vperm.slane %v176, 1
    %v180 = vperm.slane %v176, 2
    %v181 = vperm.slane %v176, 3
    %v218 = vunpack.c.l.b16 %v144
    %v219 = vunpack.c.h.b16 %v144
    %v220 = vunpack.c.l.b16 %v145
    %v221 = vunpack.c.h.b16 %v145
    %v222 = vunpack.c.l.b16 %v146
    %v223 = vunpack.c.h.b16 %v146
    %v224 = vunpack.c.l.b16 %v147
    %v225 = vunpack.c.h.b16 %v147
    %v226 = vunpack.c.l.b16 %v148
    %v227 = vunpack.c.h.b16 %v148
    %v228 = vunpack.c.l.b16 %v149
    %v229 = vunpack.c.h.b16 %v149
    %v230 = vunpack.c.l.b16 %v150
    %v231 = vunpack.c.h.b16 %v150
    %v232 = vunpack.c.l.b16 %v151
    %v233 = vunpack.c.h.b16 %v151
    %v234 = vunpack.c.l.b16 %v152
    %v235 = vunpack.c.h.b16 %v152
    %v236 = vunpack.c.l.b16 %v153
    %v237 = vunpack.c.h.b16 %v153
    %v238 = vunpack.c.l.b16 %v154
    %v239 = vunpack.c.h.b16 %v154
    %v240 = vunpack.c.l.b16 %v155
    %v241 = vunpack.c.h.b16 %v155
    %v242 = vunpack.c.l.b16 %v156
    %v243 = vunpack.c.h.b16 %v156
    %v244 = vunpack.c.l.b16 %v157
    %v245 = vunpack.c.h.b16 %v157
    %v246 = vunpack.c.l.b16 %v158
    %v247 = vunpack.c.h.b16 %v158
    %v248 = vunpack.c.l.b16 %v159
    %v249 = vunpack.c.h.b16 %v159
    %v250 = vunpack.c.l.b16 %v160
    %v251 = vunpack.c.h.b16 %v160
    %v252 = vunpack.c.l.b16 %v161
    %v253 = vunpack.c.h.b16 %v161
    %v254 = vunpack.c.l.b16 %v162
    %v255 = vunpack.c.h.b16 %v162
    %v256 = vunpack.c.l.b16 %v163
    %v257 = vunpack.c.h.b16 %v163
    %v258 = vunpack.c.l.b16 %v164
    %v259 = vunpack.c.h.b16 %v164
    %v260 = vunpack.c.l.b16 %v165
    %v261 = vunpack.c.h.b16 %v165
    %v262 = vunpack.c.l.b16 %v166
    %v263 = vunpack.c.h.b16 %v166
    %v264 = vunpack.c.l.b16 %v167
    %v265 = vunpack.c.h.b16 %v167
    %v266 = vunpack.c.l.b16 %v168
    %v267 = vunpack.c.h.b16 %v168
    %v268 = vunpack.c.l.b16 %v169
    %v269 = vunpack.c.h.b16 %v169
    %v270 = vunpack.c.l.b16 %v170
    %v271 = vunpack.c.h.b16 %v170
    %v272 = vunpack.c.l.b16 %v171
    %v273 = vunpack.c.h.b16 %v171
    %v274 = vunpack.c.l.b16 %v172
    %v275 = vunpack.c.h.b16 %v172
    %v276 = vunpack.c.l.b16 %v173
    %v277 = vunpack.c.h.b16 %v173
    %v278 = vunpack.c.l.b16 %v174
    %v279 = vunpack.c.h.b16 %v174
    %v280 = vunpack.c.l.b16 %v175
    %v281 = vunpack.c.h.b16 %v175
    %v282 = vpack.c.b16 %v222, %v218
    %v283 = vpack.c.b16 %v223, %v219
    %v284 = vpack.c.b16 %v224, %v220
    %v285 = vpack.c.b16 %v225, %v221
    %v286 = vpack.c.b16 %v230, %v226
    %v287 = vpack.c.b16 %v231, %v227
    %v288 = vpack.c.b16 %v232, %v228
    %v289 = vpack.c.b16 %v233, %v229
    %v290 = vpack.c.b16 %v238, %v234
    %v291 = vpack.c.b16 %v239, %v235
    %v292 = vpack.c.b16 %v240, %v236
    %v293 = vpack.c.b16 %v241, %v237
    %v294 = vpack.c.b16 %v246, %v242
    %v295 = vpack.c.b16 %v247, %v243
    %v296 = vpack.c.b16 %v248, %v244
    %v297 = vpack.c.b16 %v249, %v245
    %v298 = vpack.c.b16 %v254, %v250
    %v299 = vpack.c.b16 %v255, %v251
    %v300 = vpack.c.b16 %v256, %v252
    %v301 = vpack.c.b16 %v257, %v253
    %v302 = vpack.c.b16 %v262, %v258
    %v303 = vpack.c.b16 %v263, %v259
    %v304 = vpack.c.b16 %v264, %v260
    %v305 = vpack.c.b16 %v265, %v261
    %v306 = vpack.c.b16 %v270, %v266
    %v307 = vpack.c.b16 %v271, %v267
    %v308 = vpack.c.b16 %v272, %v268
    %v309 = vpack.c.b16 %v273, %v269
    %v310 = vpack.c.b16 %v278, %v274
    %v311 = vpack.c.b16 %v279, %v275
    %v312 = vpack.c.b16 %v280, %v276
    %v313 = vpack.c.b16 %v281, %v277
    %346 = vmatpush.bf16.msra.mxu0 %v310
    %347 = vmatpush.bf16.msra.mxu0 %v306
    %348 = vmatpush.bf16.msra.mxu0 %v302
    %349 = vmatpush.bf16.msra.mxu0 %v298
    %350 = vmatpush.bf16.msra.mxu0 %v294
    %351 = vmatpush.bf16.msra.mxu0 %v290
    %352 = vmatpush.bf16.msra.mxu0 %v286
    %353 = vmatpush.bf16.msra.mxu0 %v282
    %354 = vmatmul.bf16.gmra.mxu0 %v143
    %v355 = vpop.f32.mrf.mxu0
    %v356 = vadd.f32 %v178, %v355
    %v357 = vpop.f32.mrf.mxu0
    %358 = vdwg.mxu0
    %359 = vmatpush.bf16.msra.mxu0 %v311
    %360 = vmatpush.bf16.msra.mxu0 %v307
    %361 = vmatpush.bf16.msra.mxu0 %v303
    %362 = vmatpush.bf16.msra.mxu0 %v299
    %363 = vmatpush.bf16.msra.mxu0 %v295
    %364 = vmatpush.bf16.msra.mxu0 %v291
    %365 = vmatpush.bf16.msra.mxu0 %v287
    %366 = vmatpush.bf16.msra.mxu0 %v283
    %367 = vmatmul.bf16.gmra.mxu0 %v143
    %v368 = vpop.f32.mrf.mxu0
    %v369 = vadd.f32 %v179, %v368
    %v370 = vpop.f32.mrf.mxu0
    %371 = vdwg.mxu0
    %372 = vmatpush.bf16.msra.mxu0 %v312
    %373 = vmatpush.bf16.msra.mxu0 %v308
    %374 = vmatpush.bf16.msra.mxu0 %v304
    %375 = vmatpush.bf16.msra.mxu0 %v300
    %376 = vmatpush.bf16.msra.mxu0 %v296
    %377 = vmatpush.bf16.msra.mxu0 %v292
    %378 = vmatpush.bf16.msra.mxu0 %v288
    %379 = vmatpush.bf16.msra.mxu0 %v284
    %380 = vmatmul.bf16.gmra.mxu0 %v143
    %v381 = vpop.f32.mrf.mxu0
    %v382 = vadd.f32 %v180, %v381
    %v383 = vpop.f32.mrf.mxu0
    %384 = vdwg.mxu0
    %385 = vmatpush.bf16.msra.mxu0 %v313
    %386 = vmatpush.bf16.msra.mxu0 %v309
    %387 = vmatpush.bf16.msra.mxu0 %v305
    %388 = vmatpush.bf16.msra.mxu0 %v301
    %389 = vmatpush.bf16.msra.mxu0 %v297
    %390 = vmatpush.bf16.msra.mxu0 %v293
    %391 = vmatpush.bf16.msra.mxu0 %v289
    %392 = vmatpush.bf16.msra.mxu0 %v285
    %393 = vmatmul.bf16.gmra.mxu0 %v143
    %v394 = vpop.f32.mrf.mxu0
    %v395 = vadd.f32 %v181, %v394
    %v396 = vpop.f32.mrf.mxu0
    %397 = vdwg.mxu0
    %v430 = vunpack.c.l.b16 %v46
    %v431 = vunpack.c.h.b16 %v46
    %v432 = vunpack.c.l.b16 %v47
    %v433 = vunpack.c.h.b16 %v47
    %v434 = vunpack.c.l.b16 %v48
    %v435 = vunpack.c.h.b16 %v48
    %v436 = vunpack.c.l.b16 %v49
    %v437 = vunpack.c.h.b16 %v49
    %v438 = vunpack.c.l.b16 %v50
    %v439 = vunpack.c.h.b16 %v50
    %v440 = vunpack.c.l.b16 %v51
    %v441 = vunpack.c.h.b16 %v51
    %v442 = vunpack.c.l.b16 %v52
    %v443 = vunpack.c.h.b16 %v52
    %v444 = vunpack.c.l.b16 %v53
    %v445 = vunpack.c.h.b16 %v53
    %v446 = vunpack.c.l.b16 %v54
    %v447 = vunpack.c.h.b16 %v54
    %v448 = vunpack.c.l.b16 %v55
    %v449 = vunpack.c.h.b16 %v55
    %v450 = vunpack.c.l.b16 %v56
    %v451 = vunpack.c.h.b16 %v56
    %v452 = vunpack.c.l.b16 %v57
    %v453 = vunpack.c.h.b16 %v57
    %v454 = vunpack.c.l.b16 %v58
    %v455 = vunpack.c.h.b16 %v58
    %v456 = vunpack.c.l.b16 %v59
    %v457 = vunpack.c.h.b16 %v59
    %v458 = vunpack.c.l.b16 %v60
    %v459 = vunpack.c.h.b16 %v60
    %v460 = vunpack.c.l.b16 %v61
    %v461 = vunpack.c.h.b16 %v61
    %v462 = vunpack.c.l.b16 %v62
    %v463 = vunpack.c.h.b16 %v62
    %v464 = vunpack.c.l.b16 %v63
    %v465 = vunpack.c.h.b16 %v63
    %v466 = vunpack.c.l.b16 %v64
    %v467 = vunpack.c.h.b16 %v64
    %v468 = vunpack.c.l.b16 %v65
    %v469 = vunpack.c.h.b16 %v65
    %v470 = vunpack.c.l.b16 %v66
    %v471 = vunpack.c.h.b16 %v66
    %v472 = vunpack.c.l.b16 %v67
    %v473 = vunpack.c.h.b16 %v67
    %v474 = vunpack.c.l.b16 %v68
    %v475 = vunpack.c.h.b16 %v68
    %v476 = vunpack.c.l.b16 %v69
    %v477 = vunpack.c.h.b16 %v69
    %v478 = vunpack.c.l.b16 %v70
    %v479 = vunpack.c.h.b16 %v70
    %v480 = vunpack.c.l.b16 %v71
    %v481 = vunpack.c.h.b16 %v71
    %v482 = vunpack.c.l.b16 %v72
    %v483 = vunpack.c.h.b16 %v72
    %v484 = vunpack.c.l.b16 %v73
    %v485 = vunpack.c.h.b16 %v73
    %v486 = vunpack.c.l.b16 %v74
    %v487 = vunpack.c.h.b16 %v74
    %v488 = vunpack.c.l.b16 %v75
    %v489 = vunpack.c.h.b16 %v75
    %v490 = vunpack.c.l.b16 %v76
    %v491 = vunpack.c.h.b16 %v76
    %v492 = vunpack.c.l.b16 %v77
    %v493 = vunpack.c.h.b16 %v77
    %v494 = vpack.c.b16 %v434, %v430
    %v495 = vpack.c.b16 %v435, %v431
    %v496 = vpack.c.b16 %v436, %v432
    %v497 = vpack.c.b16 %v437, %v433
    %v498 = vpack.c.b16 %v442, %v438
    %v499 = vpack.c.b16 %v443, %v439
    %v500 = vpack.c.b16 %v444, %v440
    %v501 = vpack.c.b16 %v445, %v441
    %v502 = vpack.c.b16 %v450, %v446
    %v503 = vpack.c.b16 %v451, %v447
    %v504 = vpack.c.b16 %v452, %v448
    %v505 = vpack.c.b16 %v453, %v449
    %v506 = vpack.c.b16 %v458, %v454
    %v507 = vpack.c.b16 %v459, %v455
    %v508 = vpack.c.b16 %v460, %v456
    %v509 = vpack.c.b16 %v461, %v457
    %v510 = vpack.c.b16 %v466, %v462
    %v511 = vpack.c.b16 %v467, %v463
    %v512 = vpack.c.b16 %v468, %v464
    %v513 = vpack.c.b16 %v469, %v465
    %v514 = vpack.c.b16 %v474, %v470
    %v515 = vpack.c.b16 %v475, %v471
    %v516 = vpack.c.b16 %v476, %v472
    %v517 = vpack.c.b16 %v477, %v473
    %v518 = vpack.c.b16 %v482, %v478
    %v519 = vpack.c.b16 %v483, %v479
    %v520 = vpack.c.b16 %v484, %v480
    %v521 = vpack.c.b16 %v485, %v481
    %v522 = vpack.c.b16 %v490, %v486
    %v523 = vpack.c.b16 %v491, %v487
    %v524 = vpack.c.b16 %v492, %v488
    %v525 = vpack.c.b16 %v493, %v489
    %558 = vmatpush.bf16.msra.mxu0 %v522
    %559 = vmatpush.bf16.msra.mxu0 %v518
    %560 = vmatpush.bf16.msra.mxu0 %v514
    %561 = vmatpush.bf16.msra.mxu0 %v510
    %562 = vmatpush.bf16.msra.mxu0 %v506
    %563 = vmatpush.bf16.msra.mxu0 %v502
    %564 = vmatpush.bf16.msra.mxu0 %v498
    %565 = vmatpush.bf16.msra.mxu0 %v494
    %566 = vmatmul.bf16.gmra.mxu0 0
    %v567 = vpop.f32.mrf.mxu0
    %v568 = vadd.f32 0.0, %v567
    %v569 = vpop.f32.mrf.mxu0
    %570 = vdwg.mxu0
    %571 = vmatpush.bf16.msra.mxu0 %v523
    %572 = vmatpush.bf16.msra.mxu0 %v519
    %573 = vmatpush.bf16.msra.mxu0 %v515
    %574 = vmatpush.bf16.msra.mxu0 %v511
    %575 = vmatpush.bf16.msra.mxu0 %v507
    %576 = vmatpush.bf16.msra.mxu0 %v503
    %577 = vmatpush.bf16.msra.mxu0 %v499
    %578 = vmatpush.bf16.msra.mxu0 %v495
    %579 = vmatmul.bf16.gmra.mxu0 0
    %v580 = vpop.f32.mrf.mxu0
    %v581 = vadd.f32 0.0, %v580
    %v582 = vpop.f32.mrf.mxu0
    %583 = vdwg.mxu0
    %584 = vmatpush.bf16.msra.mxu0 %v524
    %585 = vmatpush.bf16.msra.mxu0 %v520
    %586 = vmatpush.bf16.msra.mxu0 %v516
    %587 = vmatpush.bf16.msra.mxu0 %v512
    %588 = vmatpush.bf16.msra.mxu0 %v508
    %589 = vmatpush.bf16.msra.mxu0 %v504
    %590 = vmatpush.bf16.msra.mxu0 %v500
    %591 = vmatpush.bf16.msra.mxu0 %v496
    %592 = vmatmul.bf16.gmra.mxu0 0
    %v593 = vpop.f32.mrf.mxu0
    %v594 = vadd.f32 0.0, %v593
    %v595 = vpop.f32.mrf.mxu0
    %596 = vdwg.mxu0
    %597 = vmatpush.bf16.msra.mxu0 %v525
    %598 = vmatpush.bf16.msra.mxu0 %v521
    %599 = vmatpush.bf16.msra.mxu0 %v517
    %600 = vmatpush.bf16.msra.mxu0 %v513
    %601 = vmatpush.bf16.msra.mxu0 %v509
    %602 = vmatpush.bf16.msra.mxu0 %v505
    %603 = vmatpush.bf16.msra.mxu0 %v501
    %604 = vmatpush.bf16.msra.mxu0 %v497
    %605 = vmatmul.bf16.gmra.mxu0 0
    %v606 = vpop.f32.mrf.mxu0
    %v607 = vadd.f32 0.0, %v606
    %v608 = vpop.f32.mrf.mxu0
    %609 = vdwg.mxu0
    %v610 = vadd.f32 %v356, %v568
    %v611 = vadd.f32 %v369, %v581
    %v612 = vadd.f32 %v382, %v594
    %v613 = vadd.f32 %v395, %v607
    %v614 = vxor.u32 %v610, 2147483648
    %v615 = vmul.f32 %v614, 1.442695
    %v616 = vpow.pop %v615
    %v617 = vadd.f32 %v616, 1.0
    %v618 = vrcp.pop %v617
    %v619 = vmul.f32 %v617, %v618
    %v620 = vsub.f32 1.0, %v619
    %v621 = vmul.f32 %v618, %v620
    %v622 = vadd.f32 %v618, %v621
    %vm623 = vweird.f32 %v617
    %vm624 = vweird.f32 %v618
    %vm625 = vmor %vm623, %vm624
    %v626 = vsel %vm625, %v618, %v622
    %v627 = vand.u32 2147483647, %v617
    %vm628 = vcmp.eq.f32.partialorder %v627, 8.507059e+37
    %v629 = vand.u32 %v617, 2147483648
    %v630 = vor.u32 1.1754944e-38, %v629
    %v631 = vsel %vm628, %v630, %v626
    %v632 = vmul.f32 1.0, %v631
    %v633 = vxor.u32 %v611, 2147483648
    %v634 = vmul.f32 %v633, 1.442695
    %v635 = vpow.pop %v634
    %v636 = vadd.f32 %v635, 1.0
    %v637 = vrcp.pop %v636
    %v638 = vmul.f32 %v636, %v637
    %v639 = vsub.f32 1.0, %v638
    %v640 = vmul.f32 %v637, %v639
    %v641 = vadd.f32 %v637, %v640
    %vm642 = vweird.f32 %v636
    %vm643 = vweird.f32 %v637
    %vm644 = vmor %vm642, %vm643
    %v645 = vsel %vm644, %v637, %v641
    %v646 = vand.u32 2147483647, %v636
    %vm647 = vcmp.eq.f32.partialorder %v646, 8.507059e+37
    %v648 = vand.u32 %v636, 2147483648
    %v649 = vor.u32 1.1754944e-38, %v648
    %v650 = vsel %vm647, %v649, %v645
    %v651 = vmul.f32 1.0, %v650
    %v652 = vtanh.pop %v612
    %v653 = vxor.u32 %v613, 2147483648
    %v654 = vmul.f32 %v653, 1.442695
    %v655 = vpow.pop %v654
    %v656 = vadd.f32 %v655, 1.0
    %v657 = vrcp.pop %v656
    %v658 = vmul.f32 %v656, %v657
    %v659 = vsub.f32 1.0, %v658
    %v660 = vmul.f32 %v657, %v659
    %v661 = vadd.f32 %v657, %v660
    %vm662 = vweird.f32 %v656
    %vm663 = vweird.f32 %v657
    %vm664 = vmor %vm662, %vm663
    %v665 = vsel %vm664, %v657, %v661
    %v666 = vand.u32 2147483647, %v656
    %vm667 = vcmp.eq.f32.partialorder %v666, 8.507059e+37
    %v668 = vand.u32 %v656, 2147483648
    %v669 = vor.u32 1.1754944e-38, %v668
    %v670 = vsel %vm667, %v669, %v665
    %v671 = vmul.f32 1.0, %v670
    %v672 = vmul.f32 %v651, 0.0
    %v673 = vmul.f32 %v632, %v652
    %v674 = vadd.f32 %v672, %v673
    %v675 = vtanh.pop %v674
    %v676 = vmul.f32 %v671, %v675
    %v677 = vpack.c.bf16 %v676, %v676
    %v710 = vunpack.c.l.b16 %v78
    %v711 = vunpack.c.h.b16 %v78
    %v712 = vunpack.c.l.b16 %v79
    %v713 = vunpack.c.h.b16 %v79
    %v714 = vunpack.c.l.b16 %v80
    %v715 = vunpack.c.h.b16 %v80
    %v716 = vunpack.c.l.b16 %v81
    %v717 = vunpack.c.h.b16 %v81
    %v718 = vunpack.c.l.b16 %v82
    %v719 = vunpack.c.h.b16 %v82
    %v720 = vunpack.c.l.b16 %v83
    %v721 = vunpack.c.h.b16 %v83
    %v722 = vunpack.c.l.b16 %v84
    %v723 = vunpack.c.h.b16 %v84
    %v724 = vunpack.c.l.b16 %v85
    %v725 = vunpack.c.h.b16 %v85
    %v726 = vunpack.c.l.b16 %v86
    %v727 = vunpack.c.h.b16 %v86
    %v728 = vunpack.c.l.b16 %v87
    %v729 = vunpack.c.h.b16 %v87
    %v730 = vunpack.c.l.b16 %v88
    %v731 = vunpack.c.h.b16 %v88
    %v732 = vunpack.c.l.b16 %v89
    %v733 = vunpack.c.h.b16 %v89
    %v734 = vunpack.c.l.b16 %v90
    %v735 = vunpack.c.h.b16 %v90
    %v736 = vunpack.c.l.b16 %v91
    %v737 = vunpack.c.h.b16 %v91
    %v738 = vunpack.c.l.b16 %v92
    %v739 = vunpack.c.h.b16 %v92
    %v740 = vunpack.c.l.b16 %v93
    %v741 = vunpack.c.h.b16 %v93
    %v742 = vunpack.c.l.b16 %v94
    %v743 = vunpack.c.h.b16 %v94
    %v744 = vunpack.c.l.b16 %v95
    %v745 = vunpack.c.h.b16 %v95
    %v746 = vunpack.c.l.b16 %v96
    %v747 = vunpack.c.h.b16 %v96
    %v748 = vunpack.c.l.b16 %v97
    %v749 = vunpack.c.h.b16 %v97
    %v750 = vunpack.c.l.b16 %v98
    %v751 = vunpack.c.h.b16 %v98
    %v752 = vunpack.c.l.b16 %v99
    %v753 = vunpack.c.h.b16 %v99
    %v754 = vunpack.c.l.b16 %v100
    %v755 = vunpack.c.h.b16 %v100
    %v756 = vunpack.c.l.b16 %v101
    %v757 = vunpack.c.h.b16 %v101
    %v758 = vunpack.c.l.b16 %v102
    %v759 = vunpack.c.h.b16 %v102
    %v760 = vunpack.c.l.b16 %v103
    %v761 = vunpack.c.h.b16 %v103
    %v762 = vunpack.c.l.b16 %v104
    %v763 = vunpack.c.h.b16 %v104
    %v764 = vunpack.c.l.b16 %v105
    %v765 = vunpack.c.h.b16 %v105
    %v766 = vunpack.c.l.b16 %v106
    %v767 = vunpack.c.h.b16 %v106
    %v768 = vunpack.c.l.b16 %v107
    %v769 = vunpack.c.h.b16 %v107
    %v770 = vunpack.c.l.b16 %v108
    %v771 = vunpack.c.h.b16 %v108
    %v772 = vunpack.c.l.b16 %v109
    %v773 = vunpack.c.h.b16 %v109
    %v774 = vpack.c.b16 %v714, %v710
    %v775 = vpack.c.b16 %v715, %v711
    %v776 = vpack.c.b16 %v716, %v712
    %v777 = vpack.c.b16 %v717, %v713
    %v778 = vpack.c.b16 %v722, %v718
    %v779 = vpack.c.b16 %v723, %v719
    %v780 = vpack.c.b16 %v724, %v720
    %v781 = vpack.c.b16 %v725, %v721
    %v782 = vpack.c.b16 %v730, %v726
    %v783 = vpack.c.b16 %v731, %v727
    %v784 = vpack.c.b16 %v732, %v728
    %v785 = vpack.c.b16 %v733, %v729
    %v786 = vpack.c.b16 %v738, %v734
    %v787 = vpack.c.b16 %v739, %v735
    %v788 = vpack.c.b16 %v740, %v736
    %v789 = vpack.c.b16 %v741, %v737
    %v790 = vpack.c.b16 %v746, %v742
    %v791 = vpack.c.b16 %v747, %v743
    %v792 = vpack.c.b16 %v748, %v744
    %v793 = vpack.c.b16 %v749, %v745
    %v794 = vpack.c.b16 %v754, %v750
    %v795 = vpack.c.b16 %v755, %v751
    %v796 = vpack.c.b16 %v756, %v752
    %v797 = vpack.c.b16 %v757, %v753
    %v798 = vpack.c.b16 %v762, %v758
    %v799 = vpack.c.b16 %v763, %v759
    %v800 = vpack.c.b16 %v764, %v760
    %v801 = vpack.c.b16 %v765, %v761
    %v802 = vpack.c.b16 %v770, %v766
    %v803 = vpack.c.b16 %v771, %v767
    %v804 = vpack.c.b16 %v772, %v768
    %v805 = vpack.c.b16 %v773, %v769
    %838 = vmatpush.bf16.msra.mxu0 %v802
    %839 = vmatpush.bf16.msra.mxu0 %v798
    %840 = vmatpush.bf16.msra.mxu0 %v794
    %841 = vmatpush.bf16.msra.mxu0 %v790
    %842 = vmatpush.bf16.msra.mxu0 %v786
    %843 = vmatpush.bf16.msra.mxu0 %v782
    %844 = vmatpush.bf16.msra.mxu0 %v778
    %845 = vmatpush.bf16.msra.mxu0 %v774
    %846 = vmatmul.bf16.gmra.mxu0 %v677
    %v847 = vpop.f32.mrf.mxu0
    %v848 = vadd.f32 0.0, %v847
    %v849 = vpop.f32.mrf.mxu0
    %850 = vdwg.mxu0
    %851 = vmatpush.bf16.msra.mxu0 %v803
    %852 = vmatpush.bf16.msra.mxu0 %v799
    %853 = vmatpush.bf16.msra.mxu0 %v795
    %854 = vmatpush.bf16.msra.mxu0 %v791
    %855 = vmatpush.bf16.msra.mxu0 %v787
    %856 = vmatpush.bf16.msra.mxu0 %v783
    %857 = vmatpush.bf16.msra.mxu0 %v779
    %858 = vmatpush.bf16.msra.mxu0 %v775
    %859 = vmatmul.bf16.gmra.mxu0 %v677
    %v860 = vpop.f32.mrf.mxu0
    %v861 = vadd.f32 0.0, %v860
    %v862 = vpop.f32.mrf.mxu0
    %863 = vdwg.mxu0
    %864 = vmatpush.bf16.msra.mxu0 %v804
    %865 = vmatpush.bf16.msra.mxu0 %v800
    %866 = vmatpush.bf16.msra.mxu0 %v796
    %867 = vmatpush.bf16.msra.mxu0 %v792
    %868 = vmatpush.bf16.msra.mxu0 %v788
    %869 = vmatpush.bf16.msra.mxu0 %v784
    %870 = vmatpush.bf16.msra.mxu0 %v780
    %871 = vmatpush.bf16.msra.mxu0 %v776
    %872 = vmatmul.bf16.gmra.mxu0 %v677
    %v873 = vpop.f32.mrf.mxu0
    %v874 = vadd.f32 0.0, %v873
    %v875 = vpop.f32.mrf.mxu0
    %876 = vdwg.mxu0
    %877 = vmatpush.bf16.msra.mxu0 %v805
    %878 = vmatpush.bf16.msra.mxu0 %v801
    %879 = vmatpush.bf16.msra.mxu0 %v797
    %880 = vmatpush.bf16.msra.mxu0 %v793
    %881 = vmatpush.bf16.msra.mxu0 %v789
    %882 = vmatpush.bf16.msra.mxu0 %v785
    %883 = vmatpush.bf16.msra.mxu0 %v781
    %884 = vmatpush.bf16.msra.mxu0 %v777
    %885 = vmatmul.bf16.gmra.mxu0 %v677
    %v886 = vpop.f32.mrf.mxu0
    %v887 = vadd.f32 0.0, %v886
    %v888 = vpop.f32.mrf.mxu0
    %889 = vdwg.mxu0
    %v891 = vperm.slane %v142, 0
    %v892 = vperm.slane %v142, 1
    %v893 = vperm.slane %v142, 2
    %v894 = vperm.slane %v142, 3
    %v899 = vadd.f32 %v891, %v848
    %v900 = vadd.f32 %v892, %v861
    %v901 = vadd.f32 %v893, %v874
    %v902 = vadd.f32 %v894, %v887
    %v935 = vunpack.c.l.b16 %v110
    %v936 = vunpack.c.h.b16 %v110
    %v937 = vunpack.c.l.b16 %v111
    %v938 = vunpack.c.h.b16 %v111
    %v939 = vunpack.c.l.b16 %v112
    %v940 = vunpack.c.h.b16 %v112
    %v941 = vunpack.c.l.b16 %v113
    %v942 = vunpack.c.h.b16 %v113
    %v943 = vunpack.c.l.b16 %v114
    %v944 = vunpack.c.h.b16 %v114
    %v945 = vunpack.c.l.b16 %v115
    %v946 = vunpack.c.h.b16 %v115
    %v947 = vunpack.c.l.b16 %v116
    %v948 = vunpack.c.h.b16 %v116
    %v949 = vunpack.c.l.b16 %v117
    %v950 = vunpack.c.h.b16 %v117
    %v951 = vunpack.c.l.b16 %v118
    %v952 = vunpack.c.h.b16 %v118
    %v953 = vunpack.c.l.b16 %v119
    %v954 = vunpack.c.h.b16 %v119
    %v955 = vunpack.c.l.b16 %v120
    %v956 = vunpack.c.h.b16 %v120
    %v957 = vunpack.c.l.b16 %v121
    %v958 = vunpack.c.h.b16 %v121
    %v959 = vunpack.c.l.b16 %v122
    %v960 = vunpack.c.h.b16 %v122
    %v961 = vunpack.c.l.b16 %v123
    %v962 = vunpack.c.h.b16 %v123
    %v963 = vunpack.c.l.b16 %v124
    %v964 = vunpack.c.h.b16 %v124
    %v965 = vunpack.c.l.b16 %v125
    %v966 = vunpack.c.h.b16 %v125
    %v967 = vunpack.c.l.b16 %v126
    %v968 = vunpack.c.h.b16 %v126
    %v969 = vunpack.c.l.b16 %v127
    %v970 = vunpack.c.h.b16 %v127
    %v971 = vunpack.c.l.b16 %v128
    %v972 = vunpack.c.h.b16 %v128
    %v973 = vunpack.c.l.b16 %v129
    %v974 = vunpack.c.h.b16 %v129
    %v975 = vunpack.c.l.b16 %v130
    %v976 = vunpack.c.h.b16 %v130
    %v977 = vunpack.c.l.b16 %v131
    %v978 = vunpack.c.h.b16 %v131
    %v979 = vunpack.c.l.b16 %v132
    %v980 = vunpack.c.h.b16 %v132
    %v981 = vunpack.c.l.b16 %v133
    %v982 = vunpack.c.h.b16 %v133
    %v983 = vunpack.c.l.b16 %v134
    %v984 = vunpack.c.h.b16 %v134
    %v985 = vunpack.c.l.b16 %v135
    %v986 = vunpack.c.h.b16 %v135
    %v987 = vunpack.c.l.b16 %v136
    %v988 = vunpack.c.h.b16 %v136
    %v989 = vunpack.c.l.b16 %v137
    %v990 = vunpack.c.h.b16 %v137
    %v991 = vunpack.c.l.b16 %v138
    %v992 = vunpack.c.h.b16 %v138
    %v993 = vunpack.c.l.b16 %v139
    %v994 = vunpack.c.h.b16 %v139
    %v995 = vunpack.c.l.b16 %v140
    %v996 = vunpack.c.h.b16 %v140
    %v997 = vunpack.c.l.b16 %v141
    %v998 = vunpack.c.h.b16 %v141
    %v999 = vpack.c.b16 %v939, %v935
    %v1000 = vpack.c.b16 %v940, %v936
    %v1001 = vpack.c.b16 %v941, %v937
    %v1002 = vpack.c.b16 %v942, %v938
    %v1003 = vpack.c.b16 %v947, %v943
    %v1004 = vpack.c.b16 %v948, %v944
    %v1005 = vpack.c.b16 %v949, %v945
    %v1006 = vpack.c.b16 %v950, %v946
    %v1007 = vpack.c.b16 %v955, %v951
    %v1008 = vpack.c.b16 %v956, %v952
    %v1009 = vpack.c.b16 %v957, %v953
    %v1010 = vpack.c.b16 %v958, %v954
    %v1011 = vpack.c.b16 %v963, %v959
    %v1012 = vpack.c.b16 %v964, %v960
    %v1013 = vpack.c.b16 %v965, %v961
    %v1014 = vpack.c.b16 %v966, %v962
    %v1015 = vpack.c.b16 %v971, %v967
    %v1016 = vpack.c.b16 %v972, %v968
    %v1017 = vpack.c.b16 %v973, %v969
    %v1018 = vpack.c.b16 %v974, %v970
    %v1019 = vpack.c.b16 %v979, %v975
    %v1020 = vpack.c.b16 %v980, %v976
    %v1021 = vpack.c.b16 %v981, %v977
    %v1022 = vpack.c.b16 %v982, %v978
    %v1023 = vpack.c.b16 %v987, %v983
    %v1024 = vpack.c.b16 %v988, %v984
    %v1025 = vpack.c.b16 %v989, %v985
    %v1026 = vpack.c.b16 %v990, %v986
    %v1027 = vpack.c.b16 %v995, %v991
    %v1028 = vpack.c.b16 %v996, %v992
    %v1029 = vpack.c.b16 %v997, %v993
    %v1030 = vpack.c.b16 %v998, %v994
    %1063 = vmatpush.bf16.msra.mxu0 %v1027
    %1064 = vmatpush.bf16.msra.mxu0 %v1023
    %1065 = vmatpush.bf16.msra.mxu0 %v1019
    %1066 = vmatpush.bf16.msra.mxu0 %v1015
    %1067 = vmatpush.bf16.msra.mxu0 %v1011
    %1068 = vmatpush.bf16.msra.mxu0 %v1007
    %1069 = vmatpush.bf16.msra.mxu0 %v1003
    %1070 = vmatpush.bf16.msra.mxu0 %v999
    %1071 = vmatmul.bf16.gmra.mxu0 0
    %v1072 = vpop.f32.mrf.mxu0
    %v1073 = vadd.f32 0.0, %v1072
    %v1074 = vpop.f32.mrf.mxu0
    %1075 = vdwg.mxu0
    %1076 = vmatpush.bf16.msra.mxu0 %v1028
    %1077 = vmatpush.bf16.msra.mxu0 %v1024
    %1078 = vmatpush.bf16.msra.mxu0 %v1020
    %1079 = vmatpush.bf16.msra.mxu0 %v1016
    %1080 = vmatpush.bf16.msra.mxu0 %v1012
    %1081 = vmatpush.bf16.msra.mxu0 %v1008
    %1082 = vmatpush.bf16.msra.mxu0 %v1004
    %1083 = vmatpush.bf16.msra.mxu0 %v1000
    %1084 = vmatmul.bf16.gmra.mxu0 0
    %v1085 = vpop.f32.mrf.mxu0
    %v1086 = vadd.f32 0.0, %v1085
    %v1087 = vpop.f32.mrf.mxu0
    %1088 = vdwg.mxu0
    %1089 = vmatpush.bf16.msra.mxu0 %v1029
    %1090 = vmatpush.bf16.msra.mxu0 %v1025
    %1091 = vmatpush.bf16.msra.mxu0 %v1021
    %1092 = vmatpush.bf16.msra.mxu0 %v1017
    %1093 = vmatpush.bf16.msra.mxu0 %v1013
    %1094 = vmatpush.bf16.msra.mxu0 %v1009
    %1095 = vmatpush.bf16.msra.mxu0 %v1005
    %1096 = vmatpush.bf16.msra.mxu0 %v1001
    %1097 = vmatmul.bf16.gmra.mxu0 0
    %v1098 = vpop.f32.mrf.mxu0
    %v1099 = vadd.f32 0.0, %v1098
    %v1100 = vpop.f32.mrf.mxu0
    %1101 = vdwg.mxu0
    %1102 = vmatpush.bf16.msra.mxu0 %v1030
    %1103 = vmatpush.bf16.msra.mxu0 %v1026
    %1104 = vmatpush.bf16.msra.mxu0 %v1022
    %1105 = vmatpush.bf16.msra.mxu0 %v1018
    %1106 = vmatpush.bf16.msra.mxu0 %v1014
    %1107 = vmatpush.bf16.msra.mxu0 %v1010
    %1108 = vmatpush.bf16.msra.mxu0 %v1006
    %1109 = vmatpush.bf16.msra.mxu0 %v1002
    %1110 = vmatmul.bf16.gmra.mxu0 0
    %v1111 = vpop.f32.mrf.mxu0
    %v1112 = vadd.f32 0.0, %v1111
    %v1113 = vpop.f32.mrf.mxu0
    %1114 = vdwg.mxu0
    %v1115 = vadd.f32 %v899, %v1073
    %v1116 = vadd.f32 %v900, %v1086
    %v1117 = vadd.f32 %v901, %v1099
    %v1118 = vadd.f32 %v902, %v1112
    %v1119 = vxor.u32 %v1115, 2147483648
    %v1120 = vmul.f32 %v1119, 1.442695
    %v1121 = vpow.pop %v1120
    %v1122 = vadd.f32 %v1121, 1.0
    %v1123 = vrcp.pop %v1122
    %v1124 = vmul.f32 %v1122, %v1123
    %v1125 = vsub.f32 1.0, %v1124
    %v1126 = vmul.f32 %v1123, %v1125
    %v1127 = vadd.f32 %v1123, %v1126
    %vm1128 = vweird.f32 %v1122
    %vm1129 = vweird.f32 %v1123
    %vm1130 = vmor %vm1128, %vm1129
    %v1131 = vsel %vm1130, %v1123, %v1127
    %v1132 = vand.u32 2147483647, %v1122
    %vm1133 = vcmp.eq.f32.partialorder %v1132, 8.507059e+37
    %v1134 = vand.u32 %v1122, 2147483648
    %v1135 = vor.u32 1.1754944e-38, %v1134
    %v1136 = vsel %vm1133, %v1135, %v1131
    %v1137 = vmul.f32 1.0, %v1136
    %v1138 = vxor.u32 %v1116, 2147483648
    %v1139 = vmul.f32 %v1138, 1.442695
    %v1140 = vpow.pop %v1139
    %v1141 = vadd.f32 %v1140, 1.0
    %v1142 = vrcp.pop %v1141
    %v1143 = vmul.f32 %v1141, %v1142
    %v1144 = vsub.f32 1.0, %v1143
    %v1145 = vmul.f32 %v1142, %v1144
    %v1146 = vadd.f32 %v1142, %v1145
    %vm1147 = vweird.f32 %v1141
    %vm1148 = vweird.f32 %v1142
    %vm1149 = vmor %vm1147, %vm1148
    %v1150 = vsel %vm1149, %v1142, %v1146
    %v1151 = vand.u32 2147483647, %v1141
    %vm1152 = vcmp.eq.f32.partialorder %v1151, 8.507059e+37
    %v1153 = vand.u32 %v1141, 2147483648
    %v1154 = vor.u32 1.1754944e-38, %v1153
    %v1155 = vsel %vm1152, %v1154, %v1150
    %v1156 = vmul.f32 1.0, %v1155
    %v1157 = vtanh.pop %v1117
    %v1158 = vxor.u32 %v1118, 2147483648
    %v1159 = vmul.f32 %v1158, 1.442695
    %v1160 = vpow.pop %v1159
    %v1161 = vadd.f32 %v1160, 1.0
    %v1162 = vrcp.pop %v1161
    %v1163 = vmul.f32 %v1161, %v1162
    %v1164 = vsub.f32 1.0, %v1163
    %v1165 = vmul.f32 %v1162, %v1164
    %v1166 = vadd.f32 %v1162, %v1165
    %vm1167 = vweird.f32 %v1161
    %vm1168 = vweird.f32 %v1162
    %vm1169 = vmor %vm1167, %vm1168
    %v1170 = vsel %vm1169, %v1162, %v1166
    %v1171 = vand.u32 2147483647, %v1161
    %vm1172 = vcmp.eq.f32.partialorder %v1171, 8.507059e+37
    %v1173 = vand.u32 %v1161, 2147483648
    %v1174 = vor.u32 1.1754944e-38, %v1173
    %v1175 = vsel %vm1172, %v1174, %v1170
    %v1176 = vmul.f32 1.0, %v1175
    %v1177 = vmul.f32 %v1156, 0.0
    %v1178 = vmul.f32 %v1137, %v1157
    %v1179 = vadd.f32 %v1177, %v1178
    %v1180 = vtanh.pop %v1179
    %v1181 = vmul.f32 %v1176, %v1180
    %1182 = vmatpush.bf16.msra.mxu0 %v522
    %1183 = vmatpush.bf16.msra.mxu0 %v518
    %1184 = vmatpush.bf16.msra.mxu0 %v514
    %1185 = vmatpush.bf16.msra.mxu0 %v510
    %1186 = vmatpush.bf16.msra.mxu0 %v506
    %1187 = vmatpush.bf16.msra.mxu0 %v502
    %1188 = vmatpush.bf16.msra.mxu0 %v498
    %1189 = vmatpush.bf16.msra.mxu0 %v494
    %1190 = vmatmul.bf16.gmra.mxu0 %v677
    %v1191 = vpop.f32.mrf.mxu0
    %v1192 = vadd.f32 0.0, %v1191
    %v1193 = vpop.f32.mrf.mxu0
    %1194 = vdwg.mxu0
    %1195 = vmatpush.bf16.msra.mxu0 %v523
    %1196 = vmatpush.bf16.msra.mxu0 %v519
    %1197 = vmatpush.bf16.msra.mxu0 %v515
    %1198 = vmatpush.bf16.msra.mxu0 %v511
    %1199 = vmatpush.bf16.msra.mxu0 %v507
    %1200 = vmatpush.bf16.msra.mxu0 %v503
    %1201 = vmatpush.bf16.msra.mxu0 %v499
    %1202 = vmatpush.bf16.msra.mxu0 %v495
    %1203 = vmatmul.bf16.gmra.mxu0 %v677
    %v1204 = vpop.f32.mrf.mxu0
    %v1205 = vadd.f32 0.0, %v1204
    %v1206 = vpop.f32.mrf.mxu0
    %1207 = vdwg.mxu0
    %1208 = vmatpush.bf16.msra.mxu0 %v524
    %1209 = vmatpush.bf16.msra.mxu0 %v520
    %1210 = vmatpush.bf16.msra.mxu0 %v516
    %1211 = vmatpush.bf16.msra.mxu0 %v512
    %1212 = vmatpush.bf16.msra.mxu0 %v508
    %1213 = vmatpush.bf16.msra.mxu0 %v504
    %1214 = vmatpush.bf16.msra.mxu0 %v500
    %1215 = vmatpush.bf16.msra.mxu0 %v496
    %1216 = vmatmul.bf16.gmra.mxu0 %v677
    %v1217 = vpop.f32.mrf.mxu0
    %v1218 = vadd.f32 0.0, %v1217
    %v1219 = vpop.f32.mrf.mxu0
    %1220 = vdwg.mxu0
    %1221 = vmatpush.bf16.msra.mxu0 %v525
    %1222 = vmatpush.bf16.msra.mxu0 %v521
    %1223 = vmatpush.bf16.msra.mxu0 %v517
    %1224 = vmatpush.bf16.msra.mxu0 %v513
    %1225 = vmatpush.bf16.msra.mxu0 %v509
    %1226 = vmatpush.bf16.msra.mxu0 %v505
    %1227 = vmatpush.bf16.msra.mxu0 %v501
    %1228 = vmatpush.bf16.msra.mxu0 %v497
    %1229 = vmatmul.bf16.gmra.mxu0 %v677
    %v1230 = vpop.f32.mrf.mxu0
    %v1231 = vadd.f32 0.0, %v1230
    %v1232 = vpop.f32.mrf.mxu0
    %1233 = vdwg.mxu0
    %v1238 = vrot.slane %v1192, 6
    %v1239 = vrot.slane %v1205, 6
    %v1240 = vrot.slane %v1218, 6
    %v1241 = vrot.slane %v1231, 6
    %v1246 = vadd.f32 %v356, %v1238
    %v1247 = vadd.f32 %v369, %v1239
    %v1248 = vadd.f32 %v382, %v1240
    %v1249 = vadd.f32 %v395, %v1241
    %v1250 = vxor.u32 %v1246, 2147483648
    %v1251 = vmul.f32 %v1250, 1.442695
    %v1252 = vpow.pop %v1251
    %v1253 = vadd.f32 %v1252, 1.0
    %v1254 = vrcp.pop %v1253
    %v1255 = vmul.f32 %v1253, %v1254
    %v1256 = vsub.f32 1.0, %v1255
    %v1257 = vmul.f32 %v1254, %v1256
    %v1258 = vadd.f32 %v1254, %v1257
    %vm1259 = vweird.f32 %v1253
    %vm1260 = vweird.f32 %v1254
    %vm1261 = vmor %vm1259, %vm1260
    %v1262 = vsel %vm1261, %v1254, %v1258
    %v1263 = vand.u32 2147483647, %v1253
    %vm1264 = vcmp.eq.f32.partialorder %v1263, 8.507059e+37
    %v1265 = vand.u32 %v1253, 2147483648
    %v1266 = vor.u32 1.1754944e-38, %v1265
    %v1267 = vsel %vm1264, %v1266, %v1262
    %v1268 = vmul.f32 1.0, %v1267
    %v1269 = vxor.u32 %v1247, 2147483648
    %v1270 = vmul.f32 %v1269, 1.442695
    %v1271 = vpow.pop %v1270
    %v1272 = vadd.f32 %v1271, 1.0
    %v1273 = vrcp.pop %v1272
    %v1274 = vmul.f32 %v1272, %v1273
    %v1275 = vsub.f32 1.0, %v1274
    %v1276 = vmul.f32 %v1273, %v1275
    %v1277 = vadd.f32 %v1273, %v1276
    %vm1278 = vweird.f32 %v1272
    %vm1279 = vweird.f32 %v1273
    %vm1280 = vmor %vm1278, %vm1279
    %v1281 = vsel %vm1280, %v1273, %v1277
    %v1282 = vand.u32 2147483647, %v1272
    %vm1283 = vcmp.eq.f32.partialorder %v1282, 8.507059e+37
    %v1284 = vand.u32 %v1272, 2147483648
    %v1285 = vor.u32 1.1754944e-38, %v1284
    %v1286 = vsel %vm1283, %v1285, %v1281
    %v1287 = vmul.f32 1.0, %v1286
    %v1288 = vtanh.pop %v1248
    %v1289 = vxor.u32 %v1249, 2147483648
    %v1290 = vmul.f32 %v1289, 1.442695
    %v1291 = vpow.pop %v1290
    %v1292 = vadd.f32 %v1291, 1.0
    %v1293 = vrcp.pop %v1292
    %v1294 = vmul.f32 %v1292, %v1293
    %v1295 = vsub.f32 1.0, %v1294
    %v1296 = vmul.f32 %v1293, %v1295
    %v1297 = vadd.f32 %v1293, %v1296
    %vm1298 = vweird.f32 %v1292
    %vm1299 = vweird.f32 %v1293
    %vm1300 = vmor %vm1298, %vm1299
    %v1301 = vsel %vm1300, %v1293, %v1297
    %v1302 = vand.u32 2147483647, %v1292
    %vm1303 = vcmp.eq.f32.partialorder %v1302, 8.507059e+37
    %v1304 = vand.u32 %v1292, 2147483648
    %v1305 = vor.u32 1.1754944e-38, %v1304
    %v1306 = vsel %vm1303, %v1305, %v1301
    %v1307 = vmul.f32 1.0, %v1306
    %v1309 = vrot.slane %v674, 6
    %v1311 = vmul.f32 %v1287, %v1309
    %v1312 = vmul.f32 %v1268, %v1288
    %v1313 = vadd.f32 %v1311, %v1312
    %v1314 = vtanh.pop %v1313
    %v1315 = vmul.f32 %v1307, %v1314
    %v1316 = vpack.c.bf16 %v1315, %v1315
    %v1318 = vrot.slane %v1316, 1
    %1320 = vmatpush.bf16.msra.mxu0 %v802
    %1321 = vmatpush.bf16.msra.mxu0 %v798
    %1322 = vmatpush.bf16.msra.mxu0 %v794
    %1323 = vmatpush.bf16.msra.mxu0 %v790
    %1324 = vmatpush.bf16.msra.mxu0 %v786
    %1325 = vmatpush.bf16.msra.mxu0 %v782
    %1326 = vmatpush.bf16.msra.mxu0 %v778
    %1327 = vmatpush.bf16.msra.mxu0 %v774
    %1328 = vmatmul.bf16.gmra.mxu0 %v1318
    %v1329 = vpop.f32.mrf.mxu0
    %v1330 = vadd.f32 0.0, %v1329
    %v1331 = vpop.f32.mrf.mxu0
    %1332 = vdwg.mxu0
    %1333 = vmatpush.bf16.msra.mxu0 %v803
    %1334 = vmatpush.bf16.msra.mxu0 %v799
    %1335 = vmatpush.bf16.msra.mxu0 %v795
    %1336 = vmatpush.bf16.msra.mxu0 %v791
    %1337 = vmatpush.bf16.msra.mxu0 %v787
    %1338 = vmatpush.bf16.msra.mxu0 %v783
    %1339 = vmatpush.bf16.msra.mxu0 %v779
    %1340 = vmatpush.bf16.msra.mxu0 %v775
    %1341 = vmatmul.bf16.gmra.mxu0 %v1318
    %v1342 = vpop.f32.mrf.mxu0
    %v1343 = vadd.f32 0.0, %v1342
    %v1344 = vpop.f32.mrf.mxu0
    %1345 = vdwg.mxu0
    %1346 = vmatpush.bf16.msra.mxu0 %v804
    %1347 = vmatpush.bf16.msra.mxu0 %v800
    %1348 = vmatpush.bf16.msra.mxu0 %v796
    %1349 = vmatpush.bf16.msra.mxu0 %v792
    %1350 = vmatpush.bf16.msra.mxu0 %v788
    %1351 = vmatpush.bf16.msra.mxu0 %v784
    %1352 = vmatpush.bf16.msra.mxu0 %v780
    %1353 = vmatpush.bf16.msra.mxu0 %v776
    %1354 = vmatmul.bf16.gmra.mxu0 %v1318
    %v1355 = vpop.f32.mrf.mxu0
    %v1356 = vadd.f32 0.0, %v1355
    %v1357 = vpop.f32.mrf.mxu0
    %1358 = vdwg.mxu0
    %1359 = vmatpush.bf16.msra.mxu0 %v805
    %1360 = vmatpush.bf16.msra.mxu0 %v801
    %1361 = vmatpush.bf16.msra.mxu0 %v797
    %1362 = vmatpush.bf16.msra.mxu0 %v793
    %1363 = vmatpush.bf16.msra.mxu0 %v789
    %1364 = vmatpush.bf16.msra.mxu0 %v785
    %1365 = vmatpush.bf16.msra.mxu0 %v781
    %1366 = vmatpush.bf16.msra.mxu0 %v777
    %1367 = vmatmul.bf16.gmra.mxu0 %v1318
    %v1368 = vpop.f32.mrf.mxu0
    %v1369 = vadd.f32 0.0, %v1368
    %v1370 = vpop.f32.mrf.mxu0
    %1371 = vdwg.mxu0
    %v1372 = vadd.f32 %v891, %v1330
    %v1373 = vadd.f32 %v892, %v1343
    %v1374 = vadd.f32 %v893, %v1356
    %v1375 = vadd.f32 %v894, %v1369
    %v1376 = vpack.c.bf16 %v1181, %v1181
    %1377 = vmatpush.bf16.msra.mxu0 %v1027
    %1378 = vmatpush.bf16.msra.mxu0 %v1023
    %1379 = vmatpush.bf16.msra.mxu0 %v1019
    %1380 = vmatpush.bf16.msra.mxu0 %v1015
    %1381 = vmatpush.bf16.msra.mxu0 %v1011
    %1382 = vmatpush.bf16.msra.mxu0 %v1007
    %1383 = vmatpush.bf16.msra.mxu0 %v1003
    %1384 = vmatpush.bf16.msra.mxu0 %v999
    %1385 = vmatmul.bf16.gmra.mxu0 %v1376
    %v1386 = vpop.f32.mrf.mxu0
    %v1387 = vadd.f32 0.0, %v1386
    %v1388 = vpop.f32.mrf.mxu0
    %1389 = vdwg.mxu0
    %1390 = vmatpush.bf16.msra.mxu0 %v1028
    %1391 = vmatpush.bf16.msra.mxu0 %v1024
    %1392 = vmatpush.bf16.msra.mxu0 %v1020
    %1393 = vmatpush.bf16.msra.mxu0 %v1016
    %1394 = vmatpush.bf16.msra.mxu0 %v1012
    %1395 = vmatpush.bf16.msra.mxu0 %v1008
    %1396 = vmatpush.bf16.msra.mxu0 %v1004
    %1397 = vmatpush.bf16.msra.mxu0 %v1000
    %1398 = vmatmul.bf16.gmra.mxu0 %v1376
    %v1399 = vpop.f32.mrf.mxu0
    %v1400 = vadd.f32 0.0, %v1399
    %v1401 = vpop.f32.mrf.mxu0
    %1402 = vdwg.mxu0
    %1403 = vmatpush.bf16.msra.mxu0 %v1029
    %1404 = vmatpush.bf16.msra.mxu0 %v1025
    %1405 = vmatpush.bf16.msra.mxu0 %v1021
    %1406 = vmatpush.bf16.msra.mxu0 %v1017
    %1407 = vmatpush.bf16.msra.mxu0 %v1013
    %1408 = vmatpush.bf16.msra.mxu0 %v1009
    %1409 = vmatpush.bf16.msra.mxu0 %v1005
    %1410 = vmatpush.bf16.msra.mxu0 %v1001
    %1411 = vmatmul.bf16.gmra.mxu0 %v1376
    %v1412 = vpop.f32.mrf.mxu0
    %v1413 = vadd.f32 0.0, %v1412
    %v1414 = vpop.f32.mrf.mxu0
    %1415 = vdwg.mxu0
    %1416 = vmatpush.bf16.msra.mxu0 %v1030
    %1417 = vmatpush.bf16.msra.mxu0 %v1026
    %1418 = vmatpush.bf16.msra.mxu0 %v1022
    %1419 = vmatpush.bf16.msra.mxu0 %v1018
    %1420 = vmatpush.bf16.msra.mxu0 %v1014
    %1421 = vmatpush.bf16.msra.mxu0 %v1010
    %1422 = vmatpush.bf16.msra.mxu0 %v1006
    %1423 = vmatpush.bf16.msra.mxu0 %v1002
    %1424 = vmatmul.bf16.gmra.mxu0 %v1376
    %v1425 = vpop.f32.mrf.mxu0
    %v1426 = vadd.f32 0.0, %v1425
    %v1427 = vpop.f32.mrf.mxu0
    %1428 = vdwg.mxu0
    %v1429 = vadd.f32 %v1372, %v1387
    %v1430 = vadd.f32 %v1373, %v1400
    %v1431 = vadd.f32 %v1374, %v1413
    %v1432 = vadd.f32 %v1375, %v1426
    %v1433 = vxor.u32 %v1429, 2147483648
    %v1434 = vmul.f32 %v1433, 1.442695
    %v1435 = vpow.pop %v1434
    %v1436 = vadd.f32 %v1435, 1.0
    %v1437 = vrcp.pop %v1436
    %v1438 = vmul.f32 %v1436, %v1437
    %v1439 = vsub.f32 1.0, %v1438
    %v1440 = vmul.f32 %v1437, %v1439
    %v1441 = vadd.f32 %v1437, %v1440
    %vm1442 = vweird.f32 %v1436
    %vm1443 = vweird.f32 %v1437
    %vm1444 = vmor %vm1442, %vm1443
    %v1445 = vsel %vm1444, %v1437, %v1441
    %v1446 = vand.u32 2147483647, %v1436
    %vm1447 = vcmp.eq.f32.partialorder %v1446, 8.507059e+37
    %v1448 = vand.u32 %v1436, 2147483648
    %v1449 = vor.u32 1.1754944e-38, %v1448
    %v1450 = vsel %vm1447, %v1449, %v1445
    %v1451 = vmul.f32 1.0, %v1450
    %v1452 = vxor.u32 %v1430, 2147483648
    %v1453 = vmul.f32 %v1452, 1.442695
    %v1454 = vpow.pop %v1453
    %v1455 = vadd.f32 %v1454, 1.0
    %v1456 = vrcp.pop %v1455
    %v1457 = vmul.f32 %v1455, %v1456
    %v1458 = vsub.f32 1.0, %v1457
    %v1459 = vmul.f32 %v1456, %v1458
    %v1460 = vadd.f32 %v1456, %v1459
    %vm1461 = vweird.f32 %v1455
    %vm1462 = vweird.f32 %v1456
    %vm1463 = vmor %vm1461, %vm1462
    %v1464 = vsel %vm1463, %v1456, %v1460
    %v1465 = vand.u32 2147483647, %v1455
    %vm1466 = vcmp.eq.f32.partialorder %v1465, 8.507059e+37
    %v1467 = vand.u32 %v1455, 2147483648
    %v1468 = vor.u32 1.1754944e-38, %v1467
    %v1469 = vsel %vm1466, %v1468, %v1464
    %v1470 = vmul.f32 1.0, %v1469
    %v1471 = vtanh.pop %v1431
    %v1472 = vxor.u32 %v1432, 2147483648
    %v1473 = vmul.f32 %v1472, 1.442695
    %v1474 = vpow.pop %v1473
    %v1475 = vadd.f32 %v1474, 1.0
    %v1476 = vrcp.pop %v1475
    %v1477 = vmul.f32 %v1475, %v1476
    %v1478 = vsub.f32 1.0, %v1477
    %v1479 = vmul.f32 %v1476, %v1478
    %v1480 = vadd.f32 %v1476, %v1479
    %vm1481 = vweird.f32 %v1475
    %vm1482 = vweird.f32 %v1476
    %vm1483 = vmor %vm1481, %vm1482
    %v1484 = vsel %vm1483, %v1476, %v1480
    %v1485 = vand.u32 2147483647, %v1475
    %vm1486 = vcmp.eq.f32.partialorder %v1485, 8.507059e+37
    %v1487 = vand.u32 %v1475, 2147483648
    %v1488 = vor.u32 1.1754944e-38, %v1487
    %v1489 = vsel %vm1486, %v1488, %v1484
    %v1490 = vmul.f32 1.0, %v1489
    %v1491 = vmul.f32 %v1470, %v1179
    %v1492 = vmul.f32 %v1451, %v1471
    %v1493 = vadd.f32 %v1491, %v1492
    %v1494 = vtanh.pop %v1493
    %v1495 = vmul.f32 %v1490, %v1494
    %1496 = vmatpush.bf16.msra.mxu0 %v522
    %1497 = vmatpush.bf16.msra.mxu0 %v518
    %1498 = vmatpush.bf16.msra.mxu0 %v514
    %1499 = vmatpush.bf16.msra.mxu0 %v510
    %1500 = vmatpush.bf16.msra.mxu0 %v506
    %1501 = vmatpush.bf16.msra.mxu0 %v502
    %1502 = vmatpush.bf16.msra.mxu0 %v498
    %1503 = vmatpush.bf16.msra.mxu0 %v494
    %1504 = vmatmul.bf16.gmra.mxu0 %v1318
    %v1505 = vpop.f32.mrf.mxu0
    %v1506 = vadd.f32 0.0, %v1505
    %v1507 = vpop.f32.mrf.mxu0
    %1508 = vdwg.mxu0
    %1509 = vmatpush.bf16.msra.mxu0 %v523
    %1510 = vmatpush.bf16.msra.mxu0 %v519
    %1511 = vmatpush.bf16.msra.mxu0 %v515
    %1512 = vmatpush.bf16.msra.mxu0 %v511
    %1513 = vmatpush.bf16.msra.mxu0 %v507
    %1514 = vmatpush.bf16.msra.mxu0 %v503
    %1515 = vmatpush.bf16.msra.mxu0 %v499
    %1516 = vmatpush.bf16.msra.mxu0 %v495
    %1517 = vmatmul.bf16.gmra.mxu0 %v1318
    %v1518 = vpop.f32.mrf.mxu0
    %v1519 = vadd.f32 0.0, %v1518
    %v1520 = vpop.f32.mrf.mxu0
    %1521 = vdwg.mxu0
    %1522 = vmatpush.bf16.msra.mxu0 %v524
    %1523 = vmatpush.bf16.msra.mxu0 %v520
    %1524 = vmatpush.bf16.msra.mxu0 %v516
    %1525 = vmatpush.bf16.msra.mxu0 %v512
    %1526 = vmatpush.bf16.msra.mxu0 %v508
    %1527 = vmatpush.bf16.msra.mxu0 %v504
    %1528 = vmatpush.bf16.msra.mxu0 %v500
    %1529 = vmatpush.bf16.msra.mxu0 %v496
    %1530 = vmatmul.bf16.gmra.mxu0 %v1318
    %v1531 = vpop.f32.mrf.mxu0
    %v1532 = vadd.f32 0.0, %v1531
    %v1533 = vpop.f32.mrf.mxu0
    %1534 = vdwg.mxu0
    %1535 = vmatpush.bf16.msra.mxu0 %v525
    %1536 = vmatpush.bf16.msra.mxu0 %v521
    %1537 = vmatpush.bf16.msra.mxu0 %v517
    %1538 = vmatpush.bf16.msra.mxu0 %v513
    %1539 = vmatpush.bf16.msra.mxu0 %v509
    %1540 = vmatpush.bf16.msra.mxu0 %v505
    %1541 = vmatpush.bf16.msra.mxu0 %v501
    %1542 = vmatpush.bf16.msra.mxu0 %v497
    %1543 = vmatmul.bf16.gmra.mxu0 %v1318
    %v1544 = vpop.f32.mrf.mxu0
    %v1545 = vadd.f32 0.0, %v1544
    %v1546 = vpop.f32.mrf.mxu0
    %1547 = vdwg.mxu0
    %v1552 = vrot.slane %v1506, 4
    %v1553 = vrot.slane %v1519, 4
    %v1554 = vrot.slane %v1532, 4
    %v1555 = vrot.slane %v1545, 4
    %v1560 = vadd.f32 %v356, %v1552
    %v1561 = vadd.f32 %v369, %v1553
    %v1562 = vadd.f32 %v382, %v1554
    %v1563 = vadd.f32 %v395, %v1555
    %v1564 = vxor.u32 %v1560, 2147483648
    %v1565 = vmul.f32 %v1564, 1.442695
    %v1566 = vpow.pop %v1565
    %v1567 = vadd.f32 %v1566, 1.0
    %v1568 = vrcp.pop %v1567
    %v1569 = vmul.f32 %v1567, %v1568
    %v1570 = vsub.f32 1.0, %v1569
    %v1571 = vmul.f32 %v1568, %v1570
    %v1572 = vadd.f32 %v1568, %v1571
    %vm1573 = vweird.f32 %v1567
    %vm1574 = vweird.f32 %v1568
    %vm1575 = vmor %vm1573, %vm1574
    %v1576 = vsel %vm1575, %v1568, %v1572
    %v1577 = vand.u32 2147483647, %v1567
    %vm1578 = vcmp.eq.f32.partialorder %v1577, 8.507059e+37
    %v1579 = vand.u32 %v1567, 2147483648
    %v1580 = vor.u32 1.1754944e-38, %v1579
    %v1581 = vsel %vm1578, %v1580, %v1576
    %v1582 = vmul.f32 1.0, %v1581
    %v1583 = vxor.u32 %v1561, 2147483648
    %v1584 = vmul.f32 %v1583, 1.442695
    %v1585 = vpow.pop %v1584
    %v1586 = vadd.f32 %v1585, 1.0
    %v1587 = vrcp.pop %v1586
    %v1588 = vmul.f32 %v1586, %v1587
    %v1589 = vsub.f32 1.0, %v1588
    %v1590 = vmul.f32 %v1587, %v1589
    %v1591 = vadd.f32 %v1587, %v1590
    %vm1592 = vweird.f32 %v1586
    %vm1593 = vweird.f32 %v1587
    %vm1594 = vmor %vm1592, %vm1593
    %v1595 = vsel %vm1594, %v1587, %v1591
    %v1596 = vand.u32 2147483647, %v1586
    %vm1597 = vcmp.eq.f32.partialorder %v1596, 8.507059e+37
    %v1598 = vand.u32 %v1586, 2147483648
    %v1599 = vor.u32 1.1754944e-38, %v1598
    %v1600 = vsel %vm1597, %v1599, %v1595
    %v1601 = vmul.f32 1.0, %v1600
    %v1602 = vtanh.pop %v1562
    %v1603 = vxor.u32 %v1563, 2147483648
    %v1604 = vmul.f32 %v1603, 1.442695
    %v1605 = vpow.pop %v1604
    %v1606 = vadd.f32 %v1605, 1.0
    %v1607 = vrcp.pop %v1606
    %v1608 = vmul.f32 %v1606, %v1607
    %v1609 = vsub.f32 1.0, %v1608
    %v1610 = vmul.f32 %v1607, %v1609
    %v1611 = vadd.f32 %v1607, %v1610
    %vm1612 = vweird.f32 %v1606
    %vm1613 = vweird.f32 %v1607
    %vm1614 = vmor %vm1612, %vm1613
    %v1615 = vsel %vm1614, %v1607, %v1611
    %v1616 = vand.u32 2147483647, %v1606
    %vm1617 = vcmp.eq.f32.partialorder %v1616, 8.507059e+37
    %v1618 = vand.u32 %v1606, 2147483648
    %v1619 = vor.u32 1.1754944e-38, %v1618
    %v1620 = vsel %vm1617, %v1619, %v1615
    %v1621 = vmul.f32 1.0, %v1620
    %v1623 = vrot.slane %v1313, 6
    %v1625 = vmul.f32 %v1601, %v1623
    %v1626 = vmul.f32 %v1582, %v1602
    %v1627 = vadd.f32 %v1625, %v1626
    %v1628 = vtanh.pop %v1627
    %v1629 = vmul.f32 %v1621, %v1628
    %v1630 = vpack.c.bf16 %v1629, %v1629
    %v1632 = vrot.slane %v1630, 2
    %1634 = vmatpush.bf16.msra.mxu0 %v802
    %1635 = vmatpush.bf16.msra.mxu0 %v798
    %1636 = vmatpush.bf16.msra.mxu0 %v794
    %1637 = vmatpush.bf16.msra.mxu0 %v790
    %1638 = vmatpush.bf16.msra.mxu0 %v786
    %1639 = vmatpush.bf16.msra.mxu0 %v782
    %1640 = vmatpush.bf16.msra.mxu0 %v778
    %1641 = vmatpush.bf16.msra.mxu0 %v774
    %1642 = vmatmul.bf16.gmra.mxu0 %v1632
    %v1643 = vpop.f32.mrf.mxu0
    %v1644 = vadd.f32 0.0, %v1643
    %v1645 = vpop.f32.mrf.mxu0
    %1646 = vdwg.mxu0
    %1647 = vmatpush.bf16.msra.mxu0 %v803
    %1648 = vmatpush.bf16.msra.mxu0 %v799
    %1649 = vmatpush.bf16.msra.mxu0 %v795
    %1650 = vmatpush.bf16.msra.mxu0 %v791
    %1651 = vmatpush.bf16.msra.mxu0 %v787
    %1652 = vmatpush.bf16.msra.mxu0 %v783
    %1653 = vmatpush.bf16.msra.mxu0 %v779
    %1654 = vmatpush.bf16.msra.mxu0 %v775
    %1655 = vmatmul.bf16.gmra.mxu0 %v1632
    %v1656 = vpop.f32.mrf.mxu0
    %v1657 = vadd.f32 0.0, %v1656
    %v1658 = vpop.f32.mrf.mxu0
    %1659 = vdwg.mxu0
    %1660 = vmatpush.bf16.msra.mxu0 %v804
    %1661 = vmatpush.bf16.msra.mxu0 %v800
    %1662 = vmatpush.bf16.msra.mxu0 %v796
    %1663 = vmatpush.bf16.msra.mxu0 %v792
    %1664 = vmatpush.bf16.msra.mxu0 %v788
    %1665 = vmatpush.bf16.msra.mxu0 %v784
    %1666 = vmatpush.bf16.msra.mxu0 %v780
    %1667 = vmatpush.bf16.msra.mxu0 %v776
    %1668 = vmatmul.bf16.gmra.mxu0 %v1632
    %v1669 = vpop.f32.mrf.mxu0
    %v1670 = vadd.f32 0.0, %v1669
    %v1671 = vpop.f32.mrf.mxu0
    %1672 = vdwg.mxu0
    %1673 = vmatpush.bf16.msra.mxu0 %v805
    %1674 = vmatpush.bf16.msra.mxu0 %v801
    %1675 = vmatpush.bf16.msra.mxu0 %v797
    %1676 = vmatpush.bf16.msra.mxu0 %v793
    %1677 = vmatpush.bf16.msra.mxu0 %v789
    %1678 = vmatpush.bf16.msra.mxu0 %v785
    %1679 = vmatpush.bf16.msra.mxu0 %v781
    %1680 = vmatpush.bf16.msra.mxu0 %v777
    %1681 = vmatmul.bf16.gmra.mxu0 %v1632
    %v1682 = vpop.f32.mrf.mxu0
    %v1683 = vadd.f32 0.0, %v1682
    %v1684 = vpop.f32.mrf.mxu0
    %1685 = vdwg.mxu0
    %v1686 = vadd.f32 %v891, %v1644
    %v1687 = vadd.f32 %v892, %v1657
    %v1688 = vadd.f32 %v893, %v1670
    %v1689 = vadd.f32 %v894, %v1683
    %v1690 = vpack.c.bf16 %v1495, %v1495
    %1691 = vmatpush.bf16.msra.mxu0 %v1027
    %1692 = vmatpush.bf16.msra.mxu0 %v1023
    %1693 = vmatpush.bf16.msra.mxu0 %v1019
    %1694 = vmatpush.bf16.msra.mxu0 %v1015
    %1695 = vmatpush.bf16.msra.mxu0 %v1011
    %1696 = vmatpush.bf16.msra.mxu0 %v1007
    %1697 = vmatpush.bf16.msra.mxu0 %v1003
    %1698 = vmatpush.bf16.msra.mxu0 %v999
    %1699 = vmatmul.bf16.gmra.mxu0 %v1690
    %v1700 = vpop.f32.mrf.mxu0
    %v1701 = vadd.f32 0.0, %v1700
    %v1702 = vpop.f32.mrf.mxu0
    %1703 = vdwg.mxu0
    %1704 = vmatpush.bf16.msra.mxu0 %v1028
    %1705 = vmatpush.bf16.msra.mxu0 %v1024
    %1706 = vmatpush.bf16.msra.mxu0 %v1020
    %1707 = vmatpush.bf16.msra.mxu0 %v1016
    %1708 = vmatpush.bf16.msra.mxu0 %v1012
    %1709 = vmatpush.bf16.msra.mxu0 %v1008
    %1710 = vmatpush.bf16.msra.mxu0 %v1004
    %1711 = vmatpush.bf16.msra.mxu0 %v1000
    %1712 = vmatmul.bf16.gmra.mxu0 %v1690
    %v1713 = vpop.f32.mrf.mxu0
    %v1714 = vadd.f32 0.0, %v1713
    %v1715 = vpop.f32.mrf.mxu0
    %1716 = vdwg.mxu0
    %1717 = vmatpush.bf16.msra.mxu0 %v1029
    %1718 = vmatpush.bf16.msra.mxu0 %v1025
    %1719 = vmatpush.bf16.msra.mxu0 %v1021
    %1720 = vmatpush.bf16.msra.mxu0 %v1017
    %1721 = vmatpush.bf16.msra.mxu0 %v1013
    %1722 = vmatpush.bf16.msra.mxu0 %v1009
    %1723 = vmatpush.bf16.msra.mxu0 %v1005
    %1724 = vmatpush.bf16.msra.mxu0 %v1001
    %1725 = vmatmul.bf16.gmra.mxu0 %v1690
    %v1726 = vpop.f32.mrf.mxu0
    %v1727 = vadd.f32 0.0, %v1726
    %v1728 = vpop.f32.mrf.mxu0
    %1729 = vdwg.mxu0
    %1730 = vmatpush.bf16.msra.mxu0 %v1030
    %1731 = vmatpush.bf16.msra.mxu0 %v1026
    %1732 = vmatpush.bf16.msra.mxu0 %v1022
    %1733 = vmatpush.bf16.msra.mxu0 %v1018
    %1734 = vmatpush.bf16.msra.mxu0 %v1014
    %1735 = vmatpush.bf16.msra.mxu0 %v1010
    %1736 = vmatpush.bf16.msra.mxu0 %v1006
    %1737 = vmatpush.bf16.msra.mxu0 %v1002
    %1738 = vmatmul.bf16.gmra.mxu0 %v1690
    %v1739 = vpop.f32.mrf.mxu0
    %v1740 = vadd.f32 0.0, %v1739
    %v1741 = vpop.f32.mrf.mxu0
    %1742 = vdwg.mxu0
    %v1743 = vadd.f32 %v1686, %v1701
    %v1744 = vadd.f32 %v1687, %v1714
    %v1745 = vadd.f32 %v1688, %v1727
    %v1746 = vadd.f32 %v1689, %v1740
    %v1747 = vxor.u32 %v1743, 2147483648
    %v1748 = vmul.f32 %v1747, 1.442695
    %v1749 = vpow.pop %v1748
    %v1750 = vadd.f32 %v1749, 1.0
    %v1751 = vrcp.pop %v1750
    %v1752 = vmul.f32 %v1750, %v1751
    %v1753 = vsub.f32 1.0, %v1752
    %v1754 = vmul.f32 %v1751, %v1753
    %v1755 = vadd.f32 %v1751, %v1754
    %vm1756 = vweird.f32 %v1750
    %vm1757 = vweird.f32 %v1751
    %vm1758 = vmor %vm1756, %vm1757
    %v1759 = vsel %vm1758, %v1751, %v1755
    %v1760 = vand.u32 2147483647, %v1750
    %vm1761 = vcmp.eq.f32.partialorder %v1760, 8.507059e+37
    %v1762 = vand.u32 %v1750, 2147483648
    %v1763 = vor.u32 1.1754944e-38, %v1762
    %v1764 = vsel %vm1761, %v1763, %v1759
    %v1765 = vmul.f32 1.0, %v1764
    %v1766 = vxor.u32 %v1744, 2147483648
    %v1767 = vmul.f32 %v1766, 1.442695
    %v1768 = vpow.pop %v1767
    %v1769 = vadd.f32 %v1768, 1.0
    %v1770 = vrcp.pop %v1769
    %v1771 = vmul.f32 %v1769, %v1770
    %v1772 = vsub.f32 1.0, %v1771
    %v1773 = vmul.f32 %v1770, %v1772
    %v1774 = vadd.f32 %v1770, %v1773
    %vm1775 = vweird.f32 %v1769
    %vm1776 = vweird.f32 %v1770
    %vm1777 = vmor %vm1775, %vm1776
    %v1778 = vsel %vm1777, %v1770, %v1774
    %v1779 = vand.u32 2147483647, %v1769
    %vm1780 = vcmp.eq.f32.partialorder %v1779, 8.507059e+37
    %v1781 = vand.u32 %v1769, 2147483648
    %v1782 = vor.u32 1.1754944e-38, %v1781
    %v1783 = vsel %vm1780, %v1782, %v1778
    %v1784 = vmul.f32 1.0, %v1783
    %v1785 = vtanh.pop %v1745
    %v1786 = vxor.u32 %v1746, 2147483648
    %v1787 = vmul.f32 %v1786, 1.442695
    %v1788 = vpow.pop %v1787
    %v1789 = vadd.f32 %v1788, 1.0
    %v1790 = vrcp.pop %v1789
    %v1791 = vmul.f32 %v1789, %v1790
    %v1792 = vsub.f32 1.0, %v1791
    %v1793 = vmul.f32 %v1790, %v1792
    %v1794 = vadd.f32 %v1790, %v1793
    %vm1795 = vweird.f32 %v1789
    %vm1796 = vweird.f32 %v1790
    %vm1797 = vmor %vm1795, %vm1796
    %v1798 = vsel %vm1797, %v1790, %v1794
    %v1799 = vand.u32 2147483647, %v1789
    %vm1800 = vcmp.eq.f32.partialorder %v1799, 8.507059e+37
    %v1801 = vand.u32 %v1789, 2147483648
    %v1802 = vor.u32 1.1754944e-38, %v1801
    %v1803 = vsel %vm1800, %v1802, %v1798
    %v1804 = vmul.f32 1.0, %v1803
    %v1805 = vmul.f32 %v1784, %v1493
    %v1806 = vmul.f32 %v1765, %v1785
    %v1807 = vadd.f32 %v1805, %v1806
    %v1808 = vtanh.pop %v1807
    %v1809 = vmul.f32 %v1804, %v1808
    %1810 = vmatpush.bf16.msra.mxu0 %v522
    %1811 = vmatpush.bf16.msra.mxu0 %v518
    %1812 = vmatpush.bf16.msra.mxu0 %v514
    %1813 = vmatpush.bf16.msra.mxu0 %v510
    %1814 = vmatpush.bf16.msra.mxu0 %v506
    %1815 = vmatpush.bf16.msra.mxu0 %v502
    %1816 = vmatpush.bf16.msra.mxu0 %v498
    %1817 = vmatpush.bf16.msra.mxu0 %v494
    %1818 = vmatmul.bf16.gmra.mxu0 %v1632
    %v1819 = vpop.f32.mrf.mxu0
    %v1820 = vadd.f32 0.0, %v1819
    %v1821 = vpop.f32.mrf.mxu0
    %1822 = vdwg.mxu0
    %1823 = vmatpush.bf16.msra.mxu0 %v523
    %1824 = vmatpush.bf16.msra.mxu0 %v519
    %1825 = vmatpush.bf16.msra.mxu0 %v515
    %1826 = vmatpush.bf16.msra.mxu0 %v511
    %1827 = vmatpush.bf16.msra.mxu0 %v507
    %1828 = vmatpush.bf16.msra.mxu0 %v503
    %1829 = vmatpush.bf16.msra.mxu0 %v499
    %1830 = vmatpush.bf16.msra.mxu0 %v495
    %1831 = vmatmul.bf16.gmra.mxu0 %v1632
    %v1832 = vpop.f32.mrf.mxu0
    %v1833 = vadd.f32 0.0, %v1832
    %v1834 = vpop.f32.mrf.mxu0
    %1835 = vdwg.mxu0
    %1836 = vmatpush.bf16.msra.mxu0 %v524
    %1837 = vmatpush.bf16.msra.mxu0 %v520
    %1838 = vmatpush.bf16.msra.mxu0 %v516
    %1839 = vmatpush.bf16.msra.mxu0 %v512
    %1840 = vmatpush.bf16.msra.mxu0 %v508
    %1841 = vmatpush.bf16.msra.mxu0 %v504
    %1842 = vmatpush.bf16.msra.mxu0 %v500
    %1843 = vmatpush.bf16.msra.mxu0 %v496
    %1844 = vmatmul.bf16.gmra.mxu0 %v1632
    %v1845 = vpop.f32.mrf.mxu0
    %v1846 = vadd.f32 0.0, %v1845
    %v1847 = vpop.f32.mrf.mxu0
    %1848 = vdwg.mxu0
    %1849 = vmatpush.bf16.msra.mxu0 %v525
    %1850 = vmatpush.bf16.msra.mxu0 %v521
    %1851 = vmatpush.bf16.msra.mxu0 %v517
    %1852 = vmatpush.bf16.msra.mxu0 %v513
    %1853 = vmatpush.bf16.msra.mxu0 %v509
    %1854 = vmatpush.bf16.msra.mxu0 %v505
    %1855 = vmatpush.bf16.msra.mxu0 %v501
    %1856 = vmatpush.bf16.msra.mxu0 %v497
    %1857 = vmatmul.bf16.gmra.mxu0 %v1632
    %v1858 = vpop.f32.mrf.mxu0
    %v1859 = vadd.f32 0.0, %v1858
    %v1860 = vpop.f32.mrf.mxu0
    %1861 = vdwg.mxu0
    %v1866 = vrot.slane %v1820, 2
    %v1867 = vrot.slane %v1833, 2
    %v1868 = vrot.slane %v1846, 2
    %v1869 = vrot.slane %v1859, 2
    %v1874 = vadd.f32 %v356, %v1866
    %v1875 = vadd.f32 %v369, %v1867
    %v1876 = vadd.f32 %v382, %v1868
    %v1877 = vadd.f32 %v395, %v1869
    %v1878 = vxor.u32 %v1874, 2147483648
    %v1879 = vmul.f32 %v1878, 1.442695
    %v1880 = vpow.pop %v1879
    %v1881 = vadd.f32 %v1880, 1.0
    %v1882 = vrcp.pop %v1881
    %v1883 = vmul.f32 %v1881, %v1882
    %v1884 = vsub.f32 1.0, %v1883
    %v1885 = vmul.f32 %v1882, %v1884
    %v1886 = vadd.f32 %v1882, %v1885
    %vm1887 = vweird.f32 %v1881
    %vm1888 = vweird.f32 %v1882
    %vm1889 = vmor %vm1887, %vm1888
    %v1890 = vsel %vm1889, %v1882, %v1886
    %v1891 = vand.u32 2147483647, %v1881
    %vm1892 = vcmp.eq.f32.partialorder %v1891, 8.507059e+37
    %v1893 = vand.u32 %v1881, 2147483648
    %v1894 = vor.u32 1.1754944e-38, %v1893
    %v1895 = vsel %vm1892, %v1894, %v1890
    %v1896 = vmul.f32 1.0, %v1895
    %v1897 = vxor.u32 %v1875, 2147483648
    %v1898 = vmul.f32 %v1897, 1.442695
    %v1899 = vpow.pop %v1898
    %v1900 = vadd.f32 %v1899, 1.0
    %v1901 = vrcp.pop %v1900
    %v1902 = vmul.f32 %v1900, %v1901
    %v1903 = vsub.f32 1.0, %v1902
    %v1904 = vmul.f32 %v1901, %v1903
    %v1905 = vadd.f32 %v1901, %v1904
    %vm1906 = vweird.f32 %v1900
    %vm1907 = vweird.f32 %v1901
    %vm1908 = vmor %vm1906, %vm1907
    %v1909 = vsel %vm1908, %v1901, %v1905
    %v1910 = vand.u32 2147483647, %v1900
    %vm1911 = vcmp.eq.f32.partialorder %v1910, 8.507059e+37
    %v1912 = vand.u32 %v1900, 2147483648
    %v1913 = vor.u32 1.1754944e-38, %v1912
    %v1914 = vsel %vm1911, %v1913, %v1909
    %v1915 = vmul.f32 1.0, %v1914
    %v1916 = vtanh.pop %v1876
    %v1917 = vxor.u32 %v1877, 2147483648
    %v1918 = vmul.f32 %v1917, 1.442695
    %v1919 = vpow.pop %v1918
    %v1920 = vadd.f32 %v1919, 1.0
    %v1921 = vrcp.pop %v1920
    %v1922 = vmul.f32 %v1920, %v1921
    %v1923 = vsub.f32 1.0, %v1922
    %v1924 = vmul.f32 %v1921, %v1923
    %v1925 = vadd.f32 %v1921, %v1924
    %vm1926 = vweird.f32 %v1920
    %vm1927 = vweird.f32 %v1921
    %vm1928 = vmor %vm1926, %vm1927
    %v1929 = vsel %vm1928, %v1921, %v1925
    %v1930 = vand.u32 2147483647, %v1920
    %vm1931 = vcmp.eq.f32.partialorder %v1930, 8.507059e+37
    %v1932 = vand.u32 %v1920, 2147483648
    %v1933 = vor.u32 1.1754944e-38, %v1932
    %v1934 = vsel %vm1931, %v1933, %v1929
    %v1935 = vmul.f32 1.0, %v1934
    %v1937 = vrot.slane %v1627, 6
    %v1939 = vmul.f32 %v1915, %v1937
    %v1940 = vmul.f32 %v1896, %v1916
    %v1941 = vadd.f32 %v1939, %v1940
    %v1942 = vtanh.pop %v1941
    %v1943 = vmul.f32 %v1935, %v1942
    %v1944 = vpack.c.bf16 %v1943, %v1943
    %v1946 = vrot.slane %v1944, 3
    %1948 = vmatpush.bf16.msra.mxu0 %v802
    %1949 = vmatpush.bf16.msra.mxu0 %v798
    %1950 = vmatpush.bf16.msra.mxu0 %v794
    %1951 = vmatpush.bf16.msra.mxu0 %v790
    %1952 = vmatpush.bf16.msra.mxu0 %v786
    %1953 = vmatpush.bf16.msra.mxu0 %v782
    %1954 = vmatpush.bf16.msra.mxu0 %v778
    %1955 = vmatpush.bf16.msra.mxu0 %v774
    %1956 = vmatmul.bf16.gmra.mxu0 %v1946
    %v1957 = vpop.f32.mrf.mxu0
    %v1958 = vadd.f32 0.0, %v1957
    %v1959 = vpop.f32.mrf.mxu0
    %1960 = vdwg.mxu0
    %1961 = vmatpush.bf16.msra.mxu0 %v803
    %1962 = vmatpush.bf16.msra.mxu0 %v799
    %1963 = vmatpush.bf16.msra.mxu0 %v795
    %1964 = vmatpush.bf16.msra.mxu0 %v791
    %1965 = vmatpush.bf16.msra.mxu0 %v787
    %1966 = vmatpush.bf16.msra.mxu0 %v783
    %1967 = vmatpush.bf16.msra.mxu0 %v779
    %1968 = vmatpush.bf16.msra.mxu0 %v775
    %1969 = vmatmul.bf16.gmra.mxu0 %v1946
    %v1970 = vpop.f32.mrf.mxu0
    %v1971 = vadd.f32 0.0, %v1970
    %v1972 = vpop.f32.mrf.mxu0
    %1973 = vdwg.mxu0
    %1974 = vmatpush.bf16.msra.mxu0 %v804
    %1975 = vmatpush.bf16.msra.mxu0 %v800
    %1976 = vmatpush.bf16.msra.mxu0 %v796
    %1977 = vmatpush.bf16.msra.mxu0 %v792
    %1978 = vmatpush.bf16.msra.mxu0 %v788
    %1979 = vmatpush.bf16.msra.mxu0 %v784
    %1980 = vmatpush.bf16.msra.mxu0 %v780
    %1981 = vmatpush.bf16.msra.mxu0 %v776
    %1982 = vmatmul.bf16.gmra.mxu0 %v1946
    %v1983 = vpop.f32.mrf.mxu0
    %v1984 = vadd.f32 0.0, %v1983
    %v1985 = vpop.f32.mrf.mxu0
    %1986 = vdwg.mxu0
    %1987 = vmatpush.bf16.msra.mxu0 %v805
    %1988 = vmatpush.bf16.msra.mxu0 %v801
    %1989 = vmatpush.bf16.msra.mxu0 %v797
    %1990 = vmatpush.bf16.msra.mxu0 %v793
    %1991 = vmatpush.bf16.msra.mxu0 %v789
    %1992 = vmatpush.bf16.msra.mxu0 %v785
    %1993 = vmatpush.bf16.msra.mxu0 %v781
    %1994 = vmatpush.bf16.msra.mxu0 %v777
    %1995 = vmatmul.bf16.gmra.mxu0 %v1946
    %v1996 = vpop.f32.mrf.mxu0
    %v1997 = vadd.f32 0.0, %v1996
    %v1998 = vpop.f32.mrf.mxu0
    %1999 = vdwg.mxu0
    %v2000 = vadd.f32 %v891, %v1958
    %v2001 = vadd.f32 %v892, %v1971
    %v2002 = vadd.f32 %v893, %v1984
    %v2003 = vadd.f32 %v894, %v1997
    %v2004 = vpack.c.bf16 %v1809, %v1809
    %2005 = vmatpush.bf16.msra.mxu0 %v1027
    %2006 = vmatpush.bf16.msra.mxu0 %v1023
    %2007 = vmatpush.bf16.msra.mxu0 %v1019
    %2008 = vmatpush.bf16.msra.mxu0 %v1015
    %2009 = vmatpush.bf16.msra.mxu0 %v1011
    %2010 = vmatpush.bf16.msra.mxu0 %v1007
    %2011 = vmatpush.bf16.msra.mxu0 %v1003
    %2012 = vmatpush.bf16.msra.mxu0 %v999
    %2013 = vmatmul.bf16.gmra.mxu0 %v2004
    %v2014 = vpop.f32.mrf.mxu0
    %v2015 = vadd.f32 0.0, %v2014
    %v2016 = vpop.f32.mrf.mxu0
    %2017 = vdwg.mxu0
    %2018 = vmatpush.bf16.msra.mxu0 %v1028
    %2019 = vmatpush.bf16.msra.mxu0 %v1024
    %2020 = vmatpush.bf16.msra.mxu0 %v1020
    %2021 = vmatpush.bf16.msra.mxu0 %v1016
    %2022 = vmatpush.bf16.msra.mxu0 %v1012
    %2023 = vmatpush.bf16.msra.mxu0 %v1008
    %2024 = vmatpush.bf16.msra.mxu0 %v1004
    %2025 = vmatpush.bf16.msra.mxu0 %v1000
    %2026 = vmatmul.bf16.gmra.mxu0 %v2004
    %v2027 = vpop.f32.mrf.mxu0
    %v2028 = vadd.f32 0.0, %v2027
    %v2029 = vpop.f32.mrf.mxu0
    %2030 = vdwg.mxu0
    %2031 = vmatpush.bf16.msra.mxu0 %v1029
    %2032 = vmatpush.bf16.msra.mxu0 %v1025
    %2033 = vmatpush.bf16.msra.mxu0 %v1021
    %2034 = vmatpush.bf16.msra.mxu0 %v1017
    %2035 = vmatpush.bf16.msra.mxu0 %v1013
    %2036 = vmatpush.bf16.msra.mxu0 %v1009
    %2037 = vmatpush.bf16.msra.mxu0 %v1005
    %2038 = vmatpush.bf16.msra.mxu0 %v1001
    %2039 = vmatmul.bf16.gmra.mxu0 %v2004
    %v2040 = vpop.f32.mrf.mxu0
    %v2041 = vadd.f32 0.0, %v2040
    %v2042 = vpop.f32.mrf.mxu0
    %2043 = vdwg.mxu0
    %2044 = vmatpush.bf16.msra.mxu0 %v1030
    %2045 = vmatpush.bf16.msra.mxu0 %v1026
    %2046 = vmatpush.bf16.msra.mxu0 %v1022
    %2047 = vmatpush.bf16.msra.mxu0 %v1018
    %2048 = vmatpush.bf16.msra.mxu0 %v1014
    %2049 = vmatpush.bf16.msra.mxu0 %v1010
    %2050 = vmatpush.bf16.msra.mxu0 %v1006
    %2051 = vmatpush.bf16.msra.mxu0 %v1002
    %2052 = vmatmul.bf16.gmra.mxu0 %v2004
    %v2053 = vpop.f32.mrf.mxu0
    %v2054 = vadd.f32 0.0, %v2053
    %v2055 = vpop.f32.mrf.mxu0
    %2056 = vdwg.mxu0
    %v2057 = vadd.f32 %v2000, %v2015
    %v2058 = vadd.f32 %v2001, %v2028
    %v2059 = vadd.f32 %v2002, %v2041
    %v2060 = vadd.f32 %v2003, %v2054
    %v2061 = vxor.u32 %v2057, 2147483648
    %v2062 = vmul.f32 %v2061, 1.442695
    %v2063 = vpow.pop %v2062
    %v2064 = vadd.f32 %v2063, 1.0
    %v2065 = vrcp.pop %v2064
    %v2066 = vmul.f32 %v2064, %v2065
    %v2067 = vsub.f32 1.0, %v2066
    %v2068 = vmul.f32 %v2065, %v2067
    %v2069 = vadd.f32 %v2065, %v2068
    %vm2070 = vweird.f32 %v2064
    %vm2071 = vweird.f32 %v2065
    %vm2072 = vmor %vm2070, %vm2071
    %v2073 = vsel %vm2072, %v2065, %v2069
    %v2074 = vand.u32 2147483647, %v2064
    %vm2075 = vcmp.eq.f32.partialorder %v2074, 8.507059e+37
    %v2076 = vand.u32 %v2064, 2147483648
    %v2077 = vor.u32 1.1754944e-38, %v2076
    %v2078 = vsel %vm2075, %v2077, %v2073
    %v2079 = vmul.f32 1.0, %v2078
    %v2080 = vxor.u32 %v2058, 2147483648
    %v2081 = vmul.f32 %v2080, 1.442695
    %v2082 = vpow.pop %v2081
    %v2083 = vadd.f32 %v2082, 1.0
    %v2084 = vrcp.pop %v2083
    %v2085 = vmul.f32 %v2083, %v2084
    %v2086 = vsub.f32 1.0, %v2085
    %v2087 = vmul.f32 %v2084, %v2086
    %v2088 = vadd.f32 %v2084, %v2087
    %vm2089 = vweird.f32 %v2083
    %vm2090 = vweird.f32 %v2084
    %vm2091 = vmor %vm2089, %vm2090
    %v2092 = vsel %vm2091, %v2084, %v2088
    %v2093 = vand.u32 2147483647, %v2083
    %vm2094 = vcmp.eq.f32.partialorder %v2093, 8.507059e+37
    %v2095 = vand.u32 %v2083, 2147483648
    %v2096 = vor.u32 1.1754944e-38, %v2095
    %v2097 = vsel %vm2094, %v2096, %v2092
    %v2098 = vmul.f32 1.0, %v2097
    %v2099 = vtanh.pop %v2059
    %v2100 = vxor.u32 %v2060, 2147483648
    %v2101 = vmul.f32 %v2100, 1.442695
    %v2102 = vpow.pop %v2101
    %v2103 = vadd.f32 %v2102, 1.0
    %v2104 = vrcp.pop %v2103
    %v2105 = vmul.f32 %v2103, %v2104
    %v2106 = vsub.f32 1.0, %v2105
    %v2107 = vmul.f32 %v2104, %v2106
    %v2108 = vadd.f32 %v2104, %v2107
    %vm2109 = vweird.f32 %v2103
    %vm2110 = vweird.f32 %v2104
    %vm2111 = vmor %vm2109, %vm2110
    %v2112 = vsel %vm2111, %v2104, %v2108
    %v2113 = vand.u32 2147483647, %v2103
    %vm2114 = vcmp.eq.f32.partialorder %v2113, 8.507059e+37
    %v2115 = vand.u32 %v2103, 2147483648
    %v2116 = vor.u32 1.1754944e-38, %v2115
    %v2117 = vsel %vm2114, %v2116, %v2112
    %v2118 = vmul.f32 1.0, %v2117
    %v2119 = vmul.f32 %v2098, %v1807
    %v2120 = vmul.f32 %v2079, %v2099
    %v2121 = vadd.f32 %v2119, %v2120
    %v2122 = vtanh.pop %v2121
    %v2123 = vmul.f32 %v2118, %v2122
    %v2124 = vpack.c.bf16 %v2123, %v2123
    %v2125 = vld [vmem:[%s7] sm:$0xff]
    %v2126 = vld [vmem:[%s7 + $0x8] sm:$0xff]
    %v2127 = vld [vmem:[%s7 + $0x10] sm:$0xff]
    %v2128 = vld [vmem:[%s7 + $0x18] sm:$0xff]
    %v2129 = vld [vmem:[%s7 + $0x20] sm:$0xff]
    %v2130 = vld [vmem:[%s7 + $0x28] sm:$0xff]
    %v2131 = vld [vmem:[%s7 + $0x30] sm:$0xff]
    %v2132 = vld [vmem:[%s7 + $0x38] sm:$0xff]
    %v2133 = vld [vmem:[%s7 + $0x40] sm:$0xff]
    %v2134 = vld [vmem:[%s7 + $0x48] sm:$0xff]
    %v2135 = vld [vmem:[%s7 + $0x50] sm:$0xff]
    %v2136 = vld [vmem:[%s7 + $0x58] sm:$0xff]
    %v2137 = vld [vmem:[%s7 + $0x60] sm:$0xff]
    %v2138 = vld [vmem:[%s7 + $0x68] sm:$0xff]
    %v2139 = vld [vmem:[%s7 + $0x70] sm:$0xff]
    %v2140 = vld [vmem:[%s7 + $0x78] sm:$0xff]
    %v2141 = vld [vmem:[%s7 + $0x80] sm:$0xff]
    %v2142 = vld [vmem:[%s7 + $0x88] sm:$0xff]
    %v2143 = vld [vmem:[%s7 + $0x90] sm:$0xff]
    %v2144 = vld [vmem:[%s7 + $0x98] sm:$0xff]
    %v2145 = vld [vmem:[%s7 + $0xa0] sm:$0xff]
    %v2146 = vld [vmem:[%s7 + $0xa8] sm:$0xff]
    %v2147 = vld [vmem:[%s7 + $0xb0] sm:$0xff]
    %v2148 = vld [vmem:[%s7 + $0xb8] sm:$0xff]
    %v2149 = vld [vmem:[%s7 + $0xc0] sm:$0xff]
    %v2150 = vld [vmem:[%s7 + $0xc8] sm:$0xff]
    %v2151 = vld [vmem:[%s7 + $0xd0] sm:$0xff]
    %v2152 = vld [vmem:[%s7 + $0xd8] sm:$0xff]
    %v2153 = vld [vmem:[%s7 + $0xe0] sm:$0xff]
    %v2154 = vld [vmem:[%s7 + $0xe8] sm:$0xff]
    %v2155 = vld [vmem:[%s7 + $0xf0] sm:$0xff]
    %v2156 = vld [vmem:[%s7 + $0xf8] sm:$0xff]
    %v2157 = vld [vmem:[%s8] sm:$0xf]
    %v2159 = vperm.slane %v2157, 0
    %v2160 = vperm.slane %v2157, 1
    %v2161 = vperm.slane %v2157, 2
    %v2162 = vperm.slane %v2157, 3
    %v2199 = vunpack.c.l.b16 %v2125
    %v2200 = vunpack.c.h.b16 %v2125
    %v2201 = vunpack.c.l.b16 %v2126
    %v2202 = vunpack.c.h.b16 %v2126
    %v2203 = vunpack.c.l.b16 %v2127
    %v2204 = vunpack.c.h.b16 %v2127
    %v2205 = vunpack.c.l.b16 %v2128
    %v2206 = vunpack.c.h.b16 %v2128
    %v2207 = vunpack.c.l.b16 %v2129
    %v2208 = vunpack.c.h.b16 %v2129
    %v2209 = vunpack.c.l.b16 %v2130
    %v2210 = vunpack.c.h.b16 %v2130
    %v2211 = vunpack.c.l.b16 %v2131
    %v2212 = vunpack.c.h.b16 %v2131
    %v2213 = vunpack.c.l.b16 %v2132
    %v2214 = vunpack.c.h.b16 %v2132
    %v2215 = vunpack.c.l.b16 %v2133
    %v2216 = vunpack.c.h.b16 %v2133
    %v2217 = vunpack.c.l.b16 %v2134
    %v2218 = vunpack.c.h.b16 %v2134
    %v2219 = vunpack.c.l.b16 %v2135
    %v2220 = vunpack.c.h.b16 %v2135
    %v2221 = vunpack.c.l.b16 %v2136
    %v2222 = vunpack.c.h.b16 %v2136
    %v2223 = vunpack.c.l.b16 %v2137
    %v2224 = vunpack.c.h.b16 %v2137
    %v2225 = vunpack.c.l.b16 %v2138
    %v2226 = vunpack.c.h.b16 %v2138
    %v2227 = vunpack.c.l.b16 %v2139
    %v2228 = vunpack.c.h.b16 %v2139
    %v2229 = vunpack.c.l.b16 %v2140
    %v2230 = vunpack.c.h.b16 %v2140
    %v2231 = vunpack.c.l.b16 %v2141
    %v2232 = vunpack.c.h.b16 %v2141
    %v2233 = vunpack.c.l.b16 %v2142
    %v2234 = vunpack.c.h.b16 %v2142
    %v2235 = vunpack.c.l.b16 %v2143
    %v2236 = vunpack.c.h.b16 %v2143
    %v2237 = vunpack.c.l.b16 %v2144
    %v2238 = vunpack.c.h.b16 %v2144
    %v2239 = vunpack.c.l.b16 %v2145
    %v2240 = vunpack.c.h.b16 %v2145
    %v2241 = vunpack.c.l.b16 %v2146
    %v2242 = vunpack.c.h.b16 %v2146
    %v2243 = vunpack.c.l.b16 %v2147
    %v2244 = vunpack.c.h.b16 %v2147
    %v2245 = vunpack.c.l.b16 %v2148
    %v2246 = vunpack.c.h.b16 %v2148
    %v2247 = vunpack.c.l.b16 %v2149
    %v2248 = vunpack.c.h.b16 %v2149
    %v2249 = vunpack.c.l.b16 %v2150
    %v2250 = vunpack.c.h.b16 %v2150
    %v2251 = vunpack.c.l.b16 %v2151
    %v2252 = vunpack.c.h.b16 %v2151
    %v2253 = vunpack.c.l.b16 %v2152
    %v2254 = vunpack.c.h.b16 %v2152
    %v2255 = vunpack.c.l.b16 %v2153
    %v2256 = vunpack.c.h.b16 %v2153
    %v2257 = vunpack.c.l.b16 %v2154
    %v2258 = vunpack.c.h.b16 %v2154
    %v2259 = vunpack.c.l.b16 %v2155
    %v2260 = vunpack.c.h.b16 %v2155
    %v2261 = vunpack.c.l.b16 %v2156
    %v2262 = vunpack.c.h.b16 %v2156
    %v2263 = vpack.c.b16 %v2203, %v2199
    %v2264 = vpack.c.b16 %v2204, %v2200
    %v2265 = vpack.c.b16 %v2205, %v2201
    %v2266 = vpack.c.b16 %v2206, %v2202
    %v2267 = vpack.c.b16 %v2211, %v2207
    %v2268 = vpack.c.b16 %v2212, %v2208
    %v2269 = vpack.c.b16 %v2213, %v2209
    %v2270 = vpack.c.b16 %v2214, %v2210
    %v2271 = vpack.c.b16 %v2219, %v2215
    %v2272 = vpack.c.b16 %v2220, %v2216
    %v2273 = vpack.c.b16 %v2221, %v2217
    %v2274 = vpack.c.b16 %v2222, %v2218
    %v2275 = vpack.c.b16 %v2227, %v2223
    %v2276 = vpack.c.b16 %v2228, %v2224
    %v2277 = vpack.c.b16 %v2229, %v2225
    %v2278 = vpack.c.b16 %v2230, %v2226
    %v2279 = vpack.c.b16 %v2235, %v2231
    %v2280 = vpack.c.b16 %v2236, %v2232
    %v2281 = vpack.c.b16 %v2237, %v2233
    %v2282 = vpack.c.b16 %v2238, %v2234
    %v2283 = vpack.c.b16 %v2243, %v2239
    %v2284 = vpack.c.b16 %v2244, %v2240
    %v2285 = vpack.c.b16 %v2245, %v2241
    %v2286 = vpack.c.b16 %v2246, %v2242
    %v2287 = vpack.c.b16 %v2251, %v2247
    %v2288 = vpack.c.b16 %v2252, %v2248
    %v2289 = vpack.c.b16 %v2253, %v2249
    %v2290 = vpack.c.b16 %v2254, %v2250
    %v2291 = vpack.c.b16 %v2259, %v2255
    %v2292 = vpack.c.b16 %v2260, %v2256
    %v2293 = vpack.c.b16 %v2261, %v2257
    %v2294 = vpack.c.b16 %v2262, %v2258
    %2327 = vmatpush.bf16.msra.mxu0 %v2291
    %2328 = vmatpush.bf16.msra.mxu0 %v2287
    %2329 = vmatpush.bf16.msra.mxu0 %v2283
    %2330 = vmatpush.bf16.msra.mxu0 %v2279
    %2331 = vmatpush.bf16.msra.mxu0 %v2275
    %2332 = vmatpush.bf16.msra.mxu0 %v2271
    %2333 = vmatpush.bf16.msra.mxu0 %v2267
    %2334 = vmatpush.bf16.msra.mxu0 %v2263
    %2335 = vmatmul.bf16.gmra.mxu0 %v2124
    %v2336 = vpop.f32.mrf.mxu0
    %v2337 = vadd.f32 %v2159, %v2336
    %v2338 = vpop.f32.mrf.mxu0
    %2339 = vdwg.mxu0
    %2340 = vmatpush.bf16.msra.mxu0 %v2292
    %2341 = vmatpush.bf16.msra.mxu0 %v2288
    %2342 = vmatpush.bf16.msra.mxu0 %v2284
    %2343 = vmatpush.bf16.msra.mxu0 %v2280
    %2344 = vmatpush.bf16.msra.mxu0 %v2276
    %2345 = vmatpush.bf16.msra.mxu0 %v2272
    %2346 = vmatpush.bf16.msra.mxu0 %v2268
    %2347 = vmatpush.bf16.msra.mxu0 %v2264
    %2348 = vmatmul.bf16.gmra.mxu0 %v2124
    %v2349 = vpop.f32.mrf.mxu0
    %v2350 = vadd.f32 %v2160, %v2349
    %v2351 = vpop.f32.mrf.mxu0
    %2352 = vdwg.mxu0
    %2353 = vmatpush.bf16.msra.mxu0 %v2293
    %2354 = vmatpush.bf16.msra.mxu0 %v2289
    %2355 = vmatpush.bf16.msra.mxu0 %v2285
    %2356 = vmatpush.bf16.msra.mxu0 %v2281
    %2357 = vmatpush.bf16.msra.mxu0 %v2277
    %2358 = vmatpush.bf16.msra.mxu0 %v2273
    %2359 = vmatpush.bf16.msra.mxu0 %v2269
    %2360 = vmatpush.bf16.msra.mxu0 %v2265
    %2361 = vmatmul.bf16.gmra.mxu0 %v2124
    %v2362 = vpop.f32.mrf.mxu0
    %v2363 = vadd.f32 %v2161, %v2362
    %v2364 = vpop.f32.mrf.mxu0
    %2365 = vdwg.mxu0
    %2366 = vmatpush.bf16.msra.mxu0 %v2294
    %2367 = vmatpush.bf16.msra.mxu0 %v2290
    %2368 = vmatpush.bf16.msra.mxu0 %v2286
    %2369 = vmatpush.bf16.msra.mxu0 %v2282
    %2370 = vmatpush.bf16.msra.mxu0 %v2278
    %2371 = vmatpush.bf16.msra.mxu0 %v2274
    %2372 = vmatpush.bf16.msra.mxu0 %v2270
    %2373 = vmatpush.bf16.msra.mxu0 %v2266
    %2374 = vmatmul.bf16.gmra.mxu0 %v2124
    %v2375 = vpop.f32.mrf.mxu0
    %v2376 = vadd.f32 %v2162, %v2375
    %v2377 = vpop.f32.mrf.mxu0
    %2378 = vdwg.mxu0
    %v2379 = vmax.f32 %v2337, 0.0
    %v2380 = vmax.f32 %v2350, 0.0
    %v2381 = vmax.f32 %v2363, 0.0
    %v2382 = vmax.f32 %v2376, 0.0
    %v2383 = vpack.c.bf16 %v2379, %v2379
    %v2384 = vpack.c.bf16 %v2380, %v2380
    %v2385 = vpack.c.bf16 %v2381, %v2381
    %v2386 = vpack.c.bf16 %v2382, %v2382
    %v2387 = vld [vmem:[%s9] sm:$0xf]
    %v2388 = vld [vmem:[%s9 + $0x4] sm:$0xf]
    %v2389 = vld [vmem:[%s9 + $0x8] sm:$0xf]
    %v2390 = vld [vmem:[%s9 + $0xc] sm:$0xf]
    %v2391 = vld [vmem:[%s9 + $0x10] sm:$0xf]
    %v2392 = vld [vmem:[%s9 + $0x14] sm:$0xf]
    %v2393 = vld [vmem:[%s9 + $0x18] sm:$0xf]
    %v2394 = vld [vmem:[%s9 + $0x1c] sm:$0xf]
    %v2395 = vld [vmem:[%s9 + $0x20] sm:$0xf]
    %v2396 = vld [vmem:[%s9 + $0x24] sm:$0xf]
    %v2397 = vld [vmem:[%s9 + $0x28] sm:$0xf]
    %v2398 = vld [vmem:[%s9 + $0x2c] sm:$0xf]
    %v2399 = vld [vmem:[%s9 + $0x30] sm:$0xf]
    %v2400 = vld [vmem:[%s9 + $0x34] sm:$0xf]
    %v2401 = vld [vmem:[%s9 + $0x38] sm:$0xf]
    %v2402 = vld [vmem:[%s9 + $0x3c] sm:$0xf]
    %v2403 = vld [vmem:[%s9 + $0x40] sm:$0xf]
    %v2404 = vld [vmem:[%s9 + $0x44] sm:$0xf]
    %v2405 = vld [vmem:[%s9 + $0x48] sm:$0xf]
    %v2406 = vld [vmem:[%s9 + $0x4c] sm:$0xf]
    %v2407 = vld [vmem:[%s9 + $0x50] sm:$0xf]
    %v2408 = vld [vmem:[%s9 + $0x54] sm:$0xf]
    %v2409 = vld [vmem:[%s9 + $0x58] sm:$0xf]
    %v2410 = vld [vmem:[%s9 + $0x5c] sm:$0xf]
    %v2411 = vld [vmem:[%s9 + $0x60] sm:$0xf]
    %v2412 = vld [vmem:[%s9 + $0x64] sm:$0xf]
    %v2413 = vld [vmem:[%s9 + $0x68] sm:$0xf]
    %v2414 = vld [vmem:[%s9 + $0x6c] sm:$0xf]
    %v2415 = vld [vmem:[%s9 + $0x70] sm:$0xf]
    %v2416 = vld [vmem:[%s9 + $0x74] sm:$0xf]
    %v2417 = vld [vmem:[%s9 + $0x78] sm:$0xf]
    %v2418 = vld [vmem:[%s9 + $0x7c] sm:$0xf]
    %v2419 = vld [vmem:[%s9 + $0x80] sm:$0xf]
    %v2420 = vld [vmem:[%s9 + $0x84] sm:$0xf]
    %v2421 = vld [vmem:[%s9 + $0x88] sm:$0xf]
    %v2422 = vld [vmem:[%s9 + $0x8c] sm:$0xf]
    %v2423 = vld [vmem:[%s9 + $0x90] sm:$0xf]
    %v2424 = vld [vmem:[%s9 + $0x94] sm:$0xf]
    %v2425 = vld [vmem:[%s9 + $0x98] sm:$0xf]
    %v2426 = vld [vmem:[%s9 + $0x9c] sm:$0xf]
    %v2427 = vld [vmem:[%s9 + $0xa0] sm:$0xf]
    %v2428 = vld [vmem:[%s9 + $0xa4] sm:$0xf]
    %v2429 = vld [vmem:[%s9 + $0xa8] sm:$0xf]
    %v2430 = vld [vmem:[%s9 + $0xac] sm:$0xf]
    %v2431 = vld [vmem:[%s9 + $0xb0] sm:$0xf]
    %v2432 = vld [vmem:[%s9 + $0xb4] sm:$0xf]
    %v2433 = vld [vmem:[%s9 + $0xb8] sm:$0xf]
    %v2434 = vld [vmem:[%s9 + $0xbc] sm:$0xf]
    %v2435 = vld [vmem:[%s9 + $0xc0] sm:$0xf]
    %v2436 = vld [vmem:[%s9 + $0xc4] sm:$0xf]
    %v2437 = vld [vmem:[%s9 + $0xc8] sm:$0xf]
    %v2438 = vld [vmem:[%s9 + $0xcc] sm:$0xf]
    %v2439 = vld [vmem:[%s9 + $0xd0] sm:$0xf]
    %v2440 = vld [vmem:[%s9 + $0xd4] sm:$0xf]
    %v2441 = vld [vmem:[%s9 + $0xd8] sm:$0xf]
    %v2442 = vld [vmem:[%s9 + $0xdc] sm:$0xf]
    %v2443 = vld [vmem:[%s9 + $0xe0] sm:$0xf]
    %v2444 = vld [vmem:[%s9 + $0xe4] sm:$0xf]
    %v2445 = vld [vmem:[%s9 + $0xe8] sm:$0xf]
    %v2446 = vld [vmem:[%s9 + $0xec] sm:$0xf]
    %v2447 = vld [vmem:[%s9 + $0xf0] sm:$0xf]
    %v2448 = vld [vmem:[%s9 + $0xf4] sm:$0xf]
    %v2449 = vld [vmem:[%s9 + $0xf8] sm:$0xf]
    %v2450 = vld [vmem:[%s9 + $0xfc] sm:$0xf]
    %v2451 = vld [vmem:[%s10] sm:$0x1]
    %v2453 = vperm.slane %v2451, 0
    %v2519 = vunpack.c.l.b16 %v2387
    %v2520 = vunpack.c.l.b16 %v2388
    %v2521 = vunpack.c.l.b16 %v2389
    %v2522 = vunpack.c.l.b16 %v2390
    %v2523 = vunpack.c.l.b16 %v2391
    %v2524 = vunpack.c.l.b16 %v2392
    %v2525 = vunpack.c.l.b16 %v2393
    %v2526 = vunpack.c.l.b16 %v2394
    %v2527 = vunpack.c.l.b16 %v2395
    %v2528 = vunpack.c.l.b16 %v2396
    %v2529 = vunpack.c.l.b16 %v2397
    %v2530 = vunpack.c.l.b16 %v2398
    %v2531 = vunpack.c.l.b16 %v2399
    %v2532 = vunpack.c.l.b16 %v2400
    %v2533 = vunpack.c.l.b16 %v2401
    %v2534 = vunpack.c.l.b16 %v2402
    %v2535 = vunpack.c.l.b16 %v2403
    %v2536 = vunpack.c.l.b16 %v2404
    %v2537 = vunpack.c.l.b16 %v2405
    %v2538 = vunpack.c.l.b16 %v2406
    %v2539 = vunpack.c.l.b16 %v2407
    %v2540 = vunpack.c.l.b16 %v2408
    %v2541 = vunpack.c.l.b16 %v2409
    %v2542 = vunpack.c.l.b16 %v2410
    %v2543 = vunpack.c.l.b16 %v2411
    %v2544 = vunpack.c.l.b16 %v2412
    %v2545 = vunpack.c.l.b16 %v2413
    %v2546 = vunpack.c.l.b16 %v2414
    %v2547 = vunpack.c.l.b16 %v2415
    %v2548 = vunpack.c.l.b16 %v2416
    %v2549 = vunpack.c.l.b16 %v2417
    %v2550 = vunpack.c.l.b16 %v2418
    %v2551 = vunpack.c.l.b16 %v2419
    %v2552 = vunpack.c.l.b16 %v2420
    %v2553 = vunpack.c.l.b16 %v2421
    %v2554 = vunpack.c.l.b16 %v2422
    %v2555 = vunpack.c.l.b16 %v2423
    %v2556 = vunpack.c.l.b16 %v2424
    %v2557 = vunpack.c.l.b16 %v2425
    %v2558 = vunpack.c.l.b16 %v2426
    %v2559 = vunpack.c.l.b16 %v2427
    %v2560 = vunpack.c.l.b16 %v2428
    %v2561 = vunpack.c.l.b16 %v2429
    %v2562 = vunpack.c.l.b16 %v2430
    %v2563 = vunpack.c.l.b16 %v2431
    %v2564 = vunpack.c.l.b16 %v2432
    %v2565 = vunpack.c.l.b16 %v2433
    %v2566 = vunpack.c.l.b16 %v2434
    %v2567 = vunpack.c.l.b16 %v2435
    %v2568 = vunpack.c.l.b16 %v2436
    %v2569 = vunpack.c.l.b16 %v2437
    %v2570 = vunpack.c.l.b16 %v2438
    %v2571 = vunpack.c.l.b16 %v2439
    %v2572 = vunpack.c.l.b16 %v2440
    %v2573 = vunpack.c.l.b16 %v2441
    %v2574 = vunpack.c.l.b16 %v2442
    %v2575 = vunpack.c.l.b16 %v2443
    %v2576 = vunpack.c.l.b16 %v2444
    %v2577 = vunpack.c.l.b16 %v2445
    %v2578 = vunpack.c.l.b16 %v2446
    %v2579 = vunpack.c.l.b16 %v2447
    %v2580 = vunpack.c.l.b16 %v2448
    %v2581 = vunpack.c.l.b16 %v2449
    %v2582 = vunpack.c.l.b16 %v2450
    %v2583 = vpack.c.b16 %v2520, %v2519
    %v2584 = vpack.c.b16 %v2522, %v2521
    %v2585 = vpack.c.b16 %v2524, %v2523
    %v2586 = vpack.c.b16 %v2526, %v2525
    %v2587 = vpack.c.b16 %v2528, %v2527
    %v2588 = vpack.c.b16 %v2530, %v2529
    %v2589 = vpack.c.b16 %v2532, %v2531
    %v2590 = vpack.c.b16 %v2534, %v2533
    %v2591 = vpack.c.b16 %v2536, %v2535
    %v2592 = vpack.c.b16 %v2538, %v2537
    %v2593 = vpack.c.b16 %v2540, %v2539
    %v2594 = vpack.c.b16 %v2542, %v2541
    %v2595 = vpack.c.b16 %v2544, %v2543
    %v2596 = vpack.c.b16 %v2546, %v2545
    %v2597 = vpack.c.b16 %v2548, %v2547
    %v2598 = vpack.c.b16 %v2550, %v2549
    %v2599 = vpack.c.b16 %v2552, %v2551
    %v2600 = vpack.c.b16 %v2554, %v2553
    %v2601 = vpack.c.b16 %v2556, %v2555
    %v2602 = vpack.c.b16 %v2558, %v2557
    %v2603 = vpack.c.b16 %v2560, %v2559
    %v2604 = vpack.c.b16 %v2562, %v2561
    %v2605 = vpack.c.b16 %v2564, %v2563
    %v2606 = vpack.c.b16 %v2566, %v2565
    %v2607 = vpack.c.b16 %v2568, %v2567
    %v2608 = vpack.c.b16 %v2570, %v2569
    %v2609 = vpack.c.b16 %v2572, %v2571
    %v2610 = vpack.c.b16 %v2574, %v2573
    %v2611 = vpack.c.b16 %v2576, %v2575
    %v2612 = vpack.c.b16 %v2578, %v2577
    %v2613 = vpack.c.b16 %v2580, %v2579
    %v2614 = vpack.c.b16 %v2582, %v2581
    %2647 = vmatpush.bf16.msra.mxu0 %v2590
    %2648 = vmatpush.bf16.msra.mxu0 %v2589
    %2649 = vmatpush.bf16.msra.mxu0 %v2588
    %2650 = vmatpush.bf16.msra.mxu0 %v2587
    %2651 = vmatpush.bf16.msra.mxu0 %v2586
    %2652 = vmatpush.bf16.msra.mxu0 %v2585
    %2653 = vmatpush.bf16.msra.mxu0 %v2584
    %2654 = vmatpush.bf16.msra.mxu0 %v2583
    %2655 = vmatmul.bf16.gmra.mxu0 %v2383
    %v2656 = vpop.f32.mrf.mxu0
    %v2657 = vadd.f32 %v2453, %v2656
    %v2658 = vpop.f32.mrf.mxu0
    %2659 = vdwg.mxu0
    %2660 = vmatpush.bf16.msra.mxu0 %v2598
    %2661 = vmatpush.bf16.msra.mxu0 %v2597
    %2662 = vmatpush.bf16.msra.mxu0 %v2596
    %2663 = vmatpush.bf16.msra.mxu0 %v2595
    %2664 = vmatpush.bf16.msra.mxu0 %v2594
    %2665 = vmatpush.bf16.msra.mxu0 %v2593
    %2666 = vmatpush.bf16.msra.mxu0 %v2592
    %2667 = vmatpush.bf16.msra.mxu0 %v2591
    %2668 = vmatmul.bf16.gmra.mxu0 %v2384
    %v2669 = vpop.f32.mrf.mxu0
    %v2670 = vadd.f32 %v2657, %v2669
    %v2671 = vpop.f32.mrf.mxu0
    %2672 = vdwg.mxu0
    %2673 = vmatpush.bf16.msra.mxu0 %v2606
    %2674 = vmatpush.bf16.msra.mxu0 %v2605
    %2675 = vmatpush.bf16.msra.mxu0 %v2604
    %2676 = vmatpush.bf16.msra.mxu0 %v2603
    %2677 = vmatpush.bf16.msra.mxu0 %v2602
    %2678 = vmatpush.bf16.msra.mxu0 %v2601
    %2679 = vmatpush.bf16.msra.mxu0 %v2600
    %2680 = vmatpush.bf16.msra.mxu0 %v2599
    %2681 = vmatmul.bf16.gmra.mxu0 %v2385
    %v2682 = vpop.f32.mrf.mxu0
    %v2683 = vadd.f32 %v2670, %v2682
    %v2684 = vpop.f32.mrf.mxu0
    %2685 = vdwg.mxu0
    %2686 = vmatpush.bf16.msra.mxu0 %v2614
    %2687 = vmatpush.bf16.msra.mxu0 %v2613
    %2688 = vmatpush.bf16.msra.mxu0 %v2612
    %2689 = vmatpush.bf16.msra.mxu0 %v2611
    %2690 = vmatpush.bf16.msra.mxu0 %v2610
    %2691 = vmatpush.bf16.msra.mxu0 %v2609
    %2692 = vmatpush.bf16.msra.mxu0 %v2608
    %2693 = vmatpush.bf16.msra.mxu0 %v2607
    %2694 = vmatmul.bf16.gmra.mxu0 %v2386
    %v2695 = vpop.f32.mrf.mxu0
    %v2696 = vadd.f32 %v2683, %v2695
    %v2697 = vpop.f32.mrf.mxu0
    %2698 = vdwg.mxu0
    %v2699 = vmax.f32 %v2696, 0.0
    %v2700 = vpack.c.bf16 %v2699, %v2699
    %v2701 = vld [vmem:[%s11] sm:$0xf]
    %v2702 = vld [vmem:[%s11 + $0x4] sm:$0xf]
    %v2703 = vld [vmem:[%s11 + $0x8] sm:$0xf]
    %v2704 = vld [vmem:[%s11 + $0xc] sm:$0xf]
    %v2705 = vld [vmem:[%s11 + $0x10] sm:$0xf]
    %v2706 = vld [vmem:[%s11 + $0x14] sm:$0xf]
    %v2707 = vld [vmem:[%s11 + $0x18] sm:$0xf]
    %v2708 = vld [vmem:[%s11 + $0x1c] sm:$0xf]
    %v2709 = vld [vmem:[%s11 + $0x20] sm:$0xf]
    %v2710 = vld [vmem:[%s11 + $0x24] sm:$0xf]
    %v2711 = vld [vmem:[%s11 + $0x28] sm:$0xf]
    %v2712 = vld [vmem:[%s11 + $0x2c] sm:$0xf]
    %v2713 = vld [vmem:[%s11 + $0x30] sm:$0xf]
    %v2714 = vld [vmem:[%s11 + $0x34] sm:$0xf]
    %v2715 = vld [vmem:[%s11 + $0x38] sm:$0xf]
    %v2716 = vld [vmem:[%s11 + $0x3c] sm:$0xf]
    %v2717 = vld [vmem:[%s12] sm:$0x1]
    %v2719 = vperm.slane %v2717, 0
    %v2737 = vunpack.c.l.b16 %v2701
    %v2738 = vunpack.c.l.b16 %v2702
    %v2739 = vunpack.c.l.b16 %v2703
    %v2740 = vunpack.c.l.b16 %v2704
    %v2741 = vunpack.c.l.b16 %v2705
    %v2742 = vunpack.c.l.b16 %v2706
    %v2743 = vunpack.c.l.b16 %v2707
    %v2744 = vunpack.c.l.b16 %v2708
    %v2745 = vunpack.c.l.b16 %v2709
    %v2746 = vunpack.c.l.b16 %v2710
    %v2747 = vunpack.c.l.b16 %v2711
    %v2748 = vunpack.c.l.b16 %v2712
    %v2749 = vunpack.c.l.b16 %v2713
    %v2750 = vunpack.c.l.b16 %v2714
    %v2751 = vunpack.c.l.b16 %v2715
    %v2752 = vunpack.c.l.b16 %v2716
    %v2753 = vpack.c.b16 %v2738, %v2737
    %v2754 = vpack.c.b16 %v2740, %v2739
    %v2755 = vpack.c.b16 %v2742, %v2741
    %v2756 = vpack.c.b16 %v2744, %v2743
    %v2757 = vpack.c.b16 %v2746, %v2745
    %v2758 = vpack.c.b16 %v2748, %v2747
    %v2759 = vpack.c.b16 %v2750, %v2749
    %v2760 = vpack.c.b16 %v2752, %v2751
    %2769 = vmatpush.bf16.msra.mxu0 %v2760
    %2770 = vmatpush.bf16.msra.mxu0 %v2759
    %2771 = vmatpush.bf16.msra.mxu0 %v2758
    %2772 = vmatpush.bf16.msra.mxu0 %v2757
    %2773 = vmatpush.bf16.msra.mxu0 %v2756
    %2774 = vmatpush.bf16.msra.mxu0 %v2755
    %2775 = vmatpush.bf16.msra.mxu0 %v2754
    %2776 = vmatpush.bf16.msra.mxu0 %v2753
    %2777 = vmatmul.bf16.gmra.mxu0 %v2700
    %v2778 = vpop.f32.mrf.mxu0
    %v2779 = vadd.f32 %v2719, %v2778
    %v2780 = vpop.f32.mrf.mxu0
    %2781 = vdwg.mxu0
    %2782 = vst [vmem:[#allocation2] sm:$0x3] %v2779
    // Predicated region
    $region54: #{temporal3d_forward.15} parent=1 // pred_check
      _
    $region55: #{temporal3d_forward.15} parent=1 // pred_check_branch
      %2784 = sbr.rel (0) target = $region57
    $region56: #{temporal3d_forward.15} parent=1 // pred_region
      %2786 = vsyncadd [#allocation3], 0
      %s2788 = sshll.u32 [#allocation2], 4
      %s2789 = int_to_ptr.vmem [resolvable:$true] %s2788
      %s2790 = sshll.u32 %s13, 4
      %s2791 = int_to_ptr.hbm [resolvable:$true] %s2790
      %2793 = dma.vmem_to_hbm [thread:$0]  %s2789, 32, %s2791, [#allocation3]
    $region57: #{temporal3d_forward.15} parent=1 // pred_fallthru
      _
    // Predicated region
    $region58: #{temporal3d_forward.15} parent=1 // pred_check
      _
    $region59: #{temporal3d_forward.15} parent=1 // pred_check_branch
      %2795 = sbr.rel (0) target = $region61
    $region60: #{temporal3d_forward.15} parent=1 // pred_region
      %2797 = dma.done [#allocation3], 32
    $region61: #{temporal3d_forward.15} parent=1 // pred_fallthru
      _
    %2798 = vsyncpa [#allocation3], 1

</llo_original>
